<compile_context>
chip_gen: v7x
topology: tpu7x:2x2x1
jax: 0.10.0
libtpu: 0.0.40
codegen_flags: <defaults>
</compile_context>

<pallas_src>
import functools

import jax
import jax.numpy as jnp
from jax.experimental import pallas as pl
from jax.experimental.pallas import tpu as pltpu


_SQRT_HALF = 0.7071067811865476


def _erf(x):
    # Abramowitz & Stegun 7.1.26 (|err| < 1.5e-7): matches nn.GELU()'s exact-erf
    # semantics to ~f32 precision without relying on an erf lowering.
    p = 0.3275911
    a1, a2, a3, a4, a5 = (0.254829592, -0.284496736, 1.421413741,
                          -1.453152027, 1.061405429)
    ax = jnp.abs(x)
    t = 1.0 / (1.0 + p * ax)
    poly = ((((a5 * t + a4) * t + a3) * t + a2) * t + a1) * t
    y = 1.0 - poly * jnp.exp(-ax * ax)
    return jnp.where(x >= 0, y, -y)


def _gelu(x):
    return 0.5 * x * (1.0 + _erf(x * _SQRT_HALF))


# ---------------------------------------------------------------------------
# Fused kernels
# ---------------------------------------------------------------------------

def _conv3x3_groupnorm(x_ref, w_ref, g_ref, b_ref, *, stride, groups, eps, Ho, Wo):
    """3x3 conv (input already zero-padded by 1) + GroupNorm, in-VMEM.

    x_ref : (Hp, Wp, Cin) f32, one padded image.
    w_ref : (9, Cin, O)   bf16, tap-major weights.
    g_ref / b_ref : (1, O) f32 affine params.
    Returns the normalized (Ho*Wo, O) f32 activation.
    """
    Cin = x_ref.shape[-1]
    O = w_ref.shape[-1]
    HW = Ho * Wo

    if stride == 1:
        def tap(dy, dx):
            return x_ref[dy:dy + Ho, dx:dx + Wo, :]
    else:
        xv = x_ref[...]

        def tap(dy, dx):
            return xv[dy:dy + (Ho - 1) * stride + 1:stride,
                      dx:dx + (Wo - 1) * stride + 1:stride, :]

    # Conv: 9 taps x (HW, Cin) @ (Cin, O) on the MXU, bf16 in / f32 accumulate.
    acc = jnp.zeros((HW, O), jnp.float32)
    for dy in range(3):
        for dx in range(3):
            a = tap(dy, dx).reshape(HW, Cin).astype(jnp.bfloat16)
            acc = acc + jnp.dot(a, w_ref[dy * 3 + dx],
                                preferred_element_type=jnp.float32)

    # GroupNorm(groups, O): biased stats over (HW, Cg) per group, per-channel
    # affine.  Masked reductions keep the activation lane-dense (no reshapes
    # or transposes of the (HW, C) tensor).
    Cg = O // groups
    lane = jax.lax.broadcasted_iota(jnp.int32, (HW, O), 1)
    cnt = float(HW * Cg)
    y = jnp.zeros((HW, O), jnp.float32)
    for g in range(groups):
        mask = (lane >= g * Cg) & (lane < (g + 1) * Cg)
        mean = jnp.sum(jnp.where(mask, acc, 0.0)) / cnt
        diff = jnp.where(mask, acc - mean, 0.0)
        var = jnp.sum(diff * diff) / cnt
        inv = jax.lax.rsqrt(var + eps)
        y = jnp.where(mask, (acc - mean) * inv, y)
    return y * g_ref[...] + b_ref[...]


def _conv_gn_kernel(x_ref, w_ref, g_ref, b_ref, o_ref, *,
                    stride, groups, eps, Ho, Wo):
    y = _conv3x3_groupnorm(x_ref, w_ref, g_ref, b_ref, stride=stride,
                           groups=groups, eps=eps, Ho=Ho, Wo=Wo)
    o_ref[...] = y.astype(o_ref.dtype)


def _conv_gn_add_gelu_kernel(x_ref, w_ref, g_ref, b_ref, r_ref, o_ref, *,
                             stride, groups, eps, Ho, Wo):
    y = _conv3x3_groupnorm(x_ref, w_ref, g_ref, b_ref, stride=stride,
                           groups=groups, eps=eps, Ho=Ho, Wo=Wo)
    z = y + r_ref[...].astype(jnp.float32)
    o_ref[...] = _gelu(z).astype(o_ref.dtype)


# ---------------------------------------------------------------------------
# Host-side wrappers
# ---------------------------------------------------------------------------

def _prep_conv(x, w, gamma, beta, stride):
    N, H, W, Cin = x.shape
    O = w.shape[0]
    Ho = (H + 2 - 3) // stride + 1
    Wo = (W + 2 - 3) // stride + 1
    xp = jnp.pad(x, ((0, 0), (1, 1), (1, 1), (0, 0)))          # zero pad = 1
    # PyTorch (O, Cin, 3, 3) -> tap-major (9, Cin, O), cast to bf16 for the MXU.
    wmat = jnp.transpose(w, (2, 3, 1, 0)).reshape(9, Cin, O).astype(jnp.bfloat16)
    g = gamma.reshape(1, O).astype(jnp.float32)
    b = beta.reshape(1, O).astype(jnp.float32)
    return xp, wmat, g, b, Ho, Wo


def conv3x3_gn(x, w, gamma, beta, *, stride=1, groups=4, eps=1e-5):
    """NHWC input, PyTorch-layout weights.  Returns (N, Ho*Wo, O)."""
    N, H, W, Cin = x.shape
    O = w.shape[0]
    xp, wmat, g, b, Ho, Wo = _prep_conv(x, w, gamma, beta, stride)
    Hp, Wp = H + 2, W + 2
    HW = Ho * Wo
    kernel = functools.partial(_conv_gn_kernel, stride=stride, groups=groups,
                               eps=eps, Ho=Ho, Wo=Wo)
    return pl.pallas_call(
        kernel,
        out_shape=jax.ShapeDtypeStruct((N, HW, O), x.dtype),
        grid=(N,),
        in_specs=[pl.BlockSpec((None, Hp, Wp, Cin), lambda n: (n, 0, 0, 0)),
                  pl.BlockSpec((9, Cin, O), lambda n: (0, 0, 0)),
                  pl.BlockSpec((1, O), lambda n: (0, 0)),
                  pl.BlockSpec((1, O), lambda n: (0, 0))],
        out_specs=pl.BlockSpec((None, HW, O), lambda n: (n, 0, 0)),
        compiler_params=pltpu.CompilerParams(dimension_semantics=("parallel",)),
    )(xp, wmat, g, b)


def conv3x3_gn_add_gelu(x, w, gamma, beta, residual, *, stride=1, groups=4,
                        eps=1e-5):
    """Second half of the block: conv + GN + residual add + exact-erf GELU."""
    N, H, W, Cin = x.shape
    O = w.shape[0]
    xp, wmat, g, b, Ho, Wo = _prep_conv(x, w, gamma, beta, stride)
    Hp, Wp = H + 2, W + 2
    HW = Ho * Wo
    r = residual.reshape(N, HW, O).astype(x.dtype)
    kernel = functools.partial(_conv_gn_add_gelu_kernel, stride=stride,
                               groups=groups, eps=eps, Ho=Ho, Wo=Wo)
    return pl.pallas_call(
        kernel,
        out_shape=jax.ShapeDtypeStruct((N, HW, O), x.dtype),
        grid=(N,),
        in_specs=[pl.BlockSpec((None, Hp, Wp, Cin), lambda n: (n, 0, 0, 0)),
                  pl.BlockSpec((9, Cin, O), lambda n: (0, 0, 0)),
                  pl.BlockSpec((1, O), lambda n: (0, 0)),
                  pl.BlockSpec((1, O), lambda n: (0, 0)),
                  pl.BlockSpec((None, HW, O), lambda n: (n, 0, 0))],
        out_specs=pl.BlockSpec((None, HW, O), lambda n: (n, 0, 0)),
        compiler_params=pltpu.CompilerParams(dimension_semantics=("parallel",)),
    )(xp, wmat, g, b, r)


def residual_block(x_nchw, params, *, stride=1, groups=4, eps=1e-5,
                   shortcut_fn=None, re_zero=False):
    """Forward pass of the PyTorch ResidualBlock.  Input / output are NCHW."""
    x = jnp.transpose(x_nchw, (0, 2, 3, 1))                    # NCHW -> NHWC
    N, H, W, _ = x.shape
    O = params['w1'].shape[0]
    Ho = (H + 2 - 3) // stride + 1
    Wo = (W + 2 - 3) // stride + 1

    # left = GN2(conv2(GN1(conv1(x))))
    left = conv3x3_gn(x, params['w1'], params['g1'], params['b1'],
                      stride=stride, groups=groups, eps=eps)    # (N, Ho*Wo, O)
    left4 = left.reshape(N, Ho, Wo, O)

    # right = shortcut(x) if shortcut else x   (re_zero scales right by alpha)
    # TODO(synk): arbitrary nn.Module shortcuts are caller-supplied as an NHWC
    # `shortcut_fn`; only the default identity path is exercised here.
    right = shortcut_fn(x) if shortcut_fn is not None else x
    if re_zero:
        right = right * params['alpha']

    out = conv3x3_gn_add_gelu(left4, params['w2'], params['g2'], params['b2'],
                              right, stride=1, groups=groups, eps=eps)
    out = out.reshape(N, Ho, Wo, O)
    return jnp.transpose(out, (0, 3, 1, 2))                    # NHWC -> NCHW


# ---------------------------------------------------------------------------
# Parameters (deterministic in-script init)
# ---------------------------------------------------------------------------

def init_block_params(key, in_channels, out_channels, re_zero=False):
    k1, k2 = jax.random.split(key)
    fan1 = in_channels * 9
    fan2 = out_channels * 9
    p = {
        'w1': jax.random.normal(k1, (out_channels, in_channels, 3, 3),
                                jnp.float32) * (2.0 / fan1) ** 0.5,
        'g1': jnp.ones((out_channels,), jnp.float32),
        'b1': jnp.zeros((out_channels,), jnp.float32),
        'w2': jax.random.normal(k2, (out_channels, out_channels, 3, 3),
                                jnp.float32) * (2.0 / fan2) ** 0.5,
        'g2': jnp.ones((out_channels,), jnp.float32),
        'b2': jnp.zeros((out_channels,), jnp.float32),
    }
    if re_zero:
        p['alpha'] = jnp.zeros((1,), jnp.float32)
    return p


if __name__ == "__main__":
    key = jax.random.PRNGKey(0)
    pkey, xkey = jax.random.split(key)
    # GroupNorm(4, C) needs C % 4 == 0; the default identity residual needs
    # in_channels == out_channels and stride == 1.  C=128 keeps every kernel
    # load/store lane-dense on TPU while staying small.
    N, C, H, W = 2, 128, 16, 16
    x = jax.random.normal(xkey, (N, C, H, W), jnp.float32)
    params = init_block_params(pkey, C, C)

    fwd = jax.jit(functools.partial(residual_block, stride=1, groups=4))
    out = jax.block_until_ready(fwd(x, params))

    assert out.shape == (N, C, H, W) and out.dtype == jnp.float32
    print("KERNEL_OK")
</pallas_src>

<mosaic_0001>
module attributes {stable_mosaic.version = 11 : i64} {
  func.func @_conv_gn_kernel(%arg0: i32, %arg1: memref<1x18x18x128xf32, #tpu.memory_space<vmem>>, %arg2: memref<9x128x128xbf16, #tpu.memory_space<vmem>>, %arg3: memref<1x128xf32, #tpu.memory_space<vmem>>, %arg4: memref<1x128xf32, #tpu.memory_space<vmem>>, %arg5: memref<1x256x128xf32, #tpu.memory_space<vmem>>) attributes {dimension_semantics = [#tpu.dimension_semantics<parallel>], iteration_bounds = array<i64: 2>, scalar_prefetch = 0 : i64, scratch_operands = 0 : i64, tpu.core_type = #tpu.core_type<tc>, window_params = [{transform_indices = @transform_0, window_bounds = array<i64: 1, 18, 18, 128>}, {pipeline_mode = #tpu.pipeline_mode<synchronous>, transform_indices = @transform_1, window_bounds = array<i64: 9, 128, 128>}, {pipeline_mode = #tpu.pipeline_mode<synchronous>, transform_indices = @transform_2, window_bounds = array<i64: 1, 128>}, {pipeline_mode = #tpu.pipeline_mode<synchronous>, transform_indices = @transform_3, window_bounds = array<i64: 1, 128>}, {transform_indices = @transform_4, window_bounds = array<i64: 1, 256, 128>}]} {
    %cst = arith.constant 0.000000e+00 : f32
    %0 = vector.broadcast %cst : f32 to vector<256x128xf32>
    %c0 = arith.constant 0 : index
    %c0_0 = arith.constant 0 : index
    %c0_1 = arith.constant 0 : index
    %c0_2 = arith.constant 0 : index
    %1 = vector.load %arg1[%c0, %c0_0, %c0_1, %c0_2] : memref<1x18x18x128xf32, #tpu.memory_space<vmem>>, vector<1x16x16x128xf32>
    %2 = vector.shape_cast %1 : vector<1x16x16x128xf32> to vector<16x16x128xf32>
    %3 = vector.shape_cast %2 : vector<16x16x128xf32> to vector<256x128xf32>
    %4 = arith.truncf %3 : vector<256x128xf32> to vector<256x128xbf16>
    %c0_3 = arith.constant 0 : index
    %c0_4 = arith.constant 0 : index
    %c0_5 = arith.constant 0 : index
    %5 = vector.load %arg2[%c0_3, %c0_4, %c0_5] : memref<9x128x128xbf16, #tpu.memory_space<vmem>>, vector<1x128x128xbf16>
    %6 = vector.shape_cast %5 : vector<1x128x128xbf16> to vector<128x128xbf16>
    %cst_6 = arith.constant dense<0.000000e+00> : vector<256x128xf32>
    %7 = tpu.matmul %4, %6, %cst_6 {dimension_numbers = #tpu.dot_dimension_numbers<[1], [0], [0], [1], [0, 0, 1, 1], [], []>} : vector<256x128xbf16>, vector<128x128xbf16>, vector<256x128xf32> -> vector<256x128xf32>
    %8 = arith.addf %0, %7 : vector<256x128xf32>
    %c0_7 = arith.constant 0 : index
    %c0_8 = arith.constant 0 : index
    %c1 = arith.constant 1 : index
    %c0_9 = arith.constant 0 : index
    %9 = vector.load %arg1[%c0_7, %c0_8, %c1, %c0_9] : memref<1x18x18x128xf32, #tpu.memory_space<vmem>>, vector<1x16x16x128xf32>
    %10 = vector.shape_cast %9 : vector<1x16x16x128xf32> to vector<16x16x128xf32>
    %11 = vector.shape_cast %10 : vector<16x16x128xf32> to vector<256x128xf32>
    %12 = arith.truncf %11 : vector<256x128xf32> to vector<256x128xbf16>
    %c1_10 = arith.constant 1 : index
    %c0_11 = arith.constant 0 : index
    %c0_12 = arith.constant 0 : index
    %13 = vector.load %arg2[%c1_10, %c0_11, %c0_12] : memref<9x128x128xbf16, #tpu.memory_space<vmem>>, vector<1x128x128xbf16>
    %14 = vector.shape_cast %13 : vector<1x128x128xbf16> to vector<128x128xbf16>
    %cst_13 = arith.constant dense<0.000000e+00> : vector<256x128xf32>
    %15 = tpu.matmul %12, %14, %cst_13 {dimension_numbers = #tpu.dot_dimension_numbers<[1], [0], [0], [1], [0, 0, 1, 1], [], []>} : vector<256x128xbf16>, vector<128x128xbf16>, vector<256x128xf32> -> vector<256x128xf32>
    %16 = arith.addf %8, %15 : vector<256x128xf32>
    %c0_14 = arith.constant 0 : index
    %c0_15 = arith.constant 0 : index
    %c2 = arith.constant 2 : index
    %c0_16 = arith.constant 0 : index
    %17 = vector.load %arg1[%c0_14, %c0_15, %c2, %c0_16] : memref<1x18x18x128xf32, #tpu.memory_space<vmem>>, vector<1x16x16x128xf32>
    %18 = vector.shape_cast %17 : vector<1x16x16x128xf32> to vector<16x16x128xf32>
    %19 = vector.shape_cast %18 : vector<16x16x128xf32> to vector<256x128xf32>
    %20 = arith.truncf %19 : vector<256x128xf32> to vector<256x128xbf16>
    %c2_17 = arith.constant 2 : index
    %c0_18 = arith.constant 0 : index
    %c0_19 = arith.constant 0 : index
    %21 = vector.load %arg2[%c2_17, %c0_18, %c0_19] : memref<9x128x128xbf16, #tpu.memory_space<vmem>>, vector<1x128x128xbf16>
    %22 = vector.shape_cast %21 : vector<1x128x128xbf16> to vector<128x128xbf16>
    %cst_20 = arith.constant dense<0.000000e+00> : vector<256x128xf32>
    %23 = tpu.matmul %20, %22, %cst_20 {dimension_numbers = #tpu.dot_dimension_numbers<[1], [0], [0], [1], [0, 0, 1, 1], [], []>} : vector<256x128xbf16>, vector<128x128xbf16>, vector<256x128xf32> -> vector<256x128xf32>
    %24 = arith.addf %16, %23 : vector<256x128xf32>
    %c0_21 = arith.constant 0 : index
    %c1_22 = arith.constant 1 : index
    %c0_23 = arith.constant 0 : index
    %c0_24 = arith.constant 0 : index
    %25 = vector.load %arg1[%c0_21, %c1_22, %c0_23, %c0_24] : memref<1x18x18x128xf32, #tpu.memory_space<vmem>>, vector<1x16x16x128xf32>
    %26 = vector.shape_cast %25 : vector<1x16x16x128xf32> to vector<16x16x128xf32>
    %27 = vector.shape_cast %26 : vector<16x16x128xf32> to vector<256x128xf32>
    %28 = arith.truncf %27 : vector<256x128xf32> to vector<256x128xbf16>
    %c3 = arith.constant 3 : index
    %c0_25 = arith.constant 0 : index
    %c0_26 = arith.constant 0 : index
    %29 = vector.load %arg2[%c3, %c0_25, %c0_26] : memref<9x128x128xbf16, #tpu.memory_space<vmem>>, vector<1x128x128xbf16>
    %30 = vector.shape_cast %29 : vector<1x128x128xbf16> to vector<128x128xbf16>
    %cst_27 = arith.constant dense<0.000000e+00> : vector<256x128xf32>
    %31 = tpu.matmul %28, %30, %cst_27 {dimension_numbers = #tpu.dot_dimension_numbers<[1], [0], [0], [1], [0, 0, 1, 1], [], []>} : vector<256x128xbf16>, vector<128x128xbf16>, vector<256x128xf32> -> vector<256x128xf32>
    %32 = arith.addf %24, %31 : vector<256x128xf32>
    %c0_28 = arith.constant 0 : index
    %c1_29 = arith.constant 1 : index
    %c1_30 = arith.constant 1 : index
    %c0_31 = arith.constant 0 : index
    %33 = vector.load %arg1[%c0_28, %c1_29, %c1_30, %c0_31] : memref<1x18x18x128xf32, #tpu.memory_space<vmem>>, vector<1x16x16x128xf32>
    %34 = vector.shape_cast %33 : vector<1x16x16x128xf32> to vector<16x16x128xf32>
    %35 = vector.shape_cast %34 : vector<16x16x128xf32> to vector<256x128xf32>
    %36 = arith.truncf %35 : vector<256x128xf32> to vector<256x128xbf16>
    %c4 = arith.constant 4 : index
    %c0_32 = arith.constant 0 : index
    %c0_33 = arith.constant 0 : index
    %37 = vector.load %arg2[%c4, %c0_32, %c0_33] : memref<9x128x128xbf16, #tpu.memory_space<vmem>>, vector<1x128x128xbf16>
    %38 = vector.shape_cast %37 : vector<1x128x128xbf16> to vector<128x128xbf16>
    %cst_34 = arith.constant dense<0.000000e+00> : vector<256x128xf32>
    %39 = tpu.matmul %36, %38, %cst_34 {dimension_numbers = #tpu.dot_dimension_numbers<[1], [0], [0], [1], [0, 0, 1, 1], [], []>} : vector<256x128xbf16>, vector<128x128xbf16>, vector<256x128xf32> -> vector<256x128xf32>
    %40 = arith.addf %32, %39 : vector<256x128xf32>
    %c0_35 = arith.constant 0 : index
    %c1_36 = arith.constant 1 : index
    %c2_37 = arith.constant 2 : index
    %c0_38 = arith.constant 0 : index
    %41 = vector.load %arg1[%c0_35, %c1_36, %c2_37, %c0_38] : memref<1x18x18x128xf32, #tpu.memory_space<vmem>>, vector<1x16x16x128xf32>
    %42 = vector.shape_cast %41 : vector<1x16x16x128xf32> to vector<16x16x128xf32>
    %43 = vector.shape_cast %42 : vector<16x16x128xf32> to vector<256x128xf32>
    %44 = arith.truncf %43 : vector<256x128xf32> to vector<256x128xbf16>
    %c5 = arith.constant 5 : index
    %c0_39 = arith.constant 0 : index
    %c0_40 = arith.constant 0 : index
    %45 = vector.load %arg2[%c5, %c0_39, %c0_40] : memref<9x128x128xbf16, #tpu.memory_space<vmem>>, vector<1x128x128xbf16>
    %46 = vector.shape_cast %45 : vector<1x128x128xbf16> to vector<128x128xbf16>
    %cst_41 = arith.constant dense<0.000000e+00> : vector<256x128xf32>
    %47 = tpu.matmul %44, %46, %cst_41 {dimension_numbers = #tpu.dot_dimension_numbers<[1], [0], [0], [1], [0, 0, 1, 1], [], []>} : vector<256x128xbf16>, vector<128x128xbf16>, vector<256x128xf32> -> vector<256x128xf32>
    %48 = arith.addf %40, %47 : vector<256x128xf32>
    %c0_42 = arith.constant 0 : index
    %c2_43 = arith.constant 2 : index
    %c0_44 = arith.constant 0 : index
    %c0_45 = arith.constant 0 : index
    %49 = vector.load %arg1[%c0_42, %c2_43, %c0_44, %c0_45] : memref<1x18x18x128xf32, #tpu.memory_space<vmem>>, vector<1x16x16x128xf32>
    %50 = vector.shape_cast %49 : vector<1x16x16x128xf32> to vector<16x16x128xf32>
    %51 = vector.shape_cast %50 : vector<16x16x128xf32> to vector<256x128xf32>
    %52 = arith.truncf %51 : vector<256x128xf32> to vector<256x128xbf16>
    %c6 = arith.constant 6 : index
    %c0_46 = arith.constant 0 : index
    %c0_47 = arith.constant 0 : index
    %53 = vector.load %arg2[%c6, %c0_46, %c0_47] : memref<9x128x128xbf16, #tpu.memory_space<vmem>>, vector<1x128x128xbf16>
    %54 = vector.shape_cast %53 : vector<1x128x128xbf16> to vector<128x128xbf16>
    %cst_48 = arith.constant dense<0.000000e+00> : vector<256x128xf32>
    %55 = tpu.matmul %52, %54, %cst_48 {dimension_numbers = #tpu.dot_dimension_numbers<[1], [0], [0], [1], [0, 0, 1, 1], [], []>} : vector<256x128xbf16>, vector<128x128xbf16>, vector<256x128xf32> -> vector<256x128xf32>
    %56 = arith.addf %48, %55 : vector<256x128xf32>
    %c0_49 = arith.constant 0 : index
    %c2_50 = arith.constant 2 : index
    %c1_51 = arith.constant 1 : index
    %c0_52 = arith.constant 0 : index
    %57 = vector.load %arg1[%c0_49, %c2_50, %c1_51, %c0_52] : memref<1x18x18x128xf32, #tpu.memory_space<vmem>>, vector<1x16x16x128xf32>
    %58 = vector.shape_cast %57 : vector<1x16x16x128xf32> to vector<16x16x128xf32>
    %59 = vector.shape_cast %58 : vector<16x16x128xf32> to vector<256x128xf32>
    %60 = arith.truncf %59 : vector<256x128xf32> to vector<256x128xbf16>
    %c7 = arith.constant 7 : index
    %c0_53 = arith.constant 0 : index
    %c0_54 = arith.constant 0 : index
    %61 = vector.load %arg2[%c7, %c0_53, %c0_54] : memref<9x128x128xbf16, #tpu.memory_space<vmem>>, vector<1x128x128xbf16>
    %62 = vector.shape_cast %61 : vector<1x128x128xbf16> to vector<128x128xbf16>
    %cst_55 = arith.constant dense<0.000000e+00> : vector<256x128xf32>
    %63 = tpu.matmul %60, %62, %cst_55 {dimension_numbers = #tpu.dot_dimension_numbers<[1], [0], [0], [1], [0, 0, 1, 1], [], []>} : vector<256x128xbf16>, vector<128x128xbf16>, vector<256x128xf32> -> vector<256x128xf32>
    %64 = arith.addf %56, %63 : vector<256x128xf32>
    %c0_56 = arith.constant 0 : index
    %c2_57 = arith.constant 2 : index
    %c2_58 = arith.constant 2 : index
    %c0_59 = arith.constant 0 : index
    %65 = vector.load %arg1[%c0_56, %c2_57, %c2_58, %c0_59] : memref<1x18x18x128xf32, #tpu.memory_space<vmem>>, vector<1x16x16x128xf32>
    %66 = vector.shape_cast %65 : vector<1x16x16x128xf32> to vector<16x16x128xf32>
    %67 = vector.shape_cast %66 : vector<16x16x128xf32> to vector<256x128xf32>
    %68 = arith.truncf %67 : vector<256x128xf32> to vector<256x128xbf16>
    %c8 = arith.constant 8 : index
    %c0_60 = arith.constant 0 : index
    %c0_61 = arith.constant 0 : index
    %69 = vector.load %arg2[%c8, %c0_60, %c0_61] : memref<9x128x128xbf16, #tpu.memory_space<vmem>>, vector<1x128x128xbf16>
    %70 = vector.shape_cast %69 : vector<1x128x128xbf16> to vector<128x128xbf16>
    %cst_62 = arith.constant dense<0.000000e+00> : vector<256x128xf32>
    %71 = tpu.matmul %68, %70, %cst_62 {dimension_numbers = #tpu.dot_dimension_numbers<[1], [0], [0], [1], [0, 0, 1, 1], [], []>} : vector<256x128xbf16>, vector<128x128xbf16>, vector<256x128xf32> -> vector<256x128xf32>
    %72 = arith.addf %64, %71 : vector<256x128xf32>
    %73 = tpu.iota {dimensions = array<i32: 1>} : vector<256x128xi32>
    %cst_63 = arith.constant 0.000000e+00 : f32
    %74 = vector.broadcast %cst_63 : f32 to vector<256x128xf32>
    %c0_i32 = arith.constant 0 : i32
    %75 = vector.broadcast %c0_i32 : i32 to vector<256x128xi32>
    %76 = arith.cmpi sge, %73, %75 : vector<256x128xi32>
    %c32_i32 = arith.constant 32 : i32
    %77 = vector.broadcast %c32_i32 : i32 to vector<256x128xi32>
    %78 = arith.cmpi slt, %73, %77 : vector<256x128xi32>
    %79 = arith.andi %76, %78 : vector<256x128xi1>
    %cst_64 = arith.constant 0.000000e+00 : f32
    %80 = vector.broadcast %cst_64 : f32 to vector<256x128xf32>
    %81 = arith.select %79, %72, %80 : vector<256x128xi1>, vector<256x128xf32>
    %82 = vector.shape_cast %81 : vector<256x128xf32> to vector<1x256x128xf32>
    %cst_65 = arith.constant dense<0.000000e+00> : vector<1xf32>
    %83 = vector.multi_reduction <add>, %82, %cst_65 [1, 2] : vector<1x256x128xf32> to vector<1xf32>
    %84 = vector.shape_cast %83 : vector<1xf32> to vector<1x1x1xf32>
    %85 = vector.extract %84[0, 0, 0] : f32 from vector<1x1x1xf32>
    %cst_66 = arith.constant 8.192000e+03 : f32
    %86 = arith.divf %85, %cst_66 : f32
    %87 = vector.broadcast %86 : f32 to vector<256x128xf32>
    %88 = arith.subf %72, %87 : vector<256x128xf32>
    %cst_67 = arith.constant 0.000000e+00 : f32
    %89 = vector.broadcast %cst_67 : f32 to vector<256x128xf32>
    %90 = arith.select %79, %88, %89 : vector<256x128xi1>, vector<256x128xf32>
    %91 = arith.mulf %90, %90 : vector<256x128xf32>
    %92 = vector.shape_cast %91 : vector<256x128xf32> to vector<1x256x128xf32>
    %cst_68 = arith.constant dense<0.000000e+00> : vector<1xf32>
    %93 = vector.multi_reduction <add>, %92, %cst_68 [1, 2] : vector<1x256x128xf32> to vector<1xf32>
    %94 = vector.shape_cast %93 : vector<1xf32> to vector<1x1x1xf32>
    %95 = vector.extract %94[0, 0, 0] : f32 from vector<1x1x1xf32>
    %cst_69 = arith.constant 8.192000e+03 : f32
    %96 = arith.divf %95, %cst_69 : f32
    %cst_70 = arith.constant 9.99999974E-6 : f32
    %97 = arith.addf %96, %cst_70 : f32
    %98 = math.rsqrt %97 : f32
    %99 = vector.broadcast %86 : f32 to vector<256x128xf32>
    %100 = arith.subf %72, %99 : vector<256x128xf32>
    %101 = vector.broadcast %98 : f32 to vector<256x128xf32>
    %102 = arith.mulf %100, %101 : vector<256x128xf32>
    %103 = arith.select %79, %102, %74 : vector<256x128xi1>, vector<256x128xf32>
    %c32_i32_71 = arith.constant 32 : i32
    %104 = vector.broadcast %c32_i32_71 : i32 to vector<256x128xi32>
    %105 = arith.cmpi sge, %73, %104 : vector<256x128xi32>
    %c64_i32 = arith.constant 64 : i32
    %106 = vector.broadcast %c64_i32 : i32 to vector<256x128xi32>
    %107 = arith.cmpi slt, %73, %106 : vector<256x128xi32>
    %108 = arith.andi %105, %107 : vector<256x128xi1>
    %cst_72 = arith.constant 0.000000e+00 : f32
    %109 = vector.broadcast %cst_72 : f32 to vector<256x128xf32>
    %110 = arith.select %108, %72, %109 : vector<256x128xi1>, vector<256x128xf32>
    %111 = vector.shape_cast %110 : vector<256x128xf32> to vector<1x256x128xf32>
    %cst_73 = arith.constant dense<0.000000e+00> : vector<1xf32>
    %112 = vector.multi_reduction <add>, %111, %cst_73 [1, 2] : vector<1x256x128xf32> to vector<1xf32>
    %113 = vector.shape_cast %112 : vector<1xf32> to vector<1x1x1xf32>
    %114 = vector.extract %113[0, 0, 0] : f32 from vector<1x1x1xf32>
    %cst_74 = arith.constant 8.192000e+03 : f32
    %115 = arith.divf %114, %cst_74 : f32
    %116 = vector.broadcast %115 : f32 to vector<256x128xf32>
    %117 = arith.subf %72, %116 : vector<256x128xf32>
    %cst_75 = arith.constant 0.000000e+00 : f32
    %118 = vector.broadcast %cst_75 : f32 to vector<256x128xf32>
    %119 = arith.select %108, %117, %118 : vector<256x128xi1>, vector<256x128xf32>
    %120 = arith.mulf %119, %119 : vector<256x128xf32>
    %121 = vector.shape_cast %120 : vector<256x128xf32> to vector<1x256x128xf32>
    %cst_76 = arith.constant dense<0.000000e+00> : vector<1xf32>
    %122 = vector.multi_reduction <add>, %121, %cst_76 [1, 2] : vector<1x256x128xf32> to vector<1xf32>
    %123 = vector.shape_cast %122 : vector<1xf32> to vector<1x1x1xf32>
    %124 = vector.extract %123[0, 0, 0] : f32 from vector<1x1x1xf32>
    %cst_77 = arith.constant 8.192000e+03 : f32
    %125 = arith.divf %124, %cst_77 : f32
    %cst_78 = arith.constant 9.99999974E-6 : f32
    %126 = arith.addf %125, %cst_78 : f32
    %127 = math.rsqrt %126 : f32
    %128 = vector.broadcast %115 : f32 to vector<256x128xf32>
    %129 = arith.subf %72, %128 : vector<256x128xf32>
    %130 = vector.broadcast %127 : f32 to vector<256x128xf32>
    %131 = arith.mulf %129, %130 : vector<256x128xf32>
    %132 = arith.select %108, %131, %103 : vector<256x128xi1>, vector<256x128xf32>
    %c64_i32_79 = arith.constant 64 : i32
    %133 = vector.broadcast %c64_i32_79 : i32 to vector<256x128xi32>
    %134 = arith.cmpi sge, %73, %133 : vector<256x128xi32>
    %c96_i32 = arith.constant 96 : i32
    %135 = vector.broadcast %c96_i32 : i32 to vector<256x128xi32>
    %136 = arith.cmpi slt, %73, %135 : vector<256x128xi32>
    %137 = arith.andi %134, %136 : vector<256x128xi1>
    %cst_80 = arith.constant 0.000000e+00 : f32
    %138 = vector.broadcast %cst_80 : f32 to vector<256x128xf32>
    %139 = arith.select %137, %72, %138 : vector<256x128xi1>, vector<256x128xf32>
    %140 = vector.shape_cast %139 : vector<256x128xf32> to vector<1x256x128xf32>
    %cst_81 = arith.constant dense<0.000000e+00> : vector<1xf32>
    %141 = vector.multi_reduction <add>, %140, %cst_81 [1, 2] : vector<1x256x128xf32> to vector<1xf32>
    %142 = vector.shape_cast %141 : vector<1xf32> to vector<1x1x1xf32>
    %143 = vector.extract %142[0, 0, 0] : f32 from vector<1x1x1xf32>
    %cst_82 = arith.constant 8.192000e+03 : f32
    %144 = arith.divf %143, %cst_82 : f32
    %145 = vector.broadcast %144 : f32 to vector<256x128xf32>
    %146 = arith.subf %72, %145 : vector<256x128xf32>
    %cst_83 = arith.constant 0.000000e+00 : f32
    %147 = vector.broadcast %cst_83 : f32 to vector<256x128xf32>
    %148 = arith.select %137, %146, %147 : vector<256x128xi1>, vector<256x128xf32>
    %149 = arith.mulf %148, %148 : vector<256x128xf32>
    %150 = vector.shape_cast %149 : vector<256x128xf32> to vector<1x256x128xf32>
    %cst_84 = arith.constant dense<0.000000e+00> : vector<1xf32>
    %151 = vector.multi_reduction <add>, %150, %cst_84 [1, 2] : vector<1x256x128xf32> to vector<1xf32>
    %152 = vector.shape_cast %151 : vector<1xf32> to vector<1x1x1xf32>
    %153 = vector.extract %152[0, 0, 0] : f32 from vector<1x1x1xf32>
    %cst_85 = arith.constant 8.192000e+03 : f32
    %154 = arith.divf %153, %cst_85 : f32
    %cst_86 = arith.constant 9.99999974E-6 : f32
    %155 = arith.addf %154, %cst_86 : f32
    %156 = math.rsqrt %155 : f32
    %157 = vector.broadcast %144 : f32 to vector<256x128xf32>
    %158 = arith.subf %72, %157 : vector<256x128xf32>
    %159 = vector.broadcast %156 : f32 to vector<256x128xf32>
    %160 = arith.mulf %158, %159 : vector<256x128xf32>
    %161 = arith.select %137, %160, %132 : vector<256x128xi1>, vector<256x128xf32>
    %c96_i32_87 = arith.constant 96 : i32
    %162 = vector.broadcast %c96_i32_87 : i32 to vector<256x128xi32>
    %163 = arith.cmpi sge, %73, %162 : vector<256x128xi32>
    %c128_i32 = arith.constant 128 : i32
    %164 = vector.broadcast %c128_i32 : i32 to vector<256x128xi32>
    %165 = arith.cmpi slt, %73, %164 : vector<256x128xi32>
    %166 = arith.andi %163, %165 : vector<256x128xi1>
    %cst_88 = arith.constant 0.000000e+00 : f32
    %167 = vector.broadcast %cst_88 : f32 to vector<256x128xf32>
    %168 = arith.select %166, %72, %167 : vector<256x128xi1>, vector<256x128xf32>
    %169 = vector.shape_cast %168 : vector<256x128xf32> to vector<1x256x128xf32>
    %cst_89 = arith.constant dense<0.000000e+00> : vector<1xf32>
    %170 = vector.multi_reduction <add>, %169, %cst_89 [1, 2] : vector<1x256x128xf32> to vector<1xf32>
    %171 = vector.shape_cast %170 : vector<1xf32> to vector<1x1x1xf32>
    %172 = vector.extract %171[0, 0, 0] : f32 from vector<1x1x1xf32>
    %cst_90 = arith.constant 8.192000e+03 : f32
    %173 = arith.divf %172, %cst_90 : f32
    %174 = vector.broadcast %173 : f32 to vector<256x128xf32>
    %175 = arith.subf %72, %174 : vector<256x128xf32>
    %cst_91 = arith.constant 0.000000e+00 : f32
    %176 = vector.broadcast %cst_91 : f32 to vector<256x128xf32>
    %177 = arith.select %166, %175, %176 : vector<256x128xi1>, vector<256x128xf32>
    %178 = arith.mulf %177, %177 : vector<256x128xf32>
    %179 = vector.shape_cast %178 : vector<256x128xf32> to vector<1x256x128xf32>
    %cst_92 = arith.constant dense<0.000000e+00> : vector<1xf32>
    %180 = vector.multi_reduction <add>, %179, %cst_92 [1, 2] : vector<1x256x128xf32> to vector<1xf32>
    %181 = vector.shape_cast %180 : vector<1xf32> to vector<1x1x1xf32>
    %182 = vector.extract %181[0, 0, 0] : f32 from vector<1x1x1xf32>
    %cst_93 = arith.constant 8.192000e+03 : f32
    %183 = arith.divf %182, %cst_93 : f32
    %cst_94 = arith.constant 9.99999974E-6 : f32
    %184 = arith.addf %183, %cst_94 : f32
    %185 = math.rsqrt %184 : f32
    %186 = vector.broadcast %173 : f32 to vector<256x128xf32>
    %187 = arith.subf %72, %186 : vector<256x128xf32>
    %188 = vector.broadcast %185 : f32 to vector<256x128xf32>
    %189 = arith.mulf %187, %188 : vector<256x128xf32>
    %190 = arith.select %166, %189, %161 : vector<256x128xi1>, vector<256x128xf32>
    %c0_95 = arith.constant 0 : index
    %c0_96 = arith.constant 0 : index
    %191 = vector.load %arg3[%c0_95, %c0_96] : memref<1x128xf32, #tpu.memory_space<vmem>>, vector<1x128xf32>
    %192 = vector.broadcast %191 : vector<1x128xf32> to vector<256x128xf32>
    %193 = arith.mulf %190, %192 : vector<256x128xf32>
    %c0_97 = arith.constant 0 : index
    %c0_98 = arith.constant 0 : index
    %194 = vector.load %arg4[%c0_97, %c0_98] : memref<1x128xf32, #tpu.memory_space<vmem>>, vector<1x128xf32>
    %195 = vector.broadcast %194 : vector<1x128xf32> to vector<256x128xf32>
    %196 = arith.addf %193, %195 : vector<256x128xf32>
    %c0_99 = arith.constant 0 : index
    %c0_100 = arith.constant 0 : index
    %c0_101 = arith.constant 0 : index
    %197 = vector.load %arg5[%c0_99, %c0_100, %c0_101] : memref<1x256x128xf32, #tpu.memory_space<vmem>>, vector<1x256x128xf32>
    %198 = vector.shape_cast %197 : vector<1x256x128xf32> to vector<256x128xf32>
    %199 = vector.shape_cast %196 : vector<256x128xf32> to vector<1x256x128xf32>
    tpu.vector_store %arg5[%c0_99, %c0_100, %c0_101], %199 {strides = array<i32>} : memref<1x256x128xf32, #tpu.memory_space<vmem>>, vector<1x256x128xf32>,
    return
  }
  func.func @transform_0(%arg0: i32) -> (i32, i32, i32, i32) {
    %c0_i32 = arith.constant 0 : i32
    %c0_i32_0 = arith.constant 0 : i32
    %c0_i32_1 = arith.constant 0 : i32
    %c0_i32_2 = arith.constant 0 : i32
    return %arg0, %c0_i32, %c0_i32_0, %c0_i32_1 : i32, i32, i32, i32
  }
  func.func @transform_1(%arg0: i32) -> (i32, i32, i32) {
    %c0_i32 = arith.constant 0 : i32
    %c0_i32_0 = arith.constant 0 : i32
    %c0_i32_1 = arith.constant 0 : i32
    %c0_i32_2 = arith.constant 0 : i32
    return %c0_i32, %c0_i32_0, %c0_i32_1 : i32, i32, i32
  }
  func.func @transform_2(%arg0: i32) -> (i32, i32) {
    %c0_i32 = arith.constant 0 : i32
    %c0_i32_0 = arith.constant 0 : i32
    %c0_i32_1 = arith.constant 0 : i32
    return %c0_i32, %c0_i32_0 : i32, i32
  }
  func.func @transform_3(%arg0: i32) -> (i32, i32) {
    %c0_i32 = arith.constant 0 : i32
    %c0_i32_0 = arith.constant 0 : i32
    %c0_i32_1 = arith.constant 0 : i32
    return %c0_i32, %c0_i32_0 : i32, i32
  }
  func.func @transform_4(%arg0: i32) -> (i32, i32, i32) {
    %c0_i32 = arith.constant 0 : i32
    %c0_i32_0 = arith.constant 0 : i32
    %c0_i32_1 = arith.constant 0 : i32
    return %arg0, %c0_i32, %c0_i32_0 : i32, i32, i32
  }
}

module attributes {stable_mosaic.version = 11 : i64} {
  func.func @_conv_gn_add_gelu_kernel(%arg0: i32, %arg1: memref<1x18x18x128xf32, #tpu.memory_space<vmem>>, %arg2: memref<9x128x128xbf16, #tpu.memory_space<vmem>>, %arg3: memref<1x128xf32, #tpu.memory_space<vmem>>, %arg4: memref<1x128xf32, #tpu.memory_space<vmem>>, %arg5: memref<1x256x128xf32, #tpu.memory_space<vmem>>, %arg6: memref<1x256x128xf32, #tpu.memory_space<vmem>>) attributes {dimension_semantics = [#tpu.dimension_semantics<parallel>], iteration_bounds = array<i64: 2>, scalar_prefetch = 0 : i64, scratch_operands = 0 : i64, tpu.core_type = #tpu.core_type<tc>, window_params = [{transform_indices = @transform_0, window_bounds = array<i64: 1, 18, 18, 128>}, {pipeline_mode = #tpu.pipeline_mode<synchronous>, transform_indices = @transform_1, window_bounds = array<i64: 9, 128, 128>}, {pipeline_mode = #tpu.pipeline_mode<synchronous>, transform_indices = @transform_2, window_bounds = array<i64: 1, 128>}, {pipeline_mode = #tpu.pipeline_mode<synchronous>, transform_indices = @transform_3, window_bounds = array<i64: 1, 128>}, {transform_indices = @transform_4, window_bounds = array<i64: 1, 256, 128>}, {transform_indices = @transform_5, window_bounds = array<i64: 1, 256, 128>}]} {
    %cst = arith.constant 0.000000e+00 : f32
    %0 = vector.broadcast %cst : f32 to vector<256x128xf32>
    %c0 = arith.constant 0 : index
    %c0_0 = arith.constant 0 : index
    %c0_1 = arith.constant 0 : index
    %c0_2 = arith.constant 0 : index
    %1 = vector.load %arg1[%c0, %c0_0, %c0_1, %c0_2] : memref<1x18x18x128xf32, #tpu.memory_space<vmem>>, vector<1x16x16x128xf32>
    %2 = vector.shape_cast %1 : vector<1x16x16x128xf32> to vector<16x16x128xf32>
    %3 = vector.shape_cast %2 : vector<16x16x128xf32> to vector<256x128xf32>
    %4 = arith.truncf %3 : vector<256x128xf32> to vector<256x128xbf16>
    %c0_3 = arith.constant 0 : index
    %c0_4 = arith.constant 0 : index
    %c0_5 = arith.constant 0 : index
    %5 = vector.load %arg2[%c0_3, %c0_4, %c0_5] : memref<9x128x128xbf16, #tpu.memory_space<vmem>>, vector<1x128x128xbf16>
    %6 = vector.shape_cast %5 : vector<1x128x128xbf16> to vector<128x128xbf16>
    %cst_6 = arith.constant dense<0.000000e+00> : vector<256x128xf32>
    %7 = tpu.matmul %4, %6, %cst_6 {dimension_numbers = #tpu.dot_dimension_numbers<[1], [0], [0], [1], [0, 0, 1, 1], [], []>} : vector<256x128xbf16>, vector<128x128xbf16>, vector<256x128xf32> -> vector<256x128xf32>
    %8 = arith.addf %0, %7 : vector<256x128xf32>
    %c0_7 = arith.constant 0 : index
    %c0_8 = arith.constant 0 : index
    %c1 = arith.constant 1 : index
    %c0_9 = arith.constant 0 : index
    %9 = vector.load %arg1[%c0_7, %c0_8, %c1, %c0_9] : memref<1x18x18x128xf32, #tpu.memory_space<vmem>>, vector<1x16x16x128xf32>
    %10 = vector.shape_cast %9 : vector<1x16x16x128xf32> to vector<16x16x128xf32>
    %11 = vector.shape_cast %10 : vector<16x16x128xf32> to vector<256x128xf32>
    %12 = arith.truncf %11 : vector<256x128xf32> to vector<256x128xbf16>
    %c1_10 = arith.constant 1 : index
    %c0_11 = arith.constant 0 : index
    %c0_12 = arith.constant 0 : index
    %13 = vector.load %arg2[%c1_10, %c0_11, %c0_12] : memref<9x128x128xbf16, #tpu.memory_space<vmem>>, vector<1x128x128xbf16>
    %14 = vector.shape_cast %13 : vector<1x128x128xbf16> to vector<128x128xbf16>
    %cst_13 = arith.constant dense<0.000000e+00> : vector<256x128xf32>
    %15 = tpu.matmul %12, %14, %cst_13 {dimension_numbers = #tpu.dot_dimension_numbers<[1], [0], [0], [1], [0, 0, 1, 1], [], []>} : vector<256x128xbf16>, vector<128x128xbf16>, vector<256x128xf32> -> vector<256x128xf32>
    %16 = arith.addf %8, %15 : vector<256x128xf32>
    %c0_14 = arith.constant 0 : index
    %c0_15 = arith.constant 0 : index
    %c2 = arith.constant 2 : index
    %c0_16 = arith.constant 0 : index
    %17 = vector.load %arg1[%c0_14, %c0_15, %c2, %c0_16] : memref<1x18x18x128xf32, #tpu.memory_space<vmem>>, vector<1x16x16x128xf32>
    %18 = vector.shape_cast %17 : vector<1x16x16x128xf32> to vector<16x16x128xf32>
    %19 = vector.shape_cast %18 : vector<16x16x128xf32> to vector<256x128xf32>
    %20 = arith.truncf %19 : vector<256x128xf32> to vector<256x128xbf16>
    %c2_17 = arith.constant 2 : index
    %c0_18 = arith.constant 0 : index
    %c0_19 = arith.constant 0 : index
    %21 = vector.load %arg2[%c2_17, %c0_18, %c0_19] : memref<9x128x128xbf16, #tpu.memory_space<vmem>>, vector<1x128x128xbf16>
    %22 = vector.shape_cast %21 : vector<1x128x128xbf16> to vector<128x128xbf16>
    %cst_20 = arith.constant dense<0.000000e+00> : vector<256x128xf32>
    %23 = tpu.matmul %20, %22, %cst_20 {dimension_numbers = #tpu.dot_dimension_numbers<[1], [0], [0], [1], [0, 0, 1, 1], [], []>} : vector<256x128xbf16>, vector<128x128xbf16>, vector<256x128xf32> -> vector<256x128xf32>
    %24 = arith.addf %16, %23 : vector<256x128xf32>
    %c0_21 = arith.constant 0 : index
    %c1_22 = arith.constant 1 : index
    %c0_23 = arith.constant 0 : index
    %c0_24 = arith.constant 0 : index
    %25 = vector.load %arg1[%c0_21, %c1_22, %c0_23, %c0_24] : memref<1x18x18x128xf32, #tpu.memory_space<vmem>>, vector<1x16x16x128xf32>
    %26 = vector.shape_cast %25 : vector<1x16x16x128xf32> to vector<16x16x128xf32>
    %27 = vector.shape_cast %26 : vector<16x16x128xf32> to vector<256x128xf32>
    %28 = arith.truncf %27 : vector<256x128xf32> to vector<256x128xbf16>
    %c3 = arith.constant 3 : index
    %c0_25 = arith.constant 0 : index
    %c0_26 = arith.constant 0 : index
    %29 = vector.load %arg2[%c3, %c0_25, %c0_26] : memref<9x128x128xbf16, #tpu.memory_space<vmem>>, vector<1x128x128xbf16>
    %30 = vector.shape_cast %29 : vector<1x128x128xbf16> to vector<128x128xbf16>
    %cst_27 = arith.constant dense<0.000000e+00> : vector<256x128xf32>
    %31 = tpu.matmul %28, %30, %cst_27 {dimension_numbers = #tpu.dot_dimension_numbers<[1], [0], [0], [1], [0, 0, 1, 1], [], []>} : vector<256x128xbf16>, vector<128x128xbf16>, vector<256x128xf32> -> vector<256x128xf32>
    %32 = arith.addf %24, %31 : vector<256x128xf32>
    %c0_28 = arith.constant 0 : index
    %c1_29 = arith.constant 1 : index
    %c1_30 = arith.constant 1 : index
    %c0_31 = arith.constant 0 : index
    %33 = vector.load %arg1[%c0_28, %c1_29, %c1_30, %c0_31] : memref<1x18x18x128xf32, #tpu.memory_space<vmem>>, vector<1x16x16x128xf32>
    %34 = vector.shape_cast %33 : vector<1x16x16x128xf32> to vector<16x16x128xf32>
    %35 = vector.shape_cast %34 : vector<16x16x128xf32> to vector<256x128xf32>
    %36 = arith.truncf %35 : vector<256x128xf32> to vector<256x128xbf16>
    %c4 = arith.constant 4 : index
    %c0_32 = arith.constant 0 : index
    %c0_33 = arith.constant 0 : index
    %37 = vector.load %arg2[%c4, %c0_32, %c0_33] : memref<9x128x128xbf16, #tpu.memory_space<vmem>>, vector<1x128x128xbf16>
    %38 = vector.shape_cast %37 : vector<1x128x128xbf16> to vector<128x128xbf16>
    %cst_34 = arith.constant dense<0.000000e+00> : vector<256x128xf32>
    %39 = tpu.matmul %36, %38, %cst_34 {dimension_numbers = #tpu.dot_dimension_numbers<[1], [0], [0], [1], [0, 0, 1, 1], [], []>} : vector<256x128xbf16>, vector<128x128xbf16>, vector<256x128xf32> -> vector<256x128xf32>
    %40 = arith.addf %32, %39 : vector<256x128xf32>
    %c0_35 = arith.constant 0 : index
    %c1_36 = arith.constant 1 : index
    %c2_37 = arith.constant 2 : index
    %c0_38 = arith.constant 0 : index
    %41 = vector.load %arg1[%c0_35, %c1_36, %c2_37, %c0_38] : memref<1x18x18x128xf32, #tpu.memory_space<vmem>>, vector<1x16x16x128xf32>
    %42 = vector.shape_cast %41 : vector<1x16x16x128xf32> to vector<16x16x128xf32>
    %43 = vector.shape_cast %42 : vector<16x16x128xf32> to vector<256x128xf32>
    %44 = arith.truncf %43 : vector<256x128xf32> to vector<256x128xbf16>
    %c5 = arith.constant 5 : index
    %c0_39 = arith.constant 0 : index
    %c0_40 = arith.constant 0 : index
    %45 = vector.load %arg2[%c5, %c0_39, %c0_40] : memref<9x128x128xbf16, #tpu.memory_space<vmem>>, vector<1x128x128xbf16>
    %46 = vector.shape_cast %45 : vector<1x128x128xbf16> to vector<128x128xbf16>
    %cst_41 = arith.constant dense<0.000000e+00> : vector<256x128xf32>
    %47 = tpu.matmul %44, %46, %cst_41 {dimension_numbers = #tpu.dot_dimension_numbers<[1], [0], [0], [1], [0, 0, 1, 1], [], []>} : vector<256x128xbf16>, vector<128x128xbf16>, vector<256x128xf32> -> vector<256x128xf32>
    %48 = arith.addf %40, %47 : vector<256x128xf32>
    %c0_42 = arith.constant 0 : index
    %c2_43 = arith.constant 2 : index
    %c0_44 = arith.constant 0 : index
    %c0_45 = arith.constant 0 : index
    %49 = vector.load %arg1[%c0_42, %c2_43, %c0_44, %c0_45] : memref<1x18x18x128xf32, #tpu.memory_space<vmem>>, vector<1x16x16x128xf32>
    %50 = vector.shape_cast %49 : vector<1x16x16x128xf32> to vector<16x16x128xf32>
    %51 = vector.shape_cast %50 : vector<16x16x128xf32> to vector<256x128xf32>
    %52 = arith.truncf %51 : vector<256x128xf32> to vector<256x128xbf16>
    %c6 = arith.constant 6 : index
    %c0_46 = arith.constant 0 : index
    %c0_47 = arith.constant 0 : index
    %53 = vector.load %arg2[%c6, %c0_46, %c0_47] : memref<9x128x128xbf16, #tpu.memory_space<vmem>>, vector<1x128x128xbf16>
    %54 = vector.shape_cast %53 : vector<1x128x128xbf16> to vector<128x128xbf16>
    %cst_48 = arith.constant dense<0.000000e+00> : vector<256x128xf32>
    %55 = tpu.matmul %52, %54, %cst_48 {dimension_numbers = #tpu.dot_dimension_numbers<[1], [0], [0], [1], [0, 0, 1, 1], [], []>} : vector<256x128xbf16>, vector<128x128xbf16>, vector<256x128xf32> -> vector<256x128xf32>
    %56 = arith.addf %48, %55 : vector<256x128xf32>
    %c0_49 = arith.constant 0 : index
    %c2_50 = arith.constant 2 : index
    %c1_51 = arith.constant 1 : index
    %c0_52 = arith.constant 0 : index
    %57 = vector.load %arg1[%c0_49, %c2_50, %c1_51, %c0_52] : memref<1x18x18x128xf32, #tpu.memory_space<vmem>>, vector<1x16x16x128xf32>
    %58 = vector.shape_cast %57 : vector<1x16x16x128xf32> to vector<16x16x128xf32>
    %59 = vector.shape_cast %58 : vector<16x16x128xf32> to vector<256x128xf32>
    %60 = arith.truncf %59 : vector<256x128xf32> to vector<256x128xbf16>
    %c7 = arith.constant 7 : index
    %c0_53 = arith.constant 0 : index
    %c0_54 = arith.constant 0 : index
    %61 = vector.load %arg2[%c7, %c0_53, %c0_54] : memref<9x128x128xbf16, #tpu.memory_space<vmem>>, vector<1x128x128xbf16>
    %62 = vector.shape_cast %61 : vector<1x128x128xbf16> to vector<128x128xbf16>
    %cst_55 = arith.constant dense<0.000000e+00> : vector<256x128xf32>
    %63 = tpu.matmul %60, %62, %cst_55 {dimension_numbers = #tpu.dot_dimension_numbers<[1], [0], [0], [1], [0, 0, 1, 1], [], []>} : vector<256x128xbf16>, vector<128x128xbf16>, vector<256x128xf32> -> vector<256x128xf32>
    %64 = arith.addf %56, %63 : vector<256x128xf32>
    %c0_56 = arith.constant 0 : index
    %c2_57 = arith.constant 2 : index
    %c2_58 = arith.constant 2 : index
    %c0_59 = arith.constant 0 : index
    %65 = vector.load %arg1[%c0_56, %c2_57, %c2_58, %c0_59] : memref<1x18x18x128xf32, #tpu.memory_space<vmem>>, vector<1x16x16x128xf32>
    %66 = vector.shape_cast %65 : vector<1x16x16x128xf32> to vector<16x16x128xf32>
    %67 = vector.shape_cast %66 : vector<16x16x128xf32> to vector<256x128xf32>
    %68 = arith.truncf %67 : vector<256x128xf32> to vector<256x128xbf16>
    %c8 = arith.constant 8 : index
    %c0_60 = arith.constant 0 : index
    %c0_61 = arith.constant 0 : index
    %69 = vector.load %arg2[%c8, %c0_60, %c0_61] : memref<9x128x128xbf16, #tpu.memory_space<vmem>>, vector<1x128x128xbf16>
    %70 = vector.shape_cast %69 : vector<1x128x128xbf16> to vector<128x128xbf16>
    %cst_62 = arith.constant dense<0.000000e+00> : vector<256x128xf32>
    %71 = tpu.matmul %68, %70, %cst_62 {dimension_numbers = #tpu.dot_dimension_numbers<[1], [0], [0], [1], [0, 0, 1, 1], [], []>} : vector<256x128xbf16>, vector<128x128xbf16>, vector<256x128xf32> -> vector<256x128xf32>
    %72 = arith.addf %64, %71 : vector<256x128xf32>
    %73 = tpu.iota {dimensions = array<i32: 1>} : vector<256x128xi32>
    %cst_63 = arith.constant 0.000000e+00 : f32
    %74 = vector.broadcast %cst_63 : f32 to vector<256x128xf32>
    %c0_i32 = arith.constant 0 : i32
    %75 = vector.broadcast %c0_i32 : i32 to vector<256x128xi32>
    %76 = arith.cmpi sge, %73, %75 : vector<256x128xi32>
    %c32_i32 = arith.constant 32 : i32
    %77 = vector.broadcast %c32_i32 : i32 to vector<256x128xi32>
    %78 = arith.cmpi slt, %73, %77 : vector<256x128xi32>
    %79 = arith.andi %76, %78 : vector<256x128xi1>
    %cst_64 = arith.constant 0.000000e+00 : f32
    %80 = vector.broadcast %cst_64 : f32 to vector<256x128xf32>
    %81 = arith.select %79, %72, %80 : vector<256x128xi1>, vector<256x128xf32>
    %82 = vector.shape_cast %81 : vector<256x128xf32> to vector<1x256x128xf32>
    %cst_65 = arith.constant dense<0.000000e+00> : vector<1xf32>
    %83 = vector.multi_reduction <add>, %82, %cst_65 [1, 2] : vector<1x256x128xf32> to vector<1xf32>
    %84 = vector.shape_cast %83 : vector<1xf32> to vector<1x1x1xf32>
    %85 = vector.extract %84[0, 0, 0] : f32 from vector<1x1x1xf32>
    %cst_66 = arith.constant 8.192000e+03 : f32
    %86 = arith.divf %85, %cst_66 : f32
    %87 = vector.broadcast %86 : f32 to vector<256x128xf32>
    %88 = arith.subf %72, %87 : vector<256x128xf32>
    %cst_67 = arith.constant 0.000000e+00 : f32
    %89 = vector.broadcast %cst_67 : f32 to vector<256x128xf32>
    %90 = arith.select %79, %88, %89 : vector<256x128xi1>, vector<256x128xf32>
    %91 = arith.mulf %90, %90 : vector<256x128xf32>
    %92 = vector.shape_cast %91 : vector<256x128xf32> to vector<1x256x128xf32>
    %cst_68 = arith.constant dense<0.000000e+00> : vector<1xf32>
    %93 = vector.multi_reduction <add>, %92, %cst_68 [1, 2] : vector<1x256x128xf32> to vector<1xf32>
    %94 = vector.shape_cast %93 : vector<1xf32> to vector<1x1x1xf32>
    %95 = vector.extract %94[0, 0, 0] : f32 from vector<1x1x1xf32>
    %cst_69 = arith.constant 8.192000e+03 : f32
    %96 = arith.divf %95, %cst_69 : f32
    %cst_70 = arith.constant 9.99999974E-6 : f32
    %97 = arith.addf %96, %cst_70 : f32
    %98 = math.rsqrt %97 : f32
    %99 = vector.broadcast %86 : f32 to vector<256x128xf32>
    %100 = arith.subf %72, %99 : vector<256x128xf32>
    %101 = vector.broadcast %98 : f32 to vector<256x128xf32>
    %102 = arith.mulf %100, %101 : vector<256x128xf32>
    %103 = arith.select %79, %102, %74 : vector<256x128xi1>, vector<256x128xf32>
    %c32_i32_71 = arith.constant 32 : i32
    %104 = vector.broadcast %c32_i32_71 : i32 to vector<256x128xi32>
    %105 = arith.cmpi sge, %73, %104 : vector<256x128xi32>
    %c64_i32 = arith.constant 64 : i32
    %106 = vector.broadcast %c64_i32 : i32 to vector<256x128xi32>
    %107 = arith.cmpi slt, %73, %106 : vector<256x128xi32>
    %108 = arith.andi %105, %107 : vector<256x128xi1>
    %cst_72 = arith.constant 0.000000e+00 : f32
    %109 = vector.broadcast %cst_72 : f32 to vector<256x128xf32>
    %110 = arith.select %108, %72, %109 : vector<256x128xi1>, vector<256x128xf32>
    %111 = vector.shape_cast %110 : vector<256x128xf32> to vector<1x256x128xf32>
    %cst_73 = arith.constant dense<0.000000e+00> : vector<1xf32>
    %112 = vector.multi_reduction <add>, %111, %cst_73 [1, 2] : vector<1x256x128xf32> to vector<1xf32>
    %113 = vector.shape_cast %112 : vector<1xf32> to vector<1x1x1xf32>
    %114 = vector.extract %113[0, 0, 0] : f32 from vector<1x1x1xf32>
    %cst_74 = arith.constant 8.192000e+03 : f32
    %115 = arith.divf %114, %cst_74 : f32
    %116 = vector.broadcast %115 : f32 to vector<256x128xf32>
    %117 = arith.subf %72, %116 : vector<256x128xf32>
    %cst_75 = arith.constant 0.000000e+00 : f32
    %118 = vector.broadcast %cst_75 : f32 to vector<256x128xf32>
    %119 = arith.select %108, %117, %118 : vector<256x128xi1>, vector<256x128xf32>
    %120 = arith.mulf %119, %119 : vector<256x128xf32>
    %121 = vector.shape_cast %120 : vector<256x128xf32> to vector<1x256x128xf32>
    %cst_76 = arith.constant dense<0.000000e+00> : vector<1xf32>
    %122 = vector.multi_reduction <add>, %121, %cst_76 [1, 2] : vector<1x256x128xf32> to vector<1xf32>
    %123 = vector.shape_cast %122 : vector<1xf32> to vector<1x1x1xf32>
    %124 = vector.extract %123[0, 0, 0] : f32 from vector<1x1x1xf32>
    %cst_77 = arith.constant 8.192000e+03 : f32
    %125 = arith.divf %124, %cst_77 : f32
    %cst_78 = arith.constant 9.99999974E-6 : f32
    %126 = arith.addf %125, %cst_78 : f32
    %127 = math.rsqrt %126 : f32
    %128 = vector.broadcast %115 : f32 to vector<256x128xf32>
    %129 = arith.subf %72, %128 : vector<256x128xf32>
    %130 = vector.broadcast %127 : f32 to vector<256x128xf32>
    %131 = arith.mulf %129, %130 : vector<256x128xf32>
    %132 = arith.select %108, %131, %103 : vector<256x128xi1>, vector<256x128xf32>
    %c64_i32_79 = arith.constant 64 : i32
    %133 = vector.broadcast %c64_i32_79 : i32 to vector<256x128xi32>
    %134 = arith.cmpi sge, %73, %133 : vector<256x128xi32>
    %c96_i32 = arith.constant 96 : i32
    %135 = vector.broadcast %c96_i32 : i32 to vector<256x128xi32>
    %136 = arith.cmpi slt, %73, %135 : vector<256x128xi32>
    %137 = arith.andi %134, %136 : vector<256x128xi1>
    %cst_80 = arith.constant 0.000000e+00 : f32
    %138 = vector.broadcast %cst_80 : f32 to vector<256x128xf32>
    %139 = arith.select %137, %72, %138 : vector<256x128xi1>, vector<256x128xf32>
    %140 = vector.shape_cast %139 : vector<256x128xf32> to vector<1x256x128xf32>
    %cst_81 = arith.constant dense<0.000000e+00> : vector<1xf32>
    %141 = vector.multi_reduction <add>, %140, %cst_81 [1, 2] : vector<1x256x128xf32> to vector<1xf32>
    %142 = vector.shape_cast %141 : vector<1xf32> to vector<1x1x1xf32>
    %143 = vector.extract %142[0, 0, 0] : f32 from vector<1x1x1xf32>
    %cst_82 = arith.constant 8.192000e+03 : f32
    %144 = arith.divf %143, %cst_82 : f32
    %145 = vector.broadcast %144 : f32 to vector<256x128xf32>
    %146 = arith.subf %72, %145 : vector<256x128xf32>
    %cst_83 = arith.constant 0.000000e+00 : f32
    %147 = vector.broadcast %cst_83 : f32 to vector<256x128xf32>
    %148 = arith.select %137, %146, %147 : vector<256x128xi1>, vector<256x128xf32>
    %149 = arith.mulf %148, %148 : vector<256x128xf32>
    %150 = vector.shape_cast %149 : vector<256x128xf32> to vector<1x256x128xf32>
    %cst_84 = arith.constant dense<0.000000e+00> : vector<1xf32>
    %151 = vector.multi_reduction <add>, %150, %cst_84 [1, 2] : vector<1x256x128xf32> to vector<1xf32>
    %152 = vector.shape_cast %151 : vector<1xf32> to vector<1x1x1xf32>
    %153 = vector.extract %152[0, 0, 0] : f32 from vector<1x1x1xf32>
    %cst_85 = arith.constant 8.192000e+03 : f32
    %154 = arith.divf %153, %cst_85 : f32
    %cst_86 = arith.constant 9.99999974E-6 : f32
    %155 = arith.addf %154, %cst_86 : f32
    %156 = math.rsqrt %155 : f32
    %157 = vector.broadcast %144 : f32 to vector<256x128xf32>
    %158 = arith.subf %72, %157 : vector<256x128xf32>
    %159 = vector.broadcast %156 : f32 to vector<256x128xf32>
    %160 = arith.mulf %158, %159 : vector<256x128xf32>
    %161 = arith.select %137, %160, %132 : vector<256x128xi1>, vector<256x128xf32>
    %c96_i32_87 = arith.constant 96 : i32
    %162 = vector.broadcast %c96_i32_87 : i32 to vector<256x128xi32>
    %163 = arith.cmpi sge, %73, %162 : vector<256x128xi32>
    %c128_i32 = arith.constant 128 : i32
    %164 = vector.broadcast %c128_i32 : i32 to vector<256x128xi32>
    %165 = arith.cmpi slt, %73, %164 : vector<256x128xi32>
    %166 = arith.andi %163, %165 : vector<256x128xi1>
    %cst_88 = arith.constant 0.000000e+00 : f32
    %167 = vector.broadcast %cst_88 : f32 to vector<256x128xf32>
    %168 = arith.select %166, %72, %167 : vector<256x128xi1>, vector<256x128xf32>
    %169 = vector.shape_cast %168 : vector<256x128xf32> to vector<1x256x128xf32>
    %cst_89 = arith.constant dense<0.000000e+00> : vector<1xf32>
    %170 = vector.multi_reduction <add>, %169, %cst_89 [1, 2] : vector<1x256x128xf32> to vector<1xf32>
    %171 = vector.shape_cast %170 : vector<1xf32> to vector<1x1x1xf32>
    %172 = vector.extract %171[0, 0, 0] : f32 from vector<1x1x1xf32>
    %cst_90 = arith.constant 8.192000e+03 : f32
    %173 = arith.divf %172, %cst_90 : f32
    %174 = vector.broadcast %173 : f32 to vector<256x128xf32>
    %175 = arith.subf %72, %174 : vector<256x128xf32>
    %cst_91 = arith.constant 0.000000e+00 : f32
    %176 = vector.broadcast %cst_91 : f32 to vector<256x128xf32>
    %177 = arith.select %166, %175, %176 : vector<256x128xi1>, vector<256x128xf32>
    %178 = arith.mulf %177, %177 : vector<256x128xf32>
    %179 = vector.shape_cast %178 : vector<256x128xf32> to vector<1x256x128xf32>
    %cst_92 = arith.constant dense<0.000000e+00> : vector<1xf32>
    %180 = vector.multi_reduction <add>, %179, %cst_92 [1, 2] : vector<1x256x128xf32> to vector<1xf32>
    %181 = vector.shape_cast %180 : vector<1xf32> to vector<1x1x1xf32>
    %182 = vector.extract %181[0, 0, 0] : f32 from vector<1x1x1xf32>
    %cst_93 = arith.constant 8.192000e+03 : f32
    %183 = arith.divf %182, %cst_93 : f32
    %cst_94 = arith.constant 9.99999974E-6 : f32
    %184 = arith.addf %183, %cst_94 : f32
    %185 = math.rsqrt %184 : f32
    %186 = vector.broadcast %173 : f32 to vector<256x128xf32>
    %187 = arith.subf %72, %186 : vector<256x128xf32>
    %188 = vector.broadcast %185 : f32 to vector<256x128xf32>
    %189 = arith.mulf %187, %188 : vector<256x128xf32>
    %190 = arith.select %166, %189, %161 : vector<256x128xi1>, vector<256x128xf32>
    %c0_95 = arith.constant 0 : index
    %c0_96 = arith.constant 0 : index
    %191 = vector.load %arg3[%c0_95, %c0_96] : memref<1x128xf32, #tpu.memory_space<vmem>>, vector<1x128xf32>
    %192 = vector.broadcast %191 : vector<1x128xf32> to vector<256x128xf32>
    %193 = arith.mulf %190, %192 : vector<256x128xf32>
    %c0_97 = arith.constant 0 : index
    %c0_98 = arith.constant 0 : index
    %194 = vector.load %arg4[%c0_97, %c0_98] : memref<1x128xf32, #tpu.memory_space<vmem>>, vector<1x128xf32>
    %195 = vector.broadcast %194 : vector<1x128xf32> to vector<256x128xf32>
    %196 = arith.addf %193, %195 : vector<256x128xf32>
    %c0_99 = arith.constant 0 : index
    %c0_100 = arith.constant 0 : index
    %c0_101 = arith.constant 0 : index
    %197 = vector.load %arg5[%c0_99, %c0_100, %c0_101] : memref<1x256x128xf32, #tpu.memory_space<vmem>>, vector<1x256x128xf32>
    %198 = vector.shape_cast %197 : vector<1x256x128xf32> to vector<256x128xf32>
    %199 = arith.addf %196, %198 : vector<256x128xf32>
    %cst_102 = arith.constant 5.000000e-01 : f32
    %200 = vector.broadcast %cst_102 : f32 to vector<256x128xf32>
    %201 = arith.mulf %200, %199 : vector<256x128xf32>
    %cst_103 = arith.constant 0.707106769 : f32
    %202 = vector.broadcast %cst_103 : f32 to vector<256x128xf32>
    %203 = arith.mulf %199, %202 : vector<256x128xf32>
    %204 = math.absf %203 : vector<256x128xf32>
    %cst_104 = arith.constant 0.327591091 : f32
    %205 = vector.broadcast %cst_104 : f32 to vector<256x128xf32>
    %206 = arith.mulf %205, %204 : vector<256x128xf32>
    %cst_105 = arith.constant 1.000000e+00 : f32
    %207 = vector.broadcast %cst_105 : f32 to vector<256x128xf32>
    %208 = arith.addf %207, %206 : vector<256x128xf32>
    %cst_106 = arith.constant 1.000000e+00 : f32
    %209 = vector.broadcast %cst_106 : f32 to vector<256x128xf32>
    %210 = arith.divf %209, %208 : vector<256x128xf32>
    %cst_107 = arith.constant 1.06140542 : f32
    %211 = vector.broadcast %cst_107 : f32 to vector<256x128xf32>
    %212 = arith.mulf %211, %210 : vector<256x128xf32>
    %cst_108 = arith.constant -1.45315206 : f32
    %213 = vector.broadcast %cst_108 : f32 to vector<256x128xf32>
    %214 = arith.addf %212, %213 : vector<256x128xf32>
    %215 = arith.mulf %214, %210 : vector<256x128xf32>
    %cst_109 = arith.constant 1.42141378 : f32
    %216 = vector.broadcast %cst_109 : f32 to vector<256x128xf32>
    %217 = arith.addf %215, %216 : vector<256x128xf32>
    %218 = arith.mulf %217, %210 : vector<256x128xf32>
    %cst_110 = arith.constant -0.284496725 : f32
    %219 = vector.broadcast %cst_110 : f32 to vector<256x128xf32>
    %220 = arith.addf %218, %219 : vector<256x128xf32>
    %221 = arith.mulf %220, %210 : vector<256x128xf32>
    %cst_111 = arith.constant 0.254829586 : f32
    %222 = vector.broadcast %cst_111 : f32 to vector<256x128xf32>
    %223 = arith.addf %221, %222 : vector<256x128xf32>
    %224 = arith.mulf %223, %210 : vector<256x128xf32>
    %cst_112 = arith.constant 0.000000e+00 : f32
    %225 = vector.broadcast %cst_112 : f32 to vector<256x128xf32>
    %226 = arith.subf %225, %204 : vector<256x128xf32>
    %227 = arith.mulf %226, %204 : vector<256x128xf32>
    %228 = math.exp %227 : vector<256x128xf32>
    %229 = arith.mulf %224, %228 : vector<256x128xf32>
    %cst_113 = arith.constant 1.000000e+00 : f32
    %230 = vector.broadcast %cst_113 : f32 to vector<256x128xf32>
    %231 = arith.subf %230, %229 : vector<256x128xf32>
    %cst_114 = arith.constant 0.000000e+00 : f32
    %232 = vector.broadcast %cst_114 : f32 to vector<256x128xf32>
    %233 = arith.cmpf oge, %203, %232 : vector<256x128xf32>
    %cst_115 = arith.constant 0.000000e+00 : f32
    %234 = vector.broadcast %cst_115 : f32 to vector<256x128xf32>
    %235 = arith.subf %234, %231 : vector<256x128xf32>
    %236 = arith.select %233, %231, %235 : vector<256x128xi1>, vector<256x128xf32>
    %cst_116 = arith.constant 1.000000e+00 : f32
    %237 = vector.broadcast %cst_116 : f32 to vector<256x128xf32>
    %238 = arith.addf %237, %236 : vector<256x128xf32>
    %239 = arith.mulf %201, %238 : vector<256x128xf32>
    %c0_117 = arith.constant 0 : index
    %c0_118 = arith.constant 0 : index
    %c0_119 = arith.constant 0 : index
    %240 = vector.load %arg6[%c0_117, %c0_118, %c0_119] : memref<1x256x128xf32, #tpu.memory_space<vmem>>, vector<1x256x128xf32>
    %241 = vector.shape_cast %240 : vector<1x256x128xf32> to vector<256x128xf32>
    %242 = vector.shape_cast %239 : vector<256x128xf32> to vector<1x256x128xf32>
    tpu.vector_store %arg6[%c0_117, %c0_118, %c0_119], %242 {strides = array<i32>} : memref<1x256x128xf32, #tpu.memory_space<vmem>>, vector<1x256x128xf32>,
    return
  }
  func.func @transform_0(%arg0: i32) -> (i32, i32, i32, i32) {
    %c0_i32 = arith.constant 0 : i32
    %c0_i32_0 = arith.constant 0 : i32
    %c0_i32_1 = arith.constant 0 : i32
    %c0_i32_2 = arith.constant 0 : i32
    return %arg0, %c0_i32, %c0_i32_0, %c0_i32_1 : i32, i32, i32, i32
  }
  func.func @transform_1(%arg0: i32) -> (i32, i32, i32) {
    %c0_i32 = arith.constant 0 : i32
    %c0_i32_0 = arith.constant 0 : i32
    %c0_i32_1 = arith.constant 0 : i32
    %c0_i32_2 = arith.constant 0 : i32
    return %c0_i32, %c0_i32_0, %c0_i32_1 : i32, i32, i32
  }
  func.func @transform_2(%arg0: i32) -> (i32, i32) {
    %c0_i32 = arith.constant 0 : i32
    %c0_i32_0 = arith.constant 0 : i32
    %c0_i32_1 = arith.constant 0 : i32
    return %c0_i32, %c0_i32_0 : i32, i32
  }
  func.func @transform_3(%arg0: i32) -> (i32, i32) {
    %c0_i32 = arith.constant 0 : i32
    %c0_i32_0 = arith.constant 0 : i32
    %c0_i32_1 = arith.constant 0 : i32
    return %c0_i32, %c0_i32_0 : i32, i32
  }
  func.func @transform_4(%arg0: i32) -> (i32, i32, i32) {
    %c0_i32 = arith.constant 0 : i32
    %c0_i32_0 = arith.constant 0 : i32
    %c0_i32_1 = arith.constant 0 : i32
    return %arg0, %c0_i32, %c0_i32_0 : i32, i32, i32
  }
  func.func @transform_5(%arg0: i32) -> (i32, i32, i32) {
    %c0_i32 = arith.constant 0 : i32
    %c0_i32_0 = arith.constant 0 : i32
    %c0_i32_1 = arith.constant 0 : i32
    return %arg0, %c0_i32, %c0_i32_0 : i32, i32, i32
  }
}

</mosaic_0001>

<llo_original>
// kernel: residual_block.2
$region0: #{residual_block.2}
  #allocation0 [shape = 'u32[]', space=smem, size = 0x4, offset = 0x4, fixed_abs, tag = 'smem constant byte address 0x4 - core index']
  #allocation1 [shape = 'u32[144,128]{1,0:T(1,128)}', space=vmem, size = 0x12000, scoped, tag = 'internal scratch']
  %s0 = inlined_call_operand.vmem [shape: f32[2,18,18,128], index: 0, kind: input, shape index: {}]
  %s1 = inlined_call_operand.vmem [shape: bf16[9,128,128], index: 1, kind: input, shape index: {}]
  %s2 = inlined_call_operand.vmem [shape: f32[1,128], index: 2, kind: input, shape index: {}]
  %s3 = inlined_call_operand.vmem [shape: f32[1,128], index: 3, kind: input, shape index: {}]
  %s4 = inlined_call_operand.vmem [shape: f32[2,256,128], index: 4, kind: output, shape index: {}]
  %s5 = sld [smem:[#allocation0]]
  $region49: #{residual_block.2} parent=0
    _
  %s7 = ssub.s32 1, %s5
  %s8 = scalar_select 0, %s7, %s5
  loop: start=0, step=1, limit=4
  $region2: #{residual_block.2} parent=0 // loop_pre_header
    _
  $region3: #{residual_block.2} parent=0 // loop_header
    %s10 = sphi 0, %s14
    %p11 = scmp.ge.s32.totalorder %s10, 4
    %s20 = sphi 0, %s22
    %s23 = sphi 0, %s20
    %s24 = sphi 0, %s23
    %s40 = sphi 0, %s24
    %s44 = sphi 0, %s44
    %s46 = sphi 0, %s44
    %s47 = sphi 0, %s46
    %s61 = sphi 0, %s47
    %s65 = sphi 0, %s65
    %s67 = sphi 0, %s65
    %s68 = sphi 0, %s67
    %s82 = sphi 0, %s68
    %s86 = sphi 0, %s86
    %s88 = sphi 0, %s86
    %s89 = sphi 0, %s88
    %s103 = sphi 0, %s89
    %s109 = sphi 0, %s111
    %s112 = sphi 0, %s109
    %s113 = sphi 0, %s112
    %s129 = sphi 0, %s113
  $region4: #{residual_block.2} parent=0 // loop_header_branch
    %13 = sbr.rel (%p11) target = $region8
  $region5: #{residual_block.2} parent=0 // loop_body
    %s15 = ssub.s32 %s10, 1
    %s16 = ssub.s32 %s10, 2
    %s17 = sadd.s32 %s10, 1
    %s18 = ssub.s32 %s10, %s17
    %p19 = scmp.eq.s32.totalorder %s18, 0
    %s21 = sadd.s32 %s20, 1
    %s22 = scalar_select %p19, %s20, %s21
    %p25 = pneg %p19
    %p26 = scmp.eq.s32.totalorder %s10, 1
    %p27 = por %p25, %p26
    %p28 = scmp.ne.s32.totalorder %s20, %s23
    %p29 = scmp.eq.s32.totalorder %s10, 0
    %p30 = por %p28, %p29
    %p31 = scmp.ne.s32.totalorder %s20, %s23
    %p32 = scmp.eq.s32.totalorder %s15, 1
    %p33 = por %p31, %p32
    %p34 = scmp.ne.s32.totalorder %s23, %s24
    %p35 = scmp.eq.s32.totalorder %s15, 0
    %p36 = por %p34, %p35
    %p37 = scmp.ne.s32.totalorder %s23, %s24
    %p38 = scmp.eq.s32.totalorder %s16, 1
    %p39 = por %p37, %p38
    %p41 = scmp.ne.s32.totalorder %s24, %s40
    %p42 = scmp.eq.s32.totalorder %s16, 0
    %p43 = por %p41, %p42
    %s45 = sadd.s32 %s44, 1
    %p48 = scmp.eq.s32.totalorder %s10, 1
    %p49 = scmp.ne.s32.totalorder %s44, %s46
    %p50 = scmp.eq.s32.totalorder %s10, 0
    %p51 = por %p49, %p50
    %p52 = scmp.ne.s32.totalorder %s44, %s46
    %p53 = scmp.eq.s32.totalorder %s15, 1
    %p54 = por %p52, %p53
    %p55 = scmp.ne.s32.totalorder %s46, %s47
    %p56 = scmp.eq.s32.totalorder %s15, 0
    %p57 = por %p55, %p56
    %p58 = scmp.ne.s32.totalorder %s46, %s47
    %p59 = scmp.eq.s32.totalorder %s16, 1
    %p60 = por %p58, %p59
    %p62 = scmp.ne.s32.totalorder %s47, %s61
    %p63 = scmp.eq.s32.totalorder %s16, 0
    %p64 = por %p62, %p63
    %s66 = sadd.s32 %s65, 1
    %p69 = scmp.eq.s32.totalorder %s10, 1
    %p70 = scmp.ne.s32.totalorder %s65, %s67
    %p71 = scmp.eq.s32.totalorder %s10, 0
    %p72 = por %p70, %p71
    %p73 = scmp.ne.s32.totalorder %s65, %s67
    %p74 = scmp.eq.s32.totalorder %s15, 1
    %p75 = por %p73, %p74
    %p76 = scmp.ne.s32.totalorder %s67, %s68
    %p77 = scmp.eq.s32.totalorder %s15, 0
    %p78 = por %p76, %p77
    %p79 = scmp.ne.s32.totalorder %s67, %s68
    %p80 = scmp.eq.s32.totalorder %s16, 1
    %p81 = por %p79, %p80
    %p83 = scmp.ne.s32.totalorder %s68, %s82
    %p84 = scmp.eq.s32.totalorder %s16, 0
    %p85 = por %p83, %p84
    %s87 = sadd.s32 %s86, 1
    %p90 = scmp.eq.s32.totalorder %s10, 1
    %p91 = scmp.ne.s32.totalorder %s86, %s88
    %p92 = scmp.eq.s32.totalorder %s10, 0
    %p93 = por %p91, %p92
    %p94 = scmp.ne.s32.totalorder %s86, %s88
    %p95 = scmp.eq.s32.totalorder %s15, 1
    %p96 = por %p94, %p95
    %p97 = scmp.ne.s32.totalorder %s88, %s89
    %p98 = scmp.eq.s32.totalorder %s15, 0
    %p99 = por %p97, %p98
    %p100 = scmp.ne.s32.totalorder %s88, %s89
    %p101 = scmp.eq.s32.totalorder %s16, 1
    %p102 = por %p100, %p101
    %p104 = scmp.ne.s32.totalorder %s89, %s103
    %p105 = scmp.eq.s32.totalorder %s16, 0
    %p106 = por %p104, %p105
    %s107 = ssub.s32 %s10, %s17
    %p108 = scmp.eq.s32.totalorder %s107, 0
    %s110 = sadd.s32 %s109, 1
    %s111 = scalar_select %p108, %s109, %s110
    %p114 = pneg %p108
    %p115 = scmp.eq.s32.totalorder %s10, 1
    %p116 = por %p114, %p115
    %p117 = scmp.ne.s32.totalorder %s109, %s112
    %p118 = scmp.eq.s32.totalorder %s10, 0
    %p119 = por %p117, %p118
    %p120 = scmp.ne.s32.totalorder %s109, %s112
    %p121 = scmp.eq.s32.totalorder %s15, 1
    %p122 = por %p120, %p121
    %p123 = scmp.ne.s32.totalorder %s112, %s113
    %p124 = scmp.eq.s32.totalorder %s15, 0
    %p125 = por %p123, %p124
    %p126 = scmp.ne.s32.totalorder %s112, %s113
    %p127 = scmp.eq.s32.totalorder %s16, 1
    %p128 = por %p126, %p127
    %p130 = scmp.ne.s32.totalorder %s113, %s129
    %p131 = scmp.eq.s32.totalorder %s16, 0
    %p132 = por %p130, %p131
    %p133 = scmp.le.s32.totalorder 1, %s10
    %p134 = scmp.lt.s32.totalorder %s10, 3
    %p135 = pnand %p133, %p134
    %p136 = pneg %p135
    // Predicated region
    $region9: #{residual_block.2} parent=5 // pred_check
      _
    $region10: #{residual_block.2} parent=5 // pred_check_branch
      %138 = sbr.rel (%p135) target = $region12
    $region11: #{residual_block.2} parent=5 // pred_region
      %s139 = ssub.s32 %s10, 1
      // Predicated region
      $region13: #{residual_block.2} parent=11 // pred_check
        %p140 = pneg %p57
      $region14: #{residual_block.2} parent=11 // pred_check_branch
        %142 = sbr.rel (%p140) target = $region16
      $region15: #{residual_block.2} parent=11 // pred_region
        _
      $region16: #{residual_block.2} parent=11 // pred_fallthru
        _
      // Predicated region
      $region17: #{residual_block.2} parent=11 // pred_check
        %p143 = pneg %p78
      $region18: #{residual_block.2} parent=11 // pred_check_branch
        %145 = sbr.rel (%p143) target = $region20
      $region19: #{residual_block.2} parent=11 // pred_region
        _
      $region20: #{residual_block.2} parent=11 // pred_fallthru
        _
      // Predicated region
      $region21: #{residual_block.2} parent=11 // pred_check
        %p146 = pneg %p99
      $region22: #{residual_block.2} parent=11 // pred_check_branch
        %148 = sbr.rel (%p146) target = $region24
      $region23: #{residual_block.2} parent=11 // pred_region
        _
      $region24: #{residual_block.2} parent=11 // pred_fallthru
        _
    $region12: #{residual_block.2} parent=5 // pred_fallthru
      _
    %p149 = scmp.lt.s32.totalorder %s10, 2
    // Predicated region
    $region25: #{residual_block.2} parent=5 // pred_check
      %p150 = pneg %p149
    $region26: #{residual_block.2} parent=5 // pred_check_branch
      %152 = sbr.rel (%p150) target = $region28
    $region27: #{residual_block.2} parent=5 // pred_region
      // Predicated region
      $region29: #{residual_block.2} parent=27 // pred_check
        %p153 = pneg %p30
      $region30: #{residual_block.2} parent=27 // pred_check_branch
        %155 = sbr.rel (%p153) target = $region32
      $region31: #{residual_block.2} parent=27 // pred_region
        %p156 = scmp.lt.s32.totalorder %s10, 1
        %s157 = scalar_select %p156, %s10, 1
        %s158 = smul.addr %s157, 54
        %s159 = smul.addr %s158, 8
        %s160 = scalar_lea.vmem %s0, %s159
      $region32: #{residual_block.2} parent=27 // pred_fallthru
        _
    $region28: #{residual_block.2} parent=5 // pred_fallthru
      _
    %p161 = scmp.le.s32.totalorder 1, %s10
    %p162 = scmp.lt.s32.totalorder %s10, 3
    %p163 = pnand %p161, %p162
    %p164 = pneg %p163
    // Predicated region
    $region33: #{residual_block.2} parent=5 // pred_check
      _
    $region34: #{residual_block.2} parent=5 // pred_check_branch
      %166 = sbr.rel (%p163) target = $region36
    $region35: #{residual_block.2} parent=5 // pred_region
      %s167 = ssub.s32 %s10, 1
      %p168 = scmp.lt.s32.totalorder %s15, 1
      %s169 = scalar_select %p168, %s15, 1
      %s170 = smul.addr %s169, 54
      %s171 = smul.addr %s170, 8
      %s172 = scalar_lea.vmem %s0, %s171
      %p173 = pneg %p36
      %p174 = pneg %p33
      %p175 = pneg %p57
      %p176 = pneg %p54
      %p177 = pneg %p78
      %p178 = pneg %p75
      %p179 = pneg %p99
      %p180 = pneg %p96
      %p181 = pneg %p125
      %p182 = pneg %p122
      %p183 = scmp.lt.s32.totalorder %s15, 1
      %s184 = scalar_select %p183, %s15, 1
      %s185 = smul.addr %s184, 32
      %s186 = smul.addr %s185, 8
      %s187 = scalar_lea.vmem %s4, %s186
      %p188 = scmp.lt.s32.totalorder %s15, 1
      %s189 = scalar_select %p188, %s15, 1
      %s190 = smul.addr %s189, 54
      %s191 = smul.addr %s190, 8
      %s192 = scalar_lea.vmem %s0, %s191
      %p193 = scmp.lt.s32.totalorder %s15, 1
      %s194 = scalar_select %p193, %s15, 1
      %s195 = smul.addr %s194, 32
      %s196 = smul.addr %s195, 8
      %s197 = scalar_lea.vmem %s4, %s196
      %v199 = vld [vmem:[%s192] sm:$0xff]
      %v200 = vld [vmem:[%s192 + $0x8] sm:$0xff]
      %v201 = vld [vmem:[%s192 + $0x18] sm:$0xff]
      %v202 = vld [vmem:[%s192 + $0x20] sm:$0xff]
      %v203 = vld [vmem:[%s192 + $0x30] sm:$0xff]
      %v204 = vld [vmem:[%s192 + $0x38] sm:$0xff]
      %v205 = vld [vmem:[%s192 + $0x48] sm:$0xff]
      %v206 = vld [vmem:[%s192 + $0x50] sm:$0xff]
      %v207 = vld [vmem:[%s192 + $0x60] sm:$0xff]
      %v208 = vld [vmem:[%s192 + $0x68] sm:$0xff]
      %v209 = vld [vmem:[%s192 + $0x78] sm:$0xff]
      %v210 = vld [vmem:[%s192 + $0x80] sm:$0xff]
      %v211 = vld [vmem:[%s192 + $0x90] sm:$0xff]
      %v212 = vld [vmem:[%s192 + $0x98] sm:$0xff]
      %v213 = vld [vmem:[%s192 + $0xa8] sm:$0xff]
      %v214 = vld [vmem:[%s192 + $0xb0] sm:$0xff]
      %v215 = vld [vmem:[%s192 + $0xc0] sm:$0xff]
      %v216 = vld [vmem:[%s192 + $0xc8] sm:$0xff]
      %v217 = vld [vmem:[%s192 + $0xd8] sm:$0xff]
      %v218 = vld [vmem:[%s192 + $0xe0] sm:$0xff]
      %v219 = vld [vmem:[%s192 + $0xf0] sm:$0xff]
      %v220 = vld [vmem:[%s192 + $0xf8] sm:$0xff]
      %v221 = vld [vmem:[%s192 + $0x108] sm:$0xff]
      %v222 = vld [vmem:[%s192 + $0x110] sm:$0xff]
      %v223 = vld [vmem:[%s192 + $0x120] sm:$0xff]
      %v224 = vld [vmem:[%s192 + $0x128] sm:$0xff]
      %v225 = vld [vmem:[%s192 + $0x138] sm:$0xff]
      %v226 = vld [vmem:[%s192 + $0x140] sm:$0xff]
      %v227 = vld [vmem:[%s192 + $0x150] sm:$0xff]
      %v228 = vld [vmem:[%s192 + $0x158] sm:$0xff]
      %v229 = vld [vmem:[%s192 + $0x168] sm:$0xff]
      %v230 = vld [vmem:[%s192 + $0x170] sm:$0xff]
      %v231 = vpack.c.bf16 %v200, %v199
      %v232 = vpack.c.bf16 %v202, %v201
      %v233 = vpack.c.bf16 %v204, %v203
      %v234 = vpack.c.bf16 %v206, %v205
      %v235 = vpack.c.bf16 %v208, %v207
      %v236 = vpack.c.bf16 %v210, %v209
      %v237 = vpack.c.bf16 %v212, %v211
      %v238 = vpack.c.bf16 %v214, %v213
      %v239 = vpack.c.bf16 %v216, %v215
      %v240 = vpack.c.bf16 %v218, %v217
      %v241 = vpack.c.bf16 %v220, %v219
      %v242 = vpack.c.bf16 %v222, %v221
      %v243 = vpack.c.bf16 %v224, %v223
      %v244 = vpack.c.bf16 %v226, %v225
      %v245 = vpack.c.bf16 %v228, %v227
      %v246 = vpack.c.bf16 %v230, %v229
      %v247 = vld [vmem:[%s1] sm:$0xf]
      %v248 = vld [vmem:[%s1 + $0x4] sm:$0xf]
      %v249 = vld [vmem:[%s1 + $0x8] sm:$0xf]
      %v250 = vld [vmem:[%s1 + $0xc] sm:$0xf]
      %v251 = vld [vmem:[%s1 + $0x10] sm:$0xf]
      %v252 = vld [vmem:[%s1 + $0x14] sm:$0xf]
      %v253 = vld [vmem:[%s1 + $0x18] sm:$0xf]
      %v254 = vld [vmem:[%s1 + $0x1c] sm:$0xf]
      %v255 = vld [vmem:[%s1 + $0x20] sm:$0xf]
      %v256 = vld [vmem:[%s1 + $0x24] sm:$0xf]
      %v257 = vld [vmem:[%s1 + $0x28] sm:$0xf]
      %v258 = vld [vmem:[%s1 + $0x2c] sm:$0xf]
      %v259 = vld [vmem:[%s1 + $0x30] sm:$0xf]
      %v260 = vld [vmem:[%s1 + $0x34] sm:$0xf]
      %v261 = vld [vmem:[%s1 + $0x38] sm:$0xf]
      %v262 = vld [vmem:[%s1 + $0x3c] sm:$0xf]
      %v263 = vld [vmem:[%s192 + $0x1] sm:$0xff]
      %v264 = vld [vmem:[%s192 + $0x9] sm:$0xff]
      %v265 = vld [vmem:[%s192 + $0x19] sm:$0xff]
      %v266 = vld [vmem:[%s192 + $0x21] sm:$0xff]
      %v267 = vld [vmem:[%s192 + $0x31] sm:$0xff]
      %v268 = vld [vmem:[%s192 + $0x39] sm:$0xff]
      %v269 = vld [vmem:[%s192 + $0x49] sm:$0xff]
      %v270 = vld [vmem:[%s192 + $0x51] sm:$0xff]
      %v271 = vld [vmem:[%s192 + $0x61] sm:$0xff]
      %v272 = vld [vmem:[%s192 + $0x69] sm:$0xff]
      %v273 = vld [vmem:[%s192 + $0x79] sm:$0xff]
      %v274 = vld [vmem:[%s192 + $0x81] sm:$0xff]
      %v275 = vld [vmem:[%s192 + $0x91] sm:$0xff]
      %v276 = vld [vmem:[%s192 + $0x99] sm:$0xff]
      %v277 = vld [vmem:[%s192 + $0xa9] sm:$0xff]
      %v278 = vld [vmem:[%s192 + $0xb1] sm:$0xff]
      %v279 = vld [vmem:[%s192 + $0xc1] sm:$0xff]
      %v280 = vld [vmem:[%s192 + $0xc9] sm:$0xff]
      %v281 = vld [vmem:[%s192 + $0xd9] sm:$0xff]
      %v282 = vld [vmem:[%s192 + $0xe1] sm:$0xff]
      %v283 = vld [vmem:[%s192 + $0xf1] sm:$0xff]
      %v284 = vld [vmem:[%s192 + $0xf9] sm:$0xff]
      %v285 = vld [vmem:[%s192 + $0x109] sm:$0xff]
      %v286 = vld [vmem:[%s192 + $0x111] sm:$0xff]
      %v287 = vld [vmem:[%s192 + $0x121] sm:$0xff]
      %v288 = vld [vmem:[%s192 + $0x129] sm:$0xff]
      %v289 = vld [vmem:[%s192 + $0x139] sm:$0xff]
      %v290 = vld [vmem:[%s192 + $0x141] sm:$0xff]
      %v291 = vld [vmem:[%s192 + $0x151] sm:$0xff]
      %v292 = vld [vmem:[%s192 + $0x159] sm:$0xff]
      %v293 = vld [vmem:[%s192 + $0x169] sm:$0xff]
      %v294 = vld [vmem:[%s192 + $0x171] sm:$0xff]
      %v295 = vpack.c.bf16 %v264, %v263
      %v296 = vpack.c.bf16 %v266, %v265
      %v297 = vpack.c.bf16 %v268, %v267
      %v298 = vpack.c.bf16 %v270, %v269
      %v299 = vpack.c.bf16 %v272, %v271
      %v300 = vpack.c.bf16 %v274, %v273
      %v301 = vpack.c.bf16 %v276, %v275
      %v302 = vpack.c.bf16 %v278, %v277
      %v303 = vpack.c.bf16 %v280, %v279
      %v304 = vpack.c.bf16 %v282, %v281
      %v305 = vpack.c.bf16 %v284, %v283
      %v306 = vpack.c.bf16 %v286, %v285
      %v307 = vpack.c.bf16 %v288, %v287
      %v308 = vpack.c.bf16 %v290, %v289
      %v309 = vpack.c.bf16 %v292, %v291
      %v310 = vpack.c.bf16 %v294, %v293
      %s311 = scalar_lea.vmem %s1, 64
      %v312 = vld [vmem:[%s311] sm:$0xf]
      %v313 = vld [vmem:[%s311 + $0x4] sm:$0xf]
      %v314 = vld [vmem:[%s311 + $0x8] sm:$0xf]
      %v315 = vld [vmem:[%s311 + $0xc] sm:$0xf]
      %v316 = vld [vmem:[%s311 + $0x10] sm:$0xf]
      %v317 = vld [vmem:[%s311 + $0x14] sm:$0xf]
      %v318 = vld [vmem:[%s311 + $0x18] sm:$0xf]
      %v319 = vld [vmem:[%s311 + $0x1c] sm:$0xf]
      %v320 = vld [vmem:[%s311 + $0x20] sm:$0xf]
      %v321 = vld [vmem:[%s311 + $0x24] sm:$0xf]
      %v322 = vld [vmem:[%s311 + $0x28] sm:$0xf]
      %v323 = vld [vmem:[%s311 + $0x2c] sm:$0xf]
      %v324 = vld [vmem:[%s311 + $0x30] sm:$0xf]
      %v325 = vld [vmem:[%s311 + $0x34] sm:$0xf]
      %v326 = vld [vmem:[%s311 + $0x38] sm:$0xf]
      %v327 = vld [vmem:[%s311 + $0x3c] sm:$0xf]
      %v344 = vunpack.c.l.b16 %v312
      %v345 = vunpack.c.l.b16 %v313
      %v346 = vunpack.c.l.b16 %v314
      %v347 = vunpack.c.l.b16 %v315
      %v348 = vunpack.c.l.b16 %v316
      %v349 = vunpack.c.l.b16 %v317
      %v350 = vunpack.c.l.b16 %v318
      %v351 = vunpack.c.l.b16 %v319
      %v352 = vunpack.c.l.b16 %v320
      %v353 = vunpack.c.l.b16 %v321
      %v354 = vunpack.c.l.b16 %v322
      %v355 = vunpack.c.l.b16 %v323
      %v356 = vunpack.c.l.b16 %v324
      %v357 = vunpack.c.l.b16 %v325
      %v358 = vunpack.c.l.b16 %v326
      %v359 = vunpack.c.l.b16 %v327
      %v360 = vpack.c.b16 %v345, %v344
      %v361 = vpack.c.b16 %v347, %v346
      %v362 = vpack.c.b16 %v349, %v348
      %v363 = vpack.c.b16 %v351, %v350
      %v364 = vpack.c.b16 %v353, %v352
      %v365 = vpack.c.b16 %v355, %v354
      %v366 = vpack.c.b16 %v357, %v356
      %v367 = vpack.c.b16 %v359, %v358
      %376 = vmatprep.subr.bf16.mxu0 0
      %377 = vmatpush1.bf16.msra.mxu0 %v360
      %378 = vmatprep.subr.bf16.mxu0 0
      %379 = vmatpush1.bf16.msra.mxu0 %v361
      %380 = vmatprep.subr.bf16.mxu0 0
      %381 = vmatpush1.bf16.msra.mxu0 %v362
      %382 = vmatprep.subr.bf16.mxu0 0
      %383 = vmatpush1.bf16.msra.mxu0 %v363
      %384 = vmatprep.subr.bf16.mxu0 0
      %385 = vmatpush1.bf16.msra.mxu0 %v364
      %386 = vmatprep.subr.bf16.mxu0 0
      %387 = vmatpush1.bf16.msra.mxu0 %v365
      %388 = vmatprep.subr.bf16.mxu0 0
      %389 = vmatpush1.bf16.msra.mxu0 %v366
      %390 = vmatprep.subr.bf16.mxu0 0
      %391 = vmatpush1.bf16.msra.mxu0 %v367
      %392 = vmatprep.subr.bf16.mxu0 0
      %393 = vmatpush1.bf16.msra.mxu0 0
      %394 = vmatprep.subr.bf16.mxu0 0
      %395 = vmatpush1.bf16.msra.mxu0 0
      %396 = vmatprep.subr.bf16.mxu0 0
      %397 = vmatpush1.bf16.msra.mxu0 0
      %398 = vmatprep.subr.bf16.mxu0 0
      %399 = vmatpush1.bf16.msra.mxu0 0
      %400 = vmatprep.subr.bf16.mxu0 0
      %401 = vmatpush1.bf16.msra.mxu0 0
      %402 = vmatprep.subr.bf16.mxu0 0
      %403 = vmatpush1.bf16.msra.mxu0 0
      %404 = vmatprep.subr.bf16.mxu0 0
      %405 = vmatpush1.bf16.msra.mxu0 0
      %406 = vmatprep.subr.bf16.mxu0 0
      %407 = vmatpush1.bf16.msra.mxu0 0
      %408 = vmatprep.mubr.bf16.mxu0 0
      %409 = vmatmul.mubr.bf16.gmra.mrb[0].mxu0 %v295
      %v410 = vpop.f32.mrb[0].mxu0
      %v411 = vadd.f32 0.0, %v410
      %v412 = vpop.f32.mrb[0].mxu0
      %v413 = vpop.f32.mrb[0].mxu0
      %v414 = vadd.f32 0.0, %v413
      %v415 = vpop.f32.mrb[0].mxu0
      %416 = vmatprep.mubr.bf16.mxu0 0
      %417 = vmatmul.mubr.bf16.gmra.mrb[0].mxu0 %v296
      %v418 = vpop.f32.mrb[0].mxu0
      %v419 = vadd.f32 0.0, %v418
      %v420 = vpop.f32.mrb[0].mxu0
      %v421 = vpop.f32.mrb[0].mxu0
      %v422 = vadd.f32 0.0, %v421
      %v423 = vpop.f32.mrb[0].mxu0
      %424 = vmatprep.mubr.bf16.mxu0 0
      %425 = vmatmul.mubr.bf16.gmra.mrb[0].mxu0 %v297
      %v426 = vpop.f32.mrb[0].mxu0
      %v427 = vadd.f32 0.0, %v426
      %v428 = vpop.f32.mrb[0].mxu0
      %v429 = vpop.f32.mrb[0].mxu0
      %v430 = vadd.f32 0.0, %v429
      %v431 = vpop.f32.mrb[0].mxu0
      %432 = vmatprep.mubr.bf16.mxu0 0
      %433 = vmatmul.mubr.bf16.gmra.mrb[0].mxu0 %v298
      %v434 = vpop.f32.mrb[0].mxu0
      %v435 = vadd.f32 0.0, %v434
      %v436 = vpop.f32.mrb[0].mxu0
      %v437 = vpop.f32.mrb[0].mxu0
      %v438 = vadd.f32 0.0, %v437
      %v439 = vpop.f32.mrb[0].mxu0
      %440 = vmatprep.mubr.bf16.mxu0 0
      %441 = vmatmul.mubr.bf16.gmra.mrb[0].mxu0 %v299
      %v442 = vpop.f32.mrb[0].mxu0
      %v443 = vadd.f32 0.0, %v442
      %v444 = vpop.f32.mrb[0].mxu0
      %v445 = vpop.f32.mrb[0].mxu0
      %v446 = vadd.f32 0.0, %v445
      %v447 = vpop.f32.mrb[0].mxu0
      %448 = vmatprep.mubr.bf16.mxu0 0
      %449 = vmatmul.mubr.bf16.gmra.mrb[0].mxu0 %v300
      %v450 = vpop.f32.mrb[0].mxu0
      %v451 = vadd.f32 0.0, %v450
      %v452 = vpop.f32.mrb[0].mxu0
      %v453 = vpop.f32.mrb[0].mxu0
      %v454 = vadd.f32 0.0, %v453
      %v455 = vpop.f32.mrb[0].mxu0
      %456 = vmatprep.mubr.bf16.mxu0 0
      %457 = vmatmul.mubr.bf16.gmra.mrb[0].mxu0 %v301
      %v458 = vpop.f32.mrb[0].mxu0
      %v459 = vadd.f32 0.0, %v458
      %v460 = vpop.f32.mrb[0].mxu0
      %v461 = vpop.f32.mrb[0].mxu0
      %v462 = vadd.f32 0.0, %v461
      %v463 = vpop.f32.mrb[0].mxu0
      %464 = vmatprep.mubr.bf16.mxu0 0
      %465 = vmatmul.mubr.bf16.gmra.mrb[0].mxu0 %v302
      %v466 = vpop.f32.mrb[0].mxu0
      %v467 = vadd.f32 0.0, %v466
      %v468 = vpop.f32.mrb[0].mxu0
      %v469 = vpop.f32.mrb[0].mxu0
      %v470 = vadd.f32 0.0, %v469
      %v471 = vpop.f32.mrb[0].mxu0
      %472 = vmatprep.mubr.bf16.mxu0 0
      %473 = vmatmul.mubr.bf16.gmra.mrb[0].mxu0 %v303
      %v474 = vpop.f32.mrb[0].mxu0
      %v475 = vadd.f32 0.0, %v474
      %v476 = vpop.f32.mrb[0].mxu0
      %v477 = vpop.f32.mrb[0].mxu0
      %v478 = vadd.f32 0.0, %v477
      %v479 = vpop.f32.mrb[0].mxu0
      %480 = vmatprep.mubr.bf16.mxu0 0
      %481 = vmatmul.mubr.bf16.gmra.mrb[0].mxu0 %v304
      %v482 = vpop.f32.mrb[0].mxu0
      %v483 = vadd.f32 0.0, %v482
      %v484 = vpop.f32.mrb[0].mxu0
      %v485 = vpop.f32.mrb[0].mxu0
      %v486 = vadd.f32 0.0, %v485
      %v487 = vpop.f32.mrb[0].mxu0
      %488 = vmatprep.mubr.bf16.mxu0 0
      %489 = vmatmul.mubr.bf16.gmra.mrb[0].mxu0 %v305
      %v490 = vpop.f32.mrb[0].mxu0
      %v491 = vadd.f32 0.0, %v490
      %v492 = vpop.f32.mrb[0].mxu0
      %v493 = vpop.f32.mrb[0].mxu0
      %v494 = vadd.f32 0.0, %v493
      %v495 = vpop.f32.mrb[0].mxu0
      %496 = vmatprep.mubr.bf16.mxu0 0
      %497 = vmatmul.mubr.bf16.gmra.mrb[0].mxu0 %v306
      %v498 = vpop.f32.mrb[0].mxu0
      %v499 = vadd.f32 0.0, %v498
      %v500 = vpop.f32.mrb[0].mxu0
      %v501 = vpop.f32.mrb[0].mxu0
      %v502 = vadd.f32 0.0, %v501
      %v503 = vpop.f32.mrb[0].mxu0
      %504 = vmatprep.mubr.bf16.mxu0 0
      %505 = vmatmul.mubr.bf16.gmra.mrb[0].mxu0 %v307
      %v506 = vpop.f32.mrb[0].mxu0
      %v507 = vadd.f32 0.0, %v506
      %v508 = vpop.f32.mrb[0].mxu0
      %v509 = vpop.f32.mrb[0].mxu0
      %v510 = vadd.f32 0.0, %v509
      %v511 = vpop.f32.mrb[0].mxu0
      %512 = vmatprep.mubr.bf16.mxu0 0
      %513 = vmatmul.mubr.bf16.gmra.mrb[0].mxu0 %v308
      %v514 = vpop.f32.mrb[0].mxu0
      %v515 = vadd.f32 0.0, %v514
      %v516 = vpop.f32.mrb[0].mxu0
      %v517 = vpop.f32.mrb[0].mxu0
      %v518 = vadd.f32 0.0, %v517
      %v519 = vpop.f32.mrb[0].mxu0
      %520 = vmatprep.mubr.bf16.mxu0 0
      %521 = vmatmul.mubr.bf16.gmra.mrb[0].mxu0 %v309
      %v522 = vpop.f32.mrb[0].mxu0
      %v523 = vadd.f32 0.0, %v522
      %v524 = vpop.f32.mrb[0].mxu0
      %v525 = vpop.f32.mrb[0].mxu0
      %v526 = vadd.f32 0.0, %v525
      %v527 = vpop.f32.mrb[0].mxu0
      %528 = vmatprep.mubr.bf16.mxu0 0
      %529 = vmatmul.mubr.bf16.gmra.mrb[0].mxu0 %v310
      %v530 = vpop.f32.mrb[0].mxu0
      %v531 = vadd.f32 0.0, %v530
      %v532 = vpop.f32.mrb[0].mxu0
      %v533 = vpop.f32.mrb[0].mxu0
      %v534 = vadd.f32 0.0, %v533
      %v535 = vpop.f32.mrb[0].mxu0
      %536 = vdwg.mxu0
      %v553 = vunpack.c.l.b16 %v247
      %v554 = vunpack.c.l.b16 %v248
      %v555 = vunpack.c.l.b16 %v249
      %v556 = vunpack.c.l.b16 %v250
      %v557 = vunpack.c.l.b16 %v251
      %v558 = vunpack.c.l.b16 %v252
      %v559 = vunpack.c.l.b16 %v253
      %v560 = vunpack.c.l.b16 %v254
      %v561 = vunpack.c.l.b16 %v255
      %v562 = vunpack.c.l.b16 %v256
      %v563 = vunpack.c.l.b16 %v257
      %v564 = vunpack.c.l.b16 %v258
      %v565 = vunpack.c.l.b16 %v259
      %v566 = vunpack.c.l.b16 %v260
      %v567 = vunpack.c.l.b16 %v261
      %v568 = vunpack.c.l.b16 %v262
      %v569 = vpack.c.b16 %v554, %v553
      %v570 = vpack.c.b16 %v556, %v555
      %v571 = vpack.c.b16 %v558, %v557
      %v572 = vpack.c.b16 %v560, %v559
      %v573 = vpack.c.b16 %v562, %v561
      %v574 = vpack.c.b16 %v564, %v563
      %v575 = vpack.c.b16 %v566, %v565
      %v576 = vpack.c.b16 %v568, %v567
      %585 = vmatprep.subr.bf16.mxu0 0
      %586 = vmatpush1.bf16.msra.mxu0 %v569
      %587 = vmatprep.subr.bf16.mxu0 0
      %588 = vmatpush1.bf16.msra.mxu0 %v570
      %589 = vmatprep.subr.bf16.mxu0 0
      %590 = vmatpush1.bf16.msra.mxu0 %v571
      %591 = vmatprep.subr.bf16.mxu0 0
      %592 = vmatpush1.bf16.msra.mxu0 %v572
      %593 = vmatprep.subr.bf16.mxu0 0
      %594 = vmatpush1.bf16.msra.mxu0 %v573
      %595 = vmatprep.subr.bf16.mxu0 0
      %596 = vmatpush1.bf16.msra.mxu0 %v574
      %597 = vmatprep.subr.bf16.mxu0 0
      %598 = vmatpush1.bf16.msra.mxu0 %v575
      %599 = vmatprep.subr.bf16.mxu0 0
      %600 = vmatpush1.bf16.msra.mxu0 %v576
      %601 = vmatprep.subr.bf16.mxu0 0
      %602 = vmatpush1.bf16.msra.mxu0 0
      %603 = vmatprep.subr.bf16.mxu0 0
      %604 = vmatpush1.bf16.msra.mxu0 0
      %605 = vmatprep.subr.bf16.mxu0 0
      %606 = vmatpush1.bf16.msra.mxu0 0
      %607 = vmatprep.subr.bf16.mxu0 0
      %608 = vmatpush1.bf16.msra.mxu0 0
      %609 = vmatprep.subr.bf16.mxu0 0
      %610 = vmatpush1.bf16.msra.mxu0 0
      %611 = vmatprep.subr.bf16.mxu0 0
      %612 = vmatpush1.bf16.msra.mxu0 0
      %613 = vmatprep.subr.bf16.mxu0 0
      %614 = vmatpush1.bf16.msra.mxu0 0
      %615 = vmatprep.subr.bf16.mxu0 0
      %616 = vmatpush1.bf16.msra.mxu0 0
      %617 = vmatprep.mubr.bf16.mxu0 0
      %618 = vmatmul.mubr.bf16.gmra.mrb[0].mxu0 %v231
      %v619 = vpop.f32.mrb[0].mxu0
      %v620 = vadd.f32 %v411, %v619
      %v621 = vpop.f32.mrb[0].mxu0
      %v622 = vpop.f32.mrb[0].mxu0
      %v623 = vadd.f32 %v414, %v622
      %v624 = vpop.f32.mrb[0].mxu0
      %625 = vmatprep.mubr.bf16.mxu0 0
      %626 = vmatmul.mubr.bf16.gmra.mrb[0].mxu0 %v232
      %v627 = vpop.f32.mrb[0].mxu0
      %v628 = vadd.f32 %v419, %v627
      %v629 = vpop.f32.mrb[0].mxu0
      %v630 = vpop.f32.mrb[0].mxu0
      %v631 = vadd.f32 %v422, %v630
      %v632 = vpop.f32.mrb[0].mxu0
      %633 = vmatprep.mubr.bf16.mxu0 0
      %634 = vmatmul.mubr.bf16.gmra.mrb[0].mxu0 %v233
      %v635 = vpop.f32.mrb[0].mxu0
      %v636 = vadd.f32 %v427, %v635
      %v637 = vpop.f32.mrb[0].mxu0
      %v638 = vpop.f32.mrb[0].mxu0
      %v639 = vadd.f32 %v430, %v638
      %v640 = vpop.f32.mrb[0].mxu0
      %641 = vmatprep.mubr.bf16.mxu0 0
      %642 = vmatmul.mubr.bf16.gmra.mrb[0].mxu0 %v234
      %v643 = vpop.f32.mrb[0].mxu0
      %v644 = vadd.f32 %v435, %v643
      %v645 = vpop.f32.mrb[0].mxu0
      %v646 = vpop.f32.mrb[0].mxu0
      %v647 = vadd.f32 %v438, %v646
      %v648 = vpop.f32.mrb[0].mxu0
      %649 = vmatprep.mubr.bf16.mxu0 0
      %650 = vmatmul.mubr.bf16.gmra.mrb[0].mxu0 %v235
      %v651 = vpop.f32.mrb[0].mxu0
      %v652 = vadd.f32 %v443, %v651
      %v653 = vpop.f32.mrb[0].mxu0
      %v654 = vpop.f32.mrb[0].mxu0
      %v655 = vadd.f32 %v446, %v654
      %v656 = vpop.f32.mrb[0].mxu0
      %657 = vmatprep.mubr.bf16.mxu0 0
      %658 = vmatmul.mubr.bf16.gmra.mrb[0].mxu0 %v236
      %v659 = vpop.f32.mrb[0].mxu0
      %v660 = vadd.f32 %v451, %v659
      %v661 = vpop.f32.mrb[0].mxu0
      %v662 = vpop.f32.mrb[0].mxu0
      %v663 = vadd.f32 %v454, %v662
      %v664 = vpop.f32.mrb[0].mxu0
      %665 = vmatprep.mubr.bf16.mxu0 0
      %666 = vmatmul.mubr.bf16.gmra.mrb[0].mxu0 %v237
      %v667 = vpop.f32.mrb[0].mxu0
      %v668 = vadd.f32 %v459, %v667
      %v669 = vpop.f32.mrb[0].mxu0
      %v670 = vpop.f32.mrb[0].mxu0
      %v671 = vadd.f32 %v462, %v670
      %v672 = vpop.f32.mrb[0].mxu0
      %673 = vmatprep.mubr.bf16.mxu0 0
      %674 = vmatmul.mubr.bf16.gmra.mrb[0].mxu0 %v238
      %v675 = vpop.f32.mrb[0].mxu0
      %v676 = vadd.f32 %v467, %v675
      %v677 = vpop.f32.mrb[0].mxu0
      %v678 = vpop.f32.mrb[0].mxu0
      %v679 = vadd.f32 %v470, %v678
      %v680 = vpop.f32.mrb[0].mxu0
      %681 = vmatprep.mubr.bf16.mxu0 0
      %682 = vmatmul.mubr.bf16.gmra.mrb[0].mxu0 %v239
      %v683 = vpop.f32.mrb[0].mxu0
      %v684 = vadd.f32 %v475, %v683
      %v685 = vpop.f32.mrb[0].mxu0
      %v686 = vpop.f32.mrb[0].mxu0
      %v687 = vadd.f32 %v478, %v686
      %v688 = vpop.f32.mrb[0].mxu0
      %689 = vmatprep.mubr.bf16.mxu0 0
      %690 = vmatmul.mubr.bf16.gmra.mrb[0].mxu0 %v240
      %v691 = vpop.f32.mrb[0].mxu0
      %v692 = vadd.f32 %v483, %v691
      %v693 = vpop.f32.mrb[0].mxu0
      %v694 = vpop.f32.mrb[0].mxu0
      %v695 = vadd.f32 %v486, %v694
      %v696 = vpop.f32.mrb[0].mxu0
      %697 = vmatprep.mubr.bf16.mxu0 0
      %698 = vmatmul.mubr.bf16.gmra.mrb[0].mxu0 %v241
      %v699 = vpop.f32.mrb[0].mxu0
      %v700 = vadd.f32 %v491, %v699
      %v701 = vpop.f32.mrb[0].mxu0
      %v702 = vpop.f32.mrb[0].mxu0
      %v703 = vadd.f32 %v494, %v702
      %v704 = vpop.f32.mrb[0].mxu0
      %705 = vmatprep.mubr.bf16.mxu0 0
      %706 = vmatmul.mubr.bf16.gmra.mrb[0].mxu0 %v242
      %v707 = vpop.f32.mrb[0].mxu0
      %v708 = vadd.f32 %v499, %v707
      %v709 = vpop.f32.mrb[0].mxu0
      %v710 = vpop.f32.mrb[0].mxu0
      %v711 = vadd.f32 %v502, %v710
      %v712 = vpop.f32.mrb[0].mxu0
      %713 = vmatprep.mubr.bf16.mxu0 0
      %714 = vmatmul.mubr.bf16.gmra.mrb[0].mxu0 %v243
      %v715 = vpop.f32.mrb[0].mxu0
      %v716 = vadd.f32 %v507, %v715
      %v717 = vpop.f32.mrb[0].mxu0
      %v718 = vpop.f32.mrb[0].mxu0
      %v719 = vadd.f32 %v510, %v718
      %v720 = vpop.f32.mrb[0].mxu0
      %721 = vmatprep.mubr.bf16.mxu0 0
      %722 = vmatmul.mubr.bf16.gmra.mrb[0].mxu0 %v244
      %v723 = vpop.f32.mrb[0].mxu0
      %v724 = vadd.f32 %v515, %v723
      %v725 = vpop.f32.mrb[0].mxu0
      %v726 = vpop.f32.mrb[0].mxu0
      %v727 = vadd.f32 %v518, %v726
      %v728 = vpop.f32.mrb[0].mxu0
      %729 = vmatprep.mubr.bf16.mxu0 0
      %730 = vmatmul.mubr.bf16.gmra.mrb[0].mxu0 %v245
      %v731 = vpop.f32.mrb[0].mxu0
      %v732 = vadd.f32 %v523, %v731
      %v733 = vpop.f32.mrb[0].mxu0
      %v734 = vpop.f32.mrb[0].mxu0
      %v735 = vadd.f32 %v526, %v734
      %v736 = vpop.f32.mrb[0].mxu0
      %737 = vmatprep.mubr.bf16.mxu0 0
      %738 = vmatmul.mubr.bf16.gmra.mrb[0].mxu0 %v246
      %v739 = vpop.f32.mrb[0].mxu0
      %v740 = vadd.f32 %v531, %v739
      %v741 = vpop.f32.mrb[0].mxu0
      %v742 = vpop.f32.mrb[0].mxu0
      %v743 = vadd.f32 %v534, %v742
      %v744 = vpop.f32.mrb[0].mxu0
      %745 = vdwg.mxu0
      %v746 = vld [vmem:[%s192 + $0x2] sm:$0xff]
      %v747 = vld [vmem:[%s192 + $0xa] sm:$0xff]
      %v748 = vld [vmem:[%s192 + $0x1a] sm:$0xff]
      %v749 = vld [vmem:[%s192 + $0x22] sm:$0xff]
      %v750 = vld [vmem:[%s192 + $0x32] sm:$0xff]
      %v751 = vld [vmem:[%s192 + $0x3a] sm:$0xff]
      %v752 = vld [vmem:[%s192 + $0x4a] sm:$0xff]
      %v753 = vld [vmem:[%s192 + $0x52] sm:$0xff]
      %v754 = vld [vmem:[%s192 + $0x62] sm:$0xff]
      %v755 = vld [vmem:[%s192 + $0x6a] sm:$0xff]
      %v756 = vld [vmem:[%s192 + $0x7a] sm:$0xff]
      %v757 = vld [vmem:[%s192 + $0x82] sm:$0xff]
      %v758 = vld [vmem:[%s192 + $0x92] sm:$0xff]
      %v759 = vld [vmem:[%s192 + $0x9a] sm:$0xff]
      %v760 = vld [vmem:[%s192 + $0xaa] sm:$0xff]
      %v761 = vld [vmem:[%s192 + $0xb2] sm:$0xff]
      %v762 = vld [vmem:[%s192 + $0xc2] sm:$0xff]
      %v763 = vld [vmem:[%s192 + $0xca] sm:$0xff]
      %v764 = vld [vmem:[%s192 + $0xda] sm:$0xff]
      %v765 = vld [vmem:[%s192 + $0xe2] sm:$0xff]
      %v766 = vld [vmem:[%s192 + $0xf2] sm:$0xff]
      %v767 = vld [vmem:[%s192 + $0xfa] sm:$0xff]
      %v768 = vld [vmem:[%s192 + $0x10a] sm:$0xff]
      %v769 = vld [vmem:[%s192 + $0x112] sm:$0xff]
      %v770 = vld [vmem:[%s192 + $0x122] sm:$0xff]
      %v771 = vld [vmem:[%s192 + $0x12a] sm:$0xff]
      %v772 = vld [vmem:[%s192 + $0x13a] sm:$0xff]
      %v773 = vld [vmem:[%s192 + $0x142] sm:$0xff]
      %v774 = vld [vmem:[%s192 + $0x152] sm:$0xff]
      %v775 = vld [vmem:[%s192 + $0x15a] sm:$0xff]
      %v776 = vld [vmem:[%s192 + $0x16a] sm:$0xff]
      %v777 = vld [vmem:[%s192 + $0x172] sm:$0xff]
      %v778 = vpack.c.bf16 %v747, %v746
      %v779 = vpack.c.bf16 %v749, %v748
      %v780 = vpack.c.bf16 %v751, %v750
      %v781 = vpack.c.bf16 %v753, %v752
      %v782 = vpack.c.bf16 %v755, %v754
      %v783 = vpack.c.bf16 %v757, %v756
      %v784 = vpack.c.bf16 %v759, %v758
      %v785 = vpack.c.bf16 %v761, %v760
      %v786 = vpack.c.bf16 %v763, %v762
      %v787 = vpack.c.bf16 %v765, %v764
      %v788 = vpack.c.bf16 %v767, %v766
      %v789 = vpack.c.bf16 %v769, %v768
      %v790 = vpack.c.bf16 %v771, %v770
      %v791 = vpack.c.bf16 %v773, %v772
      %v792 = vpack.c.bf16 %v775, %v774
      %v793 = vpack.c.bf16 %v777, %v776
      %s794 = scalar_lea.vmem %s1, 128
      %v795 = vld [vmem:[%s794] sm:$0xf]
      %v796 = vld [vmem:[%s794 + $0x4] sm:$0xf]
      %v797 = vld [vmem:[%s794 + $0x8] sm:$0xf]
      %v798 = vld [vmem:[%s794 + $0xc] sm:$0xf]
      %v799 = vld [vmem:[%s794 + $0x10] sm:$0xf]
      %v800 = vld [vmem:[%s794 + $0x14] sm:$0xf]
      %v801 = vld [vmem:[%s794 + $0x18] sm:$0xf]
      %v802 = vld [vmem:[%s794 + $0x1c] sm:$0xf]
      %v803 = vld [vmem:[%s794 + $0x20] sm:$0xf]
      %v804 = vld [vmem:[%s794 + $0x24] sm:$0xf]
      %v805 = vld [vmem:[%s794 + $0x28] sm:$0xf]
      %v806 = vld [vmem:[%s794 + $0x2c] sm:$0xf]
      %v807 = vld [vmem:[%s794 + $0x30] sm:$0xf]
      %v808 = vld [vmem:[%s794 + $0x34] sm:$0xf]
      %v809 = vld [vmem:[%s794 + $0x38] sm:$0xf]
      %v810 = vld [vmem:[%s794 + $0x3c] sm:$0xf]
      %v827 = vunpack.c.l.b16 %v795
      %v828 = vunpack.c.l.b16 %v796
      %v829 = vunpack.c.l.b16 %v797
      %v830 = vunpack.c.l.b16 %v798
      %v831 = vunpack.c.l.b16 %v799
      %v832 = vunpack.c.l.b16 %v800
      %v833 = vunpack.c.l.b16 %v801
      %v834 = vunpack.c.l.b16 %v802
      %v835 = vunpack.c.l.b16 %v803
      %v836 = vunpack.c.l.b16 %v804
      %v837 = vunpack.c.l.b16 %v805
      %v838 = vunpack.c.l.b16 %v806
      %v839 = vunpack.c.l.b16 %v807
      %v840 = vunpack.c.l.b16 %v808
      %v841 = vunpack.c.l.b16 %v809
      %v842 = vunpack.c.l.b16 %v810
      %v843 = vpack.c.b16 %v828, %v827
      %v844 = vpack.c.b16 %v830, %v829
      %v845 = vpack.c.b16 %v832, %v831
      %v846 = vpack.c.b16 %v834, %v833
      %v847 = vpack.c.b16 %v836, %v835
      %v848 = vpack.c.b16 %v838, %v837
      %v849 = vpack.c.b16 %v840, %v839
      %v850 = vpack.c.b16 %v842, %v841
      %859 = vmatprep.subr.bf16.mxu0 0
      %860 = vmatpush1.bf16.msra.mxu0 %v843
      %861 = vmatprep.subr.bf16.mxu0 0
      %862 = vmatpush1.bf16.msra.mxu0 %v844
      %863 = vmatprep.subr.bf16.mxu0 0
      %864 = vmatpush1.bf16.msra.mxu0 %v845
      %865 = vmatprep.subr.bf16.mxu0 0
      %866 = vmatpush1.bf16.msra.mxu0 %v846
      %867 = vmatprep.subr.bf16.mxu0 0
      %868 = vmatpush1.bf16.msra.mxu0 %v847
      %869 = vmatprep.subr.bf16.mxu0 0
      %870 = vmatpush1.bf16.msra.mxu0 %v848
      %871 = vmatprep.subr.bf16.mxu0 0
      %872 = vmatpush1.bf16.msra.mxu0 %v849
      %873 = vmatprep.subr.bf16.mxu0 0
      %874 = vmatpush1.bf16.msra.mxu0 %v850
      %875 = vmatprep.subr.bf16.mxu0 0
      %876 = vmatpush1.bf16.msra.mxu0 0
      %877 = vmatprep.subr.bf16.mxu0 0
      %878 = vmatpush1.bf16.msra.mxu0 0
      %879 = vmatprep.subr.bf16.mxu0 0
      %880 = vmatpush1.bf16.msra.mxu0 0
      %881 = vmatprep.subr.bf16.mxu0 0
      %882 = vmatpush1.bf16.msra.mxu0 0
      %883 = vmatprep.subr.bf16.mxu0 0
      %884 = vmatpush1.bf16.msra.mxu0 0
      %885 = vmatprep.subr.bf16.mxu0 0
      %886 = vmatpush1.bf16.msra.mxu0 0
      %887 = vmatprep.subr.bf16.mxu0 0
      %888 = vmatpush1.bf16.msra.mxu0 0
      %889 = vmatprep.subr.bf16.mxu0 0
      %890 = vmatpush1.bf16.msra.mxu0 0
      %891 = vmatprep.mubr.bf16.mxu0 0
      %892 = vmatmul.mubr.bf16.gmra.mrb[0].mxu0 %v778
      %v893 = vpop.f32.mrb[0].mxu0
      %v894 = vadd.f32 0.0, %v893
      %v895 = vpop.f32.mrb[0].mxu0
      %v896 = vpop.f32.mrb[0].mxu0
      %v897 = vadd.f32 0.0, %v896
      %v898 = vpop.f32.mrb[0].mxu0
      %899 = vmatprep.mubr.bf16.mxu0 0
      %900 = vmatmul.mubr.bf16.gmra.mrb[0].mxu0 %v779
      %v901 = vpop.f32.mrb[0].mxu0
      %v902 = vadd.f32 0.0, %v901
      %v903 = vpop.f32.mrb[0].mxu0
      %v904 = vpop.f32.mrb[0].mxu0
      %v905 = vadd.f32 0.0, %v904
      %v906 = vpop.f32.mrb[0].mxu0
      %907 = vmatprep.mubr.bf16.mxu0 0
      %908 = vmatmul.mubr.bf16.gmra.mrb[0].mxu0 %v780
      %v909 = vpop.f32.mrb[0].mxu0
      %v910 = vadd.f32 0.0, %v909
      %v911 = vpop.f32.mrb[0].mxu0
      %v912 = vpop.f32.mrb[0].mxu0
      %v913 = vadd.f32 0.0, %v912
      %v914 = vpop.f32.mrb[0].mxu0
      %915 = vmatprep.mubr.bf16.mxu0 0
      %916 = vmatmul.mubr.bf16.gmra.mrb[0].mxu0 %v781
      %v917 = vpop.f32.mrb[0].mxu0
      %v918 = vadd.f32 0.0, %v917
      %v919 = vpop.f32.mrb[0].mxu0
      %v920 = vpop.f32.mrb[0].mxu0
      %v921 = vadd.f32 0.0, %v920
      %v922 = vpop.f32.mrb[0].mxu0
      %923 = vmatprep.mubr.bf16.mxu0 0
      %924 = vmatmul.mubr.bf16.gmra.mrb[0].mxu0 %v782
      %v925 = vpop.f32.mrb[0].mxu0
      %v926 = vadd.f32 0.0, %v925
      %v927 = vpop.f32.mrb[0].mxu0
      %v928 = vpop.f32.mrb[0].mxu0
      %v929 = vadd.f32 0.0, %v928
      %v930 = vpop.f32.mrb[0].mxu0
      %931 = vmatprep.mubr.bf16.mxu0 0
      %932 = vmatmul.mubr.bf16.gmra.mrb[0].mxu0 %v783
      %v933 = vpop.f32.mrb[0].mxu0
      %v934 = vadd.f32 0.0, %v933
      %v935 = vpop.f32.mrb[0].mxu0
      %v936 = vpop.f32.mrb[0].mxu0
      %v937 = vadd.f32 0.0, %v936
      %v938 = vpop.f32.mrb[0].mxu0
      %939 = vmatprep.mubr.bf16.mxu0 0
      %940 = vmatmul.mubr.bf16.gmra.mrb[0].mxu0 %v784
      %v941 = vpop.f32.mrb[0].mxu0
      %v942 = vadd.f32 0.0, %v941
      %v943 = vpop.f32.mrb[0].mxu0
      %v944 = vpop.f32.mrb[0].mxu0
      %v945 = vadd.f32 0.0, %v944
      %v946 = vpop.f32.mrb[0].mxu0
      %947 = vmatprep.mubr.bf16.mxu0 0
      %948 = vmatmul.mubr.bf16.gmra.mrb[0].mxu0 %v785
      %v949 = vpop.f32.mrb[0].mxu0
      %v950 = vadd.f32 0.0, %v949
      %v951 = vpop.f32.mrb[0].mxu0
      %v952 = vpop.f32.mrb[0].mxu0
      %v953 = vadd.f32 0.0, %v952
      %v954 = vpop.f32.mrb[0].mxu0
      %955 = vmatprep.mubr.bf16.mxu0 0
      %956 = vmatmul.mubr.bf16.gmra.mrb[0].mxu0 %v786
      %v957 = vpop.f32.mrb[0].mxu0
      %v958 = vadd.f32 0.0, %v957
      %v959 = vpop.f32.mrb[0].mxu0
      %v960 = vpop.f32.mrb[0].mxu0
      %v961 = vadd.f32 0.0, %v960
      %v962 = vpop.f32.mrb[0].mxu0
      %963 = vmatprep.mubr.bf16.mxu0 0
      %964 = vmatmul.mubr.bf16.gmra.mrb[0].mxu0 %v787
      %v965 = vpop.f32.mrb[0].mxu0
      %v966 = vadd.f32 0.0, %v965
      %v967 = vpop.f32.mrb[0].mxu0
      %v968 = vpop.f32.mrb[0].mxu0
      %v969 = vadd.f32 0.0, %v968
      %v970 = vpop.f32.mrb[0].mxu0
      %971 = vmatprep.mubr.bf16.mxu0 0
      %972 = vmatmul.mubr.bf16.gmra.mrb[0].mxu0 %v788
      %v973 = vpop.f32.mrb[0].mxu0
      %v974 = vadd.f32 0.0, %v973
      %v975 = vpop.f32.mrb[0].mxu0
      %v976 = vpop.f32.mrb[0].mxu0
      %v977 = vadd.f32 0.0, %v976
      %v978 = vpop.f32.mrb[0].mxu0
      %979 = vmatprep.mubr.bf16.mxu0 0
      %980 = vmatmul.mubr.bf16.gmra.mrb[0].mxu0 %v789
      %v981 = vpop.f32.mrb[0].mxu0
      %v982 = vadd.f32 0.0, %v981
      %v983 = vpop.f32.mrb[0].mxu0
      %v984 = vpop.f32.mrb[0].mxu0
      %v985 = vadd.f32 0.0, %v984
      %v986 = vpop.f32.mrb[0].mxu0
      %987 = vmatprep.mubr.bf16.mxu0 0
      %988 = vmatmul.mubr.bf16.gmra.mrb[0].mxu0 %v790
      %v989 = vpop.f32.mrb[0].mxu0
      %v990 = vadd.f32 0.0, %v989
      %v991 = vpop.f32.mrb[0].mxu0
      %v992 = vpop.f32.mrb[0].mxu0
      %v993 = vadd.f32 0.0, %v992
      %v994 = vpop.f32.mrb[0].mxu0
      %995 = vmatprep.mubr.bf16.mxu0 0
      %996 = vmatmul.mubr.bf16.gmra.mrb[0].mxu0 %v791
      %v997 = vpop.f32.mrb[0].mxu0
      %v998 = vadd.f32 0.0, %v997
      %v999 = vpop.f32.mrb[0].mxu0
      %v1000 = vpop.f32.mrb[0].mxu0
      %v1001 = vadd.f32 0.0, %v1000
      %v1002 = vpop.f32.mrb[0].mxu0
      %1003 = vmatprep.mubr.bf16.mxu0 0
      %1004 = vmatmul.mubr.bf16.gmra.mrb[0].mxu0 %v792
      %v1005 = vpop.f32.mrb[0].mxu0
      %v1006 = vadd.f32 0.0, %v1005
      %v1007 = vpop.f32.mrb[0].mxu0
      %v1008 = vpop.f32.mrb[0].mxu0
      %v1009 = vadd.f32 0.0, %v1008
      %v1010 = vpop.f32.mrb[0].mxu0
      %1011 = vmatprep.mubr.bf16.mxu0 0
      %1012 = vmatmul.mubr.bf16.gmra.mrb[0].mxu0 %v793
      %v1013 = vpop.f32.mrb[0].mxu0
      %v1014 = vadd.f32 0.0, %v1013
      %v1015 = vpop.f32.mrb[0].mxu0
      %v1016 = vpop.f32.mrb[0].mxu0
      %v1017 = vadd.f32 0.0, %v1016
      %v1018 = vpop.f32.mrb[0].mxu0
      %1019 = vdwg.mxu0
      %v1020 = vadd.f32 %v620, %v894
      %v1021 = vadd.f32 %v623, %v897
      %v1022 = vadd.f32 %v628, %v902
      %v1023 = vadd.f32 %v631, %v905
      %v1024 = vadd.f32 %v636, %v910
      %v1025 = vadd.f32 %v639, %v913
      %v1026 = vadd.f32 %v644, %v918
      %v1027 = vadd.f32 %v647, %v921
      %v1028 = vadd.f32 %v652, %v926
      %v1029 = vadd.f32 %v655, %v929
      %v1030 = vadd.f32 %v660, %v934
      %v1031 = vadd.f32 %v663, %v937
      %v1032 = vadd.f32 %v668, %v942
      %v1033 = vadd.f32 %v671, %v945
      %v1034 = vadd.f32 %v676, %v950
      %v1035 = vadd.f32 %v679, %v953
      %v1036 = vadd.f32 %v684, %v958
      %v1037 = vadd.f32 %v687, %v961
      %v1038 = vadd.f32 %v692, %v966
      %v1039 = vadd.f32 %v695, %v969
      %v1040 = vadd.f32 %v700, %v974
      %v1041 = vadd.f32 %v703, %v977
      %v1042 = vadd.f32 %v708, %v982
      %v1043 = vadd.f32 %v711, %v985
      %v1044 = vadd.f32 %v716, %v990
      %v1045 = vadd.f32 %v719, %v993
      %v1046 = vadd.f32 %v724, %v998
      %v1047 = vadd.f32 %v727, %v1001
      %v1048 = vadd.f32 %v732, %v1006
      %v1049 = vadd.f32 %v735, %v1009
      %v1050 = vadd.f32 %v740, %v1014
      %v1051 = vadd.f32 %v743, %v1017
      %s1052 = scalar_lea.vmem %s192, 24
      %v1053 = vld [vmem:[%s1052] sm:$0xff]
      %v1054 = vld [vmem:[%s1052 + $0x8] sm:$0xff]
      %v1055 = vld [vmem:[%s1052 + $0x18] sm:$0xff]
      %v1056 = vld [vmem:[%s1052 + $0x20] sm:$0xff]
      %v1057 = vld [vmem:[%s1052 + $0x30] sm:$0xff]
      %v1058 = vld [vmem:[%s1052 + $0x38] sm:$0xff]
      %v1059 = vld [vmem:[%s1052 + $0x48] sm:$0xff]
      %v1060 = vld [vmem:[%s1052 + $0x50] sm:$0xff]
      %v1061 = vld [vmem:[%s1052 + $0x60] sm:$0xff]
      %v1062 = vld [vmem:[%s1052 + $0x68] sm:$0xff]
      %v1063 = vld [vmem:[%s1052 + $0x78] sm:$0xff]
      %v1064 = vld [vmem:[%s1052 + $0x80] sm:$0xff]
      %v1065 = vld [vmem:[%s1052 + $0x90] sm:$0xff]
      %v1066 = vld [vmem:[%s1052 + $0x98] sm:$0xff]
      %v1067 = vld [vmem:[%s1052 + $0xa8] sm:$0xff]
      %v1068 = vld [vmem:[%s1052 + $0xb0] sm:$0xff]
      %v1069 = vld [vmem:[%s1052 + $0xc0] sm:$0xff]
      %v1070 = vld [vmem:[%s1052 + $0xc8] sm:$0xff]
      %v1071 = vld [vmem:[%s1052 + $0xd8] sm:$0xff]
      %v1072 = vld [vmem:[%s1052 + $0xe0] sm:$0xff]
      %v1073 = vld [vmem:[%s1052 + $0xf0] sm:$0xff]
      %v1074 = vld [vmem:[%s1052 + $0xf8] sm:$0xff]
      %v1075 = vld [vmem:[%s1052 + $0x108] sm:$0xff]
      %v1076 = vld [vmem:[%s1052 + $0x110] sm:$0xff]
      %v1077 = vld [vmem:[%s1052 + $0x120] sm:$0xff]
      %v1078 = vld [vmem:[%s1052 + $0x128] sm:$0xff]
      %v1079 = vld [vmem:[%s1052 + $0x138] sm:$0xff]
      %v1080 = vld [vmem:[%s1052 + $0x140] sm:$0xff]
      %v1081 = vld [vmem:[%s1052 + $0x150] sm:$0xff]
      %v1082 = vld [vmem:[%s1052 + $0x158] sm:$0xff]
      %v1083 = vld [vmem:[%s1052 + $0x168] sm:$0xff]
      %v1084 = vld [vmem:[%s1052 + $0x170] sm:$0xff]
      %v1085 = vpack.c.bf16 %v1054, %v1053
      %v1086 = vpack.c.bf16 %v1056, %v1055
      %v1087 = vpack.c.bf16 %v1058, %v1057
      %v1088 = vpack.c.bf16 %v1060, %v1059
      %v1089 = vpack.c.bf16 %v1062, %v1061
      %v1090 = vpack.c.bf16 %v1064, %v1063
      %v1091 = vpack.c.bf16 %v1066, %v1065
      %v1092 = vpack.c.bf16 %v1068, %v1067
      %v1093 = vpack.c.bf16 %v1070, %v1069
      %v1094 = vpack.c.bf16 %v1072, %v1071
      %v1095 = vpack.c.bf16 %v1074, %v1073
      %v1096 = vpack.c.bf16 %v1076, %v1075
      %v1097 = vpack.c.bf16 %v1078, %v1077
      %v1098 = vpack.c.bf16 %v1080, %v1079
      %v1099 = vpack.c.bf16 %v1082, %v1081
      %v1100 = vpack.c.bf16 %v1084, %v1083
      %s1101 = scalar_lea.vmem %s1, 192
      %v1102 = vld [vmem:[%s1101] sm:$0xf]
      %v1103 = vld [vmem:[%s1101 + $0x4] sm:$0xf]
      %v1104 = vld [vmem:[%s1101 + $0x8] sm:$0xf]
      %v1105 = vld [vmem:[%s1101 + $0xc] sm:$0xf]
      %v1106 = vld [vmem:[%s1101 + $0x10] sm:$0xf]
      %v1107 = vld [vmem:[%s1101 + $0x14] sm:$0xf]
      %v1108 = vld [vmem:[%s1101 + $0x18] sm:$0xf]
      %v1109 = vld [vmem:[%s1101 + $0x1c] sm:$0xf]
      %v1110 = vld [vmem:[%s1101 + $0x20] sm:$0xf]
      %v1111 = vld [vmem:[%s1101 + $0x24] sm:$0xf]
      %v1112 = vld [vmem:[%s1101 + $0x28] sm:$0xf]
      %v1113 = vld [vmem:[%s1101 + $0x2c] sm:$0xf]
      %v1114 = vld [vmem:[%s1101 + $0x30] sm:$0xf]
      %v1115 = vld [vmem:[%s1101 + $0x34] sm:$0xf]
      %v1116 = vld [vmem:[%s1101 + $0x38] sm:$0xf]
      %v1117 = vld [vmem:[%s1101 + $0x3c] sm:$0xf]
      %v1134 = vunpack.c.l.b16 %v1102
      %v1135 = vunpack.c.l.b16 %v1103
      %v1136 = vunpack.c.l.b16 %v1104
      %v1137 = vunpack.c.l.b16 %v1105
      %v1138 = vunpack.c.l.b16 %v1106
      %v1139 = vunpack.c.l.b16 %v1107
      %v1140 = vunpack.c.l.b16 %v1108
      %v1141 = vunpack.c.l.b16 %v1109
      %v1142 = vunpack.c.l.b16 %v1110
      %v1143 = vunpack.c.l.b16 %v1111
      %v1144 = vunpack.c.l.b16 %v1112
      %v1145 = vunpack.c.l.b16 %v1113
      %v1146 = vunpack.c.l.b16 %v1114
      %v1147 = vunpack.c.l.b16 %v1115
      %v1148 = vunpack.c.l.b16 %v1116
      %v1149 = vunpack.c.l.b16 %v1117
      %v1150 = vpack.c.b16 %v1135, %v1134
      %v1151 = vpack.c.b16 %v1137, %v1136
      %v1152 = vpack.c.b16 %v1139, %v1138
      %v1153 = vpack.c.b16 %v1141, %v1140
      %v1154 = vpack.c.b16 %v1143, %v1142
      %v1155 = vpack.c.b16 %v1145, %v1144
      %v1156 = vpack.c.b16 %v1147, %v1146
      %v1157 = vpack.c.b16 %v1149, %v1148
      %1166 = vmatprep.subr.bf16.mxu0 0
      %1167 = vmatpush1.bf16.msra.mxu0 %v1150
      %1168 = vmatprep.subr.bf16.mxu0 0
      %1169 = vmatpush1.bf16.msra.mxu0 %v1151
      %1170 = vmatprep.subr.bf16.mxu0 0
      %1171 = vmatpush1.bf16.msra.mxu0 %v1152
      %1172 = vmatprep.subr.bf16.mxu0 0
      %1173 = vmatpush1.bf16.msra.mxu0 %v1153
      %1174 = vmatprep.subr.bf16.mxu0 0
      %1175 = vmatpush1.bf16.msra.mxu0 %v1154
      %1176 = vmatprep.subr.bf16.mxu0 0
      %1177 = vmatpush1.bf16.msra.mxu0 %v1155
      %1178 = vmatprep.subr.bf16.mxu0 0
      %1179 = vmatpush1.bf16.msra.mxu0 %v1156
      %1180 = vmatprep.subr.bf16.mxu0 0
      %1181 = vmatpush1.bf16.msra.mxu0 %v1157
      %1182 = vmatprep.subr.bf16.mxu0 0
      %1183 = vmatpush1.bf16.msra.mxu0 0
      %1184 = vmatprep.subr.bf16.mxu0 0
      %1185 = vmatpush1.bf16.msra.mxu0 0
      %1186 = vmatprep.subr.bf16.mxu0 0
      %1187 = vmatpush1.bf16.msra.mxu0 0
      %1188 = vmatprep.subr.bf16.mxu0 0
      %1189 = vmatpush1.bf16.msra.mxu0 0
      %1190 = vmatprep.subr.bf16.mxu0 0
      %1191 = vmatpush1.bf16.msra.mxu0 0
      %1192 = vmatprep.subr.bf16.mxu0 0
      %1193 = vmatpush1.bf16.msra.mxu0 0
      %1194 = vmatprep.subr.bf16.mxu0 0
      %1195 = vmatpush1.bf16.msra.mxu0 0
      %1196 = vmatprep.subr.bf16.mxu0 0
      %1197 = vmatpush1.bf16.msra.mxu0 0
      %1198 = vmatprep.mubr.bf16.mxu0 0
      %1199 = vmatmul.mubr.bf16.gmra.mrb[0].mxu0 %v1085
      %v1200 = vpop.f32.mrb[0].mxu0
      %v1201 = vadd.f32 0.0, %v1200
      %v1202 = vpop.f32.mrb[0].mxu0
      %v1203 = vpop.f32.mrb[0].mxu0
      %v1204 = vadd.f32 0.0, %v1203
      %v1205 = vpop.f32.mrb[0].mxu0
      %1206 = vmatprep.mubr.bf16.mxu0 0
      %1207 = vmatmul.mubr.bf16.gmra.mrb[0].mxu0 %v1086
      %v1208 = vpop.f32.mrb[0].mxu0
      %v1209 = vadd.f32 0.0, %v1208
      %v1210 = vpop.f32.mrb[0].mxu0
      %v1211 = vpop.f32.mrb[0].mxu0
      %v1212 = vadd.f32 0.0, %v1211
      %v1213 = vpop.f32.mrb[0].mxu0
      %1214 = vmatprep.mubr.bf16.mxu0 0
      %1215 = vmatmul.mubr.bf16.gmra.mrb[0].mxu0 %v1087
      %v1216 = vpop.f32.mrb[0].mxu0
      %v1217 = vadd.f32 0.0, %v1216
      %v1218 = vpop.f32.mrb[0].mxu0
      %v1219 = vpop.f32.mrb[0].mxu0
      %v1220 = vadd.f32 0.0, %v1219
      %v1221 = vpop.f32.mrb[0].mxu0
      %1222 = vmatprep.mubr.bf16.mxu0 0
      %1223 = vmatmul.mubr.bf16.gmra.mrb[0].mxu0 %v1088
      %v1224 = vpop.f32.mrb[0].mxu0
      %v1225 = vadd.f32 0.0, %v1224
      %v1226 = vpop.f32.mrb[0].mxu0
      %v1227 = vpop.f32.mrb[0].mxu0
      %v1228 = vadd.f32 0.0, %v1227
      %v1229 = vpop.f32.mrb[0].mxu0
      %1230 = vmatprep.mubr.bf16.mxu0 0
      %1231 = vmatmul.mubr.bf16.gmra.mrb[0].mxu0 %v1089
      %v1232 = vpop.f32.mrb[0].mxu0
      %v1233 = vadd.f32 0.0, %v1232
      %v1234 = vpop.f32.mrb[0].mxu0
      %v1235 = vpop.f32.mrb[0].mxu0
      %v1236 = vadd.f32 0.0, %v1235
      %v1237 = vpop.f32.mrb[0].mxu0
      %1238 = vmatprep.mubr.bf16.mxu0 0
      %1239 = vmatmul.mubr.bf16.gmra.mrb[0].mxu0 %v1090
      %v1240 = vpop.f32.mrb[0].mxu0
      %v1241 = vadd.f32 0.0, %v1240
      %v1242 = vpop.f32.mrb[0].mxu0
      %v1243 = vpop.f32.mrb[0].mxu0
      %v1244 = vadd.f32 0.0, %v1243
      %v1245 = vpop.f32.mrb[0].mxu0
      %1246 = vmatprep.mubr.bf16.mxu0 0
      %1247 = vmatmul.mubr.bf16.gmra.mrb[0].mxu0 %v1091
      %v1248 = vpop.f32.mrb[0].mxu0
      %v1249 = vadd.f32 0.0, %v1248
      %v1250 = vpop.f32.mrb[0].mxu0
      %v1251 = vpop.f32.mrb[0].mxu0
      %v1252 = vadd.f32 0.0, %v1251
      %v1253 = vpop.f32.mrb[0].mxu0
      %1254 = vmatprep.mubr.bf16.mxu0 0
      %1255 = vmatmul.mubr.bf16.gmra.mrb[0].mxu0 %v1092
      %v1256 = vpop.f32.mrb[0].mxu0
      %v1257 = vadd.f32 0.0, %v1256
      %v1258 = vpop.f32.mrb[0].mxu0
      %v1259 = vpop.f32.mrb[0].mxu0
      %v1260 = vadd.f32 0.0, %v1259
      %v1261 = vpop.f32.mrb[0].mxu0
      %1262 = vmatprep.mubr.bf16.mxu0 0
      %1263 = vmatmul.mubr.bf16.gmra.mrb[0].mxu0 %v1093
      %v1264 = vpop.f32.mrb[0].mxu0
      %v1265 = vadd.f32 0.0, %v1264
      %v1266 = vpop.f32.mrb[0].mxu0
      %v1267 = vpop.f32.mrb[0].mxu0
      %v1268 = vadd.f32 0.0, %v1267
      %v1269 = vpop.f32.mrb[0].mxu0
      %1270 = vmatprep.mubr.bf16.mxu0 0
      %1271 = vmatmul.mubr.bf16.gmra.mrb[0].mxu0 %v1094
      %v1272 = vpop.f32.mrb[0].mxu0
      %v1273 = vadd.f32 0.0, %v1272
      %v1274 = vpop.f32.mrb[0].mxu0
      %v1275 = vpop.f32.mrb[0].mxu0
      %v1276 = vadd.f32 0.0, %v1275
      %v1277 = vpop.f32.mrb[0].mxu0
      %1278 = vmatprep.mubr.bf16.mxu0 0
      %1279 = vmatmul.mubr.bf16.gmra.mrb[0].mxu0 %v1095
      %v1280 = vpop.f32.mrb[0].mxu0
      %v1281 = vadd.f32 0.0, %v1280
      %v1282 = vpop.f32.mrb[0].mxu0
      %v1283 = vpop.f32.mrb[0].mxu0
      %v1284 = vadd.f32 0.0, %v1283
      %v1285 = vpop.f32.mrb[0].mxu0
      %1286 = vmatprep.mubr.bf16.mxu0 0
      %1287 = vmatmul.mubr.bf16.gmra.mrb[0].mxu0 %v1096
      %v1288 = vpop.f32.mrb[0].mxu0
      %v1289 = vadd.f32 0.0, %v1288
      %v1290 = vpop.f32.mrb[0].mxu0
      %v1291 = vpop.f32.mrb[0].mxu0
      %v1292 = vadd.f32 0.0, %v1291
      %v1293 = vpop.f32.mrb[0].mxu0
      %1294 = vmatprep.mubr.bf16.mxu0 0
      %1295 = vmatmul.mubr.bf16.gmra.mrb[0].mxu0 %v1097
      %v1296 = vpop.f32.mrb[0].mxu0
      %v1297 = vadd.f32 0.0, %v1296
      %v1298 = vpop.f32.mrb[0].mxu0
      %v1299 = vpop.f32.mrb[0].mxu0
      %v1300 = vadd.f32 0.0, %v1299
      %v1301 = vpop.f32.mrb[0].mxu0
      %1302 = vmatprep.mubr.bf16.mxu0 0
      %1303 = vmatmul.mubr.bf16.gmra.mrb[0].mxu0 %v1098
      %v1304 = vpop.f32.mrb[0].mxu0
      %v1305 = vadd.f32 0.0, %v1304
      %v1306 = vpop.f32.mrb[0].mxu0
      %v1307 = vpop.f32.mrb[0].mxu0
      %v1308 = vadd.f32 0.0, %v1307
      %v1309 = vpop.f32.mrb[0].mxu0
      %1310 = vmatprep.mubr.bf16.mxu0 0
      %1311 = vmatmul.mubr.bf16.gmra.mrb[0].mxu0 %v1099
      %v1312 = vpop.f32.mrb[0].mxu0
      %v1313 = vadd.f32 0.0, %v1312
      %v1314 = vpop.f32.mrb[0].mxu0
      %v1315 = vpop.f32.mrb[0].mxu0
      %v1316 = vadd.f32 0.0, %v1315
      %v1317 = vpop.f32.mrb[0].mxu0
      %1318 = vmatprep.mubr.bf16.mxu0 0
      %1319 = vmatmul.mubr.bf16.gmra.mrb[0].mxu0 %v1100
      %v1320 = vpop.f32.mrb[0].mxu0
      %v1321 = vadd.f32 0.0, %v1320
      %v1322 = vpop.f32.mrb[0].mxu0
      %v1323 = vpop.f32.mrb[0].mxu0
      %v1324 = vadd.f32 0.0, %v1323
      %v1325 = vpop.f32.mrb[0].mxu0
      %1326 = vdwg.mxu0
      %v1327 = vadd.f32 %v1020, %v1201
      %v1328 = vadd.f32 %v1021, %v1204
      %v1329 = vadd.f32 %v1022, %v1209
      %v1330 = vadd.f32 %v1023, %v1212
      %v1331 = vadd.f32 %v1024, %v1217
      %v1332 = vadd.f32 %v1025, %v1220
      %v1333 = vadd.f32 %v1026, %v1225
      %v1334 = vadd.f32 %v1027, %v1228
      %v1335 = vadd.f32 %v1028, %v1233
      %v1336 = vadd.f32 %v1029, %v1236
      %v1337 = vadd.f32 %v1030, %v1241
      %v1338 = vadd.f32 %v1031, %v1244
      %v1339 = vadd.f32 %v1032, %v1249
      %v1340 = vadd.f32 %v1033, %v1252
      %v1341 = vadd.f32 %v1034, %v1257
      %v1342 = vadd.f32 %v1035, %v1260
      %v1343 = vadd.f32 %v1036, %v1265
      %v1344 = vadd.f32 %v1037, %v1268
      %v1345 = vadd.f32 %v1038, %v1273
      %v1346 = vadd.f32 %v1039, %v1276
      %v1347 = vadd.f32 %v1040, %v1281
      %v1348 = vadd.f32 %v1041, %v1284
      %v1349 = vadd.f32 %v1042, %v1289
      %v1350 = vadd.f32 %v1043, %v1292
      %v1351 = vadd.f32 %v1044, %v1297
      %v1352 = vadd.f32 %v1045, %v1300
      %v1353 = vadd.f32 %v1046, %v1305
      %v1354 = vadd.f32 %v1047, %v1308
      %v1355 = vadd.f32 %v1048, %v1313
      %v1356 = vadd.f32 %v1049, %v1316
      %v1357 = vadd.f32 %v1050, %v1321
      %v1358 = vadd.f32 %v1051, %v1324
      %v1359 = vld [vmem:[%s1052 + $0x1] sm:$0xff]
      %v1360 = vld [vmem:[%s1052 + $0x9] sm:$0xff]
      %v1361 = vld [vmem:[%s1052 + $0x19] sm:$0xff]
      %v1362 = vld [vmem:[%s1052 + $0x21] sm:$0xff]
      %v1363 = vld [vmem:[%s1052 + $0x31] sm:$0xff]
      %v1364 = vld [vmem:[%s1052 + $0x39] sm:$0xff]
      %v1365 = vld [vmem:[%s1052 + $0x49] sm:$0xff]
      %v1366 = vld [vmem:[%s1052 + $0x51] sm:$0xff]
      %v1367 = vld [vmem:[%s1052 + $0x61] sm:$0xff]
      %v1368 = vld [vmem:[%s1052 + $0x69] sm:$0xff]
      %v1369 = vld [vmem:[%s1052 + $0x79] sm:$0xff]
      %v1370 = vld [vmem:[%s1052 + $0x81] sm:$0xff]
      %v1371 = vld [vmem:[%s1052 + $0x91] sm:$0xff]
      %v1372 = vld [vmem:[%s1052 + $0x99] sm:$0xff]
      %v1373 = vld [vmem:[%s1052 + $0xa9] sm:$0xff]
      %v1374 = vld [vmem:[%s1052 + $0xb1] sm:$0xff]
      %v1375 = vld [vmem:[%s1052 + $0xc1] sm:$0xff]
      %v1376 = vld [vmem:[%s1052 + $0xc9] sm:$0xff]
      %v1377 = vld [vmem:[%s1052 + $0xd9] sm:$0xff]
      %v1378 = vld [vmem:[%s1052 + $0xe1] sm:$0xff]
      %v1379 = vld [vmem:[%s1052 + $0xf1] sm:$0xff]
      %v1380 = vld [vmem:[%s1052 + $0xf9] sm:$0xff]
      %v1381 = vld [vmem:[%s1052 + $0x109] sm:$0xff]
      %v1382 = vld [vmem:[%s1052 + $0x111] sm:$0xff]
      %v1383 = vld [vmem:[%s1052 + $0x121] sm:$0xff]
      %v1384 = vld [vmem:[%s1052 + $0x129] sm:$0xff]
      %v1385 = vld [vmem:[%s1052 + $0x139] sm:$0xff]
      %v1386 = vld [vmem:[%s1052 + $0x141] sm:$0xff]
      %v1387 = vld [vmem:[%s1052 + $0x151] sm:$0xff]
      %v1388 = vld [vmem:[%s1052 + $0x159] sm:$0xff]
      %v1389 = vld [vmem:[%s1052 + $0x169] sm:$0xff]
      %v1390 = vld [vmem:[%s1052 + $0x171] sm:$0xff]
      %v1391 = vpack.c.bf16 %v1360, %v1359
      %v1392 = vpack.c.bf16 %v1362, %v1361
      %v1393 = vpack.c.bf16 %v1364, %v1363
      %v1394 = vpack.c.bf16 %v1366, %v1365
      %v1395 = vpack.c.bf16 %v1368, %v1367
      %v1396 = vpack.c.bf16 %v1370, %v1369
      %v1397 = vpack.c.bf16 %v1372, %v1371
      %v1398 = vpack.c.bf16 %v1374, %v1373
      %v1399 = vpack.c.bf16 %v1376, %v1375
      %v1400 = vpack.c.bf16 %v1378, %v1377
      %v1401 = vpack.c.bf16 %v1380, %v1379
      %v1402 = vpack.c.bf16 %v1382, %v1381
      %v1403 = vpack.c.bf16 %v1384, %v1383
      %v1404 = vpack.c.bf16 %v1386, %v1385
      %v1405 = vpack.c.bf16 %v1388, %v1387
      %v1406 = vpack.c.bf16 %v1390, %v1389
      %s1407 = scalar_lea.vmem %s1, 256
      %v1408 = vld [vmem:[%s1407] sm:$0xf]
      %v1409 = vld [vmem:[%s1407 + $0x4] sm:$0xf]
      %v1410 = vld [vmem:[%s1407 + $0x8] sm:$0xf]
      %v1411 = vld [vmem:[%s1407 + $0xc] sm:$0xf]
      %v1412 = vld [vmem:[%s1407 + $0x10] sm:$0xf]
      %v1413 = vld [vmem:[%s1407 + $0x14] sm:$0xf]
      %v1414 = vld [vmem:[%s1407 + $0x18] sm:$0xf]
      %v1415 = vld [vmem:[%s1407 + $0x1c] sm:$0xf]
      %v1416 = vld [vmem:[%s1407 + $0x20] sm:$0xf]
      %v1417 = vld [vmem:[%s1407 + $0x24] sm:$0xf]
      %v1418 = vld [vmem:[%s1407 + $0x28] sm:$0xf]
      %v1419 = vld [vmem:[%s1407 + $0x2c] sm:$0xf]
      %v1420 = vld [vmem:[%s1407 + $0x30] sm:$0xf]
      %v1421 = vld [vmem:[%s1407 + $0x34] sm:$0xf]
      %v1422 = vld [vmem:[%s1407 + $0x38] sm:$0xf]
      %v1423 = vld [vmem:[%s1407 + $0x3c] sm:$0xf]
      %v1440 = vunpack.c.l.b16 %v1408
      %v1441 = vunpack.c.l.b16 %v1409
      %v1442 = vunpack.c.l.b16 %v1410
      %v1443 = vunpack.c.l.b16 %v1411
      %v1444 = vunpack.c.l.b16 %v1412
      %v1445 = vunpack.c.l.b16 %v1413
      %v1446 = vunpack.c.l.b16 %v1414
      %v1447 = vunpack.c.l.b16 %v1415
      %v1448 = vunpack.c.l.b16 %v1416
      %v1449 = vunpack.c.l.b16 %v1417
      %v1450 = vunpack.c.l.b16 %v1418
      %v1451 = vunpack.c.l.b16 %v1419
      %v1452 = vunpack.c.l.b16 %v1420
      %v1453 = vunpack.c.l.b16 %v1421
      %v1454 = vunpack.c.l.b16 %v1422
      %v1455 = vunpack.c.l.b16 %v1423
      %v1456 = vpack.c.b16 %v1441, %v1440
      %v1457 = vpack.c.b16 %v1443, %v1442
      %v1458 = vpack.c.b16 %v1445, %v1444
      %v1459 = vpack.c.b16 %v1447, %v1446
      %v1460 = vpack.c.b16 %v1449, %v1448
      %v1461 = vpack.c.b16 %v1451, %v1450
      %v1462 = vpack.c.b16 %v1453, %v1452
      %v1463 = vpack.c.b16 %v1455, %v1454
      %1472 = vmatprep.subr.bf16.mxu0 0
      %1473 = vmatpush1.bf16.msra.mxu0 %v1456
      %1474 = vmatprep.subr.bf16.mxu0 0
      %1475 = vmatpush1.bf16.msra.mxu0 %v1457
      %1476 = vmatprep.subr.bf16.mxu0 0
      %1477 = vmatpush1.bf16.msra.mxu0 %v1458
      %1478 = vmatprep.subr.bf16.mxu0 0
      %1479 = vmatpush1.bf16.msra.mxu0 %v1459
      %1480 = vmatprep.subr.bf16.mxu0 0
      %1481 = vmatpush1.bf16.msra.mxu0 %v1460
      %1482 = vmatprep.subr.bf16.mxu0 0
      %1483 = vmatpush1.bf16.msra.mxu0 %v1461
      %1484 = vmatprep.subr.bf16.mxu0 0
      %1485 = vmatpush1.bf16.msra.mxu0 %v1462
      %1486 = vmatprep.subr.bf16.mxu0 0
      %1487 = vmatpush1.bf16.msra.mxu0 %v1463
      %1488 = vmatprep.subr.bf16.mxu0 0
      %1489 = vmatpush1.bf16.msra.mxu0 0
      %1490 = vmatprep.subr.bf16.mxu0 0
      %1491 = vmatpush1.bf16.msra.mxu0 0
      %1492 = vmatprep.subr.bf16.mxu0 0
      %1493 = vmatpush1.bf16.msra.mxu0 0
      %1494 = vmatprep.subr.bf16.mxu0 0
      %1495 = vmatpush1.bf16.msra.mxu0 0
      %1496 = vmatprep.subr.bf16.mxu0 0
      %1497 = vmatpush1.bf16.msra.mxu0 0
      %1498 = vmatprep.subr.bf16.mxu0 0
      %1499 = vmatpush1.bf16.msra.mxu0 0
      %1500 = vmatprep.subr.bf16.mxu0 0
      %1501 = vmatpush1.bf16.msra.mxu0 0
      %1502 = vmatprep.subr.bf16.mxu0 0
      %1503 = vmatpush1.bf16.msra.mxu0 0
      %1504 = vmatprep.mubr.bf16.mxu0 0
      %1505 = vmatmul.mubr.bf16.gmra.mrb[0].mxu0 %v1391
      %v1506 = vpop.f32.mrb[0].mxu0
      %v1507 = vadd.f32 0.0, %v1506
      %v1508 = vpop.f32.mrb[0].mxu0
      %v1509 = vpop.f32.mrb[0].mxu0
      %v1510 = vadd.f32 0.0, %v1509
      %v1511 = vpop.f32.mrb[0].mxu0
      %1512 = vmatprep.mubr.bf16.mxu0 0
      %1513 = vmatmul.mubr.bf16.gmra.mrb[0].mxu0 %v1392
      %v1514 = vpop.f32.mrb[0].mxu0
      %v1515 = vadd.f32 0.0, %v1514
      %v1516 = vpop.f32.mrb[0].mxu0
      %v1517 = vpop.f32.mrb[0].mxu0
      %v1518 = vadd.f32 0.0, %v1517
      %v1519 = vpop.f32.mrb[0].mxu0
      %1520 = vmatprep.mubr.bf16.mxu0 0
      %1521 = vmatmul.mubr.bf16.gmra.mrb[0].mxu0 %v1393
      %v1522 = vpop.f32.mrb[0].mxu0
      %v1523 = vadd.f32 0.0, %v1522
      %v1524 = vpop.f32.mrb[0].mxu0
      %v1525 = vpop.f32.mrb[0].mxu0
      %v1526 = vadd.f32 0.0, %v1525
      %v1527 = vpop.f32.mrb[0].mxu0
      %1528 = vmatprep.mubr.bf16.mxu0 0
      %1529 = vmatmul.mubr.bf16.gmra.mrb[0].mxu0 %v1394
      %v1530 = vpop.f32.mrb[0].mxu0
      %v1531 = vadd.f32 0.0, %v1530
      %v1532 = vpop.f32.mrb[0].mxu0
      %v1533 = vpop.f32.mrb[0].mxu0
      %v1534 = vadd.f32 0.0, %v1533
      %v1535 = vpop.f32.mrb[0].mxu0
      %1536 = vmatprep.mubr.bf16.mxu0 0
      %1537 = vmatmul.mubr.bf16.gmra.mrb[0].mxu0 %v1395
      %v1538 = vpop.f32.mrb[0].mxu0
      %v1539 = vadd.f32 0.0, %v1538
      %v1540 = vpop.f32.mrb[0].mxu0
      %v1541 = vpop.f32.mrb[0].mxu0
      %v1542 = vadd.f32 0.0, %v1541
      %v1543 = vpop.f32.mrb[0].mxu0
      %1544 = vmatprep.mubr.bf16.mxu0 0
      %1545 = vmatmul.mubr.bf16.gmra.mrb[0].mxu0 %v1396
      %v1546 = vpop.f32.mrb[0].mxu0
      %v1547 = vadd.f32 0.0, %v1546
      %v1548 = vpop.f32.mrb[0].mxu0
      %v1549 = vpop.f32.mrb[0].mxu0
      %v1550 = vadd.f32 0.0, %v1549
      %v1551 = vpop.f32.mrb[0].mxu0
      %1552 = vmatprep.mubr.bf16.mxu0 0
      %1553 = vmatmul.mubr.bf16.gmra.mrb[0].mxu0 %v1397
      %v1554 = vpop.f32.mrb[0].mxu0
      %v1555 = vadd.f32 0.0, %v1554
      %v1556 = vpop.f32.mrb[0].mxu0
      %v1557 = vpop.f32.mrb[0].mxu0
      %v1558 = vadd.f32 0.0, %v1557
      %v1559 = vpop.f32.mrb[0].mxu0
      %1560 = vmatprep.mubr.bf16.mxu0 0
      %1561 = vmatmul.mubr.bf16.gmra.mrb[0].mxu0 %v1398
      %v1562 = vpop.f32.mrb[0].mxu0
      %v1563 = vadd.f32 0.0, %v1562
      %v1564 = vpop.f32.mrb[0].mxu0
      %v1565 = vpop.f32.mrb[0].mxu0
      %v1566 = vadd.f32 0.0, %v1565
      %v1567 = vpop.f32.mrb[0].mxu0
      %1568 = vmatprep.mubr.bf16.mxu0 0
      %1569 = vmatmul.mubr.bf16.gmra.mrb[0].mxu0 %v1399
      %v1570 = vpop.f32.mrb[0].mxu0
      %v1571 = vadd.f32 0.0, %v1570
      %v1572 = vpop.f32.mrb[0].mxu0
      %v1573 = vpop.f32.mrb[0].mxu0
      %v1574 = vadd.f32 0.0, %v1573
      %v1575 = vpop.f32.mrb[0].mxu0
      %1576 = vmatprep.mubr.bf16.mxu0 0
      %1577 = vmatmul.mubr.bf16.gmra.mrb[0].mxu0 %v1400
      %v1578 = vpop.f32.mrb[0].mxu0
      %v1579 = vadd.f32 0.0, %v1578
      %v1580 = vpop.f32.mrb[0].mxu0
      %v1581 = vpop.f32.mrb[0].mxu0
      %v1582 = vadd.f32 0.0, %v1581
      %v1583 = vpop.f32.mrb[0].mxu0
      %1584 = vmatprep.mubr.bf16.mxu0 0
      %1585 = vmatmul.mubr.bf16.gmra.mrb[0].mxu0 %v1401
      %v1586 = vpop.f32.mrb[0].mxu0
      %v1587 = vadd.f32 0.0, %v1586
      %v1588 = vpop.f32.mrb[0].mxu0
      %v1589 = vpop.f32.mrb[0].mxu0
      %v1590 = vadd.f32 0.0, %v1589
      %v1591 = vpop.f32.mrb[0].mxu0
      %1592 = vmatprep.mubr.bf16.mxu0 0
      %1593 = vmatmul.mubr.bf16.gmra.mrb[0].mxu0 %v1402
      %v1594 = vpop.f32.mrb[0].mxu0
      %v1595 = vadd.f32 0.0, %v1594
      %v1596 = vpop.f32.mrb[0].mxu0
      %v1597 = vpop.f32.mrb[0].mxu0
      %v1598 = vadd.f32 0.0, %v1597
      %v1599 = vpop.f32.mrb[0].mxu0
      %1600 = vmatprep.mubr.bf16.mxu0 0
      %1601 = vmatmul.mubr.bf16.gmra.mrb[0].mxu0 %v1403
      %v1602 = vpop.f32.mrb[0].mxu0
      %v1603 = vadd.f32 0.0, %v1602
      %v1604 = vpop.f32.mrb[0].mxu0
      %v1605 = vpop.f32.mrb[0].mxu0
      %v1606 = vadd.f32 0.0, %v1605
      %v1607 = vpop.f32.mrb[0].mxu0
      %1608 = vmatprep.mubr.bf16.mxu0 0
      %1609 = vmatmul.mubr.bf16.gmra.mrb[0].mxu0 %v1404
      %v1610 = vpop.f32.mrb[0].mxu0
      %v1611 = vadd.f32 0.0, %v1610
      %v1612 = vpop.f32.mrb[0].mxu0
      %v1613 = vpop.f32.mrb[0].mxu0
      %v1614 = vadd.f32 0.0, %v1613
      %v1615 = vpop.f32.mrb[0].mxu0
      %1616 = vmatprep.mubr.bf16.mxu0 0
      %1617 = vmatmul.mubr.bf16.gmra.mrb[0].mxu0 %v1405
      %v1618 = vpop.f32.mrb[0].mxu0
      %v1619 = vadd.f32 0.0, %v1618
      %v1620 = vpop.f32.mrb[0].mxu0
      %v1621 = vpop.f32.mrb[0].mxu0
      %v1622 = vadd.f32 0.0, %v1621
      %v1623 = vpop.f32.mrb[0].mxu0
      %1624 = vmatprep.mubr.bf16.mxu0 0
      %1625 = vmatmul.mubr.bf16.gmra.mrb[0].mxu0 %v1406
      %v1626 = vpop.f32.mrb[0].mxu0
      %v1627 = vadd.f32 0.0, %v1626
      %v1628 = vpop.f32.mrb[0].mxu0
      %v1629 = vpop.f32.mrb[0].mxu0
      %v1630 = vadd.f32 0.0, %v1629
      %v1631 = vpop.f32.mrb[0].mxu0
      %1632 = vdwg.mxu0
      %v1633 = vadd.f32 %v1327, %v1507
      %v1634 = vadd.f32 %v1328, %v1510
      %v1635 = vadd.f32 %v1329, %v1515
      %v1636 = vadd.f32 %v1330, %v1518
      %v1637 = vadd.f32 %v1331, %v1523
      %v1638 = vadd.f32 %v1332, %v1526
      %v1639 = vadd.f32 %v1333, %v1531
      %v1640 = vadd.f32 %v1334, %v1534
      %v1641 = vadd.f32 %v1335, %v1539
      %v1642 = vadd.f32 %v1336, %v1542
      %v1643 = vadd.f32 %v1337, %v1547
      %v1644 = vadd.f32 %v1338, %v1550
      %v1645 = vadd.f32 %v1339, %v1555
      %v1646 = vadd.f32 %v1340, %v1558
      %v1647 = vadd.f32 %v1341, %v1563
      %v1648 = vadd.f32 %v1342, %v1566
      %v1649 = vadd.f32 %v1343, %v1571
      %v1650 = vadd.f32 %v1344, %v1574
      %v1651 = vadd.f32 %v1345, %v1579
      %v1652 = vadd.f32 %v1346, %v1582
      %v1653 = vadd.f32 %v1347, %v1587
      %v1654 = vadd.f32 %v1348, %v1590
      %v1655 = vadd.f32 %v1349, %v1595
      %v1656 = vadd.f32 %v1350, %v1598
      %v1657 = vadd.f32 %v1351, %v1603
      %v1658 = vadd.f32 %v1352, %v1606
      %v1659 = vadd.f32 %v1353, %v1611
      %v1660 = vadd.f32 %v1354, %v1614
      %v1661 = vadd.f32 %v1355, %v1619
      %v1662 = vadd.f32 %v1356, %v1622
      %v1663 = vadd.f32 %v1357, %v1627
      %v1664 = vadd.f32 %v1358, %v1630
      %v1665 = vld [vmem:[%s1052 + $0x2] sm:$0xff]
      %v1666 = vld [vmem:[%s1052 + $0xa] sm:$0xff]
      %v1667 = vld [vmem:[%s1052 + $0x1a] sm:$0xff]
      %v1668 = vld [vmem:[%s1052 + $0x22] sm:$0xff]
      %v1669 = vld [vmem:[%s1052 + $0x32] sm:$0xff]
      %v1670 = vld [vmem:[%s1052 + $0x3a] sm:$0xff]
      %v1671 = vld [vmem:[%s1052 + $0x4a] sm:$0xff]
      %v1672 = vld [vmem:[%s1052 + $0x52] sm:$0xff]
      %v1673 = vld [vmem:[%s1052 + $0x62] sm:$0xff]
      %v1674 = vld [vmem:[%s1052 + $0x6a] sm:$0xff]
      %v1675 = vld [vmem:[%s1052 + $0x7a] sm:$0xff]
      %v1676 = vld [vmem:[%s1052 + $0x82] sm:$0xff]
      %v1677 = vld [vmem:[%s1052 + $0x92] sm:$0xff]
      %v1678 = vld [vmem:[%s1052 + $0x9a] sm:$0xff]
      %v1679 = vld [vmem:[%s1052 + $0xaa] sm:$0xff]
      %v1680 = vld [vmem:[%s1052 + $0xb2] sm:$0xff]
      %v1681 = vld [vmem:[%s1052 + $0xc2] sm:$0xff]
      %v1682 = vld [vmem:[%s1052 + $0xca] sm:$0xff]
      %v1683 = vld [vmem:[%s1052 + $0xda] sm:$0xff]
      %v1684 = vld [vmem:[%s1052 + $0xe2] sm:$0xff]
      %v1685 = vld [vmem:[%s1052 + $0xf2] sm:$0xff]
      %v1686 = vld [vmem:[%s1052 + $0xfa] sm:$0xff]
      %v1687 = vld [vmem:[%s1052 + $0x10a] sm:$0xff]
      %v1688 = vld [vmem:[%s1052 + $0x112] sm:$0xff]
      %v1689 = vld [vmem:[%s1052 + $0x122] sm:$0xff]
      %v1690 = vld [vmem:[%s1052 + $0x12a] sm:$0xff]
      %v1691 = vld [vmem:[%s1052 + $0x13a] sm:$0xff]
      %v1692 = vld [vmem:[%s1052 + $0x142] sm:$0xff]
      %v1693 = vld [vmem:[%s1052 + $0x152] sm:$0xff]
      %v1694 = vld [vmem:[%s1052 + $0x15a] sm:$0xff]
      %v1695 = vld [vmem:[%s1052 + $0x16a] sm:$0xff]
      %v1696 = vld [vmem:[%s1052 + $0x172] sm:$0xff]
      %v1697 = vpack.c.bf16 %v1666, %v1665
      %v1698 = vpack.c.bf16 %v1668, %v1667
      %v1699 = vpack.c.bf16 %v1670, %v1669
      %v1700 = vpack.c.bf16 %v1672, %v1671
      %v1701 = vpack.c.bf16 %v1674, %v1673
      %v1702 = vpack.c.bf16 %v1676, %v1675
      %v1703 = vpack.c.bf16 %v1678, %v1677
      %v1704 = vpack.c.bf16 %v1680, %v1679
      %v1705 = vpack.c.bf16 %v1682, %v1681
      %v1706 = vpack.c.bf16 %v1684, %v1683
      %v1707 = vpack.c.bf16 %v1686, %v1685
      %v1708 = vpack.c.bf16 %v1688, %v1687
      %v1709 = vpack.c.bf16 %v1690, %v1689
      %v1710 = vpack.c.bf16 %v1692, %v1691
      %v1711 = vpack.c.bf16 %v1694, %v1693
      %v1712 = vpack.c.bf16 %v1696, %v1695
      %s1713 = scalar_lea.vmem %s1, 320
      %v1714 = vld [vmem:[%s1713] sm:$0xf]
      %v1715 = vld [vmem:[%s1713 + $0x4] sm:$0xf]
      %v1716 = vld [vmem:[%s1713 + $0x8] sm:$0xf]
      %v1717 = vld [vmem:[%s1713 + $0xc] sm:$0xf]
      %v1718 = vld [vmem:[%s1713 + $0x10] sm:$0xf]
      %v1719 = vld [vmem:[%s1713 + $0x14] sm:$0xf]
      %v1720 = vld [vmem:[%s1713 + $0x18] sm:$0xf]
      %v1721 = vld [vmem:[%s1713 + $0x1c] sm:$0xf]
      %v1722 = vld [vmem:[%s1713 + $0x20] sm:$0xf]
      %v1723 = vld [vmem:[%s1713 + $0x24] sm:$0xf]
      %v1724 = vld [vmem:[%s1713 + $0x28] sm:$0xf]
      %v1725 = vld [vmem:[%s1713 + $0x2c] sm:$0xf]
      %v1726 = vld [vmem:[%s1713 + $0x30] sm:$0xf]
      %v1727 = vld [vmem:[%s1713 + $0x34] sm:$0xf]
      %v1728 = vld [vmem:[%s1713 + $0x38] sm:$0xf]
      %v1729 = vld [vmem:[%s1713 + $0x3c] sm:$0xf]
      %v1746 = vunpack.c.l.b16 %v1714
      %v1747 = vunpack.c.l.b16 %v1715
      %v1748 = vunpack.c.l.b16 %v1716
      %v1749 = vunpack.c.l.b16 %v1717
      %v1750 = vunpack.c.l.b16 %v1718
      %v1751 = vunpack.c.l.b16 %v1719
      %v1752 = vunpack.c.l.b16 %v1720
      %v1753 = vunpack.c.l.b16 %v1721
      %v1754 = vunpack.c.l.b16 %v1722
      %v1755 = vunpack.c.l.b16 %v1723
      %v1756 = vunpack.c.l.b16 %v1724
      %v1757 = vunpack.c.l.b16 %v1725
      %v1758 = vunpack.c.l.b16 %v1726
      %v1759 = vunpack.c.l.b16 %v1727
      %v1760 = vunpack.c.l.b16 %v1728
      %v1761 = vunpack.c.l.b16 %v1729
      %v1762 = vpack.c.b16 %v1747, %v1746
      %v1763 = vpack.c.b16 %v1749, %v1748
      %v1764 = vpack.c.b16 %v1751, %v1750
      %v1765 = vpack.c.b16 %v1753, %v1752
      %v1766 = vpack.c.b16 %v1755, %v1754
      %v1767 = vpack.c.b16 %v1757, %v1756
      %v1768 = vpack.c.b16 %v1759, %v1758
      %v1769 = vpack.c.b16 %v1761, %v1760
      %1778 = vmatprep.subr.bf16.mxu0 0
      %1779 = vmatpush1.bf16.msra.mxu0 %v1762
      %1780 = vmatprep.subr.bf16.mxu0 0
      %1781 = vmatpush1.bf16.msra.mxu0 %v1763
      %1782 = vmatprep.subr.bf16.mxu0 0
      %1783 = vmatpush1.bf16.msra.mxu0 %v1764
      %1784 = vmatprep.subr.bf16.mxu0 0
      %1785 = vmatpush1.bf16.msra.mxu0 %v1765
      %1786 = vmatprep.subr.bf16.mxu0 0
      %1787 = vmatpush1.bf16.msra.mxu0 %v1766
      %1788 = vmatprep.subr.bf16.mxu0 0
      %1789 = vmatpush1.bf16.msra.mxu0 %v1767
      %1790 = vmatprep.subr.bf16.mxu0 0
      %1791 = vmatpush1.bf16.msra.mxu0 %v1768
      %1792 = vmatprep.subr.bf16.mxu0 0
      %1793 = vmatpush1.bf16.msra.mxu0 %v1769
      %1794 = vmatprep.subr.bf16.mxu0 0
      %1795 = vmatpush1.bf16.msra.mxu0 0
      %1796 = vmatprep.subr.bf16.mxu0 0
      %1797 = vmatpush1.bf16.msra.mxu0 0
      %1798 = vmatprep.subr.bf16.mxu0 0
      %1799 = vmatpush1.bf16.msra.mxu0 0
      %1800 = vmatprep.subr.bf16.mxu0 0
      %1801 = vmatpush1.bf16.msra.mxu0 0
      %1802 = vmatprep.subr.bf16.mxu0 0
      %1803 = vmatpush1.bf16.msra.mxu0 0
      %1804 = vmatprep.subr.bf16.mxu0 0
      %1805 = vmatpush1.bf16.msra.mxu0 0
      %1806 = vmatprep.subr.bf16.mxu0 0
      %1807 = vmatpush1.bf16.msra.mxu0 0
      %1808 = vmatprep.subr.bf16.mxu0 0
      %1809 = vmatpush1.bf16.msra.mxu0 0
      %1810 = vmatprep.mubr.bf16.mxu0 0
      %1811 = vmatmul.mubr.bf16.gmra.mrb[0].mxu0 %v1697
      %v1812 = vpop.f32.mrb[0].mxu0
      %v1813 = vadd.f32 0.0, %v1812
      %v1814 = vpop.f32.mrb[0].mxu0
      %v1815 = vpop.f32.mrb[0].mxu0
      %v1816 = vadd.f32 0.0, %v1815
      %v1817 = vpop.f32.mrb[0].mxu0
      %1818 = vmatprep.mubr.bf16.mxu0 0
      %1819 = vmatmul.mubr.bf16.gmra.mrb[0].mxu0 %v1698
      %v1820 = vpop.f32.mrb[0].mxu0
      %v1821 = vadd.f32 0.0, %v1820
      %v1822 = vpop.f32.mrb[0].mxu0
      %v1823 = vpop.f32.mrb[0].mxu0
      %v1824 = vadd.f32 0.0, %v1823
      %v1825 = vpop.f32.mrb[0].mxu0
      %1826 = vmatprep.mubr.bf16.mxu0 0
      %1827 = vmatmul.mubr.bf16.gmra.mrb[0].mxu0 %v1699
      %v1828 = vpop.f32.mrb[0].mxu0
      %v1829 = vadd.f32 0.0, %v1828
      %v1830 = vpop.f32.mrb[0].mxu0
      %v1831 = vpop.f32.mrb[0].mxu0
      %v1832 = vadd.f32 0.0, %v1831
      %v1833 = vpop.f32.mrb[0].mxu0
      %1834 = vmatprep.mubr.bf16.mxu0 0
      %1835 = vmatmul.mubr.bf16.gmra.mrb[0].mxu0 %v1700
      %v1836 = vpop.f32.mrb[0].mxu0
      %v1837 = vadd.f32 0.0, %v1836
      %v1838 = vpop.f32.mrb[0].mxu0
      %v1839 = vpop.f32.mrb[0].mxu0
      %v1840 = vadd.f32 0.0, %v1839
      %v1841 = vpop.f32.mrb[0].mxu0
      %1842 = vmatprep.mubr.bf16.mxu0 0
      %1843 = vmatmul.mubr.bf16.gmra.mrb[0].mxu0 %v1701
      %v1844 = vpop.f32.mrb[0].mxu0
      %v1845 = vadd.f32 0.0, %v1844
      %v1846 = vpop.f32.mrb[0].mxu0
      %v1847 = vpop.f32.mrb[0].mxu0
      %v1848 = vadd.f32 0.0, %v1847
      %v1849 = vpop.f32.mrb[0].mxu0
      %1850 = vmatprep.mubr.bf16.mxu0 0
      %1851 = vmatmul.mubr.bf16.gmra.mrb[0].mxu0 %v1702
      %v1852 = vpop.f32.mrb[0].mxu0
      %v1853 = vadd.f32 0.0, %v1852
      %v1854 = vpop.f32.mrb[0].mxu0
      %v1855 = vpop.f32.mrb[0].mxu0
      %v1856 = vadd.f32 0.0, %v1855
      %v1857 = vpop.f32.mrb[0].mxu0
      %1858 = vmatprep.mubr.bf16.mxu0 0
      %1859 = vmatmul.mubr.bf16.gmra.mrb[0].mxu0 %v1703
      %v1860 = vpop.f32.mrb[0].mxu0
      %v1861 = vadd.f32 0.0, %v1860
      %v1862 = vpop.f32.mrb[0].mxu0
      %v1863 = vpop.f32.mrb[0].mxu0
      %v1864 = vadd.f32 0.0, %v1863
      %v1865 = vpop.f32.mrb[0].mxu0
      %1866 = vmatprep.mubr.bf16.mxu0 0
      %1867 = vmatmul.mubr.bf16.gmra.mrb[0].mxu0 %v1704
      %v1868 = vpop.f32.mrb[0].mxu0
      %v1869 = vadd.f32 0.0, %v1868
      %v1870 = vpop.f32.mrb[0].mxu0
      %v1871 = vpop.f32.mrb[0].mxu0
      %v1872 = vadd.f32 0.0, %v1871
      %v1873 = vpop.f32.mrb[0].mxu0
      %1874 = vmatprep.mubr.bf16.mxu0 0
      %1875 = vmatmul.mubr.bf16.gmra.mrb[0].mxu0 %v1705
      %v1876 = vpop.f32.mrb[0].mxu0
      %v1877 = vadd.f32 0.0, %v1876
      %v1878 = vpop.f32.mrb[0].mxu0
      %v1879 = vpop.f32.mrb[0].mxu0
      %v1880 = vadd.f32 0.0, %v1879
      %v1881 = vpop.f32.mrb[0].mxu0
      %1882 = vmatprep.mubr.bf16.mxu0 0
      %1883 = vmatmul.mubr.bf16.gmra.mrb[0].mxu0 %v1706
      %v1884 = vpop.f32.mrb[0].mxu0
      %v1885 = vadd.f32 0.0, %v1884
      %v1886 = vpop.f32.mrb[0].mxu0
      %v1887 = vpop.f32.mrb[0].mxu0
      %v1888 = vadd.f32 0.0, %v1887
      %v1889 = vpop.f32.mrb[0].mxu0
      %1890 = vmatprep.mubr.bf16.mxu0 0
      %1891 = vmatmul.mubr.bf16.gmra.mrb[0].mxu0 %v1707
      %v1892 = vpop.f32.mrb[0].mxu0
      %v1893 = vadd.f32 0.0, %v1892
      %v1894 = vpop.f32.mrb[0].mxu0
      %v1895 = vpop.f32.mrb[0].mxu0
      %v1896 = vadd.f32 0.0, %v1895
      %v1897 = vpop.f32.mrb[0].mxu0
      %1898 = vmatprep.mubr.bf16.mxu0 0
      %1899 = vmatmul.mubr.bf16.gmra.mrb[0].mxu0 %v1708
      %v1900 = vpop.f32.mrb[0].mxu0
      %v1901 = vadd.f32 0.0, %v1900
      %v1902 = vpop.f32.mrb[0].mxu0
      %v1903 = vpop.f32.mrb[0].mxu0
      %v1904 = vadd.f32 0.0, %v1903
      %v1905 = vpop.f32.mrb[0].mxu0
      %1906 = vmatprep.mubr.bf16.mxu0 0
      %1907 = vmatmul.mubr.bf16.gmra.mrb[0].mxu0 %v1709
      %v1908 = vpop.f32.mrb[0].mxu0
      %v1909 = vadd.f32 0.0, %v1908
      %v1910 = vpop.f32.mrb[0].mxu0
      %v1911 = vpop.f32.mrb[0].mxu0
      %v1912 = vadd.f32 0.0, %v1911
      %v1913 = vpop.f32.mrb[0].mxu0
      %1914 = vmatprep.mubr.bf16.mxu0 0
      %1915 = vmatmul.mubr.bf16.gmra.mrb[0].mxu0 %v1710
      %v1916 = vpop.f32.mrb[0].mxu0
      %v1917 = vadd.f32 0.0, %v1916
      %v1918 = vpop.f32.mrb[0].mxu0
      %v1919 = vpop.f32.mrb[0].mxu0
      %v1920 = vadd.f32 0.0, %v1919
      %v1921 = vpop.f32.mrb[0].mxu0
      %1922 = vmatprep.mubr.bf16.mxu0 0
      %1923 = vmatmul.mubr.bf16.gmra.mrb[0].mxu0 %v1711
      %v1924 = vpop.f32.mrb[0].mxu0
      %v1925 = vadd.f32 0.0, %v1924
      %v1926 = vpop.f32.mrb[0].mxu0
      %v1927 = vpop.f32.mrb[0].mxu0
      %v1928 = vadd.f32 0.0, %v1927
      %v1929 = vpop.f32.mrb[0].mxu0
      %1930 = vmatprep.mubr.bf16.mxu0 0
      %1931 = vmatmul.mubr.bf16.gmra.mrb[0].mxu0 %v1712
      %v1932 = vpop.f32.mrb[0].mxu0
      %v1933 = vadd.f32 0.0, %v1932
      %v1934 = vpop.f32.mrb[0].mxu0
      %v1935 = vpop.f32.mrb[0].mxu0
      %v1936 = vadd.f32 0.0, %v1935
      %v1937 = vpop.f32.mrb[0].mxu0
      %1938 = vdwg.mxu0
      %v1939 = vadd.f32 %v1633, %v1813
      %v1940 = vadd.f32 %v1634, %v1816
      %v1941 = vadd.f32 %v1635, %v1821
      %v1942 = vadd.f32 %v1636, %v1824
      %v1943 = vadd.f32 %v1637, %v1829
      %v1944 = vadd.f32 %v1638, %v1832
      %v1945 = vadd.f32 %v1639, %v1837
      %v1946 = vadd.f32 %v1640, %v1840
      %v1947 = vadd.f32 %v1641, %v1845
      %v1948 = vadd.f32 %v1642, %v1848
      %v1949 = vadd.f32 %v1643, %v1853
      %v1950 = vadd.f32 %v1644, %v1856
      %v1951 = vadd.f32 %v1645, %v1861
      %v1952 = vadd.f32 %v1646, %v1864
      %v1953 = vadd.f32 %v1647, %v1869
      %v1954 = vadd.f32 %v1648, %v1872
      %v1955 = vadd.f32 %v1649, %v1877
      %v1956 = vadd.f32 %v1650, %v1880
      %v1957 = vadd.f32 %v1651, %v1885
      %v1958 = vadd.f32 %v1652, %v1888
      %v1959 = vadd.f32 %v1653, %v1893
      %v1960 = vadd.f32 %v1654, %v1896
      %v1961 = vadd.f32 %v1655, %v1901
      %v1962 = vadd.f32 %v1656, %v1904
      %v1963 = vadd.f32 %v1657, %v1909
      %v1964 = vadd.f32 %v1658, %v1912
      %v1965 = vadd.f32 %v1659, %v1917
      %v1966 = vadd.f32 %v1660, %v1920
      %v1967 = vadd.f32 %v1661, %v1925
      %v1968 = vadd.f32 %v1662, %v1928
      %v1969 = vadd.f32 %v1663, %v1933
      %v1970 = vadd.f32 %v1664, %v1936
      %s1971 = scalar_lea.vmem %s192, 48
      %v1972 = vld [vmem:[%s1971] sm:$0xff]
      %v1973 = vld [vmem:[%s1971 + $0x8] sm:$0xff]
      %v1974 = vld [vmem:[%s1971 + $0x18] sm:$0xff]
      %v1975 = vld [vmem:[%s1971 + $0x20] sm:$0xff]
      %v1976 = vld [vmem:[%s1971 + $0x30] sm:$0xff]
      %v1977 = vld [vmem:[%s1971 + $0x38] sm:$0xff]
      %v1978 = vld [vmem:[%s1971 + $0x48] sm:$0xff]
      %v1979 = vld [vmem:[%s1971 + $0x50] sm:$0xff]
      %v1980 = vld [vmem:[%s1971 + $0x60] sm:$0xff]
      %v1981 = vld [vmem:[%s1971 + $0x68] sm:$0xff]
      %v1982 = vld [vmem:[%s1971 + $0x78] sm:$0xff]
      %v1983 = vld [vmem:[%s1971 + $0x80] sm:$0xff]
      %v1984 = vld [vmem:[%s1971 + $0x90] sm:$0xff]
      %v1985 = vld [vmem:[%s1971 + $0x98] sm:$0xff]
      %v1986 = vld [vmem:[%s1971 + $0xa8] sm:$0xff]
      %v1987 = vld [vmem:[%s1971 + $0xb0] sm:$0xff]
      %v1988 = vld [vmem:[%s1971 + $0xc0] sm:$0xff]
      %v1989 = vld [vmem:[%s1971 + $0xc8] sm:$0xff]
      %v1990 = vld [vmem:[%s1971 + $0xd8] sm:$0xff]
      %v1991 = vld [vmem:[%s1971 + $0xe0] sm:$0xff]
      %v1992 = vld [vmem:[%s1971 + $0xf0] sm:$0xff]
      %v1993 = vld [vmem:[%s1971 + $0xf8] sm:$0xff]
      %v1994 = vld [vmem:[%s1971 + $0x108] sm:$0xff]
      %v1995 = vld [vmem:[%s1971 + $0x110] sm:$0xff]
      %v1996 = vld [vmem:[%s1971 + $0x120] sm:$0xff]
      %v1997 = vld [vmem:[%s1971 + $0x128] sm:$0xff]
      %v1998 = vld [vmem:[%s1971 + $0x138] sm:$0xff]
      %v1999 = vld [vmem:[%s1971 + $0x140] sm:$0xff]
      %v2000 = vld [vmem:[%s1971 + $0x150] sm:$0xff]
      %v2001 = vld [vmem:[%s1971 + $0x158] sm:$0xff]
      %v2002 = vld [vmem:[%s1971 + $0x168] sm:$0xff]
      %v2003 = vld [vmem:[%s1971 + $0x170] sm:$0xff]
      %v2004 = vpack.c.bf16 %v1973, %v1972
      %v2005 = vpack.c.bf16 %v1975, %v1974
      %v2006 = vpack.c.bf16 %v1977, %v1976
      %v2007 = vpack.c.bf16 %v1979, %v1978
      %v2008 = vpack.c.bf16 %v1981, %v1980
      %v2009 = vpack.c.bf16 %v1983, %v1982
      %v2010 = vpack.c.bf16 %v1985, %v1984
      %v2011 = vpack.c.bf16 %v1987, %v1986
      %v2012 = vpack.c.bf16 %v1989, %v1988
      %v2013 = vpack.c.bf16 %v1991, %v1990
      %v2014 = vpack.c.bf16 %v1993, %v1992
      %v2015 = vpack.c.bf16 %v1995, %v1994
      %v2016 = vpack.c.bf16 %v1997, %v1996
      %v2017 = vpack.c.bf16 %v1999, %v1998
      %v2018 = vpack.c.bf16 %v2001, %v2000
      %v2019 = vpack.c.bf16 %v2003, %v2002
      %s2020 = scalar_lea.vmem %s1, 384
      %v2021 = vld [vmem:[%s2020] sm:$0xf]
      %v2022 = vld [vmem:[%s2020 + $0x4] sm:$0xf]
      %v2023 = vld [vmem:[%s2020 + $0x8] sm:$0xf]
      %v2024 = vld [vmem:[%s2020 + $0xc] sm:$0xf]
      %v2025 = vld [vmem:[%s2020 + $0x10] sm:$0xf]
      %v2026 = vld [vmem:[%s2020 + $0x14] sm:$0xf]
      %v2027 = vld [vmem:[%s2020 + $0x18] sm:$0xf]
      %v2028 = vld [vmem:[%s2020 + $0x1c] sm:$0xf]
      %v2029 = vld [vmem:[%s2020 + $0x20] sm:$0xf]
      %v2030 = vld [vmem:[%s2020 + $0x24] sm:$0xf]
      %v2031 = vld [vmem:[%s2020 + $0x28] sm:$0xf]
      %v2032 = vld [vmem:[%s2020 + $0x2c] sm:$0xf]
      %v2033 = vld [vmem:[%s2020 + $0x30] sm:$0xf]
      %v2034 = vld [vmem:[%s2020 + $0x34] sm:$0xf]
      %v2035 = vld [vmem:[%s2020 + $0x38] sm:$0xf]
      %v2036 = vld [vmem:[%s2020 + $0x3c] sm:$0xf]
      %v2053 = vunpack.c.l.b16 %v2021
      %v2054 = vunpack.c.l.b16 %v2022
      %v2055 = vunpack.c.l.b16 %v2023
      %v2056 = vunpack.c.l.b16 %v2024
      %v2057 = vunpack.c.l.b16 %v2025
      %v2058 = vunpack.c.l.b16 %v2026
      %v2059 = vunpack.c.l.b16 %v2027
      %v2060 = vunpack.c.l.b16 %v2028
      %v2061 = vunpack.c.l.b16 %v2029
      %v2062 = vunpack.c.l.b16 %v2030
      %v2063 = vunpack.c.l.b16 %v2031
      %v2064 = vunpack.c.l.b16 %v2032
      %v2065 = vunpack.c.l.b16 %v2033
      %v2066 = vunpack.c.l.b16 %v2034
      %v2067 = vunpack.c.l.b16 %v2035
      %v2068 = vunpack.c.l.b16 %v2036
      %v2069 = vpack.c.b16 %v2054, %v2053
      %v2070 = vpack.c.b16 %v2056, %v2055
      %v2071 = vpack.c.b16 %v2058, %v2057
      %v2072 = vpack.c.b16 %v2060, %v2059
      %v2073 = vpack.c.b16 %v2062, %v2061
      %v2074 = vpack.c.b16 %v2064, %v2063
      %v2075 = vpack.c.b16 %v2066, %v2065
      %v2076 = vpack.c.b16 %v2068, %v2067
      %2085 = vmatprep.subr.bf16.mxu0 0
      %2086 = vmatpush1.bf16.msra.mxu0 %v2069
      %2087 = vmatprep.subr.bf16.mxu0 0
      %2088 = vmatpush1.bf16.msra.mxu0 %v2070
      %2089 = vmatprep.subr.bf16.mxu0 0
      %2090 = vmatpush1.bf16.msra.mxu0 %v2071
      %2091 = vmatprep.subr.bf16.mxu0 0
      %2092 = vmatpush1.bf16.msra.mxu0 %v2072
      %2093 = vmatprep.subr.bf16.mxu0 0
      %2094 = vmatpush1.bf16.msra.mxu0 %v2073
      %2095 = vmatprep.subr.bf16.mxu0 0
      %2096 = vmatpush1.bf16.msra.mxu0 %v2074
      %2097 = vmatprep.subr.bf16.mxu0 0
      %2098 = vmatpush1.bf16.msra.mxu0 %v2075
      %2099 = vmatprep.subr.bf16.mxu0 0
      %2100 = vmatpush1.bf16.msra.mxu0 %v2076
      %2101 = vmatprep.subr.bf16.mxu0 0
      %2102 = vmatpush1.bf16.msra.mxu0 0
      %2103 = vmatprep.subr.bf16.mxu0 0
      %2104 = vmatpush1.bf16.msra.mxu0 0
      %2105 = vmatprep.subr.bf16.mxu0 0
      %2106 = vmatpush1.bf16.msra.mxu0 0
      %2107 = vmatprep.subr.bf16.mxu0 0
      %2108 = vmatpush1.bf16.msra.mxu0 0
      %2109 = vmatprep.subr.bf16.mxu0 0
      %2110 = vmatpush1.bf16.msra.mxu0 0
      %2111 = vmatprep.subr.bf16.mxu0 0
      %2112 = vmatpush1.bf16.msra.mxu0 0
      %2113 = vmatprep.subr.bf16.mxu0 0
      %2114 = vmatpush1.bf16.msra.mxu0 0
      %2115 = vmatprep.subr.bf16.mxu0 0
      %2116 = vmatpush1.bf16.msra.mxu0 0
      %2117 = vmatprep.mubr.bf16.mxu0 0
      %2118 = vmatmul.mubr.bf16.gmra.mrb[0].mxu0 %v2004
      %v2119 = vpop.f32.mrb[0].mxu0
      %v2120 = vadd.f32 0.0, %v2119
      %v2121 = vpop.f32.mrb[0].mxu0
      %v2122 = vpop.f32.mrb[0].mxu0
      %v2123 = vadd.f32 0.0, %v2122
      %v2124 = vpop.f32.mrb[0].mxu0
      %2125 = vmatprep.mubr.bf16.mxu0 0
      %2126 = vmatmul.mubr.bf16.gmra.mrb[0].mxu0 %v2005
      %v2127 = vpop.f32.mrb[0].mxu0
      %v2128 = vadd.f32 0.0, %v2127
      %v2129 = vpop.f32.mrb[0].mxu0
      %v2130 = vpop.f32.mrb[0].mxu0
      %v2131 = vadd.f32 0.0, %v2130
      %v2132 = vpop.f32.mrb[0].mxu0
      %2133 = vmatprep.mubr.bf16.mxu0 0
      %2134 = vmatmul.mubr.bf16.gmra.mrb[0].mxu0 %v2006
      %v2135 = vpop.f32.mrb[0].mxu0
      %v2136 = vadd.f32 0.0, %v2135
      %v2137 = vpop.f32.mrb[0].mxu0
      %v2138 = vpop.f32.mrb[0].mxu0
      %v2139 = vadd.f32 0.0, %v2138
      %v2140 = vpop.f32.mrb[0].mxu0
      %2141 = vmatprep.mubr.bf16.mxu0 0
      %2142 = vmatmul.mubr.bf16.gmra.mrb[0].mxu0 %v2007
      %v2143 = vpop.f32.mrb[0].mxu0
      %v2144 = vadd.f32 0.0, %v2143
      %v2145 = vpop.f32.mrb[0].mxu0
      %v2146 = vpop.f32.mrb[0].mxu0
      %v2147 = vadd.f32 0.0, %v2146
      %v2148 = vpop.f32.mrb[0].mxu0
      %2149 = vmatprep.mubr.bf16.mxu0 0
      %2150 = vmatmul.mubr.bf16.gmra.mrb[0].mxu0 %v2008
      %v2151 = vpop.f32.mrb[0].mxu0
      %v2152 = vadd.f32 0.0, %v2151
      %v2153 = vpop.f32.mrb[0].mxu0
      %v2154 = vpop.f32.mrb[0].mxu0
      %v2155 = vadd.f32 0.0, %v2154
      %v2156 = vpop.f32.mrb[0].mxu0
      %2157 = vmatprep.mubr.bf16.mxu0 0
      %2158 = vmatmul.mubr.bf16.gmra.mrb[0].mxu0 %v2009
      %v2159 = vpop.f32.mrb[0].mxu0
      %v2160 = vadd.f32 0.0, %v2159
      %v2161 = vpop.f32.mrb[0].mxu0
      %v2162 = vpop.f32.mrb[0].mxu0
      %v2163 = vadd.f32 0.0, %v2162
      %v2164 = vpop.f32.mrb[0].mxu0
      %2165 = vmatprep.mubr.bf16.mxu0 0
      %2166 = vmatmul.mubr.bf16.gmra.mrb[0].mxu0 %v2010
      %v2167 = vpop.f32.mrb[0].mxu0
      %v2168 = vadd.f32 0.0, %v2167
      %v2169 = vpop.f32.mrb[0].mxu0
      %v2170 = vpop.f32.mrb[0].mxu0
      %v2171 = vadd.f32 0.0, %v2170
      %v2172 = vpop.f32.mrb[0].mxu0
      %2173 = vmatprep.mubr.bf16.mxu0 0
      %2174 = vmatmul.mubr.bf16.gmra.mrb[0].mxu0 %v2011
      %v2175 = vpop.f32.mrb[0].mxu0
      %v2176 = vadd.f32 0.0, %v2175
      %v2177 = vpop.f32.mrb[0].mxu0
      %v2178 = vpop.f32.mrb[0].mxu0
      %v2179 = vadd.f32 0.0, %v2178
      %v2180 = vpop.f32.mrb[0].mxu0
      %2181 = vmatprep.mubr.bf16.mxu0 0
      %2182 = vmatmul.mubr.bf16.gmra.mrb[0].mxu0 %v2012
      %v2183 = vpop.f32.mrb[0].mxu0
      %v2184 = vadd.f32 0.0, %v2183
      %v2185 = vpop.f32.mrb[0].mxu0
      %v2186 = vpop.f32.mrb[0].mxu0
      %v2187 = vadd.f32 0.0, %v2186
      %v2188 = vpop.f32.mrb[0].mxu0
      %2189 = vmatprep.mubr.bf16.mxu0 0
      %2190 = vmatmul.mubr.bf16.gmra.mrb[0].mxu0 %v2013
      %v2191 = vpop.f32.mrb[0].mxu0
      %v2192 = vadd.f32 0.0, %v2191
      %v2193 = vpop.f32.mrb[0].mxu0
      %v2194 = vpop.f32.mrb[0].mxu0
      %v2195 = vadd.f32 0.0, %v2194
      %v2196 = vpop.f32.mrb[0].mxu0
      %2197 = vmatprep.mubr.bf16.mxu0 0
      %2198 = vmatmul.mubr.bf16.gmra.mrb[0].mxu0 %v2014
      %v2199 = vpop.f32.mrb[0].mxu0
      %v2200 = vadd.f32 0.0, %v2199
      %v2201 = vpop.f32.mrb[0].mxu0
      %v2202 = vpop.f32.mrb[0].mxu0
      %v2203 = vadd.f32 0.0, %v2202
      %v2204 = vpop.f32.mrb[0].mxu0
      %2205 = vmatprep.mubr.bf16.mxu0 0
      %2206 = vmatmul.mubr.bf16.gmra.mrb[0].mxu0 %v2015
      %v2207 = vpop.f32.mrb[0].mxu0
      %v2208 = vadd.f32 0.0, %v2207
      %v2209 = vpop.f32.mrb[0].mxu0
      %v2210 = vpop.f32.mrb[0].mxu0
      %v2211 = vadd.f32 0.0, %v2210
      %v2212 = vpop.f32.mrb[0].mxu0
      %2213 = vmatprep.mubr.bf16.mxu0 0
      %2214 = vmatmul.mubr.bf16.gmra.mrb[0].mxu0 %v2016
      %v2215 = vpop.f32.mrb[0].mxu0
      %v2216 = vadd.f32 0.0, %v2215
      %v2217 = vpop.f32.mrb[0].mxu0
      %v2218 = vpop.f32.mrb[0].mxu0
      %v2219 = vadd.f32 0.0, %v2218
      %v2220 = vpop.f32.mrb[0].mxu0
      %2221 = vmatprep.mubr.bf16.mxu0 0
      %2222 = vmatmul.mubr.bf16.gmra.mrb[0].mxu0 %v2017
      %v2223 = vpop.f32.mrb[0].mxu0
      %v2224 = vadd.f32 0.0, %v2223
      %v2225 = vpop.f32.mrb[0].mxu0
      %v2226 = vpop.f32.mrb[0].mxu0
      %v2227 = vadd.f32 0.0, %v2226
      %v2228 = vpop.f32.mrb[0].mxu0
      %2229 = vmatprep.mubr.bf16.mxu0 0
      %2230 = vmatmul.mubr.bf16.gmra.mrb[0].mxu0 %v2018
      %v2231 = vpop.f32.mrb[0].mxu0
      %v2232 = vadd.f32 0.0, %v2231
      %v2233 = vpop.f32.mrb[0].mxu0
      %v2234 = vpop.f32.mrb[0].mxu0
      %v2235 = vadd.f32 0.0, %v2234
      %v2236 = vpop.f32.mrb[0].mxu0
      %2237 = vmatprep.mubr.bf16.mxu0 0
      %2238 = vmatmul.mubr.bf16.gmra.mrb[0].mxu0 %v2019
      %v2239 = vpop.f32.mrb[0].mxu0
      %v2240 = vadd.f32 0.0, %v2239
      %v2241 = vpop.f32.mrb[0].mxu0
      %v2242 = vpop.f32.mrb[0].mxu0
      %v2243 = vadd.f32 0.0, %v2242
      %v2244 = vpop.f32.mrb[0].mxu0
      %2245 = vdwg.mxu0
      %v2246 = vadd.f32 %v1939, %v2120
      %v2247 = vadd.f32 %v1940, %v2123
      %v2248 = vadd.f32 %v1941, %v2128
      %v2249 = vadd.f32 %v1942, %v2131
      %v2250 = vadd.f32 %v1943, %v2136
      %v2251 = vadd.f32 %v1944, %v2139
      %v2252 = vadd.f32 %v1945, %v2144
      %v2253 = vadd.f32 %v1946, %v2147
      %v2254 = vadd.f32 %v1947, %v2152
      %v2255 = vadd.f32 %v1948, %v2155
      %v2256 = vadd.f32 %v1949, %v2160
      %v2257 = vadd.f32 %v1950, %v2163
      %v2258 = vadd.f32 %v1951, %v2168
      %v2259 = vadd.f32 %v1952, %v2171
      %v2260 = vadd.f32 %v1953, %v2176
      %v2261 = vadd.f32 %v1954, %v2179
      %v2262 = vadd.f32 %v1955, %v2184
      %v2263 = vadd.f32 %v1956, %v2187
      %v2264 = vadd.f32 %v1957, %v2192
      %v2265 = vadd.f32 %v1958, %v2195
      %v2266 = vadd.f32 %v1959, %v2200
      %v2267 = vadd.f32 %v1960, %v2203
      %v2268 = vadd.f32 %v1961, %v2208
      %v2269 = vadd.f32 %v1962, %v2211
      %v2270 = vadd.f32 %v1963, %v2216
      %v2271 = vadd.f32 %v1964, %v2219
      %v2272 = vadd.f32 %v1965, %v2224
      %v2273 = vadd.f32 %v1966, %v2227
      %v2274 = vadd.f32 %v1967, %v2232
      %v2275 = vadd.f32 %v1968, %v2235
      %v2276 = vadd.f32 %v1969, %v2240
      %v2277 = vadd.f32 %v1970, %v2243
      %v2278 = vld [vmem:[%s1971 + $0x1] sm:$0xff]
      %v2279 = vld [vmem:[%s1971 + $0x9] sm:$0xff]
      %v2280 = vld [vmem:[%s1971 + $0x19] sm:$0xff]
      %v2281 = vld [vmem:[%s1971 + $0x21] sm:$0xff]
      %v2282 = vld [vmem:[%s1971 + $0x31] sm:$0xff]
      %v2283 = vld [vmem:[%s1971 + $0x39] sm:$0xff]
      %v2284 = vld [vmem:[%s1971 + $0x49] sm:$0xff]
      %v2285 = vld [vmem:[%s1971 + $0x51] sm:$0xff]
      %v2286 = vld [vmem:[%s1971 + $0x61] sm:$0xff]
      %v2287 = vld [vmem:[%s1971 + $0x69] sm:$0xff]
      %v2288 = vld [vmem:[%s1971 + $0x79] sm:$0xff]
      %v2289 = vld [vmem:[%s1971 + $0x81] sm:$0xff]
      %v2290 = vld [vmem:[%s1971 + $0x91] sm:$0xff]
      %v2291 = vld [vmem:[%s1971 + $0x99] sm:$0xff]
      %v2292 = vld [vmem:[%s1971 + $0xa9] sm:$0xff]
      %v2293 = vld [vmem:[%s1971 + $0xb1] sm:$0xff]
      %v2294 = vld [vmem:[%s1971 + $0xc1] sm:$0xff]
      %v2295 = vld [vmem:[%s1971 + $0xc9] sm:$0xff]
      %v2296 = vld [vmem:[%s1971 + $0xd9] sm:$0xff]
      %v2297 = vld [vmem:[%s1971 + $0xe1] sm:$0xff]
      %v2298 = vld [vmem:[%s1971 + $0xf1] sm:$0xff]
      %v2299 = vld [vmem:[%s1971 + $0xf9] sm:$0xff]
      %v2300 = vld [vmem:[%s1971 + $0x109] sm:$0xff]
      %v2301 = vld [vmem:[%s1971 + $0x111] sm:$0xff]
      %v2302 = vld [vmem:[%s1971 + $0x121] sm:$0xff]
      %v2303 = vld [vmem:[%s1971 + $0x129] sm:$0xff]
      %v2304 = vld [vmem:[%s1971 + $0x139] sm:$0xff]
      %v2305 = vld [vmem:[%s1971 + $0x141] sm:$0xff]
      %v2306 = vld [vmem:[%s1971 + $0x151] sm:$0xff]
      %v2307 = vld [vmem:[%s1971 + $0x159] sm:$0xff]
      %v2308 = vld [vmem:[%s1971 + $0x169] sm:$0xff]
      %v2309 = vld [vmem:[%s1971 + $0x171] sm:$0xff]
      %v2310 = vpack.c.bf16 %v2279, %v2278
      %v2311 = vpack.c.bf16 %v2281, %v2280
      %v2312 = vpack.c.bf16 %v2283, %v2282
      %v2313 = vpack.c.bf16 %v2285, %v2284
      %v2314 = vpack.c.bf16 %v2287, %v2286
      %v2315 = vpack.c.bf16 %v2289, %v2288
      %v2316 = vpack.c.bf16 %v2291, %v2290
      %v2317 = vpack.c.bf16 %v2293, %v2292
      %v2318 = vpack.c.bf16 %v2295, %v2294
      %v2319 = vpack.c.bf16 %v2297, %v2296
      %v2320 = vpack.c.bf16 %v2299, %v2298
      %v2321 = vpack.c.bf16 %v2301, %v2300
      %v2322 = vpack.c.bf16 %v2303, %v2302
      %v2323 = vpack.c.bf16 %v2305, %v2304
      %v2324 = vpack.c.bf16 %v2307, %v2306
      %v2325 = vpack.c.bf16 %v2309, %v2308
      %s2326 = scalar_lea.vmem %s1, 448
      %v2327 = vld [vmem:[%s2326] sm:$0xf]
      %v2328 = vld [vmem:[%s2326 + $0x4] sm:$0xf]
      %v2329 = vld [vmem:[%s2326 + $0x8] sm:$0xf]
      %v2330 = vld [vmem:[%s2326 + $0xc] sm:$0xf]
      %v2331 = vld [vmem:[%s2326 + $0x10] sm:$0xf]
      %v2332 = vld [vmem:[%s2326 + $0x14] sm:$0xf]
      %v2333 = vld [vmem:[%s2326 + $0x18] sm:$0xf]
      %v2334 = vld [vmem:[%s2326 + $0x1c] sm:$0xf]
      %v2335 = vld [vmem:[%s2326 + $0x20] sm:$0xf]
      %v2336 = vld [vmem:[%s2326 + $0x24] sm:$0xf]
      %v2337 = vld [vmem:[%s2326 + $0x28] sm:$0xf]
      %v2338 = vld [vmem:[%s2326 + $0x2c] sm:$0xf]
      %v2339 = vld [vmem:[%s2326 + $0x30] sm:$0xf]
      %v2340 = vld [vmem:[%s2326 + $0x34] sm:$0xf]
      %v2341 = vld [vmem:[%s2326 + $0x38] sm:$0xf]
      %v2342 = vld [vmem:[%s2326 + $0x3c] sm:$0xf]
      %v2359 = vunpack.c.l.b16 %v2327
      %v2360 = vunpack.c.l.b16 %v2328
      %v2361 = vunpack.c.l.b16 %v2329
      %v2362 = vunpack.c.l.b16 %v2330
      %v2363 = vunpack.c.l.b16 %v2331
      %v2364 = vunpack.c.l.b16 %v2332
      %v2365 = vunpack.c.l.b16 %v2333
      %v2366 = vunpack.c.l.b16 %v2334
      %v2367 = vunpack.c.l.b16 %v2335
      %v2368 = vunpack.c.l.b16 %v2336
      %v2369 = vunpack.c.l.b16 %v2337
      %v2370 = vunpack.c.l.b16 %v2338
      %v2371 = vunpack.c.l.b16 %v2339
      %v2372 = vunpack.c.l.b16 %v2340
      %v2373 = vunpack.c.l.b16 %v2341
      %v2374 = vunpack.c.l.b16 %v2342
      %v2375 = vpack.c.b16 %v2360, %v2359
      %v2376 = vpack.c.b16 %v2362, %v2361
      %v2377 = vpack.c.b16 %v2364, %v2363
      %v2378 = vpack.c.b16 %v2366, %v2365
      %v2379 = vpack.c.b16 %v2368, %v2367
      %v2380 = vpack.c.b16 %v2370, %v2369
      %v2381 = vpack.c.b16 %v2372, %v2371
      %v2382 = vpack.c.b16 %v2374, %v2373
      %2391 = vmatprep.subr.bf16.mxu0 0
      %2392 = vmatpush1.bf16.msra.mxu0 %v2375
      %2393 = vmatprep.subr.bf16.mxu0 0
      %2394 = vmatpush1.bf16.msra.mxu0 %v2376
      %2395 = vmatprep.subr.bf16.mxu0 0
      %2396 = vmatpush1.bf16.msra.mxu0 %v2377
      %2397 = vmatprep.subr.bf16.mxu0 0
      %2398 = vmatpush1.bf16.msra.mxu0 %v2378
      %2399 = vmatprep.subr.bf16.mxu0 0
      %2400 = vmatpush1.bf16.msra.mxu0 %v2379
      %2401 = vmatprep.subr.bf16.mxu0 0
      %2402 = vmatpush1.bf16.msra.mxu0 %v2380
      %2403 = vmatprep.subr.bf16.mxu0 0
      %2404 = vmatpush1.bf16.msra.mxu0 %v2381
      %2405 = vmatprep.subr.bf16.mxu0 0
      %2406 = vmatpush1.bf16.msra.mxu0 %v2382
      %2407 = vmatprep.subr.bf16.mxu0 0
      %2408 = vmatpush1.bf16.msra.mxu0 0
      %2409 = vmatprep.subr.bf16.mxu0 0
      %2410 = vmatpush1.bf16.msra.mxu0 0
      %2411 = vmatprep.subr.bf16.mxu0 0
      %2412 = vmatpush1.bf16.msra.mxu0 0
      %2413 = vmatprep.subr.bf16.mxu0 0
      %2414 = vmatpush1.bf16.msra.mxu0 0
      %2415 = vmatprep.subr.bf16.mxu0 0
      %2416 = vmatpush1.bf16.msra.mxu0 0
      %2417 = vmatprep.subr.bf16.mxu0 0
      %2418 = vmatpush1.bf16.msra.mxu0 0
      %2419 = vmatprep.subr.bf16.mxu0 0
      %2420 = vmatpush1.bf16.msra.mxu0 0
      %2421 = vmatprep.subr.bf16.mxu0 0
      %2422 = vmatpush1.bf16.msra.mxu0 0
      %2423 = vmatprep.mubr.bf16.mxu0 0
      %2424 = vmatmul.mubr.bf16.gmra.mrb[0].mxu0 %v2310
      %v2425 = vpop.f32.mrb[0].mxu0
      %v2426 = vadd.f32 0.0, %v2425
      %v2427 = vpop.f32.mrb[0].mxu0
      %v2428 = vpop.f32.mrb[0].mxu0
      %v2429 = vadd.f32 0.0, %v2428
      %v2430 = vpop.f32.mrb[0].mxu0
      %2431 = vmatprep.mubr.bf16.mxu0 0
      %2432 = vmatmul.mubr.bf16.gmra.mrb[0].mxu0 %v2311
      %v2433 = vpop.f32.mrb[0].mxu0
      %v2434 = vadd.f32 0.0, %v2433
      %v2435 = vpop.f32.mrb[0].mxu0
      %v2436 = vpop.f32.mrb[0].mxu0
      %v2437 = vadd.f32 0.0, %v2436
      %v2438 = vpop.f32.mrb[0].mxu0
      %2439 = vmatprep.mubr.bf16.mxu0 0
      %2440 = vmatmul.mubr.bf16.gmra.mrb[0].mxu0 %v2312
      %v2441 = vpop.f32.mrb[0].mxu0
      %v2442 = vadd.f32 0.0, %v2441
      %v2443 = vpop.f32.mrb[0].mxu0
      %v2444 = vpop.f32.mrb[0].mxu0
      %v2445 = vadd.f32 0.0, %v2444
      %v2446 = vpop.f32.mrb[0].mxu0
      %2447 = vmatprep.mubr.bf16.mxu0 0
      %2448 = vmatmul.mubr.bf16.gmra.mrb[0].mxu0 %v2313
      %v2449 = vpop.f32.mrb[0].mxu0
      %v2450 = vadd.f32 0.0, %v2449
      %v2451 = vpop.f32.mrb[0].mxu0
      %v2452 = vpop.f32.mrb[0].mxu0
      %v2453 = vadd.f32 0.0, %v2452
      %v2454 = vpop.f32.mrb[0].mxu0
      %2455 = vmatprep.mubr.bf16.mxu0 0
      %2456 = vmatmul.mubr.bf16.gmra.mrb[0].mxu0 %v2314
      %v2457 = vpop.f32.mrb[0].mxu0
      %v2458 = vadd.f32 0.0, %v2457
      %v2459 = vpop.f32.mrb[0].mxu0
      %v2460 = vpop.f32.mrb[0].mxu0
      %v2461 = vadd.f32 0.0, %v2460
      %v2462 = vpop.f32.mrb[0].mxu0
      %2463 = vmatprep.mubr.bf16.mxu0 0
      %2464 = vmatmul.mubr.bf16.gmra.mrb[0].mxu0 %v2315
      %v2465 = vpop.f32.mrb[0].mxu0
      %v2466 = vadd.f32 0.0, %v2465
      %v2467 = vpop.f32.mrb[0].mxu0
      %v2468 = vpop.f32.mrb[0].mxu0
      %v2469 = vadd.f32 0.0, %v2468
      %v2470 = vpop.f32.mrb[0].mxu0
      %2471 = vmatprep.mubr.bf16.mxu0 0
      %2472 = vmatmul.mubr.bf16.gmra.mrb[0].mxu0 %v2316
      %v2473 = vpop.f32.mrb[0].mxu0
      %v2474 = vadd.f32 0.0, %v2473
      %v2475 = vpop.f32.mrb[0].mxu0
      %v2476 = vpop.f32.mrb[0].mxu0
      %v2477 = vadd.f32 0.0, %v2476
      %v2478 = vpop.f32.mrb[0].mxu0
      %2479 = vmatprep.mubr.bf16.mxu0 0
      %2480 = vmatmul.mubr.bf16.gmra.mrb[0].mxu0 %v2317
      %v2481 = vpop.f32.mrb[0].mxu0
      %v2482 = vadd.f32 0.0, %v2481
      %v2483 = vpop.f32.mrb[0].mxu0
      %v2484 = vpop.f32.mrb[0].mxu0
      %v2485 = vadd.f32 0.0, %v2484
      %v2486 = vpop.f32.mrb[0].mxu0
      %2487 = vmatprep.mubr.bf16.mxu0 0
      %2488 = vmatmul.mubr.bf16.gmra.mrb[0].mxu0 %v2318
      %v2489 = vpop.f32.mrb[0].mxu0
      %v2490 = vadd.f32 0.0, %v2489
      %v2491 = vpop.f32.mrb[0].mxu0
      %v2492 = vpop.f32.mrb[0].mxu0
      %v2493 = vadd.f32 0.0, %v2492
      %v2494 = vpop.f32.mrb[0].mxu0
      %2495 = vmatprep.mubr.bf16.mxu0 0
      %2496 = vmatmul.mubr.bf16.gmra.mrb[0].mxu0 %v2319
      %v2497 = vpop.f32.mrb[0].mxu0
      %v2498 = vadd.f32 0.0, %v2497
      %v2499 = vpop.f32.mrb[0].mxu0
      %v2500 = vpop.f32.mrb[0].mxu0
      %v2501 = vadd.f32 0.0, %v2500
      %v2502 = vpop.f32.mrb[0].mxu0
      %2503 = vmatprep.mubr.bf16.mxu0 0
      %2504 = vmatmul.mubr.bf16.gmra.mrb[0].mxu0 %v2320
      %v2505 = vpop.f32.mrb[0].mxu0
      %v2506 = vadd.f32 0.0, %v2505
      %v2507 = vpop.f32.mrb[0].mxu0
      %v2508 = vpop.f32.mrb[0].mxu0
      %v2509 = vadd.f32 0.0, %v2508
      %v2510 = vpop.f32.mrb[0].mxu0
      %2511 = vmatprep.mubr.bf16.mxu0 0
      %2512 = vmatmul.mubr.bf16.gmra.mrb[0].mxu0 %v2321
      %v2513 = vpop.f32.mrb[0].mxu0
      %v2514 = vadd.f32 0.0, %v2513
      %v2515 = vpop.f32.mrb[0].mxu0
      %v2516 = vpop.f32.mrb[0].mxu0
      %v2517 = vadd.f32 0.0, %v2516
      %v2518 = vpop.f32.mrb[0].mxu0
      %2519 = vmatprep.mubr.bf16.mxu0 0
      %2520 = vmatmul.mubr.bf16.gmra.mrb[0].mxu0 %v2322
      %v2521 = vpop.f32.mrb[0].mxu0
      %v2522 = vadd.f32 0.0, %v2521
      %v2523 = vpop.f32.mrb[0].mxu0
      %v2524 = vpop.f32.mrb[0].mxu0
      %v2525 = vadd.f32 0.0, %v2524
      %v2526 = vpop.f32.mrb[0].mxu0
      %2527 = vmatprep.mubr.bf16.mxu0 0
      %2528 = vmatmul.mubr.bf16.gmra.mrb[0].mxu0 %v2323
      %v2529 = vpop.f32.mrb[0].mxu0
      %v2530 = vadd.f32 0.0, %v2529
      %v2531 = vpop.f32.mrb[0].mxu0
      %v2532 = vpop.f32.mrb[0].mxu0
      %v2533 = vadd.f32 0.0, %v2532
      %v2534 = vpop.f32.mrb[0].mxu0
      %2535 = vmatprep.mubr.bf16.mxu0 0
      %2536 = vmatmul.mubr.bf16.gmra.mrb[0].mxu0 %v2324
      %v2537 = vpop.f32.mrb[0].mxu0
      %v2538 = vadd.f32 0.0, %v2537
      %v2539 = vpop.f32.mrb[0].mxu0
      %v2540 = vpop.f32.mrb[0].mxu0
      %v2541 = vadd.f32 0.0, %v2540
      %v2542 = vpop.f32.mrb[0].mxu0
      %2543 = vmatprep.mubr.bf16.mxu0 0
      %2544 = vmatmul.mubr.bf16.gmra.mrb[0].mxu0 %v2325
      %v2545 = vpop.f32.mrb[0].mxu0
      %v2546 = vadd.f32 0.0, %v2545
      %v2547 = vpop.f32.mrb[0].mxu0
      %v2548 = vpop.f32.mrb[0].mxu0
      %v2549 = vadd.f32 0.0, %v2548
      %v2550 = vpop.f32.mrb[0].mxu0
      %2551 = vdwg.mxu0
      %v2552 = vadd.f32 %v2246, %v2426
      %v2553 = vadd.f32 %v2247, %v2429
      %v2554 = vadd.f32 %v2248, %v2434
      %v2555 = vadd.f32 %v2249, %v2437
      %v2556 = vadd.f32 %v2250, %v2442
      %v2557 = vadd.f32 %v2251, %v2445
      %v2558 = vadd.f32 %v2252, %v2450
      %v2559 = vadd.f32 %v2253, %v2453
      %v2560 = vadd.f32 %v2254, %v2458
      %v2561 = vadd.f32 %v2255, %v2461
      %v2562 = vadd.f32 %v2256, %v2466
      %v2563 = vadd.f32 %v2257, %v2469
      %v2564 = vadd.f32 %v2258, %v2474
      %v2565 = vadd.f32 %v2259, %v2477
      %v2566 = vadd.f32 %v2260, %v2482
      %v2567 = vadd.f32 %v2261, %v2485
      %v2568 = vadd.f32 %v2262, %v2490
      %v2569 = vadd.f32 %v2263, %v2493
      %v2570 = vadd.f32 %v2264, %v2498
      %v2571 = vadd.f32 %v2265, %v2501
      %v2572 = vadd.f32 %v2266, %v2506
      %v2573 = vadd.f32 %v2267, %v2509
      %v2574 = vadd.f32 %v2268, %v2514
      %v2575 = vadd.f32 %v2269, %v2517
      %v2576 = vadd.f32 %v2270, %v2522
      %v2577 = vadd.f32 %v2271, %v2525
      %v2578 = vadd.f32 %v2272, %v2530
      %v2579 = vadd.f32 %v2273, %v2533
      %v2580 = vadd.f32 %v2274, %v2538
      %v2581 = vadd.f32 %v2275, %v2541
      %v2582 = vadd.f32 %v2276, %v2546
      %v2583 = vadd.f32 %v2277, %v2549
      %v2584 = vld [vmem:[%s1971 + $0x2] sm:$0xff]
      %v2585 = vld [vmem:[%s1971 + $0xa] sm:$0xff]
      %v2586 = vld [vmem:[%s1971 + $0x1a] sm:$0xff]
      %v2587 = vld [vmem:[%s1971 + $0x22] sm:$0xff]
      %v2588 = vld [vmem:[%s1971 + $0x32] sm:$0xff]
      %v2589 = vld [vmem:[%s1971 + $0x3a] sm:$0xff]
      %v2590 = vld [vmem:[%s1971 + $0x4a] sm:$0xff]
      %v2591 = vld [vmem:[%s1971 + $0x52] sm:$0xff]
      %v2592 = vld [vmem:[%s1971 + $0x62] sm:$0xff]
      %v2593 = vld [vmem:[%s1971 + $0x6a] sm:$0xff]
      %v2594 = vld [vmem:[%s1971 + $0x7a] sm:$0xff]
      %v2595 = vld [vmem:[%s1971 + $0x82] sm:$0xff]
      %v2596 = vld [vmem:[%s1971 + $0x92] sm:$0xff]
      %v2597 = vld [vmem:[%s1971 + $0x9a] sm:$0xff]
      %v2598 = vld [vmem:[%s1971 + $0xaa] sm:$0xff]
      %v2599 = vld [vmem:[%s1971 + $0xb2] sm:$0xff]
      %v2600 = vld [vmem:[%s1971 + $0xc2] sm:$0xff]
      %v2601 = vld [vmem:[%s1971 + $0xca] sm:$0xff]
      %v2602 = vld [vmem:[%s1971 + $0xda] sm:$0xff]
      %v2603 = vld [vmem:[%s1971 + $0xe2] sm:$0xff]
      %v2604 = vld [vmem:[%s1971 + $0xf2] sm:$0xff]
      %v2605 = vld [vmem:[%s1971 + $0xfa] sm:$0xff]
      %v2606 = vld [vmem:[%s1971 + $0x10a] sm:$0xff]
      %v2607 = vld [vmem:[%s1971 + $0x112] sm:$0xff]
      %v2608 = vld [vmem:[%s1971 + $0x122] sm:$0xff]
      %v2609 = vld [vmem:[%s1971 + $0x12a] sm:$0xff]
      %v2610 = vld [vmem:[%s1971 + $0x13a] sm:$0xff]
      %v2611 = vld [vmem:[%s1971 + $0x142] sm:$0xff]
      %v2612 = vld [vmem:[%s1971 + $0x152] sm:$0xff]
      %v2613 = vld [vmem:[%s1971 + $0x15a] sm:$0xff]
      %v2614 = vld [vmem:[%s1971 + $0x16a] sm:$0xff]
      %v2615 = vld [vmem:[%s1971 + $0x172] sm:$0xff]
      %v2616 = vpack.c.bf16 %v2585, %v2584
      %v2617 = vpack.c.bf16 %v2587, %v2586
      %v2618 = vpack.c.bf16 %v2589, %v2588
      %v2619 = vpack.c.bf16 %v2591, %v2590
      %v2620 = vpack.c.bf16 %v2593, %v2592
      %v2621 = vpack.c.bf16 %v2595, %v2594
      %v2622 = vpack.c.bf16 %v2597, %v2596
      %v2623 = vpack.c.bf16 %v2599, %v2598
      %v2624 = vpack.c.bf16 %v2601, %v2600
      %v2625 = vpack.c.bf16 %v2603, %v2602
      %v2626 = vpack.c.bf16 %v2605, %v2604
      %v2627 = vpack.c.bf16 %v2607, %v2606
      %v2628 = vpack.c.bf16 %v2609, %v2608
      %v2629 = vpack.c.bf16 %v2611, %v2610
      %v2630 = vpack.c.bf16 %v2613, %v2612
      %v2631 = vpack.c.bf16 %v2615, %v2614
      %s2632 = scalar_lea.vmem %s1, 512
      %v2633 = vld [vmem:[%s2632] sm:$0xf]
      %v2634 = vld [vmem:[%s2632 + $0x4] sm:$0xf]
      %v2635 = vld [vmem:[%s2632 + $0x8] sm:$0xf]
      %v2636 = vld [vmem:[%s2632 + $0xc] sm:$0xf]
      %v2637 = vld [vmem:[%s2632 + $0x10] sm:$0xf]
      %v2638 = vld [vmem:[%s2632 + $0x14] sm:$0xf]
      %v2639 = vld [vmem:[%s2632 + $0x18] sm:$0xf]
      %v2640 = vld [vmem:[%s2632 + $0x1c] sm:$0xf]
      %v2641 = vld [vmem:[%s2632 + $0x20] sm:$0xf]
      %v2642 = vld [vmem:[%s2632 + $0x24] sm:$0xf]
      %v2643 = vld [vmem:[%s2632 + $0x28] sm:$0xf]
      %v2644 = vld [vmem:[%s2632 + $0x2c] sm:$0xf]
      %v2645 = vld [vmem:[%s2632 + $0x30] sm:$0xf]
      %v2646 = vld [vmem:[%s2632 + $0x34] sm:$0xf]
      %v2647 = vld [vmem:[%s2632 + $0x38] sm:$0xf]
      %v2648 = vld [vmem:[%s2632 + $0x3c] sm:$0xf]
      %v2665 = vunpack.c.l.b16 %v2633
      %v2666 = vunpack.c.l.b16 %v2634
      %v2667 = vunpack.c.l.b16 %v2635
      %v2668 = vunpack.c.l.b16 %v2636
      %v2669 = vunpack.c.l.b16 %v2637
      %v2670 = vunpack.c.l.b16 %v2638
      %v2671 = vunpack.c.l.b16 %v2639
      %v2672 = vunpack.c.l.b16 %v2640
      %v2673 = vunpack.c.l.b16 %v2641
      %v2674 = vunpack.c.l.b16 %v2642
      %v2675 = vunpack.c.l.b16 %v2643
      %v2676 = vunpack.c.l.b16 %v2644
      %v2677 = vunpack.c.l.b16 %v2645
      %v2678 = vunpack.c.l.b16 %v2646
      %v2679 = vunpack.c.l.b16 %v2647
      %v2680 = vunpack.c.l.b16 %v2648
      %v2681 = vpack.c.b16 %v2666, %v2665
      %v2682 = vpack.c.b16 %v2668, %v2667
      %v2683 = vpack.c.b16 %v2670, %v2669
      %v2684 = vpack.c.b16 %v2672, %v2671
      %v2685 = vpack.c.b16 %v2674, %v2673
      %v2686 = vpack.c.b16 %v2676, %v2675
      %v2687 = vpack.c.b16 %v2678, %v2677
      %v2688 = vpack.c.b16 %v2680, %v2679
      %2697 = vmatprep.subr.bf16.mxu0 0
      %2698 = vmatpush1.bf16.msra.mxu0 %v2681
      %2699 = vmatprep.subr.bf16.mxu0 0
      %2700 = vmatpush1.bf16.msra.mxu0 %v2682
      %2701 = vmatprep.subr.bf16.mxu0 0
      %2702 = vmatpush1.bf16.msra.mxu0 %v2683
      %2703 = vmatprep.subr.bf16.mxu0 0
      %2704 = vmatpush1.bf16.msra.mxu0 %v2684
      %2705 = vmatprep.subr.bf16.mxu0 0
      %2706 = vmatpush1.bf16.msra.mxu0 %v2685
      %2707 = vmatprep.subr.bf16.mxu0 0
      %2708 = vmatpush1.bf16.msra.mxu0 %v2686
      %2709 = vmatprep.subr.bf16.mxu0 0
      %2710 = vmatpush1.bf16.msra.mxu0 %v2687
      %2711 = vmatprep.subr.bf16.mxu0 0
      %2712 = vmatpush1.bf16.msra.mxu0 %v2688
      %2713 = vmatprep.subr.bf16.mxu0 0
      %2714 = vmatpush1.bf16.msra.mxu0 0
      %2715 = vmatprep.subr.bf16.mxu0 0
      %2716 = vmatpush1.bf16.msra.mxu0 0
      %2717 = vmatprep.subr.bf16.mxu0 0
      %2718 = vmatpush1.bf16.msra.mxu0 0
      %2719 = vmatprep.subr.bf16.mxu0 0
      %2720 = vmatpush1.bf16.msra.mxu0 0
      %2721 = vmatprep.subr.bf16.mxu0 0
      %2722 = vmatpush1.bf16.msra.mxu0 0
      %2723 = vmatprep.subr.bf16.mxu0 0
      %2724 = vmatpush1.bf16.msra.mxu0 0
      %2725 = vmatprep.subr.bf16.mxu0 0
      %2726 = vmatpush1.bf16.msra.mxu0 0
      %2727 = vmatprep.subr.bf16.mxu0 0
      %2728 = vmatpush1.bf16.msra.mxu0 0
      %2729 = vmatprep.mubr.bf16.mxu0 0
      %2730 = vmatmul.mubr.bf16.gmra.mrb[0].mxu0 %v2616
      %v2731 = vpop.f32.mrb[0].mxu0
      %v2732 = vadd.f32 0.0, %v2731
      %v2733 = vpop.f32.mrb[0].mxu0
      %v2734 = vpop.f32.mrb[0].mxu0
      %v2735 = vadd.f32 0.0, %v2734
      %v2736 = vpop.f32.mrb[0].mxu0
      %2737 = vmatprep.mubr.bf16.mxu0 0
      %2738 = vmatmul.mubr.bf16.gmra.mrb[0].mxu0 %v2617
      %v2739 = vpop.f32.mrb[0].mxu0
      %v2740 = vadd.f32 0.0, %v2739
      %v2741 = vpop.f32.mrb[0].mxu0
      %v2742 = vpop.f32.mrb[0].mxu0
      %v2743 = vadd.f32 0.0, %v2742
      %v2744 = vpop.f32.mrb[0].mxu0
      %2745 = vmatprep.mubr.bf16.mxu0 0
      %2746 = vmatmul.mubr.bf16.gmra.mrb[0].mxu0 %v2618
      %v2747 = vpop.f32.mrb[0].mxu0
      %v2748 = vadd.f32 0.0, %v2747
      %v2749 = vpop.f32.mrb[0].mxu0
      %v2750 = vpop.f32.mrb[0].mxu0
      %v2751 = vadd.f32 0.0, %v2750
      %v2752 = vpop.f32.mrb[0].mxu0
      %2753 = vmatprep.mubr.bf16.mxu0 0
      %2754 = vmatmul.mubr.bf16.gmra.mrb[0].mxu0 %v2619
      %v2755 = vpop.f32.mrb[0].mxu0
      %v2756 = vadd.f32 0.0, %v2755
      %v2757 = vpop.f32.mrb[0].mxu0
      %v2758 = vpop.f32.mrb[0].mxu0
      %v2759 = vadd.f32 0.0, %v2758
      %v2760 = vpop.f32.mrb[0].mxu0
      %2761 = vmatprep.mubr.bf16.mxu0 0
      %2762 = vmatmul.mubr.bf16.gmra.mrb[0].mxu0 %v2620
      %v2763 = vpop.f32.mrb[0].mxu0
      %v2764 = vadd.f32 0.0, %v2763
      %v2765 = vpop.f32.mrb[0].mxu0
      %v2766 = vpop.f32.mrb[0].mxu0
      %v2767 = vadd.f32 0.0, %v2766
      %v2768 = vpop.f32.mrb[0].mxu0
      %2769 = vmatprep.mubr.bf16.mxu0 0
      %2770 = vmatmul.mubr.bf16.gmra.mrb[0].mxu0 %v2621
      %v2771 = vpop.f32.mrb[0].mxu0
      %v2772 = vadd.f32 0.0, %v2771
      %v2773 = vpop.f32.mrb[0].mxu0
      %v2774 = vpop.f32.mrb[0].mxu0
      %v2775 = vadd.f32 0.0, %v2774
      %v2776 = vpop.f32.mrb[0].mxu0
      %2777 = vmatprep.mubr.bf16.mxu0 0
      %2778 = vmatmul.mubr.bf16.gmra.mrb[0].mxu0 %v2622
      %v2779 = vpop.f32.mrb[0].mxu0
      %v2780 = vadd.f32 0.0, %v2779
      %v2781 = vpop.f32.mrb[0].mxu0
      %v2782 = vpop.f32.mrb[0].mxu0
      %v2783 = vadd.f32 0.0, %v2782
      %v2784 = vpop.f32.mrb[0].mxu0
      %2785 = vmatprep.mubr.bf16.mxu0 0
      %2786 = vmatmul.mubr.bf16.gmra.mrb[0].mxu0 %v2623
      %v2787 = vpop.f32.mrb[0].mxu0
      %v2788 = vadd.f32 0.0, %v2787
      %v2789 = vpop.f32.mrb[0].mxu0
      %v2790 = vpop.f32.mrb[0].mxu0
      %v2791 = vadd.f32 0.0, %v2790
      %v2792 = vpop.f32.mrb[0].mxu0
      %2793 = vmatprep.mubr.bf16.mxu0 0
      %2794 = vmatmul.mubr.bf16.gmra.mrb[0].mxu0 %v2624
      %v2795 = vpop.f32.mrb[0].mxu0
      %v2796 = vadd.f32 0.0, %v2795
      %v2797 = vpop.f32.mrb[0].mxu0
      %v2798 = vpop.f32.mrb[0].mxu0
      %v2799 = vadd.f32 0.0, %v2798
      %v2800 = vpop.f32.mrb[0].mxu0
      %2801 = vmatprep.mubr.bf16.mxu0 0
      %2802 = vmatmul.mubr.bf16.gmra.mrb[0].mxu0 %v2625
      %v2803 = vpop.f32.mrb[0].mxu0
      %v2804 = vadd.f32 0.0, %v2803
      %v2805 = vpop.f32.mrb[0].mxu0
      %v2806 = vpop.f32.mrb[0].mxu0
      %v2807 = vadd.f32 0.0, %v2806
      %v2808 = vpop.f32.mrb[0].mxu0
      %2809 = vmatprep.mubr.bf16.mxu0 0
      %2810 = vmatmul.mubr.bf16.gmra.mrb[0].mxu0 %v2626
      %v2811 = vpop.f32.mrb[0].mxu0
      %v2812 = vadd.f32 0.0, %v2811
      %v2813 = vpop.f32.mrb[0].mxu0
      %v2814 = vpop.f32.mrb[0].mxu0
      %v2815 = vadd.f32 0.0, %v2814
      %v2816 = vpop.f32.mrb[0].mxu0
      %2817 = vmatprep.mubr.bf16.mxu0 0
      %2818 = vmatmul.mubr.bf16.gmra.mrb[0].mxu0 %v2627
      %v2819 = vpop.f32.mrb[0].mxu0
      %v2820 = vadd.f32 0.0, %v2819
      %v2821 = vpop.f32.mrb[0].mxu0
      %v2822 = vpop.f32.mrb[0].mxu0
      %v2823 = vadd.f32 0.0, %v2822
      %v2824 = vpop.f32.mrb[0].mxu0
      %2825 = vmatprep.mubr.bf16.mxu0 0
      %2826 = vmatmul.mubr.bf16.gmra.mrb[0].mxu0 %v2628
      %v2827 = vpop.f32.mrb[0].mxu0
      %v2828 = vadd.f32 0.0, %v2827
      %v2829 = vpop.f32.mrb[0].mxu0
      %v2830 = vpop.f32.mrb[0].mxu0
      %v2831 = vadd.f32 0.0, %v2830
      %v2832 = vpop.f32.mrb[0].mxu0
      %2833 = vmatprep.mubr.bf16.mxu0 0
      %2834 = vmatmul.mubr.bf16.gmra.mrb[0].mxu0 %v2629
      %v2835 = vpop.f32.mrb[0].mxu0
      %v2836 = vadd.f32 0.0, %v2835
      %v2837 = vpop.f32.mrb[0].mxu0
      %v2838 = vpop.f32.mrb[0].mxu0
      %v2839 = vadd.f32 0.0, %v2838
      %v2840 = vpop.f32.mrb[0].mxu0
      %2841 = vmatprep.mubr.bf16.mxu0 0
      %2842 = vmatmul.mubr.bf16.gmra.mrb[0].mxu0 %v2630
      %v2843 = vpop.f32.mrb[0].mxu0
      %v2844 = vadd.f32 0.0, %v2843
      %v2845 = vpop.f32.mrb[0].mxu0
      %v2846 = vpop.f32.mrb[0].mxu0
      %v2847 = vadd.f32 0.0, %v2846
      %v2848 = vpop.f32.mrb[0].mxu0
      %2849 = vmatprep.mubr.bf16.mxu0 0
      %2850 = vmatmul.mubr.bf16.gmra.mrb[0].mxu0 %v2631
      %v2851 = vpop.f32.mrb[0].mxu0
      %v2852 = vadd.f32 0.0, %v2851
      %v2853 = vpop.f32.mrb[0].mxu0
      %v2854 = vpop.f32.mrb[0].mxu0
      %v2855 = vadd.f32 0.0, %v2854
      %v2856 = vpop.f32.mrb[0].mxu0
      %2857 = vdwg.mxu0
      %v2858 = vadd.f32 %v2552, %v2732
      %v2859 = vadd.f32 %v2553, %v2735
      %v2860 = vadd.f32 %v2554, %v2740
      %v2861 = vadd.f32 %v2555, %v2743
      %v2862 = vadd.f32 %v2556, %v2748
      %v2863 = vadd.f32 %v2557, %v2751
      %v2864 = vadd.f32 %v2558, %v2756
      %v2865 = vadd.f32 %v2559, %v2759
      %v2866 = vadd.f32 %v2560, %v2764
      %v2867 = vadd.f32 %v2561, %v2767
      %v2868 = vadd.f32 %v2562, %v2772
      %v2869 = vadd.f32 %v2563, %v2775
      %v2870 = vadd.f32 %v2564, %v2780
      %v2871 = vadd.f32 %v2565, %v2783
      %v2872 = vadd.f32 %v2566, %v2788
      %v2873 = vadd.f32 %v2567, %v2791
      %v2874 = vadd.f32 %v2568, %v2796
      %v2875 = vadd.f32 %v2569, %v2799
      %v2876 = vadd.f32 %v2570, %v2804
      %v2877 = vadd.f32 %v2571, %v2807
      %v2878 = vadd.f32 %v2572, %v2812
      %v2879 = vadd.f32 %v2573, %v2815
      %v2880 = vadd.f32 %v2574, %v2820
      %v2881 = vadd.f32 %v2575, %v2823
      %v2882 = vadd.f32 %v2576, %v2828
      %v2883 = vadd.f32 %v2577, %v2831
      %v2884 = vadd.f32 %v2578, %v2836
      %v2885 = vadd.f32 %v2579, %v2839
      %v2886 = vadd.f32 %v2580, %v2844
      %v2887 = vadd.f32 %v2581, %v2847
      %v2888 = vadd.f32 %v2582, %v2852
      %v2889 = vadd.f32 %v2583, %v2855
      %v2890 = vlaneseq
      %v2891 = vand.u32 %v2890, 127
      %vm2892 = vcmp.ge.s32.totalorder %v2891, 0
      %vm2893 = vcmp.lt.s32.totalorder %v2891, 32
      %vm2894 = vmand %vm2892, %vm2893
      %v2895 = vsel %vm2894, %v2858, 0.0
      %v2896 = vsel %vm2894, %v2859, 0.0
      %v2897 = vsel %vm2894, %v2860, 0.0
      %v2898 = vsel %vm2894, %v2861, 0.0
      %v2899 = vsel %vm2894, %v2862, 0.0
      %v2900 = vsel %vm2894, %v2863, 0.0
      %v2901 = vsel %vm2894, %v2864, 0.0
      %v2902 = vsel %vm2894, %v2865, 0.0
      %v2903 = vsel %vm2894, %v2866, 0.0
      %v2904 = vsel %vm2894, %v2867, 0.0
      %v2905 = vsel %vm2894, %v2868, 0.0
      %v2906 = vsel %vm2894, %v2869, 0.0
      %v2907 = vsel %vm2894, %v2870, 0.0
      %v2908 = vsel %vm2894, %v2871, 0.0
      %v2909 = vsel %vm2894, %v2872, 0.0
      %v2910 = vsel %vm2894, %v2873, 0.0
      %v2911 = vsel %vm2894, %v2874, 0.0
      %v2912 = vsel %vm2894, %v2875, 0.0
      %v2913 = vsel %vm2894, %v2876, 0.0
      %v2914 = vsel %vm2894, %v2877, 0.0
      %v2915 = vsel %vm2894, %v2878, 0.0
      %v2916 = vsel %vm2894, %v2879, 0.0
      %v2917 = vsel %vm2894, %v2880, 0.0
      %v2918 = vsel %vm2894, %v2881, 0.0
      %v2919 = vsel %vm2894, %v2882, 0.0
      %v2920 = vsel %vm2894, %v2883, 0.0
      %v2921 = vsel %vm2894, %v2884, 0.0
      %v2922 = vsel %vm2894, %v2885, 0.0
      %v2923 = vsel %vm2894, %v2886, 0.0
      %v2924 = vsel %vm2894, %v2887, 0.0
      %v2925 = vsel %vm2894, %v2888, 0.0
      %v2926 = vsel %vm2894, %v2889, 0.0
      %v2927 = vadd.f32 %v2895, %v2896
      %v2928 = vadd.f32 %v2927, %v2897
      %v2929 = vadd.f32 %v2928, %v2898
      %v2930 = vadd.f32 %v2929, %v2899
      %v2931 = vadd.f32 %v2930, %v2900
      %v2932 = vadd.f32 %v2931, %v2901
      %v2933 = vadd.f32 %v2932, %v2902
      %v2934 = vadd.f32 %v2933, %v2903
      %v2935 = vadd.f32 %v2934, %v2904
      %v2936 = vadd.f32 %v2935, %v2905
      %v2937 = vadd.f32 %v2936, %v2906
      %v2938 = vadd.f32 %v2937, %v2907
      %v2939 = vadd.f32 %v2938, %v2908
      %v2940 = vadd.f32 %v2939, %v2909
      %v2941 = vadd.f32 %v2940, %v2910
      %v2942 = vadd.f32 %v2941, %v2911
      %v2943 = vadd.f32 %v2942, %v2912
      %v2944 = vadd.f32 %v2943, %v2913
      %v2945 = vadd.f32 %v2944, %v2914
      %v2946 = vadd.f32 %v2945, %v2915
      %v2947 = vadd.f32 %v2946, %v2916
      %v2948 = vadd.f32 %v2947, %v2917
      %v2949 = vadd.f32 %v2948, %v2918
      %v2950 = vadd.f32 %v2949, %v2919
      %v2951 = vadd.f32 %v2950, %v2920
      %v2952 = vadd.f32 %v2951, %v2921
      %v2953 = vadd.f32 %v2952, %v2922
      %v2954 = vadd.f32 %v2953, %v2923
      %v2955 = vadd.f32 %v2954, %v2924
      %v2956 = vadd.f32 %v2955, %v2925
      %v2957 = vadd.f32 %v2956, %v2926
      %2958 = vadd.xlane.f32.xlu0 %v2957
      %v2959 = vpop.xlane.xlu0 %2958
      %v2960 = vrot.slane %v2959, 4
      %v2961 = vadd.f32 %v2959, %v2960
      %v2962 = vrot.slane %v2961, 2
      %v2963 = vadd.f32 %v2961, %v2962
      %v2964 = vrot.slane %v2963, 1
      %v2965 = vadd.f32 %v2963, %v2964
      %s2966 = vtos %v2965
      %v2967 = vrcp.pop 8192.0
      %s2968 = vtos %v2967
      %s2969 = smul.f32 %s2966, %s2968
      %v2970 = vstv %s2969
      %v2971 = vsub.f32 %v2858, %v2970
      %v2972 = vsub.f32 %v2859, %v2970
      %v2973 = vsub.f32 %v2860, %v2970
      %v2974 = vsub.f32 %v2861, %v2970
      %v2975 = vsub.f32 %v2862, %v2970
      %v2976 = vsub.f32 %v2863, %v2970
      %v2977 = vsub.f32 %v2864, %v2970
      %v2978 = vsub.f32 %v2865, %v2970
      %v2979 = vsub.f32 %v2866, %v2970
      %v2980 = vsub.f32 %v2867, %v2970
      %v2981 = vsub.f32 %v2868, %v2970
      %v2982 = vsub.f32 %v2869, %v2970
      %v2983 = vsub.f32 %v2870, %v2970
      %v2984 = vsub.f32 %v2871, %v2970
      %v2985 = vsub.f32 %v2872, %v2970
      %v2986 = vsub.f32 %v2873, %v2970
      %v2987 = vsub.f32 %v2874, %v2970
      %v2988 = vsub.f32 %v2875, %v2970
      %v2989 = vsub.f32 %v2876, %v2970
      %v2990 = vsub.f32 %v2877, %v2970
      %v2991 = vsub.f32 %v2878, %v2970
      %v2992 = vsub.f32 %v2879, %v2970
      %v2993 = vsub.f32 %v2880, %v2970
      %v2994 = vsub.f32 %v2881, %v2970
      %v2995 = vsub.f32 %v2882, %v2970
      %v2996 = vsub.f32 %v2883, %v2970
      %v2997 = vsub.f32 %v2884, %v2970
      %v2998 = vsub.f32 %v2885, %v2970
      %v2999 = vsub.f32 %v2886, %v2970
      %v3000 = vsub.f32 %v2887, %v2970
      %v3001 = vsub.f32 %v2888, %v2970
      %v3002 = vsub.f32 %v2889, %v2970
      %v3003 = vsel %vm2894, %v2971, 0.0
      %v3004 = vsel %vm2894, %v2972, 0.0
      %v3005 = vsel %vm2894, %v2973, 0.0
      %v3006 = vsel %vm2894, %v2974, 0.0
      %v3007 = vsel %vm2894, %v2975, 0.0
      %v3008 = vsel %vm2894, %v2976, 0.0
      %v3009 = vsel %vm2894, %v2977, 0.0
      %v3010 = vsel %vm2894, %v2978, 0.0
      %v3011 = vsel %vm2894, %v2979, 0.0
      %v3012 = vsel %vm2894, %v2980, 0.0
      %v3013 = vsel %vm2894, %v2981, 0.0
      %v3014 = vsel %vm2894, %v2982, 0.0
      %v3015 = vsel %vm2894, %v2983, 0.0
      %v3016 = vsel %vm2894, %v2984, 0.0
      %v3017 = vsel %vm2894, %v2985, 0.0
      %v3018 = vsel %vm2894, %v2986, 0.0
      %v3019 = vsel %vm2894, %v2987, 0.0
      %v3020 = vsel %vm2894, %v2988, 0.0
      %v3021 = vsel %vm2894, %v2989, 0.0
      %v3022 = vsel %vm2894, %v2990, 0.0
      %v3023 = vsel %vm2894, %v2991, 0.0
      %v3024 = vsel %vm2894, %v2992, 0.0
      %v3025 = vsel %vm2894, %v2993, 0.0
      %v3026 = vsel %vm2894, %v2994, 0.0
      %v3027 = vsel %vm2894, %v2995, 0.0
      %v3028 = vsel %vm2894, %v2996, 0.0
      %v3029 = vsel %vm2894, %v2997, 0.0
      %v3030 = vsel %vm2894, %v2998, 0.0
      %v3031 = vsel %vm2894, %v2999, 0.0
      %v3032 = vsel %vm2894, %v3000, 0.0
      %v3033 = vsel %vm2894, %v3001, 0.0
      %v3034 = vsel %vm2894, %v3002, 0.0
      %v3035 = vmul.f32 %v3003, %v3003
      %v3036 = vmul.f32 %v3004, %v3004
      %v3037 = vmul.f32 %v3005, %v3005
      %v3038 = vmul.f32 %v3006, %v3006
      %v3039 = vmul.f32 %v3007, %v3007
      %v3040 = vmul.f32 %v3008, %v3008
      %v3041 = vmul.f32 %v3009, %v3009
      %v3042 = vmul.f32 %v3010, %v3010
      %v3043 = vmul.f32 %v3011, %v3011
      %v3044 = vmul.f32 %v3012, %v3012
      %v3045 = vmul.f32 %v3013, %v3013
      %v3046 = vmul.f32 %v3014, %v3014
      %v3047 = vmul.f32 %v3015, %v3015
      %v3048 = vmul.f32 %v3016, %v3016
      %v3049 = vmul.f32 %v3017, %v3017
      %v3050 = vmul.f32 %v3018, %v3018
      %v3051 = vmul.f32 %v3019, %v3019
      %v3052 = vmul.f32 %v3020, %v3020
      %v3053 = vmul.f32 %v3021, %v3021
      %v3054 = vmul.f32 %v3022, %v3022
      %v3055 = vmul.f32 %v3023, %v3023
      %v3056 = vmul.f32 %v3024, %v3024
      %v3057 = vmul.f32 %v3025, %v3025
      %v3058 = vmul.f32 %v3026, %v3026
      %v3059 = vmul.f32 %v3027, %v3027
      %v3060 = vmul.f32 %v3028, %v3028
      %v3061 = vmul.f32 %v3029, %v3029
      %v3062 = vmul.f32 %v3030, %v3030
      %v3063 = vmul.f32 %v3031, %v3031
      %v3064 = vmul.f32 %v3032, %v3032
      %v3065 = vmul.f32 %v3033, %v3033
      %v3066 = vmul.f32 %v3034, %v3034
      %v3067 = vadd.f32 %v3035, %v3036
      %v3068 = vadd.f32 %v3067, %v3037
      %v3069 = vadd.f32 %v3068, %v3038
      %v3070 = vadd.f32 %v3069, %v3039
      %v3071 = vadd.f32 %v3070, %v3040
      %v3072 = vadd.f32 %v3071, %v3041
      %v3073 = vadd.f32 %v3072, %v3042
      %v3074 = vadd.f32 %v3073, %v3043
      %v3075 = vadd.f32 %v3074, %v3044
      %v3076 = vadd.f32 %v3075, %v3045
      %v3077 = vadd.f32 %v3076, %v3046
      %v3078 = vadd.f32 %v3077, %v3047
      %v3079 = vadd.f32 %v3078, %v3048
      %v3080 = vadd.f32 %v3079, %v3049
      %v3081 = vadd.f32 %v3080, %v3050
      %v3082 = vadd.f32 %v3081, %v3051
      %v3083 = vadd.f32 %v3082, %v3052
      %v3084 = vadd.f32 %v3083, %v3053
      %v3085 = vadd.f32 %v3084, %v3054
      %v3086 = vadd.f32 %v3085, %v3055
      %v3087 = vadd.f32 %v3086, %v3056
      %v3088 = vadd.f32 %v3087, %v3057
      %v3089 = vadd.f32 %v3088, %v3058
      %v3090 = vadd.f32 %v3089, %v3059
      %v3091 = vadd.f32 %v3090, %v3060
      %v3092 = vadd.f32 %v3091, %v3061
      %v3093 = vadd.f32 %v3092, %v3062
      %v3094 = vadd.f32 %v3093, %v3063
      %v3095 = vadd.f32 %v3094, %v3064
      %v3096 = vadd.f32 %v3095, %v3065
      %v3097 = vadd.f32 %v3096, %v3066
      %3098 = vadd.xlane.f32.xlu0 %v3097
      %v3099 = vpop.xlane.xlu0 %3098
      %v3100 = vrot.slane %v3099, 4
      %v3101 = vadd.f32 %v3099, %v3100
      %v3102 = vrot.slane %v3101, 2
      %v3103 = vadd.f32 %v3101, %v3102
      %v3104 = vrot.slane %v3103, 1
      %v3105 = vadd.f32 %v3103, %v3104
      %s3106 = vtos %v3105
      %v3107 = vrcp.pop 8192.0
      %s3108 = vtos %v3107
      %s3109 = smul.f32 %s3106, %s3108
      %s3110 = sadd.f32 %s3109, 1e-05
      %v3111 = vstv %s3110
      %v3112 = vrsqrt.pop %v3111
      %s3113 = vtos %v3112
      %v3114 = vstv %s3113
      %v3115 = vmul.f32 %v2971, %v3114
      %v3116 = vmul.f32 %v2972, %v3114
      %v3117 = vmul.f32 %v2973, %v3114
      %v3118 = vmul.f32 %v2974, %v3114
      %v3119 = vmul.f32 %v2975, %v3114
      %v3120 = vmul.f32 %v2976, %v3114
      %v3121 = vmul.f32 %v2977, %v3114
      %v3122 = vmul.f32 %v2978, %v3114
      %v3123 = vmul.f32 %v2979, %v3114
      %v3124 = vmul.f32 %v2980, %v3114
      %v3125 = vmul.f32 %v2981, %v3114
      %v3126 = vmul.f32 %v2982, %v3114
      %v3127 = vmul.f32 %v2983, %v3114
      %v3128 = vmul.f32 %v2984, %v3114
      %v3129 = vmul.f32 %v2985, %v3114
      %v3130 = vmul.f32 %v2986, %v3114
      %v3131 = vmul.f32 %v2987, %v3114
      %v3132 = vmul.f32 %v2988, %v3114
      %v3133 = vmul.f32 %v2989, %v3114
      %v3134 = vmul.f32 %v2990, %v3114
      %v3135 = vmul.f32 %v2991, %v3114
      %v3136 = vmul.f32 %v2992, %v3114
      %v3137 = vmul.f32 %v2993, %v3114
      %v3138 = vmul.f32 %v2994, %v3114
      %v3139 = vmul.f32 %v2995, %v3114
      %v3140 = vmul.f32 %v2996, %v3114
      %v3141 = vmul.f32 %v2997, %v3114
      %v3142 = vmul.f32 %v2998, %v3114
      %v3143 = vmul.f32 %v2999, %v3114
      %v3144 = vmul.f32 %v3000, %v3114
      %v3145 = vmul.f32 %v3001, %v3114
      %v3146 = vmul.f32 %v3002, %v3114
      %v3147 = vsel %vm2894, %v3115, 0.0
      %v3148 = vsel %vm2894, %v3116, 0.0
      %v3149 = vsel %vm2894, %v3117, 0.0
      %v3150 = vsel %vm2894, %v3118, 0.0
      %v3151 = vsel %vm2894, %v3119, 0.0
      %v3152 = vsel %vm2894, %v3120, 0.0
      %v3153 = vsel %vm2894, %v3121, 0.0
      %v3154 = vsel %vm2894, %v3122, 0.0
      %v3155 = vsel %vm2894, %v3123, 0.0
      %v3156 = vsel %vm2894, %v3124, 0.0
      %v3157 = vsel %vm2894, %v3125, 0.0
      %v3158 = vsel %vm2894, %v3126, 0.0
      %v3159 = vsel %vm2894, %v3127, 0.0
      %v3160 = vsel %vm2894, %v3128, 0.0
      %v3161 = vsel %vm2894, %v3129, 0.0
      %v3162 = vsel %vm2894, %v3130, 0.0
      %v3163 = vsel %vm2894, %v3131, 0.0
      %v3164 = vsel %vm2894, %v3132, 0.0
      %v3165 = vsel %vm2894, %v3133, 0.0
      %v3166 = vsel %vm2894, %v3134, 0.0
      %v3167 = vsel %vm2894, %v3135, 0.0
      %v3168 = vsel %vm2894, %v3136, 0.0
      %v3169 = vsel %vm2894, %v3137, 0.0
      %v3170 = vsel %vm2894, %v3138, 0.0
      %v3171 = vsel %vm2894, %v3139, 0.0
      %v3172 = vsel %vm2894, %v3140, 0.0
      %v3173 = vsel %vm2894, %v3141, 0.0
      %v3174 = vsel %vm2894, %v3142, 0.0
      %v3175 = vsel %vm2894, %v3143, 0.0
      %v3176 = vsel %vm2894, %v3144, 0.0
      %v3177 = vsel %vm2894, %v3145, 0.0
      %v3178 = vsel %vm2894, %v3146, 0.0
      %vm3179 = vcmp.ge.s32.totalorder %v2891, 32
      %vm3180 = vcmp.lt.s32.totalorder %v2891, 64
      %vm3181 = vmand %vm3179, %vm3180
      %v3182 = vsel %vm3181, %v2858, 0.0
      %v3183 = vsel %vm3181, %v2859, 0.0
      %v3184 = vsel %vm3181, %v2860, 0.0
      %v3185 = vsel %vm3181, %v2861, 0.0
      %v3186 = vsel %vm3181, %v2862, 0.0
      %v3187 = vsel %vm3181, %v2863, 0.0
      %v3188 = vsel %vm3181, %v2864, 0.0
      %v3189 = vsel %vm3181, %v2865, 0.0
      %v3190 = vsel %vm3181, %v2866, 0.0
      %v3191 = vsel %vm3181, %v2867, 0.0
      %v3192 = vsel %vm3181, %v2868, 0.0
      %v3193 = vsel %vm3181, %v2869, 0.0
      %v3194 = vsel %vm3181, %v2870, 0.0
      %v3195 = vsel %vm3181, %v2871, 0.0
      %v3196 = vsel %vm3181, %v2872, 0.0
      %v3197 = vsel %vm3181, %v2873, 0.0
      %v3198 = vsel %vm3181, %v2874, 0.0
      %v3199 = vsel %vm3181, %v2875, 0.0
      %v3200 = vsel %vm3181, %v2876, 0.0
      %v3201 = vsel %vm3181, %v2877, 0.0
      %v3202 = vsel %vm3181, %v2878, 0.0
      %v3203 = vsel %vm3181, %v2879, 0.0
      %v3204 = vsel %vm3181, %v2880, 0.0
      %v3205 = vsel %vm3181, %v2881, 0.0
      %v3206 = vsel %vm3181, %v2882, 0.0
      %v3207 = vsel %vm3181, %v2883, 0.0
      %v3208 = vsel %vm3181, %v2884, 0.0
      %v3209 = vsel %vm3181, %v2885, 0.0
      %v3210 = vsel %vm3181, %v2886, 0.0
      %v3211 = vsel %vm3181, %v2887, 0.0
      %v3212 = vsel %vm3181, %v2888, 0.0
      %v3213 = vsel %vm3181, %v2889, 0.0
      %v3214 = vadd.f32 %v3182, %v3183
      %v3215 = vadd.f32 %v3214, %v3184
      %v3216 = vadd.f32 %v3215, %v3185
      %v3217 = vadd.f32 %v3216, %v3186
      %v3218 = vadd.f32 %v3217, %v3187
      %v3219 = vadd.f32 %v3218, %v3188
      %v3220 = vadd.f32 %v3219, %v3189
      %v3221 = vadd.f32 %v3220, %v3190
      %v3222 = vadd.f32 %v3221, %v3191
      %v3223 = vadd.f32 %v3222, %v3192
      %v3224 = vadd.f32 %v3223, %v3193
      %v3225 = vadd.f32 %v3224, %v3194
      %v3226 = vadd.f32 %v3225, %v3195
      %v3227 = vadd.f32 %v3226, %v3196
      %v3228 = vadd.f32 %v3227, %v3197
      %v3229 = vadd.f32 %v3228, %v3198
      %v3230 = vadd.f32 %v3229, %v3199
      %v3231 = vadd.f32 %v3230, %v3200
      %v3232 = vadd.f32 %v3231, %v3201
      %v3233 = vadd.f32 %v3232, %v3202
      %v3234 = vadd.f32 %v3233, %v3203
      %v3235 = vadd.f32 %v3234, %v3204
      %v3236 = vadd.f32 %v3235, %v3205
      %v3237 = vadd.f32 %v3236, %v3206
      %v3238 = vadd.f32 %v3237, %v3207
      %v3239 = vadd.f32 %v3238, %v3208
      %v3240 = vadd.f32 %v3239, %v3209
      %v3241 = vadd.f32 %v3240, %v3210
      %v3242 = vadd.f32 %v3241, %v3211
      %v3243 = vadd.f32 %v3242, %v3212
      %v3244 = vadd.f32 %v3243, %v3213
      %3245 = vadd.xlane.f32.xlu0 %v3244
      %v3246 = vpop.xlane.xlu0 %3245
      %v3247 = vrot.slane %v3246, 4
      %v3248 = vadd.f32 %v3246, %v3247
      %v3249 = vrot.slane %v3248, 2
      %v3250 = vadd.f32 %v3248, %v3249
      %v3251 = vrot.slane %v3250, 1
      %v3252 = vadd.f32 %v3250, %v3251
      %s3253 = vtos %v3252
      %v3254 = vrcp.pop 8192.0
      %s3255 = vtos %v3254
      %s3256 = smul.f32 %s3253, %s3255
      %v3257 = vstv %s3256
      %v3258 = vsub.f32 %v2858, %v3257
      %v3259 = vsub.f32 %v2859, %v3257
      %v3260 = vsub.f32 %v2860, %v3257
      %v3261 = vsub.f32 %v2861, %v3257
      %v3262 = vsub.f32 %v2862, %v3257
      %v3263 = vsub.f32 %v2863, %v3257
      %v3264 = vsub.f32 %v2864, %v3257
      %v3265 = vsub.f32 %v2865, %v3257
      %v3266 = vsub.f32 %v2866, %v3257
      %v3267 = vsub.f32 %v2867, %v3257
      %v3268 = vsub.f32 %v2868, %v3257
      %v3269 = vsub.f32 %v2869, %v3257
      %v3270 = vsub.f32 %v2870, %v3257
      %v3271 = vsub.f32 %v2871, %v3257
      %v3272 = vsub.f32 %v2872, %v3257
      %v3273 = vsub.f32 %v2873, %v3257
      %v3274 = vsub.f32 %v2874, %v3257
      %v3275 = vsub.f32 %v2875, %v3257
      %v3276 = vsub.f32 %v2876, %v3257
      %v3277 = vsub.f32 %v2877, %v3257
      %v3278 = vsub.f32 %v2878, %v3257
      %v3279 = vsub.f32 %v2879, %v3257
      %v3280 = vsub.f32 %v2880, %v3257
      %v3281 = vsub.f32 %v2881, %v3257
      %v3282 = vsub.f32 %v2882, %v3257
      %v3283 = vsub.f32 %v2883, %v3257
      %v3284 = vsub.f32 %v2884, %v3257
      %v3285 = vsub.f32 %v2885, %v3257
      %v3286 = vsub.f32 %v2886, %v3257
      %v3287 = vsub.f32 %v2887, %v3257
      %v3288 = vsub.f32 %v2888, %v3257
      %v3289 = vsub.f32 %v2889, %v3257
      %v3290 = vsel %vm3181, %v3258, 0.0
      %v3291 = vsel %vm3181, %v3259, 0.0
      %v3292 = vsel %vm3181, %v3260, 0.0
      %v3293 = vsel %vm3181, %v3261, 0.0
      %v3294 = vsel %vm3181, %v3262, 0.0
      %v3295 = vsel %vm3181, %v3263, 0.0
      %v3296 = vsel %vm3181, %v3264, 0.0
      %v3297 = vsel %vm3181, %v3265, 0.0
      %v3298 = vsel %vm3181, %v3266, 0.0
      %v3299 = vsel %vm3181, %v3267, 0.0
      %v3300 = vsel %vm3181, %v3268, 0.0
      %v3301 = vsel %vm3181, %v3269, 0.0
      %v3302 = vsel %vm3181, %v3270, 0.0
      %v3303 = vsel %vm3181, %v3271, 0.0
      %v3304 = vsel %vm3181, %v3272, 0.0
      %v3305 = vsel %vm3181, %v3273, 0.0
      %v3306 = vsel %vm3181, %v3274, 0.0
      %v3307 = vsel %vm3181, %v3275, 0.0
      %v3308 = vsel %vm3181, %v3276, 0.0
      %v3309 = vsel %vm3181, %v3277, 0.0
      %v3310 = vsel %vm3181, %v3278, 0.0
      %v3311 = vsel %vm3181, %v3279, 0.0
      %v3312 = vsel %vm3181, %v3280, 0.0
      %v3313 = vsel %vm3181, %v3281, 0.0
      %v3314 = vsel %vm3181, %v3282, 0.0
      %v3315 = vsel %vm3181, %v3283, 0.0
      %v3316 = vsel %vm3181, %v3284, 0.0
      %v3317 = vsel %vm3181, %v3285, 0.0
      %v3318 = vsel %vm3181, %v3286, 0.0
      %v3319 = vsel %vm3181, %v3287, 0.0
      %v3320 = vsel %vm3181, %v3288, 0.0
      %v3321 = vsel %vm3181, %v3289, 0.0
      %v3322 = vmul.f32 %v3290, %v3290
      %v3323 = vmul.f32 %v3291, %v3291
      %v3324 = vmul.f32 %v3292, %v3292
      %v3325 = vmul.f32 %v3293, %v3293
      %v3326 = vmul.f32 %v3294, %v3294
      %v3327 = vmul.f32 %v3295, %v3295
      %v3328 = vmul.f32 %v3296, %v3296
      %v3329 = vmul.f32 %v3297, %v3297
      %v3330 = vmul.f32 %v3298, %v3298
      %v3331 = vmul.f32 %v3299, %v3299
      %v3332 = vmul.f32 %v3300, %v3300
      %v3333 = vmul.f32 %v3301, %v3301
      %v3334 = vmul.f32 %v3302, %v3302
      %v3335 = vmul.f32 %v3303, %v3303
      %v3336 = vmul.f32 %v3304, %v3304
      %v3337 = vmul.f32 %v3305, %v3305
      %v3338 = vmul.f32 %v3306, %v3306
      %v3339 = vmul.f32 %v3307, %v3307
      %v3340 = vmul.f32 %v3308, %v3308
      %v3341 = vmul.f32 %v3309, %v3309
      %v3342 = vmul.f32 %v3310, %v3310
      %v3343 = vmul.f32 %v3311, %v3311
      %v3344 = vmul.f32 %v3312, %v3312
      %v3345 = vmul.f32 %v3313, %v3313
      %v3346 = vmul.f32 %v3314, %v3314
      %v3347 = vmul.f32 %v3315, %v3315
      %v3348 = vmul.f32 %v3316, %v3316
      %v3349 = vmul.f32 %v3317, %v3317
      %v3350 = vmul.f32 %v3318, %v3318
      %v3351 = vmul.f32 %v3319, %v3319
      %v3352 = vmul.f32 %v3320, %v3320
      %v3353 = vmul.f32 %v3321, %v3321
      %v3354 = vadd.f32 %v3322, %v3323
      %v3355 = vadd.f32 %v3354, %v3324
      %v3356 = vadd.f32 %v3355, %v3325
      %v3357 = vadd.f32 %v3356, %v3326
      %v3358 = vadd.f32 %v3357, %v3327
      %v3359 = vadd.f32 %v3358, %v3328
      %v3360 = vadd.f32 %v3359, %v3329
      %v3361 = vadd.f32 %v3360, %v3330
      %v3362 = vadd.f32 %v3361, %v3331
      %v3363 = vadd.f32 %v3362, %v3332
      %v3364 = vadd.f32 %v3363, %v3333
      %v3365 = vadd.f32 %v3364, %v3334
      %v3366 = vadd.f32 %v3365, %v3335
      %v3367 = vadd.f32 %v3366, %v3336
      %v3368 = vadd.f32 %v3367, %v3337
      %v3369 = vadd.f32 %v3368, %v3338
      %v3370 = vadd.f32 %v3369, %v3339
      %v3371 = vadd.f32 %v3370, %v3340
      %v3372 = vadd.f32 %v3371, %v3341
      %v3373 = vadd.f32 %v3372, %v3342
      %v3374 = vadd.f32 %v3373, %v3343
      %v3375 = vadd.f32 %v3374, %v3344
      %v3376 = vadd.f32 %v3375, %v3345
      %v3377 = vadd.f32 %v3376, %v3346
      %v3378 = vadd.f32 %v3377, %v3347
      %v3379 = vadd.f32 %v3378, %v3348
      %v3380 = vadd.f32 %v3379, %v3349
      %v3381 = vadd.f32 %v3380, %v3350
      %v3382 = vadd.f32 %v3381, %v3351
      %v3383 = vadd.f32 %v3382, %v3352
      %v3384 = vadd.f32 %v3383, %v3353
      %3385 = vadd.xlane.f32.xlu0 %v3384
      %v3386 = vpop.xlane.xlu0 %3385
      %v3387 = vrot.slane %v3386, 4
      %v3388 = vadd.f32 %v3386, %v3387
      %v3389 = vrot.slane %v3388, 2
      %v3390 = vadd.f32 %v3388, %v3389
      %v3391 = vrot.slane %v3390, 1
      %v3392 = vadd.f32 %v3390, %v3391
      %s3393 = vtos %v3392
      %v3394 = vrcp.pop 8192.0
      %s3395 = vtos %v3394
      %s3396 = smul.f32 %s3393, %s3395
      %s3397 = sadd.f32 %s3396, 1e-05
      %v3398 = vstv %s3397
      %v3399 = vrsqrt.pop %v3398
      %s3400 = vtos %v3399
      %v3401 = vstv %s3400
      %v3402 = vmul.f32 %v3258, %v3401
      %v3403 = vmul.f32 %v3259, %v3401
      %v3404 = vmul.f32 %v3260, %v3401
      %v3405 = vmul.f32 %v3261, %v3401
      %v3406 = vmul.f32 %v3262, %v3401
      %v3407 = vmul.f32 %v3263, %v3401
      %v3408 = vmul.f32 %v3264, %v3401
      %v3409 = vmul.f32 %v3265, %v3401
      %v3410 = vmul.f32 %v3266, %v3401
      %v3411 = vmul.f32 %v3267, %v3401
      %v3412 = vmul.f32 %v3268, %v3401
      %v3413 = vmul.f32 %v3269, %v3401
      %v3414 = vmul.f32 %v3270, %v3401
      %v3415 = vmul.f32 %v3271, %v3401
      %v3416 = vmul.f32 %v3272, %v3401
      %v3417 = vmul.f32 %v3273, %v3401
      %v3418 = vmul.f32 %v3274, %v3401
      %v3419 = vmul.f32 %v3275, %v3401
      %v3420 = vmul.f32 %v3276, %v3401
      %v3421 = vmul.f32 %v3277, %v3401
      %v3422 = vmul.f32 %v3278, %v3401
      %v3423 = vmul.f32 %v3279, %v3401
      %v3424 = vmul.f32 %v3280, %v3401
      %v3425 = vmul.f32 %v3281, %v3401
      %v3426 = vmul.f32 %v3282, %v3401
      %v3427 = vmul.f32 %v3283, %v3401
      %v3428 = vmul.f32 %v3284, %v3401
      %v3429 = vmul.f32 %v3285, %v3401
      %v3430 = vmul.f32 %v3286, %v3401
      %v3431 = vmul.f32 %v3287, %v3401
      %v3432 = vmul.f32 %v3288, %v3401
      %v3433 = vmul.f32 %v3289, %v3401
      %v3434 = vsel %vm3181, %v3402, %v3147
      %v3435 = vsel %vm3181, %v3403, %v3148
      %v3436 = vsel %vm3181, %v3404, %v3149
      %v3437 = vsel %vm3181, %v3405, %v3150
      %v3438 = vsel %vm3181, %v3406, %v3151
      %v3439 = vsel %vm3181, %v3407, %v3152
      %v3440 = vsel %vm3181, %v3408, %v3153
      %v3441 = vsel %vm3181, %v3409, %v3154
      %v3442 = vsel %vm3181, %v3410, %v3155
      %v3443 = vsel %vm3181, %v3411, %v3156
      %v3444 = vsel %vm3181, %v3412, %v3157
      %v3445 = vsel %vm3181, %v3413, %v3158
      %v3446 = vsel %vm3181, %v3414, %v3159
      %v3447 = vsel %vm3181, %v3415, %v3160
      %v3448 = vsel %vm3181, %v3416, %v3161
      %v3449 = vsel %vm3181, %v3417, %v3162
      %v3450 = vsel %vm3181, %v3418, %v3163
      %v3451 = vsel %vm3181, %v3419, %v3164
      %v3452 = vsel %vm3181, %v3420, %v3165
      %v3453 = vsel %vm3181, %v3421, %v3166
      %v3454 = vsel %vm3181, %v3422, %v3167
      %v3455 = vsel %vm3181, %v3423, %v3168
      %v3456 = vsel %vm3181, %v3424, %v3169
      %v3457 = vsel %vm3181, %v3425, %v3170
      %v3458 = vsel %vm3181, %v3426, %v3171
      %v3459 = vsel %vm3181, %v3427, %v3172
      %v3460 = vsel %vm3181, %v3428, %v3173
      %v3461 = vsel %vm3181, %v3429, %v3174
      %v3462 = vsel %vm3181, %v3430, %v3175
      %v3463 = vsel %vm3181, %v3431, %v3176
      %v3464 = vsel %vm3181, %v3432, %v3177
      %v3465 = vsel %vm3181, %v3433, %v3178
      %vm3466 = vcmp.ge.s32.totalorder %v2891, 64
      %vm3467 = vcmp.lt.s32.totalorder %v2891, 96
      %vm3468 = vmand %vm3466, %vm3467
      %v3469 = vsel %vm3468, %v2858, 0.0
      %v3470 = vsel %vm3468, %v2859, 0.0
      %v3471 = vsel %vm3468, %v2860, 0.0
      %v3472 = vsel %vm3468, %v2861, 0.0
      %v3473 = vsel %vm3468, %v2862, 0.0
      %v3474 = vsel %vm3468, %v2863, 0.0
      %v3475 = vsel %vm3468, %v2864, 0.0
      %v3476 = vsel %vm3468, %v2865, 0.0
      %v3477 = vsel %vm3468, %v2866, 0.0
      %v3478 = vsel %vm3468, %v2867, 0.0
      %v3479 = vsel %vm3468, %v2868, 0.0
      %v3480 = vsel %vm3468, %v2869, 0.0
      %v3481 = vsel %vm3468, %v2870, 0.0
      %v3482 = vsel %vm3468, %v2871, 0.0
      %v3483 = vsel %vm3468, %v2872, 0.0
      %v3484 = vsel %vm3468, %v2873, 0.0
      %v3485 = vsel %vm3468, %v2874, 0.0
      %v3486 = vsel %vm3468, %v2875, 0.0
      %v3487 = vsel %vm3468, %v2876, 0.0
      %v3488 = vsel %vm3468, %v2877, 0.0
      %v3489 = vsel %vm3468, %v2878, 0.0
      %v3490 = vsel %vm3468, %v2879, 0.0
      %v3491 = vsel %vm3468, %v2880, 0.0
      %v3492 = vsel %vm3468, %v2881, 0.0
      %v3493 = vsel %vm3468, %v2882, 0.0
      %v3494 = vsel %vm3468, %v2883, 0.0
      %v3495 = vsel %vm3468, %v2884, 0.0
      %v3496 = vsel %vm3468, %v2885, 0.0
      %v3497 = vsel %vm3468, %v2886, 0.0
      %v3498 = vsel %vm3468, %v2887, 0.0
      %v3499 = vsel %vm3468, %v2888, 0.0
      %v3500 = vsel %vm3468, %v2889, 0.0
      %v3501 = vadd.f32 %v3469, %v3470
      %v3502 = vadd.f32 %v3501, %v3471
      %v3503 = vadd.f32 %v3502, %v3472
      %v3504 = vadd.f32 %v3503, %v3473
      %v3505 = vadd.f32 %v3504, %v3474
      %v3506 = vadd.f32 %v3505, %v3475
      %v3507 = vadd.f32 %v3506, %v3476
      %v3508 = vadd.f32 %v3507, %v3477
      %v3509 = vadd.f32 %v3508, %v3478
      %v3510 = vadd.f32 %v3509, %v3479
      %v3511 = vadd.f32 %v3510, %v3480
      %v3512 = vadd.f32 %v3511, %v3481
      %v3513 = vadd.f32 %v3512, %v3482
      %v3514 = vadd.f32 %v3513, %v3483
      %v3515 = vadd.f32 %v3514, %v3484
      %v3516 = vadd.f32 %v3515, %v3485
      %v3517 = vadd.f32 %v3516, %v3486
      %v3518 = vadd.f32 %v3517, %v3487
      %v3519 = vadd.f32 %v3518, %v3488
      %v3520 = vadd.f32 %v3519, %v3489
      %v3521 = vadd.f32 %v3520, %v3490
      %v3522 = vadd.f32 %v3521, %v3491
      %v3523 = vadd.f32 %v3522, %v3492
      %v3524 = vadd.f32 %v3523, %v3493
      %v3525 = vadd.f32 %v3524, %v3494
      %v3526 = vadd.f32 %v3525, %v3495
      %v3527 = vadd.f32 %v3526, %v3496
      %v3528 = vadd.f32 %v3527, %v3497
      %v3529 = vadd.f32 %v3528, %v3498
      %v3530 = vadd.f32 %v3529, %v3499
      %v3531 = vadd.f32 %v3530, %v3500
      %3532 = vadd.xlane.f32.xlu0 %v3531
      %v3533 = vpop.xlane.xlu0 %3532
      %v3534 = vrot.slane %v3533, 4
      %v3535 = vadd.f32 %v3533, %v3534
      %v3536 = vrot.slane %v3535, 2
      %v3537 = vadd.f32 %v3535, %v3536
      %v3538 = vrot.slane %v3537, 1
      %v3539 = vadd.f32 %v3537, %v3538
      %s3540 = vtos %v3539
      %v3541 = vrcp.pop 8192.0
      %s3542 = vtos %v3541
      %s3543 = smul.f32 %s3540, %s3542
      %v3544 = vstv %s3543
      %v3545 = vsub.f32 %v2858, %v3544
      %v3546 = vsub.f32 %v2859, %v3544
      %v3547 = vsub.f32 %v2860, %v3544
      %v3548 = vsub.f32 %v2861, %v3544
      %v3549 = vsub.f32 %v2862, %v3544
      %v3550 = vsub.f32 %v2863, %v3544
      %v3551 = vsub.f32 %v2864, %v3544
      %v3552 = vsub.f32 %v2865, %v3544
      %v3553 = vsub.f32 %v2866, %v3544
      %v3554 = vsub.f32 %v2867, %v3544
      %v3555 = vsub.f32 %v2868, %v3544
      %v3556 = vsub.f32 %v2869, %v3544
      %v3557 = vsub.f32 %v2870, %v3544
      %v3558 = vsub.f32 %v2871, %v3544
      %v3559 = vsub.f32 %v2872, %v3544
      %v3560 = vsub.f32 %v2873, %v3544
      %v3561 = vsub.f32 %v2874, %v3544
      %v3562 = vsub.f32 %v2875, %v3544
      %v3563 = vsub.f32 %v2876, %v3544
      %v3564 = vsub.f32 %v2877, %v3544
      %v3565 = vsub.f32 %v2878, %v3544
      %v3566 = vsub.f32 %v2879, %v3544
      %v3567 = vsub.f32 %v2880, %v3544
      %v3568 = vsub.f32 %v2881, %v3544
      %v3569 = vsub.f32 %v2882, %v3544
      %v3570 = vsub.f32 %v2883, %v3544
      %v3571 = vsub.f32 %v2884, %v3544
      %v3572 = vsub.f32 %v2885, %v3544
      %v3573 = vsub.f32 %v2886, %v3544
      %v3574 = vsub.f32 %v2887, %v3544
      %v3575 = vsub.f32 %v2888, %v3544
      %v3576 = vsub.f32 %v2889, %v3544
      %v3577 = vsel %vm3468, %v3545, 0.0
      %v3578 = vsel %vm3468, %v3546, 0.0
      %v3579 = vsel %vm3468, %v3547, 0.0
      %v3580 = vsel %vm3468, %v3548, 0.0
      %v3581 = vsel %vm3468, %v3549, 0.0
      %v3582 = vsel %vm3468, %v3550, 0.0
      %v3583 = vsel %vm3468, %v3551, 0.0
      %v3584 = vsel %vm3468, %v3552, 0.0
      %v3585 = vsel %vm3468, %v3553, 0.0
      %v3586 = vsel %vm3468, %v3554, 0.0
      %v3587 = vsel %vm3468, %v3555, 0.0
      %v3588 = vsel %vm3468, %v3556, 0.0
      %v3589 = vsel %vm3468, %v3557, 0.0
      %v3590 = vsel %vm3468, %v3558, 0.0
      %v3591 = vsel %vm3468, %v3559, 0.0
      %v3592 = vsel %vm3468, %v3560, 0.0
      %v3593 = vsel %vm3468, %v3561, 0.0
      %v3594 = vsel %vm3468, %v3562, 0.0
      %v3595 = vsel %vm3468, %v3563, 0.0
      %v3596 = vsel %vm3468, %v3564, 0.0
      %v3597 = vsel %vm3468, %v3565, 0.0
      %v3598 = vsel %vm3468, %v3566, 0.0
      %v3599 = vsel %vm3468, %v3567, 0.0
      %v3600 = vsel %vm3468, %v3568, 0.0
      %v3601 = vsel %vm3468, %v3569, 0.0
      %v3602 = vsel %vm3468, %v3570, 0.0
      %v3603 = vsel %vm3468, %v3571, 0.0
      %v3604 = vsel %vm3468, %v3572, 0.0
      %v3605 = vsel %vm3468, %v3573, 0.0
      %v3606 = vsel %vm3468, %v3574, 0.0
      %v3607 = vsel %vm3468, %v3575, 0.0
      %v3608 = vsel %vm3468, %v3576, 0.0
      %v3609 = vmul.f32 %v3577, %v3577
      %v3610 = vmul.f32 %v3578, %v3578
      %v3611 = vmul.f32 %v3579, %v3579
      %v3612 = vmul.f32 %v3580, %v3580
      %v3613 = vmul.f32 %v3581, %v3581
      %v3614 = vmul.f32 %v3582, %v3582
      %v3615 = vmul.f32 %v3583, %v3583
      %v3616 = vmul.f32 %v3584, %v3584
      %v3617 = vmul.f32 %v3585, %v3585
      %v3618 = vmul.f32 %v3586, %v3586
      %v3619 = vmul.f32 %v3587, %v3587
      %v3620 = vmul.f32 %v3588, %v3588
      %v3621 = vmul.f32 %v3589, %v3589
      %v3622 = vmul.f32 %v3590, %v3590
      %v3623 = vmul.f32 %v3591, %v3591
      %v3624 = vmul.f32 %v3592, %v3592
      %v3625 = vmul.f32 %v3593, %v3593
      %v3626 = vmul.f32 %v3594, %v3594
      %v3627 = vmul.f32 %v3595, %v3595
      %v3628 = vmul.f32 %v3596, %v3596
      %v3629 = vmul.f32 %v3597, %v3597
      %v3630 = vmul.f32 %v3598, %v3598
      %v3631 = vmul.f32 %v3599, %v3599
      %v3632 = vmul.f32 %v3600, %v3600
      %v3633 = vmul.f32 %v3601, %v3601
      %v3634 = vmul.f32 %v3602, %v3602
      %v3635 = vmul.f32 %v3603, %v3603
      %v3636 = vmul.f32 %v3604, %v3604
      %v3637 = vmul.f32 %v3605, %v3605
      %v3638 = vmul.f32 %v3606, %v3606
      %v3639 = vmul.f32 %v3607, %v3607
      %v3640 = vmul.f32 %v3608, %v3608
      %v3641 = vadd.f32 %v3609, %v3610
      %v3642 = vadd.f32 %v3641, %v3611
      %v3643 = vadd.f32 %v3642, %v3612
      %v3644 = vadd.f32 %v3643, %v3613
      %v3645 = vadd.f32 %v3644, %v3614
      %v3646 = vadd.f32 %v3645, %v3615
      %v3647 = vadd.f32 %v3646, %v3616
      %v3648 = vadd.f32 %v3647, %v3617
      %v3649 = vadd.f32 %v3648, %v3618
      %v3650 = vadd.f32 %v3649, %v3619
      %v3651 = vadd.f32 %v3650, %v3620
      %v3652 = vadd.f32 %v3651, %v3621
      %v3653 = vadd.f32 %v3652, %v3622
      %v3654 = vadd.f32 %v3653, %v3623
      %v3655 = vadd.f32 %v3654, %v3624
      %v3656 = vadd.f32 %v3655, %v3625
      %v3657 = vadd.f32 %v3656, %v3626
      %v3658 = vadd.f32 %v3657, %v3627
      %v3659 = vadd.f32 %v3658, %v3628
      %v3660 = vadd.f32 %v3659, %v3629
      %v3661 = vadd.f32 %v3660, %v3630
      %v3662 = vadd.f32 %v3661, %v3631
      %v3663 = vadd.f32 %v3662, %v3632
      %v3664 = vadd.f32 %v3663, %v3633
      %v3665 = vadd.f32 %v3664, %v3634
      %v3666 = vadd.f32 %v3665, %v3635
      %v3667 = vadd.f32 %v3666, %v3636
      %v3668 = vadd.f32 %v3667, %v3637
      %v3669 = vadd.f32 %v3668, %v3638
      %v3670 = vadd.f32 %v3669, %v3639
      %v3671 = vadd.f32 %v3670, %v3640
      %3672 = vadd.xlane.f32.xlu0 %v3671
      %v3673 = vpop.xlane.xlu0 %3672
      %v3674 = vrot.slane %v3673, 4
      %v3675 = vadd.f32 %v3673, %v3674
      %v3676 = vrot.slane %v3675, 2
      %v3677 = vadd.f32 %v3675, %v3676
      %v3678 = vrot.slane %v3677, 1
      %v3679 = vadd.f32 %v3677, %v3678
      %s3680 = vtos %v3679
      %v3681 = vrcp.pop 8192.0
      %s3682 = vtos %v3681
      %s3683 = smul.f32 %s3680, %s3682
      %s3684 = sadd.f32 %s3683, 1e-05
      %v3685 = vstv %s3684
      %v3686 = vrsqrt.pop %v3685
      %s3687 = vtos %v3686
      %v3688 = vstv %s3687
      %v3689 = vmul.f32 %v3545, %v3688
      %v3690 = vmul.f32 %v3546, %v3688
      %v3691 = vmul.f32 %v3547, %v3688
      %v3692 = vmul.f32 %v3548, %v3688
      %v3693 = vmul.f32 %v3549, %v3688
      %v3694 = vmul.f32 %v3550, %v3688
      %v3695 = vmul.f32 %v3551, %v3688
      %v3696 = vmul.f32 %v3552, %v3688
      %v3697 = vmul.f32 %v3553, %v3688
      %v3698 = vmul.f32 %v3554, %v3688
      %v3699 = vmul.f32 %v3555, %v3688
      %v3700 = vmul.f32 %v3556, %v3688
      %v3701 = vmul.f32 %v3557, %v3688
      %v3702 = vmul.f32 %v3558, %v3688
      %v3703 = vmul.f32 %v3559, %v3688
      %v3704 = vmul.f32 %v3560, %v3688
      %v3705 = vmul.f32 %v3561, %v3688
      %v3706 = vmul.f32 %v3562, %v3688
      %v3707 = vmul.f32 %v3563, %v3688
      %v3708 = vmul.f32 %v3564, %v3688
      %v3709 = vmul.f32 %v3565, %v3688
      %v3710 = vmul.f32 %v3566, %v3688
      %v3711 = vmul.f32 %v3567, %v3688
      %v3712 = vmul.f32 %v3568, %v3688
      %v3713 = vmul.f32 %v3569, %v3688
      %v3714 = vmul.f32 %v3570, %v3688
      %v3715 = vmul.f32 %v3571, %v3688
      %v3716 = vmul.f32 %v3572, %v3688
      %v3717 = vmul.f32 %v3573, %v3688
      %v3718 = vmul.f32 %v3574, %v3688
      %v3719 = vmul.f32 %v3575, %v3688
      %v3720 = vmul.f32 %v3576, %v3688
      %v3721 = vsel %vm3468, %v3689, %v3434
      %v3722 = vsel %vm3468, %v3690, %v3435
      %v3723 = vsel %vm3468, %v3691, %v3436
      %v3724 = vsel %vm3468, %v3692, %v3437
      %v3725 = vsel %vm3468, %v3693, %v3438
      %v3726 = vsel %vm3468, %v3694, %v3439
      %v3727 = vsel %vm3468, %v3695, %v3440
      %v3728 = vsel %vm3468, %v3696, %v3441
      %v3729 = vsel %vm3468, %v3697, %v3442
      %v3730 = vsel %vm3468, %v3698, %v3443
      %v3731 = vsel %vm3468, %v3699, %v3444
      %v3732 = vsel %vm3468, %v3700, %v3445
      %v3733 = vsel %vm3468, %v3701, %v3446
      %v3734 = vsel %vm3468, %v3702, %v3447
      %v3735 = vsel %vm3468, %v3703, %v3448
      %v3736 = vsel %vm3468, %v3704, %v3449
      %v3737 = vsel %vm3468, %v3705, %v3450
      %v3738 = vsel %vm3468, %v3706, %v3451
      %v3739 = vsel %vm3468, %v3707, %v3452
      %v3740 = vsel %vm3468, %v3708, %v3453
      %v3741 = vsel %vm3468, %v3709, %v3454
      %v3742 = vsel %vm3468, %v3710, %v3455
      %v3743 = vsel %vm3468, %v3711, %v3456
      %v3744 = vsel %vm3468, %v3712, %v3457
      %v3745 = vsel %vm3468, %v3713, %v3458
      %v3746 = vsel %vm3468, %v3714, %v3459
      %v3747 = vsel %vm3468, %v3715, %v3460
      %v3748 = vsel %vm3468, %v3716, %v3461
      %v3749 = vsel %vm3468, %v3717, %v3462
      %v3750 = vsel %vm3468, %v3718, %v3463
      %v3751 = vsel %vm3468, %v3719, %v3464
      %v3752 = vsel %vm3468, %v3720, %v3465
      %vm3753 = vcmp.ge.s32.totalorder %v2891, 96
      %vm3754 = vcmp.lt.s32.totalorder %v2891, 128
      %vm3755 = vmand %vm3753, %vm3754
      %v3756 = vsel %vm3755, %v2858, 0.0
      %v3757 = vsel %vm3755, %v2859, 0.0
      %v3758 = vsel %vm3755, %v2860, 0.0
      %v3759 = vsel %vm3755, %v2861, 0.0
      %v3760 = vsel %vm3755, %v2862, 0.0
      %v3761 = vsel %vm3755, %v2863, 0.0
      %v3762 = vsel %vm3755, %v2864, 0.0
      %v3763 = vsel %vm3755, %v2865, 0.0
      %v3764 = vsel %vm3755, %v2866, 0.0
      %v3765 = vsel %vm3755, %v2867, 0.0
      %v3766 = vsel %vm3755, %v2868, 0.0
      %v3767 = vsel %vm3755, %v2869, 0.0
      %v3768 = vsel %vm3755, %v2870, 0.0
      %v3769 = vsel %vm3755, %v2871, 0.0
      %v3770 = vsel %vm3755, %v2872, 0.0
      %v3771 = vsel %vm3755, %v2873, 0.0
      %v3772 = vsel %vm3755, %v2874, 0.0
      %v3773 = vsel %vm3755, %v2875, 0.0
      %v3774 = vsel %vm3755, %v2876, 0.0
      %v3775 = vsel %vm3755, %v2877, 0.0
      %v3776 = vsel %vm3755, %v2878, 0.0
      %v3777 = vsel %vm3755, %v2879, 0.0
      %v3778 = vsel %vm3755, %v2880, 0.0
      %v3779 = vsel %vm3755, %v2881, 0.0
      %v3780 = vsel %vm3755, %v2882, 0.0
      %v3781 = vsel %vm3755, %v2883, 0.0
      %v3782 = vsel %vm3755, %v2884, 0.0
      %v3783 = vsel %vm3755, %v2885, 0.0
      %v3784 = vsel %vm3755, %v2886, 0.0
      %v3785 = vsel %vm3755, %v2887, 0.0
      %v3786 = vsel %vm3755, %v2888, 0.0
      %v3787 = vsel %vm3755, %v2889, 0.0
      %v3788 = vadd.f32 %v3756, %v3757
      %v3789 = vadd.f32 %v3788, %v3758
      %v3790 = vadd.f32 %v3789, %v3759
      %v3791 = vadd.f32 %v3790, %v3760
      %v3792 = vadd.f32 %v3791, %v3761
      %v3793 = vadd.f32 %v3792, %v3762
      %v3794 = vadd.f32 %v3793, %v3763
      %v3795 = vadd.f32 %v3794, %v3764
      %v3796 = vadd.f32 %v3795, %v3765
      %v3797 = vadd.f32 %v3796, %v3766
      %v3798 = vadd.f32 %v3797, %v3767
      %v3799 = vadd.f32 %v3798, %v3768
      %v3800 = vadd.f32 %v3799, %v3769
      %v3801 = vadd.f32 %v3800, %v3770
      %v3802 = vadd.f32 %v3801, %v3771
      %v3803 = vadd.f32 %v3802, %v3772
      %v3804 = vadd.f32 %v3803, %v3773
      %v3805 = vadd.f32 %v3804, %v3774
      %v3806 = vadd.f32 %v3805, %v3775
      %v3807 = vadd.f32 %v3806, %v3776
      %v3808 = vadd.f32 %v3807, %v3777
      %v3809 = vadd.f32 %v3808, %v3778
      %v3810 = vadd.f32 %v3809, %v3779
      %v3811 = vadd.f32 %v3810, %v3780
      %v3812 = vadd.f32 %v3811, %v3781
      %v3813 = vadd.f32 %v3812, %v3782
      %v3814 = vadd.f32 %v3813, %v3783
      %v3815 = vadd.f32 %v3814, %v3784
      %v3816 = vadd.f32 %v3815, %v3785
      %v3817 = vadd.f32 %v3816, %v3786
      %v3818 = vadd.f32 %v3817, %v3787
      %3819 = vadd.xlane.f32.xlu0 %v3818
      %v3820 = vpop.xlane.xlu0 %3819
      %v3821 = vrot.slane %v3820, 4
      %v3822 = vadd.f32 %v3820, %v3821
      %v3823 = vrot.slane %v3822, 2
      %v3824 = vadd.f32 %v3822, %v3823
      %v3825 = vrot.slane %v3824, 1
      %v3826 = vadd.f32 %v3824, %v3825
      %s3827 = vtos %v3826
      %v3828 = vrcp.pop 8192.0
      %s3829 = vtos %v3828
      %s3830 = smul.f32 %s3827, %s3829
      %v3831 = vstv %s3830
      %v3832 = vsub.f32 %v2858, %v3831
      %v3833 = vsub.f32 %v2859, %v3831
      %v3834 = vsub.f32 %v2860, %v3831
      %v3835 = vsub.f32 %v2861, %v3831
      %v3836 = vsub.f32 %v2862, %v3831
      %v3837 = vsub.f32 %v2863, %v3831
      %v3838 = vsub.f32 %v2864, %v3831
      %v3839 = vsub.f32 %v2865, %v3831
      %v3840 = vsub.f32 %v2866, %v3831
      %v3841 = vsub.f32 %v2867, %v3831
      %v3842 = vsub.f32 %v2868, %v3831
      %v3843 = vsub.f32 %v2869, %v3831
      %v3844 = vsub.f32 %v2870, %v3831
      %v3845 = vsub.f32 %v2871, %v3831
      %v3846 = vsub.f32 %v2872, %v3831
      %v3847 = vsub.f32 %v2873, %v3831
      %v3848 = vsub.f32 %v2874, %v3831
      %v3849 = vsub.f32 %v2875, %v3831
      %v3850 = vsub.f32 %v2876, %v3831
      %v3851 = vsub.f32 %v2877, %v3831
      %v3852 = vsub.f32 %v2878, %v3831
      %v3853 = vsub.f32 %v2879, %v3831
      %v3854 = vsub.f32 %v2880, %v3831
      %v3855 = vsub.f32 %v2881, %v3831
      %v3856 = vsub.f32 %v2882, %v3831
      %v3857 = vsub.f32 %v2883, %v3831
      %v3858 = vsub.f32 %v2884, %v3831
      %v3859 = vsub.f32 %v2885, %v3831
      %v3860 = vsub.f32 %v2886, %v3831
      %v3861 = vsub.f32 %v2887, %v3831
      %v3862 = vsub.f32 %v2888, %v3831
      %v3863 = vsub.f32 %v2889, %v3831
      %v3864 = vsel %vm3755, %v3832, 0.0
      %v3865 = vsel %vm3755, %v3833, 0.0
      %v3866 = vsel %vm3755, %v3834, 0.0
      %v3867 = vsel %vm3755, %v3835, 0.0
      %v3868 = vsel %vm3755, %v3836, 0.0
      %v3869 = vsel %vm3755, %v3837, 0.0
      %v3870 = vsel %vm3755, %v3838, 0.0
      %v3871 = vsel %vm3755, %v3839, 0.0
      %v3872 = vsel %vm3755, %v3840, 0.0
      %v3873 = vsel %vm3755, %v3841, 0.0
      %v3874 = vsel %vm3755, %v3842, 0.0
      %v3875 = vsel %vm3755, %v3843, 0.0
      %v3876 = vsel %vm3755, %v3844, 0.0
      %v3877 = vsel %vm3755, %v3845, 0.0
      %v3878 = vsel %vm3755, %v3846, 0.0
      %v3879 = vsel %vm3755, %v3847, 0.0
      %v3880 = vsel %vm3755, %v3848, 0.0
      %v3881 = vsel %vm3755, %v3849, 0.0
      %v3882 = vsel %vm3755, %v3850, 0.0
      %v3883 = vsel %vm3755, %v3851, 0.0
      %v3884 = vsel %vm3755, %v3852, 0.0
      %v3885 = vsel %vm3755, %v3853, 0.0
      %v3886 = vsel %vm3755, %v3854, 0.0
      %v3887 = vsel %vm3755, %v3855, 0.0
      %v3888 = vsel %vm3755, %v3856, 0.0
      %v3889 = vsel %vm3755, %v3857, 0.0
      %v3890 = vsel %vm3755, %v3858, 0.0
      %v3891 = vsel %vm3755, %v3859, 0.0
      %v3892 = vsel %vm3755, %v3860, 0.0
      %v3893 = vsel %vm3755, %v3861, 0.0
      %v3894 = vsel %vm3755, %v3862, 0.0
      %v3895 = vsel %vm3755, %v3863, 0.0
      %v3896 = vmul.f32 %v3864, %v3864
      %v3897 = vmul.f32 %v3865, %v3865
      %v3898 = vmul.f32 %v3866, %v3866
      %v3899 = vmul.f32 %v3867, %v3867
      %v3900 = vmul.f32 %v3868, %v3868
      %v3901 = vmul.f32 %v3869, %v3869
      %v3902 = vmul.f32 %v3870, %v3870
      %v3903 = vmul.f32 %v3871, %v3871
      %v3904 = vmul.f32 %v3872, %v3872
      %v3905 = vmul.f32 %v3873, %v3873
      %v3906 = vmul.f32 %v3874, %v3874
      %v3907 = vmul.f32 %v3875, %v3875
      %v3908 = vmul.f32 %v3876, %v3876
      %v3909 = vmul.f32 %v3877, %v3877
      %v3910 = vmul.f32 %v3878, %v3878
      %v3911 = vmul.f32 %v3879, %v3879
      %v3912 = vmul.f32 %v3880, %v3880
      %v3913 = vmul.f32 %v3881, %v3881
      %v3914 = vmul.f32 %v3882, %v3882
      %v3915 = vmul.f32 %v3883, %v3883
      %v3916 = vmul.f32 %v3884, %v3884
      %v3917 = vmul.f32 %v3885, %v3885
      %v3918 = vmul.f32 %v3886, %v3886
      %v3919 = vmul.f32 %v3887, %v3887
      %v3920 = vmul.f32 %v3888, %v3888
      %v3921 = vmul.f32 %v3889, %v3889
      %v3922 = vmul.f32 %v3890, %v3890
      %v3923 = vmul.f32 %v3891, %v3891
      %v3924 = vmul.f32 %v3892, %v3892
      %v3925 = vmul.f32 %v3893, %v3893
      %v3926 = vmul.f32 %v3894, %v3894
      %v3927 = vmul.f32 %v3895, %v3895
      %v3928 = vadd.f32 %v3896, %v3897
      %v3929 = vadd.f32 %v3928, %v3898
      %v3930 = vadd.f32 %v3929, %v3899
      %v3931 = vadd.f32 %v3930, %v3900
      %v3932 = vadd.f32 %v3931, %v3901
      %v3933 = vadd.f32 %v3932, %v3902
      %v3934 = vadd.f32 %v3933, %v3903
      %v3935 = vadd.f32 %v3934, %v3904
      %v3936 = vadd.f32 %v3935, %v3905
      %v3937 = vadd.f32 %v3936, %v3906
      %v3938 = vadd.f32 %v3937, %v3907
      %v3939 = vadd.f32 %v3938, %v3908
      %v3940 = vadd.f32 %v3939, %v3909
      %v3941 = vadd.f32 %v3940, %v3910
      %v3942 = vadd.f32 %v3941, %v3911
      %v3943 = vadd.f32 %v3942, %v3912
      %v3944 = vadd.f32 %v3943, %v3913
      %v3945 = vadd.f32 %v3944, %v3914
      %v3946 = vadd.f32 %v3945, %v3915
      %v3947 = vadd.f32 %v3946, %v3916
      %v3948 = vadd.f32 %v3947, %v3917
      %v3949 = vadd.f32 %v3948, %v3918
      %v3950 = vadd.f32 %v3949, %v3919
      %v3951 = vadd.f32 %v3950, %v3920
      %v3952 = vadd.f32 %v3951, %v3921
      %v3953 = vadd.f32 %v3952, %v3922
      %v3954 = vadd.f32 %v3953, %v3923
      %v3955 = vadd.f32 %v3954, %v3924
      %v3956 = vadd.f32 %v3955, %v3925
      %v3957 = vadd.f32 %v3956, %v3926
      %v3958 = vadd.f32 %v3957, %v3927
      %3959 = vadd.xlane.f32.xlu0 %v3958
      %v3960 = vpop.xlane.xlu0 %3959
      %v3961 = vrot.slane %v3960, 4
      %v3962 = vadd.f32 %v3960, %v3961
      %v3963 = vrot.slane %v3962, 2
      %v3964 = vadd.f32 %v3962, %v3963
      %v3965 = vrot.slane %v3964, 1
      %v3966 = vadd.f32 %v3964, %v3965
      %s3967 = vtos %v3966
      %v3968 = vrcp.pop 8192.0
      %s3969 = vtos %v3968
      %s3970 = smul.f32 %s3967, %s3969
      %s3971 = sadd.f32 %s3970, 1e-05
      %v3972 = vstv %s3971
      %v3973 = vrsqrt.pop %v3972
      %s3974 = vtos %v3973
      %v3975 = vstv %s3974
      %v3976 = vmul.f32 %v3832, %v3975
      %v3977 = vmul.f32 %v3833, %v3975
      %v3978 = vmul.f32 %v3834, %v3975
      %v3979 = vmul.f32 %v3835, %v3975
      %v3980 = vmul.f32 %v3836, %v3975
      %v3981 = vmul.f32 %v3837, %v3975
      %v3982 = vmul.f32 %v3838, %v3975
      %v3983 = vmul.f32 %v3839, %v3975
      %v3984 = vmul.f32 %v3840, %v3975
      %v3985 = vmul.f32 %v3841, %v3975
      %v3986 = vmul.f32 %v3842, %v3975
      %v3987 = vmul.f32 %v3843, %v3975
      %v3988 = vmul.f32 %v3844, %v3975
      %v3989 = vmul.f32 %v3845, %v3975
      %v3990 = vmul.f32 %v3846, %v3975
      %v3991 = vmul.f32 %v3847, %v3975
      %v3992 = vmul.f32 %v3848, %v3975
      %v3993 = vmul.f32 %v3849, %v3975
      %v3994 = vmul.f32 %v3850, %v3975
      %v3995 = vmul.f32 %v3851, %v3975
      %v3996 = vmul.f32 %v3852, %v3975
      %v3997 = vmul.f32 %v3853, %v3975
      %v3998 = vmul.f32 %v3854, %v3975
      %v3999 = vmul.f32 %v3855, %v3975
      %v4000 = vmul.f32 %v3856, %v3975
      %v4001 = vmul.f32 %v3857, %v3975
      %v4002 = vmul.f32 %v3858, %v3975
      %v4003 = vmul.f32 %v3859, %v3975
      %v4004 = vmul.f32 %v3860, %v3975
      %v4005 = vmul.f32 %v3861, %v3975
      %v4006 = vmul.f32 %v3862, %v3975
      %v4007 = vmul.f32 %v3863, %v3975
      %v4008 = vsel %vm3755, %v3976, %v3721
      %v4009 = vsel %vm3755, %v3977, %v3722
      %v4010 = vsel %vm3755, %v3978, %v3723
      %v4011 = vsel %vm3755, %v3979, %v3724
      %v4012 = vsel %vm3755, %v3980, %v3725
      %v4013 = vsel %vm3755, %v3981, %v3726
      %v4014 = vsel %vm3755, %v3982, %v3727
      %v4015 = vsel %vm3755, %v3983, %v3728
      %v4016 = vsel %vm3755, %v3984, %v3729
      %v4017 = vsel %vm3755, %v3985, %v3730
      %v4018 = vsel %vm3755, %v3986, %v3731
      %v4019 = vsel %vm3755, %v3987, %v3732
      %v4020 = vsel %vm3755, %v3988, %v3733
      %v4021 = vsel %vm3755, %v3989, %v3734
      %v4022 = vsel %vm3755, %v3990, %v3735
      %v4023 = vsel %vm3755, %v3991, %v3736
      %v4024 = vsel %vm3755, %v3992, %v3737
      %v4025 = vsel %vm3755, %v3993, %v3738
      %v4026 = vsel %vm3755, %v3994, %v3739
      %v4027 = vsel %vm3755, %v3995, %v3740
      %v4028 = vsel %vm3755, %v3996, %v3741
      %v4029 = vsel %vm3755, %v3997, %v3742
      %v4030 = vsel %vm3755, %v3998, %v3743
      %v4031 = vsel %vm3755, %v3999, %v3744
      %v4032 = vsel %vm3755, %v4000, %v3745
      %v4033 = vsel %vm3755, %v4001, %v3746
      %v4034 = vsel %vm3755, %v4002, %v3747
      %v4035 = vsel %vm3755, %v4003, %v3748
      %v4036 = vsel %vm3755, %v4004, %v3749
      %v4037 = vsel %vm3755, %v4005, %v3750
      %v4038 = vsel %vm3755, %v4006, %v3751
      %v4039 = vsel %vm3755, %v4007, %v3752
      %v4040 = vld [vmem:[%s2] sm:$0x1]
      %v4042 = vlaneseq
      %v4043 = vshrl.u32 %v4042, 7
      %v4044 = vsub.s32 0, %v4043
      %v4045 = vrot.slane %v4040, %v4044
      %v4047 = vmul.f32 %v4008, %v4045
      %v4048 = vmul.f32 %v4009, %v4045
      %v4049 = vmul.f32 %v4010, %v4045
      %v4050 = vmul.f32 %v4011, %v4045
      %v4051 = vmul.f32 %v4012, %v4045
      %v4052 = vmul.f32 %v4013, %v4045
      %v4053 = vmul.f32 %v4014, %v4045
      %v4054 = vmul.f32 %v4015, %v4045
      %v4055 = vmul.f32 %v4016, %v4045
      %v4056 = vmul.f32 %v4017, %v4045
      %v4057 = vmul.f32 %v4018, %v4045
      %v4058 = vmul.f32 %v4019, %v4045
      %v4059 = vmul.f32 %v4020, %v4045
      %v4060 = vmul.f32 %v4021, %v4045
      %v4061 = vmul.f32 %v4022, %v4045
      %v4062 = vmul.f32 %v4023, %v4045
      %v4063 = vmul.f32 %v4024, %v4045
      %v4064 = vmul.f32 %v4025, %v4045
      %v4065 = vmul.f32 %v4026, %v4045
      %v4066 = vmul.f32 %v4027, %v4045
      %v4067 = vmul.f32 %v4028, %v4045
      %v4068 = vmul.f32 %v4029, %v4045
      %v4069 = vmul.f32 %v4030, %v4045
      %v4070 = vmul.f32 %v4031, %v4045
      %v4071 = vmul.f32 %v4032, %v4045
      %v4072 = vmul.f32 %v4033, %v4045
      %v4073 = vmul.f32 %v4034, %v4045
      %v4074 = vmul.f32 %v4035, %v4045
      %v4075 = vmul.f32 %v4036, %v4045
      %v4076 = vmul.f32 %v4037, %v4045
      %v4077 = vmul.f32 %v4038, %v4045
      %v4078 = vmul.f32 %v4039, %v4045
      %v4079 = vld [vmem:[%s3] sm:$0x1]
      %v4081 = vlaneseq
      %v4082 = vshrl.u32 %v4081, 7
      %v4083 = vsub.s32 0, %v4082
      %v4084 = vrot.slane %v4079, %v4083
      %v4086 = vadd.f32 %v4047, %v4084
      %v4087 = vadd.f32 %v4048, %v4084
      %v4088 = vadd.f32 %v4049, %v4084
      %v4089 = vadd.f32 %v4050, %v4084
      %v4090 = vadd.f32 %v4051, %v4084
      %v4091 = vadd.f32 %v4052, %v4084
      %v4092 = vadd.f32 %v4053, %v4084
      %v4093 = vadd.f32 %v4054, %v4084
      %v4094 = vadd.f32 %v4055, %v4084
      %v4095 = vadd.f32 %v4056, %v4084
      %v4096 = vadd.f32 %v4057, %v4084
      %v4097 = vadd.f32 %v4058, %v4084
      %v4098 = vadd.f32 %v4059, %v4084
      %v4099 = vadd.f32 %v4060, %v4084
      %v4100 = vadd.f32 %v4061, %v4084
      %v4101 = vadd.f32 %v4062, %v4084
      %v4102 = vadd.f32 %v4063, %v4084
      %v4103 = vadd.f32 %v4064, %v4084
      %v4104 = vadd.f32 %v4065, %v4084
      %v4105 = vadd.f32 %v4066, %v4084
      %v4106 = vadd.f32 %v4067, %v4084
      %v4107 = vadd.f32 %v4068, %v4084
      %v4108 = vadd.f32 %v4069, %v4084
      %v4109 = vadd.f32 %v4070, %v4084
      %v4110 = vadd.f32 %v4071, %v4084
      %v4111 = vadd.f32 %v4072, %v4084
      %v4112 = vadd.f32 %v4073, %v4084
      %v4113 = vadd.f32 %v4074, %v4084
      %v4114 = vadd.f32 %v4075, %v4084
      %v4115 = vadd.f32 %v4076, %v4084
      %v4116 = vadd.f32 %v4077, %v4084
      %v4117 = vadd.f32 %v4078, %v4084
      %4118 = vst [vmem:[%s197] sm:$0xff] %v4086
      %4119 = vst [vmem:[%s197 + $0x8] sm:$0xff] %v4087
      %4120 = vst [vmem:[%s197 + $0x10] sm:$0xff] %v4088
      %4121 = vst [vmem:[%s197 + $0x18] sm:$0xff] %v4089
      %4122 = vst [vmem:[%s197 + $0x20] sm:$0xff] %v4090
      %4123 = vst [vmem:[%s197 + $0x28] sm:$0xff] %v4091
      %4124 = vst [vmem:[%s197 + $0x30] sm:$0xff] %v4092
      %4125 = vst [vmem:[%s197 + $0x38] sm:$0xff] %v4093
      %4126 = vst [vmem:[%s197 + $0x40] sm:$0xff] %v4094
      %4127 = vst [vmem:[%s197 + $0x48] sm:$0xff] %v4095
      %4128 = vst [vmem:[%s197 + $0x50] sm:$0xff] %v4096
      %4129 = vst [vmem:[%s197 + $0x58] sm:$0xff] %v4097
      %4130 = vst [vmem:[%s197 + $0x60] sm:$0xff] %v4098
      %4131 = vst [vmem:[%s197 + $0x68] sm:$0xff] %v4099
      %4132 = vst [vmem:[%s197 + $0x70] sm:$0xff] %v4100
      %4133 = vst [vmem:[%s197 + $0x78] sm:$0xff] %v4101
      %4134 = vst [vmem:[%s197 + $0x80] sm:$0xff] %v4102
      %4135 = vst [vmem:[%s197 + $0x88] sm:$0xff] %v4103
      %4136 = vst [vmem:[%s197 + $0x90] sm:$0xff] %v4104
      %4137 = vst [vmem:[%s197 + $0x98] sm:$0xff] %v4105
      %4138 = vst [vmem:[%s197 + $0xa0] sm:$0xff] %v4106
      %4139 = vst [vmem:[%s197 + $0xa8] sm:$0xff] %v4107
      %4140 = vst [vmem:[%s197 + $0xb0] sm:$0xff] %v4108
      %4141 = vst [vmem:[%s197 + $0xb8] sm:$0xff] %v4109
      %4142 = vst [vmem:[%s197 + $0xc0] sm:$0xff] %v4110
      %4143 = vst [vmem:[%s197 + $0xc8] sm:$0xff] %v4111
      %4144 = vst [vmem:[%s197 + $0xd0] sm:$0xff] %v4112
      %4145 = vst [vmem:[%s197 + $0xd8] sm:$0xff] %v4113
      %4146 = vst [vmem:[%s197 + $0xe0] sm:$0xff] %v4114
      %4147 = vst [vmem:[%s197 + $0xe8] sm:$0xff] %v4115
      %4148 = vst [vmem:[%s197 + $0xf0] sm:$0xff] %v4116
      %4149 = vst [vmem:[%s197 + $0xf8] sm:$0xff] %v4117
      %p4150 = scmp.lt.s32.totalorder %s15, 1
      %s4151 = scalar_select %p4150, %s15, 1
      %s4152 = smul.addr %s4151, 32
      %s4153 = smul.addr %s4152, 8
      %s4154 = scalar_lea.vmem %s4, %s4153
      // Predicated region
      $region37: #{residual_block.2} parent=35 // pred_check
        %p4155 = pneg %p122
      $region38: #{residual_block.2} parent=35 // pred_check_branch
        %4157 = sbr.rel (%p4155) target = $region40
      $region39: #{residual_block.2} parent=35 // pred_region
        _
      $region40: #{residual_block.2} parent=35 // pred_fallthru
        _
    $region36: #{residual_block.2} parent=5 // pred_fallthru
      _
    %p4158 = scmp.le.s32.totalorder 2, %s10
    // Predicated region
    $region41: #{residual_block.2} parent=5 // pred_check
      %p4159 = pneg %p4158
    $region42: #{residual_block.2} parent=5 // pred_check_branch
      %4161 = sbr.rel (%p4159) target = $region44
    $region43: #{residual_block.2} parent=5 // pred_region
      %s4162 = ssub.s32 %s10, 2
      // Predicated region
      $region45: #{residual_block.2} parent=43 // pred_check
        %p4163 = pneg %p128
      $region46: #{residual_block.2} parent=43 // pred_check_branch
        %4165 = sbr.rel (%p4163) target = $region48
      $region47: #{residual_block.2} parent=43 // pred_region
        %p4166 = scmp.lt.s32.totalorder %s16, 1
        %s4167 = scalar_select %p4166, %s16, 1
        %s4168 = smul.addr %s4167, 32
        %s4169 = smul.addr %s4168, 8
        %s4170 = scalar_lea.vmem %s4, %s4169
      $region48: #{residual_block.2} parent=43 // pred_fallthru
        _
    $region44: #{residual_block.2} parent=5 // pred_fallthru
      _
  $region6: #{residual_block.2} parent=0 // loop_footer
    %s14 = sadd.s32 1, %s10
  $region7: #{residual_block.2} parent=0 // loop_footer_branch
    %9 = sbr.rel target = $region3
  $region8: #{residual_block.2} parent=0 // loop_exit
    _

// kernel: residual_block.3
$region0: #{residual_block.3}
  #allocation0 [shape = 'u32[]', space=smem, size = 0x4, offset = 0x4, fixed_abs, tag = 'smem constant byte address 0x4 - core index']
  #allocation1 [shape = 'u32[144,128]{1,0:T(1,128)}', space=vmem, size = 0x12000, scoped, tag = 'internal scratch']
  %s0 = inlined_call_operand.vmem [shape: f32[2,18,18,128], index: 0, kind: input, shape index: {}]
  %s1 = inlined_call_operand.vmem [shape: bf16[9,128,128], index: 1, kind: input, shape index: {}]
  %s2 = inlined_call_operand.vmem [shape: f32[1,128], index: 2, kind: input, shape index: {}]
  %s3 = inlined_call_operand.vmem [shape: f32[1,128], index: 3, kind: input, shape index: {}]
  %s4 = inlined_call_operand.vmem [shape: f32[2,256,128], index: 4, kind: input, shape index: {}]
  %s5 = inlined_call_operand.hbm [shape: f32[2,256,128], index: 5, kind: output, shape index: {}]
  %s6 = sld [smem:[#allocation0]]
  $region53: #{residual_block.3} parent=0
    _
  %s8 = ssub.s32 1, %s6
  %s9 = scalar_select 0, %s8, %s6
  $region1: #{residual_block.3} parent=0
    #allocation2 [shape = 'u8[262144]{0}', space=vmem, size = 0x40000, scoped, tag = 'output window, operand 0']
    #allocation3 [shape = 's32[2]{0}', space=sflag, size = 0x8, scoped, tag = 'scoped memory for residual_block.3']
    %10 = vsyncpa [#allocation3], 0
    %s11 = scalar_lea.sflag [#allocation3], 1
    %12 = vsyncpa %s11, 0
    loop: start=0, step=1, limit=4
    $region2: #{residual_block.3} parent=1 // loop_pre_header
      _
    $region3: #{residual_block.3} parent=1 // loop_header
      %s14 = sphi 0, %s18
      %p15 = scmp.ge.s32.totalorder %s14, 4
      %s24 = sphi 0, %s26
      %s27 = sphi 0, %s24
      %s28 = sphi 0, %s27
      %s44 = sphi 0, %s28
      %s48 = sphi 0, %s48
      %s50 = sphi 0, %s48
      %s51 = sphi 0, %s50
      %s65 = sphi 0, %s51
      %s69 = sphi 0, %s69
      %s71 = sphi 0, %s69
      %s72 = sphi 0, %s71
      %s86 = sphi 0, %s72
      %s90 = sphi 0, %s90
      %s92 = sphi 0, %s90
      %s93 = sphi 0, %s92
      %s107 = sphi 0, %s93
      %s113 = sphi 0, %s115
      %s116 = sphi 0, %s113
      %s117 = sphi 0, %s116
      %s133 = sphi 0, %s117
      %s139 = sphi 0, %s141
      %s142 = sphi 0, %s139
      %s143 = sphi 0, %s142
      %s159 = sphi 0, %s143
    $region4: #{residual_block.3} parent=1 // loop_header_branch
      %17 = sbr.rel (%p15) target = $region8
    $region5: #{residual_block.3} parent=1 // loop_body
      %s19 = ssub.s32 %s14, 1
      %s20 = ssub.s32 %s14, 2
      %s21 = sadd.s32 %s14, 1
      %s22 = ssub.s32 %s14, %s21
      %p23 = scmp.eq.s32.totalorder %s22, 0
      %s25 = sadd.s32 %s24, 1
      %s26 = scalar_select %p23, %s24, %s25
      %p29 = pneg %p23
      %p30 = scmp.eq.s32.totalorder %s14, 1
      %p31 = por %p29, %p30
      %p32 = scmp.ne.s32.totalorder %s24, %s27
      %p33 = scmp.eq.s32.totalorder %s14, 0
      %p34 = por %p32, %p33
      %p35 = scmp.ne.s32.totalorder %s24, %s27
      %p36 = scmp.eq.s32.totalorder %s19, 1
      %p37 = por %p35, %p36
      %p38 = scmp.ne.s32.totalorder %s27, %s28
      %p39 = scmp.eq.s32.totalorder %s19, 0
      %p40 = por %p38, %p39
      %p41 = scmp.ne.s32.totalorder %s27, %s28
      %p42 = scmp.eq.s32.totalorder %s20, 1
      %p43 = por %p41, %p42
      %p45 = scmp.ne.s32.totalorder %s28, %s44
      %p46 = scmp.eq.s32.totalorder %s20, 0
      %p47 = por %p45, %p46
      %s49 = sadd.s32 %s48, 1
      %p52 = scmp.eq.s32.totalorder %s14, 1
      %p53 = scmp.ne.s32.totalorder %s48, %s50
      %p54 = scmp.eq.s32.totalorder %s14, 0
      %p55 = por %p53, %p54
      %p56 = scmp.ne.s32.totalorder %s48, %s50
      %p57 = scmp.eq.s32.totalorder %s19, 1
      %p58 = por %p56, %p57
      %p59 = scmp.ne.s32.totalorder %s50, %s51
      %p60 = scmp.eq.s32.totalorder %s19, 0
      %p61 = por %p59, %p60
      %p62 = scmp.ne.s32.totalorder %s50, %s51
      %p63 = scmp.eq.s32.totalorder %s20, 1
      %p64 = por %p62, %p63
      %p66 = scmp.ne.s32.totalorder %s51, %s65
      %p67 = scmp.eq.s32.totalorder %s20, 0
      %p68 = por %p66, %p67
      %s70 = sadd.s32 %s69, 1
      %p73 = scmp.eq.s32.totalorder %s14, 1
      %p74 = scmp.ne.s32.totalorder %s69, %s71
      %p75 = scmp.eq.s32.totalorder %s14, 0
      %p76 = por %p74, %p75
      %p77 = scmp.ne.s32.totalorder %s69, %s71
      %p78 = scmp.eq.s32.totalorder %s19, 1
      %p79 = por %p77, %p78
      %p80 = scmp.ne.s32.totalorder %s71, %s72
      %p81 = scmp.eq.s32.totalorder %s19, 0
      %p82 = por %p80, %p81
      %p83 = scmp.ne.s32.totalorder %s71, %s72
      %p84 = scmp.eq.s32.totalorder %s20, 1
      %p85 = por %p83, %p84
      %p87 = scmp.ne.s32.totalorder %s72, %s86
      %p88 = scmp.eq.s32.totalorder %s20, 0
      %p89 = por %p87, %p88
      %s91 = sadd.s32 %s90, 1
      %p94 = scmp.eq.s32.totalorder %s14, 1
      %p95 = scmp.ne.s32.totalorder %s90, %s92
      %p96 = scmp.eq.s32.totalorder %s14, 0
      %p97 = por %p95, %p96
      %p98 = scmp.ne.s32.totalorder %s90, %s92
      %p99 = scmp.eq.s32.totalorder %s19, 1
      %p100 = por %p98, %p99
      %p101 = scmp.ne.s32.totalorder %s92, %s93
      %p102 = scmp.eq.s32.totalorder %s19, 0
      %p103 = por %p101, %p102
      %p104 = scmp.ne.s32.totalorder %s92, %s93
      %p105 = scmp.eq.s32.totalorder %s20, 1
      %p106 = por %p104, %p105
      %p108 = scmp.ne.s32.totalorder %s93, %s107
      %p109 = scmp.eq.s32.totalorder %s20, 0
      %p110 = por %p108, %p109
      %s111 = ssub.s32 %s14, %s21
      %p112 = scmp.eq.s32.totalorder %s111, 0
      %s114 = sadd.s32 %s113, 1
      %s115 = scalar_select %p112, %s113, %s114
      %p118 = pneg %p112
      %p119 = scmp.eq.s32.totalorder %s14, 1
      %p120 = por %p118, %p119
      %p121 = scmp.ne.s32.totalorder %s113, %s116
      %p122 = scmp.eq.s32.totalorder %s14, 0
      %p123 = por %p121, %p122
      %p124 = scmp.ne.s32.totalorder %s113, %s116
      %p125 = scmp.eq.s32.totalorder %s19, 1
      %p126 = por %p124, %p125
      %p127 = scmp.ne.s32.totalorder %s116, %s117
      %p128 = scmp.eq.s32.totalorder %s19, 0
      %p129 = por %p127, %p128
      %p130 = scmp.ne.s32.totalorder %s116, %s117
      %p131 = scmp.eq.s32.totalorder %s20, 1
      %p132 = por %p130, %p131
      %p134 = scmp.ne.s32.totalorder %s117, %s133
      %p135 = scmp.eq.s32.totalorder %s20, 0
      %p136 = por %p134, %p135
      %s137 = ssub.s32 %s14, %s21
      %p138 = scmp.eq.s32.totalorder %s137, 0
      %s140 = sadd.s32 %s139, 1
      %s141 = scalar_select %p138, %s139, %s140
      %p144 = pneg %p138
      %p145 = scmp.eq.s32.totalorder %s14, 1
      %p146 = por %p144, %p145
      %p147 = scmp.ne.s32.totalorder %s139, %s142
      %p148 = scmp.eq.s32.totalorder %s14, 0
      %p149 = por %p147, %p148
      %p150 = scmp.ne.s32.totalorder %s139, %s142
      %p151 = scmp.eq.s32.totalorder %s19, 1
      %p152 = por %p150, %p151
      %p153 = scmp.ne.s32.totalorder %s142, %s143
      %p154 = scmp.eq.s32.totalorder %s19, 0
      %p155 = por %p153, %p154
      %p156 = scmp.ne.s32.totalorder %s142, %s143
      %p157 = scmp.eq.s32.totalorder %s20, 1
      %p158 = por %p156, %p157
      %p160 = scmp.ne.s32.totalorder %s143, %s159
      %p161 = scmp.eq.s32.totalorder %s20, 0
      %p162 = por %p160, %p161
      %p163 = scmp.le.s32.totalorder 1, %s14
      %p164 = scmp.lt.s32.totalorder %s14, 3
      %p165 = pnand %p163, %p164
      %p166 = pneg %p165
      // Predicated region
      $region9: #{residual_block.3} parent=5 // pred_check
        _
      $region10: #{residual_block.3} parent=5 // pred_check_branch
        %168 = sbr.rel (%p165) target = $region12
      $region11: #{residual_block.3} parent=5 // pred_region
        %s169 = ssub.s32 %s14, 1
        // Predicated region
        $region13: #{residual_block.3} parent=11 // pred_check
          %p170 = pneg %p61
        $region14: #{residual_block.3} parent=11 // pred_check_branch
          %172 = sbr.rel (%p170) target = $region16
        $region15: #{residual_block.3} parent=11 // pred_region
          _
        $region16: #{residual_block.3} parent=11 // pred_fallthru
          _
        // Predicated region
        $region17: #{residual_block.3} parent=11 // pred_check
          %p173 = pneg %p82
        $region18: #{residual_block.3} parent=11 // pred_check_branch
          %175 = sbr.rel (%p173) target = $region20
        $region19: #{residual_block.3} parent=11 // pred_region
          _
        $region20: #{residual_block.3} parent=11 // pred_fallthru
          _
        // Predicated region
        $region21: #{residual_block.3} parent=11 // pred_check
          %p176 = pneg %p103
        $region22: #{residual_block.3} parent=11 // pred_check_branch
          %178 = sbr.rel (%p176) target = $region24
        $region23: #{residual_block.3} parent=11 // pred_region
          _
        $region24: #{residual_block.3} parent=11 // pred_fallthru
          _
      $region12: #{residual_block.3} parent=5 // pred_fallthru
        _
      %p179 = scmp.lt.s32.totalorder %s14, 2
      // Predicated region
      $region25: #{residual_block.3} parent=5 // pred_check
        %p180 = pneg %p179
      $region26: #{residual_block.3} parent=5 // pred_check_branch
        %182 = sbr.rel (%p180) target = $region28
      $region27: #{residual_block.3} parent=5 // pred_region
        // Predicated region
        $region29: #{residual_block.3} parent=27 // pred_check
          %p183 = pneg %p34
        $region30: #{residual_block.3} parent=27 // pred_check_branch
          %185 = sbr.rel (%p183) target = $region32
        $region31: #{residual_block.3} parent=27 // pred_region
          %p186 = scmp.lt.s32.totalorder %s14, 1
          %s187 = scalar_select %p186, %s14, 1
          %s188 = smul.addr %s187, 54
          %s189 = smul.addr %s188, 8
          %s190 = scalar_lea.vmem %s0, %s189
        $region32: #{residual_block.3} parent=27 // pred_fallthru
          _
        // Predicated region
        $region33: #{residual_block.3} parent=27 // pred_check
          %p191 = pneg %p123
        $region34: #{residual_block.3} parent=27 // pred_check_branch
          %193 = sbr.rel (%p191) target = $region36
        $region35: #{residual_block.3} parent=27 // pred_region
          %p194 = scmp.lt.s32.totalorder %s14, 1
          %s195 = scalar_select %p194, %s14, 1
          %s196 = smul.addr %s195, 32
          %s197 = smul.addr %s196, 8
          %s198 = scalar_lea.vmem %s4, %s197
        $region36: #{residual_block.3} parent=27 // pred_fallthru
          _
      $region28: #{residual_block.3} parent=5 // pred_fallthru
        _
      %p199 = scmp.le.s32.totalorder 1, %s14
      %p200 = scmp.lt.s32.totalorder %s14, 3
      %p201 = pnand %p199, %p200
      %p202 = pneg %p201
      // Predicated region
      $region37: #{residual_block.3} parent=5 // pred_check
        _
      $region38: #{residual_block.3} parent=5 // pred_check_branch
        %204 = sbr.rel (%p201) target = $region40
      $region39: #{residual_block.3} parent=5 // pred_region
        %s205 = ssub.s32 %s14, 1
        %p206 = scmp.lt.s32.totalorder %s19, 1
        %s207 = scalar_select %p206, %s19, 1
        %s208 = smul.addr %s207, 54
        %s209 = smul.addr %s208, 8
        %s210 = scalar_lea.vmem %s0, %s209
        %p211 = pneg %p40
        %p212 = pneg %p37
        %p213 = pneg %p61
        %p214 = pneg %p58
        %p215 = pneg %p82
        %p216 = pneg %p79
        %p217 = pneg %p103
        %p218 = pneg %p100
        %p219 = scmp.lt.s32.totalorder %s19, 1
        %s220 = scalar_select %p219, %s19, 1
        %s221 = smul.addr %s220, 32
        %s222 = smul.addr %s221, 8
        %s223 = scalar_lea.vmem %s4, %s222
        %p224 = pneg %p129
        %p225 = pneg %p126
        %p226 = pneg %p155
        %p227 = pneg %p152
        %s228 = sand.u32 %s142, 1
        %s229 = scalar_lea.sflag [#allocation3], %s228
        %s230 = sand.u32 %s142, 1
        %s231 = smul.addr %s230, 256
        %s232 = scalar_lea.vmem [#allocation2], %s231
        %p233 = scmp.lt.s32.totalorder %s19, 1
        %s234 = scalar_select %p233, %s19, 1
        %s235 = smul.addr %s234, 54
        %s236 = smul.addr %s235, 8
        %s237 = scalar_lea.vmem %s0, %s236
        %p238 = scmp.lt.s32.totalorder %s19, 1
        %s239 = scalar_select %p238, %s19, 1
        %s240 = smul.addr %s239, 32
        %s241 = smul.addr %s240, 8
        %s242 = scalar_lea.vmem %s4, %s241
        %v244 = vld [vmem:[%s237] sm:$0xff]
        %v245 = vld [vmem:[%s237 + $0x8] sm:$0xff]
        %v246 = vld [vmem:[%s237 + $0x18] sm:$0xff]
        %v247 = vld [vmem:[%s237 + $0x20] sm:$0xff]
        %v248 = vld [vmem:[%s237 + $0x30] sm:$0xff]
        %v249 = vld [vmem:[%s237 + $0x38] sm:$0xff]
        %v250 = vld [vmem:[%s237 + $0x48] sm:$0xff]
        %v251 = vld [vmem:[%s237 + $0x50] sm:$0xff]
        %v252 = vld [vmem:[%s237 + $0x60] sm:$0xff]
        %v253 = vld [vmem:[%s237 + $0x68] sm:$0xff]
        %v254 = vld [vmem:[%s237 + $0x78] sm:$0xff]
        %v255 = vld [vmem:[%s237 + $0x80] sm:$0xff]
        %v256 = vld [vmem:[%s237 + $0x90] sm:$0xff]
        %v257 = vld [vmem:[%s237 + $0x98] sm:$0xff]
        %v258 = vld [vmem:[%s237 + $0xa8] sm:$0xff]
        %v259 = vld [vmem:[%s237 + $0xb0] sm:$0xff]
        %v260 = vld [vmem:[%s237 + $0xc0] sm:$0xff]
        %v261 = vld [vmem:[%s237 + $0xc8] sm:$0xff]
        %v262 = vld [vmem:[%s237 + $0xd8] sm:$0xff]
        %v263 = vld [vmem:[%s237 + $0xe0] sm:$0xff]
        %v264 = vld [vmem:[%s237 + $0xf0] sm:$0xff]
        %v265 = vld [vmem:[%s237 + $0xf8] sm:$0xff]
        %v266 = vld [vmem:[%s237 + $0x108] sm:$0xff]
        %v267 = vld [vmem:[%s237 + $0x110] sm:$0xff]
        %v268 = vld [vmem:[%s237 + $0x120] sm:$0xff]
        %v269 = vld [vmem:[%s237 + $0x128] sm:$0xff]
        %v270 = vld [vmem:[%s237 + $0x138] sm:$0xff]
        %v271 = vld [vmem:[%s237 + $0x140] sm:$0xff]
        %v272 = vld [vmem:[%s237 + $0x150] sm:$0xff]
        %v273 = vld [vmem:[%s237 + $0x158] sm:$0xff]
        %v274 = vld [vmem:[%s237 + $0x168] sm:$0xff]
        %v275 = vld [vmem:[%s237 + $0x170] sm:$0xff]
        %v276 = vpack.c.bf16 %v245, %v244
        %v277 = vpack.c.bf16 %v247, %v246
        %v278 = vpack.c.bf16 %v249, %v248
        %v279 = vpack.c.bf16 %v251, %v250
        %v280 = vpack.c.bf16 %v253, %v252
        %v281 = vpack.c.bf16 %v255, %v254
        %v282 = vpack.c.bf16 %v257, %v256
        %v283 = vpack.c.bf16 %v259, %v258
        %v284 = vpack.c.bf16 %v261, %v260
        %v285 = vpack.c.bf16 %v263, %v262
        %v286 = vpack.c.bf16 %v265, %v264
        %v287 = vpack.c.bf16 %v267, %v266
        %v288 = vpack.c.bf16 %v269, %v268
        %v289 = vpack.c.bf16 %v271, %v270
        %v290 = vpack.c.bf16 %v273, %v272
        %v291 = vpack.c.bf16 %v275, %v274
        %v292 = vld [vmem:[%s1] sm:$0xf]
        %v293 = vld [vmem:[%s1 + $0x4] sm:$0xf]
        %v294 = vld [vmem:[%s1 + $0x8] sm:$0xf]
        %v295 = vld [vmem:[%s1 + $0xc] sm:$0xf]
        %v296 = vld [vmem:[%s1 + $0x10] sm:$0xf]
        %v297 = vld [vmem:[%s1 + $0x14] sm:$0xf]
        %v298 = vld [vmem:[%s1 + $0x18] sm:$0xf]
        %v299 = vld [vmem:[%s1 + $0x1c] sm:$0xf]
        %v300 = vld [vmem:[%s1 + $0x20] sm:$0xf]
        %v301 = vld [vmem:[%s1 + $0x24] sm:$0xf]
        %v302 = vld [vmem:[%s1 + $0x28] sm:$0xf]
        %v303 = vld [vmem:[%s1 + $0x2c] sm:$0xf]
        %v304 = vld [vmem:[%s1 + $0x30] sm:$0xf]
        %v305 = vld [vmem:[%s1 + $0x34] sm:$0xf]
        %v306 = vld [vmem:[%s1 + $0x38] sm:$0xf]
        %v307 = vld [vmem:[%s1 + $0x3c] sm:$0xf]
        %v308 = vld [vmem:[%s237 + $0x1] sm:$0xff]
        %v309 = vld [vmem:[%s237 + $0x9] sm:$0xff]
        %v310 = vld [vmem:[%s237 + $0x19] sm:$0xff]
        %v311 = vld [vmem:[%s237 + $0x21] sm:$0xff]
        %v312 = vld [vmem:[%s237 + $0x31] sm:$0xff]
        %v313 = vld [vmem:[%s237 + $0x39] sm:$0xff]
        %v314 = vld [vmem:[%s237 + $0x49] sm:$0xff]
        %v315 = vld [vmem:[%s237 + $0x51] sm:$0xff]
        %v316 = vld [vmem:[%s237 + $0x61] sm:$0xff]
        %v317 = vld [vmem:[%s237 + $0x69] sm:$0xff]
        %v318 = vld [vmem:[%s237 + $0x79] sm:$0xff]
        %v319 = vld [vmem:[%s237 + $0x81] sm:$0xff]
        %v320 = vld [vmem:[%s237 + $0x91] sm:$0xff]
        %v321 = vld [vmem:[%s237 + $0x99] sm:$0xff]
        %v322 = vld [vmem:[%s237 + $0xa9] sm:$0xff]
        %v323 = vld [vmem:[%s237 + $0xb1] sm:$0xff]
        %v324 = vld [vmem:[%s237 + $0xc1] sm:$0xff]
        %v325 = vld [vmem:[%s237 + $0xc9] sm:$0xff]
        %v326 = vld [vmem:[%s237 + $0xd9] sm:$0xff]
        %v327 = vld [vmem:[%s237 + $0xe1] sm:$0xff]
        %v328 = vld [vmem:[%s237 + $0xf1] sm:$0xff]
        %v329 = vld [vmem:[%s237 + $0xf9] sm:$0xff]
        %v330 = vld [vmem:[%s237 + $0x109] sm:$0xff]
        %v331 = vld [vmem:[%s237 + $0x111] sm:$0xff]
        %v332 = vld [vmem:[%s237 + $0x121] sm:$0xff]
        %v333 = vld [vmem:[%s237 + $0x129] sm:$0xff]
        %v334 = vld [vmem:[%s237 + $0x139] sm:$0xff]
        %v335 = vld [vmem:[%s237 + $0x141] sm:$0xff]
        %v336 = vld [vmem:[%s237 + $0x151] sm:$0xff]
        %v337 = vld [vmem:[%s237 + $0x159] sm:$0xff]
        %v338 = vld [vmem:[%s237 + $0x169] sm:$0xff]
        %v339 = vld [vmem:[%s237 + $0x171] sm:$0xff]
        %v340 = vpack.c.bf16 %v309, %v308
        %v341 = vpack.c.bf16 %v311, %v310
        %v342 = vpack.c.bf16 %v313, %v312
        %v343 = vpack.c.bf16 %v315, %v314
        %v344 = vpack.c.bf16 %v317, %v316
        %v345 = vpack.c.bf16 %v319, %v318
        %v346 = vpack.c.bf16 %v321, %v320
        %v347 = vpack.c.bf16 %v323, %v322
        %v348 = vpack.c.bf16 %v325, %v324
        %v349 = vpack.c.bf16 %v327, %v326
        %v350 = vpack.c.bf16 %v329, %v328
        %v351 = vpack.c.bf16 %v331, %v330
        %v352 = vpack.c.bf16 %v333, %v332
        %v353 = vpack.c.bf16 %v335, %v334
        %v354 = vpack.c.bf16 %v337, %v336
        %v355 = vpack.c.bf16 %v339, %v338
        %s356 = scalar_lea.vmem %s1, 64
        %v357 = vld [vmem:[%s356] sm:$0xf]
        %v358 = vld [vmem:[%s356 + $0x4] sm:$0xf]
        %v359 = vld [vmem:[%s356 + $0x8] sm:$0xf]
        %v360 = vld [vmem:[%s356 + $0xc] sm:$0xf]
        %v361 = vld [vmem:[%s356 + $0x10] sm:$0xf]
        %v362 = vld [vmem:[%s356 + $0x14] sm:$0xf]
        %v363 = vld [vmem:[%s356 + $0x18] sm:$0xf]
        %v364 = vld [vmem:[%s356 + $0x1c] sm:$0xf]
        %v365 = vld [vmem:[%s356 + $0x20] sm:$0xf]
        %v366 = vld [vmem:[%s356 + $0x24] sm:$0xf]
        %v367 = vld [vmem:[%s356 + $0x28] sm:$0xf]
        %v368 = vld [vmem:[%s356 + $0x2c] sm:$0xf]
        %v369 = vld [vmem:[%s356 + $0x30] sm:$0xf]
        %v370 = vld [vmem:[%s356 + $0x34] sm:$0xf]
        %v371 = vld [vmem:[%s356 + $0x38] sm:$0xf]
        %v372 = vld [vmem:[%s356 + $0x3c] sm:$0xf]
        %v389 = vunpack.c.l.b16 %v357
        %v390 = vunpack.c.l.b16 %v358
        %v391 = vunpack.c.l.b16 %v359
        %v392 = vunpack.c.l.b16 %v360
        %v393 = vunpack.c.l.b16 %v361
        %v394 = vunpack.c.l.b16 %v362
        %v395 = vunpack.c.l.b16 %v363
        %v396 = vunpack.c.l.b16 %v364
        %v397 = vunpack.c.l.b16 %v365
        %v398 = vunpack.c.l.b16 %v366
        %v399 = vunpack.c.l.b16 %v367
        %v400 = vunpack.c.l.b16 %v368
        %v401 = vunpack.c.l.b16 %v369
        %v402 = vunpack.c.l.b16 %v370
        %v403 = vunpack.c.l.b16 %v371
        %v404 = vunpack.c.l.b16 %v372
        %v405 = vpack.c.b16 %v390, %v389
        %v406 = vpack.c.b16 %v392, %v391
        %v407 = vpack.c.b16 %v394, %v393
        %v408 = vpack.c.b16 %v396, %v395
        %v409 = vpack.c.b16 %v398, %v397
        %v410 = vpack.c.b16 %v400, %v399
        %v411 = vpack.c.b16 %v402, %v401
        %v412 = vpack.c.b16 %v404, %v403
        %421 = vmatprep.subr.bf16.mxu0 0
        %422 = vmatpush1.bf16.msra.mxu0 %v405
        %423 = vmatprep.subr.bf16.mxu0 0
        %424 = vmatpush1.bf16.msra.mxu0 %v406
        %425 = vmatprep.subr.bf16.mxu0 0
        %426 = vmatpush1.bf16.msra.mxu0 %v407
        %427 = vmatprep.subr.bf16.mxu0 0
        %428 = vmatpush1.bf16.msra.mxu0 %v408
        %429 = vmatprep.subr.bf16.mxu0 0
        %430 = vmatpush1.bf16.msra.mxu0 %v409
        %431 = vmatprep.subr.bf16.mxu0 0
        %432 = vmatpush1.bf16.msra.mxu0 %v410
        %433 = vmatprep.subr.bf16.mxu0 0
        %434 = vmatpush1.bf16.msra.mxu0 %v411
        %435 = vmatprep.subr.bf16.mxu0 0
        %436 = vmatpush1.bf16.msra.mxu0 %v412
        %437 = vmatprep.subr.bf16.mxu0 0
        %438 = vmatpush1.bf16.msra.mxu0 0
        %439 = vmatprep.subr.bf16.mxu0 0
        %440 = vmatpush1.bf16.msra.mxu0 0
        %441 = vmatprep.subr.bf16.mxu0 0
        %442 = vmatpush1.bf16.msra.mxu0 0
        %443 = vmatprep.subr.bf16.mxu0 0
        %444 = vmatpush1.bf16.msra.mxu0 0
        %445 = vmatprep.subr.bf16.mxu0 0
        %446 = vmatpush1.bf16.msra.mxu0 0
        %447 = vmatprep.subr.bf16.mxu0 0
        %448 = vmatpush1.bf16.msra.mxu0 0
        %449 = vmatprep.subr.bf16.mxu0 0
        %450 = vmatpush1.bf16.msra.mxu0 0
        %451 = vmatprep.subr.bf16.mxu0 0
        %452 = vmatpush1.bf16.msra.mxu0 0
        %453 = vmatprep.mubr.bf16.mxu0 0
        %454 = vmatmul.mubr.bf16.gmra.mrb[0].mxu0 %v340
        %v455 = vpop.f32.mrb[0].mxu0
        %v456 = vadd.f32 0.0, %v455
        %v457 = vpop.f32.mrb[0].mxu0
        %v458 = vpop.f32.mrb[0].mxu0
        %v459 = vadd.f32 0.0, %v458
        %v460 = vpop.f32.mrb[0].mxu0
        %461 = vmatprep.mubr.bf16.mxu0 0
        %462 = vmatmul.mubr.bf16.gmra.mrb[0].mxu0 %v341
        %v463 = vpop.f32.mrb[0].mxu0
        %v464 = vadd.f32 0.0, %v463
        %v465 = vpop.f32.mrb[0].mxu0
        %v466 = vpop.f32.mrb[0].mxu0
        %v467 = vadd.f32 0.0, %v466
        %v468 = vpop.f32.mrb[0].mxu0
        %469 = vmatprep.mubr.bf16.mxu0 0
        %470 = vmatmul.mubr.bf16.gmra.mrb[0].mxu0 %v342
        %v471 = vpop.f32.mrb[0].mxu0
        %v472 = vadd.f32 0.0, %v471
        %v473 = vpop.f32.mrb[0].mxu0
        %v474 = vpop.f32.mrb[0].mxu0
        %v475 = vadd.f32 0.0, %v474
        %v476 = vpop.f32.mrb[0].mxu0
        %477 = vmatprep.mubr.bf16.mxu0 0
        %478 = vmatmul.mubr.bf16.gmra.mrb[0].mxu0 %v343
        %v479 = vpop.f32.mrb[0].mxu0
        %v480 = vadd.f32 0.0, %v479
        %v481 = vpop.f32.mrb[0].mxu0
        %v482 = vpop.f32.mrb[0].mxu0
        %v483 = vadd.f32 0.0, %v482
        %v484 = vpop.f32.mrb[0].mxu0
        %485 = vmatprep.mubr.bf16.mxu0 0
        %486 = vmatmul.mubr.bf16.gmra.mrb[0].mxu0 %v344
        %v487 = vpop.f32.mrb[0].mxu0
        %v488 = vadd.f32 0.0, %v487
        %v489 = vpop.f32.mrb[0].mxu0
        %v490 = vpop.f32.mrb[0].mxu0
        %v491 = vadd.f32 0.0, %v490
        %v492 = vpop.f32.mrb[0].mxu0
        %493 = vmatprep.mubr.bf16.mxu0 0
        %494 = vmatmul.mubr.bf16.gmra.mrb[0].mxu0 %v345
        %v495 = vpop.f32.mrb[0].mxu0
        %v496 = vadd.f32 0.0, %v495
        %v497 = vpop.f32.mrb[0].mxu0
        %v498 = vpop.f32.mrb[0].mxu0
        %v499 = vadd.f32 0.0, %v498
        %v500 = vpop.f32.mrb[0].mxu0
        %501 = vmatprep.mubr.bf16.mxu0 0
        %502 = vmatmul.mubr.bf16.gmra.mrb[0].mxu0 %v346
        %v503 = vpop.f32.mrb[0].mxu0
        %v504 = vadd.f32 0.0, %v503
        %v505 = vpop.f32.mrb[0].mxu0
        %v506 = vpop.f32.mrb[0].mxu0
        %v507 = vadd.f32 0.0, %v506
        %v508 = vpop.f32.mrb[0].mxu0
        %509 = vmatprep.mubr.bf16.mxu0 0
        %510 = vmatmul.mubr.bf16.gmra.mrb[0].mxu0 %v347
        %v511 = vpop.f32.mrb[0].mxu0
        %v512 = vadd.f32 0.0, %v511
        %v513 = vpop.f32.mrb[0].mxu0
        %v514 = vpop.f32.mrb[0].mxu0
        %v515 = vadd.f32 0.0, %v514
        %v516 = vpop.f32.mrb[0].mxu0
        %517 = vmatprep.mubr.bf16.mxu0 0
        %518 = vmatmul.mubr.bf16.gmra.mrb[0].mxu0 %v348
        %v519 = vpop.f32.mrb[0].mxu0
        %v520 = vadd.f32 0.0, %v519
        %v521 = vpop.f32.mrb[0].mxu0
        %v522 = vpop.f32.mrb[0].mxu0
        %v523 = vadd.f32 0.0, %v522
        %v524 = vpop.f32.mrb[0].mxu0
        %525 = vmatprep.mubr.bf16.mxu0 0
        %526 = vmatmul.mubr.bf16.gmra.mrb[0].mxu0 %v349
        %v527 = vpop.f32.mrb[0].mxu0
        %v528 = vadd.f32 0.0, %v527
        %v529 = vpop.f32.mrb[0].mxu0
        %v530 = vpop.f32.mrb[0].mxu0
        %v531 = vadd.f32 0.0, %v530
        %v532 = vpop.f32.mrb[0].mxu0
        %533 = vmatprep.mubr.bf16.mxu0 0
        %534 = vmatmul.mubr.bf16.gmra.mrb[0].mxu0 %v350
        %v535 = vpop.f32.mrb[0].mxu0
        %v536 = vadd.f32 0.0, %v535
        %v537 = vpop.f32.mrb[0].mxu0
        %v538 = vpop.f32.mrb[0].mxu0
        %v539 = vadd.f32 0.0, %v538
        %v540 = vpop.f32.mrb[0].mxu0
        %541 = vmatprep.mubr.bf16.mxu0 0
        %542 = vmatmul.mubr.bf16.gmra.mrb[0].mxu0 %v351
        %v543 = vpop.f32.mrb[0].mxu0
        %v544 = vadd.f32 0.0, %v543
        %v545 = vpop.f32.mrb[0].mxu0
        %v546 = vpop.f32.mrb[0].mxu0
        %v547 = vadd.f32 0.0, %v546
        %v548 = vpop.f32.mrb[0].mxu0
        %549 = vmatprep.mubr.bf16.mxu0 0
        %550 = vmatmul.mubr.bf16.gmra.mrb[0].mxu0 %v352
        %v551 = vpop.f32.mrb[0].mxu0
        %v552 = vadd.f32 0.0, %v551
        %v553 = vpop.f32.mrb[0].mxu0
        %v554 = vpop.f32.mrb[0].mxu0
        %v555 = vadd.f32 0.0, %v554
        %v556 = vpop.f32.mrb[0].mxu0
        %557 = vmatprep.mubr.bf16.mxu0 0
        %558 = vmatmul.mubr.bf16.gmra.mrb[0].mxu0 %v353
        %v559 = vpop.f32.mrb[0].mxu0
        %v560 = vadd.f32 0.0, %v559
        %v561 = vpop.f32.mrb[0].mxu0
        %v562 = vpop.f32.mrb[0].mxu0
        %v563 = vadd.f32 0.0, %v562
        %v564 = vpop.f32.mrb[0].mxu0
        %565 = vmatprep.mubr.bf16.mxu0 0
        %566 = vmatmul.mubr.bf16.gmra.mrb[0].mxu0 %v354
        %v567 = vpop.f32.mrb[0].mxu0
        %v568 = vadd.f32 0.0, %v567
        %v569 = vpop.f32.mrb[0].mxu0
        %v570 = vpop.f32.mrb[0].mxu0
        %v571 = vadd.f32 0.0, %v570
        %v572 = vpop.f32.mrb[0].mxu0
        %573 = vmatprep.mubr.bf16.mxu0 0
        %574 = vmatmul.mubr.bf16.gmra.mrb[0].mxu0 %v355
        %v575 = vpop.f32.mrb[0].mxu0
        %v576 = vadd.f32 0.0, %v575
        %v577 = vpop.f32.mrb[0].mxu0
        %v578 = vpop.f32.mrb[0].mxu0
        %v579 = vadd.f32 0.0, %v578
        %v580 = vpop.f32.mrb[0].mxu0
        %581 = vdwg.mxu0
        %v598 = vunpack.c.l.b16 %v292
        %v599 = vunpack.c.l.b16 %v293
        %v600 = vunpack.c.l.b16 %v294
        %v601 = vunpack.c.l.b16 %v295
        %v602 = vunpack.c.l.b16 %v296
        %v603 = vunpack.c.l.b16 %v297
        %v604 = vunpack.c.l.b16 %v298
        %v605 = vunpack.c.l.b16 %v299
        %v606 = vunpack.c.l.b16 %v300
        %v607 = vunpack.c.l.b16 %v301
        %v608 = vunpack.c.l.b16 %v302
        %v609 = vunpack.c.l.b16 %v303
        %v610 = vunpack.c.l.b16 %v304
        %v611 = vunpack.c.l.b16 %v305
        %v612 = vunpack.c.l.b16 %v306
        %v613 = vunpack.c.l.b16 %v307
        %v614 = vpack.c.b16 %v599, %v598
        %v615 = vpack.c.b16 %v601, %v600
        %v616 = vpack.c.b16 %v603, %v602
        %v617 = vpack.c.b16 %v605, %v604
        %v618 = vpack.c.b16 %v607, %v606
        %v619 = vpack.c.b16 %v609, %v608
        %v620 = vpack.c.b16 %v611, %v610
        %v621 = vpack.c.b16 %v613, %v612
        %630 = vmatprep.subr.bf16.mxu0 0
        %631 = vmatpush1.bf16.msra.mxu0 %v614
        %632 = vmatprep.subr.bf16.mxu0 0
        %633 = vmatpush1.bf16.msra.mxu0 %v615
        %634 = vmatprep.subr.bf16.mxu0 0
        %635 = vmatpush1.bf16.msra.mxu0 %v616
        %636 = vmatprep.subr.bf16.mxu0 0
        %637 = vmatpush1.bf16.msra.mxu0 %v617
        %638 = vmatprep.subr.bf16.mxu0 0
        %639 = vmatpush1.bf16.msra.mxu0 %v618
        %640 = vmatprep.subr.bf16.mxu0 0
        %641 = vmatpush1.bf16.msra.mxu0 %v619
        %642 = vmatprep.subr.bf16.mxu0 0
        %643 = vmatpush1.bf16.msra.mxu0 %v620
        %644 = vmatprep.subr.bf16.mxu0 0
        %645 = vmatpush1.bf16.msra.mxu0 %v621
        %646 = vmatprep.subr.bf16.mxu0 0
        %647 = vmatpush1.bf16.msra.mxu0 0
        %648 = vmatprep.subr.bf16.mxu0 0
        %649 = vmatpush1.bf16.msra.mxu0 0
        %650 = vmatprep.subr.bf16.mxu0 0
        %651 = vmatpush1.bf16.msra.mxu0 0
        %652 = vmatprep.subr.bf16.mxu0 0
        %653 = vmatpush1.bf16.msra.mxu0 0
        %654 = vmatprep.subr.bf16.mxu0 0
        %655 = vmatpush1.bf16.msra.mxu0 0
        %656 = vmatprep.subr.bf16.mxu0 0
        %657 = vmatpush1.bf16.msra.mxu0 0
        %658 = vmatprep.subr.bf16.mxu0 0
        %659 = vmatpush1.bf16.msra.mxu0 0
        %660 = vmatprep.subr.bf16.mxu0 0
        %661 = vmatpush1.bf16.msra.mxu0 0
        %662 = vmatprep.mubr.bf16.mxu0 0
        %663 = vmatmul.mubr.bf16.gmra.mrb[0].mxu0 %v276
        %v664 = vpop.f32.mrb[0].mxu0
        %v665 = vadd.f32 %v456, %v664
        %v666 = vpop.f32.mrb[0].mxu0
        %v667 = vpop.f32.mrb[0].mxu0
        %v668 = vadd.f32 %v459, %v667
        %v669 = vpop.f32.mrb[0].mxu0
        %670 = vmatprep.mubr.bf16.mxu0 0
        %671 = vmatmul.mubr.bf16.gmra.mrb[0].mxu0 %v277
        %v672 = vpop.f32.mrb[0].mxu0
        %v673 = vadd.f32 %v464, %v672
        %v674 = vpop.f32.mrb[0].mxu0
        %v675 = vpop.f32.mrb[0].mxu0
        %v676 = vadd.f32 %v467, %v675
        %v677 = vpop.f32.mrb[0].mxu0
        %678 = vmatprep.mubr.bf16.mxu0 0
        %679 = vmatmul.mubr.bf16.gmra.mrb[0].mxu0 %v278
        %v680 = vpop.f32.mrb[0].mxu0
        %v681 = vadd.f32 %v472, %v680
        %v682 = vpop.f32.mrb[0].mxu0
        %v683 = vpop.f32.mrb[0].mxu0
        %v684 = vadd.f32 %v475, %v683
        %v685 = vpop.f32.mrb[0].mxu0
        %686 = vmatprep.mubr.bf16.mxu0 0
        %687 = vmatmul.mubr.bf16.gmra.mrb[0].mxu0 %v279
        %v688 = vpop.f32.mrb[0].mxu0
        %v689 = vadd.f32 %v480, %v688
        %v690 = vpop.f32.mrb[0].mxu0
        %v691 = vpop.f32.mrb[0].mxu0
        %v692 = vadd.f32 %v483, %v691
        %v693 = vpop.f32.mrb[0].mxu0
        %694 = vmatprep.mubr.bf16.mxu0 0
        %695 = vmatmul.mubr.bf16.gmra.mrb[0].mxu0 %v280
        %v696 = vpop.f32.mrb[0].mxu0
        %v697 = vadd.f32 %v488, %v696
        %v698 = vpop.f32.mrb[0].mxu0
        %v699 = vpop.f32.mrb[0].mxu0
        %v700 = vadd.f32 %v491, %v699
        %v701 = vpop.f32.mrb[0].mxu0
        %702 = vmatprep.mubr.bf16.mxu0 0
        %703 = vmatmul.mubr.bf16.gmra.mrb[0].mxu0 %v281
        %v704 = vpop.f32.mrb[0].mxu0
        %v705 = vadd.f32 %v496, %v704
        %v706 = vpop.f32.mrb[0].mxu0
        %v707 = vpop.f32.mrb[0].mxu0
        %v708 = vadd.f32 %v499, %v707
        %v709 = vpop.f32.mrb[0].mxu0
        %710 = vmatprep.mubr.bf16.mxu0 0
        %711 = vmatmul.mubr.bf16.gmra.mrb[0].mxu0 %v282
        %v712 = vpop.f32.mrb[0].mxu0
        %v713 = vadd.f32 %v504, %v712
        %v714 = vpop.f32.mrb[0].mxu0
        %v715 = vpop.f32.mrb[0].mxu0
        %v716 = vadd.f32 %v507, %v715
        %v717 = vpop.f32.mrb[0].mxu0
        %718 = vmatprep.mubr.bf16.mxu0 0
        %719 = vmatmul.mubr.bf16.gmra.mrb[0].mxu0 %v283
        %v720 = vpop.f32.mrb[0].mxu0
        %v721 = vadd.f32 %v512, %v720
        %v722 = vpop.f32.mrb[0].mxu0
        %v723 = vpop.f32.mrb[0].mxu0
        %v724 = vadd.f32 %v515, %v723
        %v725 = vpop.f32.mrb[0].mxu0
        %726 = vmatprep.mubr.bf16.mxu0 0
        %727 = vmatmul.mubr.bf16.gmra.mrb[0].mxu0 %v284
        %v728 = vpop.f32.mrb[0].mxu0
        %v729 = vadd.f32 %v520, %v728
        %v730 = vpop.f32.mrb[0].mxu0
        %v731 = vpop.f32.mrb[0].mxu0
        %v732 = vadd.f32 %v523, %v731
        %v733 = vpop.f32.mrb[0].mxu0
        %734 = vmatprep.mubr.bf16.mxu0 0
        %735 = vmatmul.mubr.bf16.gmra.mrb[0].mxu0 %v285
        %v736 = vpop.f32.mrb[0].mxu0
        %v737 = vadd.f32 %v528, %v736
        %v738 = vpop.f32.mrb[0].mxu0
        %v739 = vpop.f32.mrb[0].mxu0
        %v740 = vadd.f32 %v531, %v739
        %v741 = vpop.f32.mrb[0].mxu0
        %742 = vmatprep.mubr.bf16.mxu0 0
        %743 = vmatmul.mubr.bf16.gmra.mrb[0].mxu0 %v286
        %v744 = vpop.f32.mrb[0].mxu0
        %v745 = vadd.f32 %v536, %v744
        %v746 = vpop.f32.mrb[0].mxu0
        %v747 = vpop.f32.mrb[0].mxu0
        %v748 = vadd.f32 %v539, %v747
        %v749 = vpop.f32.mrb[0].mxu0
        %750 = vmatprep.mubr.bf16.mxu0 0
        %751 = vmatmul.mubr.bf16.gmra.mrb[0].mxu0 %v287
        %v752 = vpop.f32.mrb[0].mxu0
        %v753 = vadd.f32 %v544, %v752
        %v754 = vpop.f32.mrb[0].mxu0
        %v755 = vpop.f32.mrb[0].mxu0
        %v756 = vadd.f32 %v547, %v755
        %v757 = vpop.f32.mrb[0].mxu0
        %758 = vmatprep.mubr.bf16.mxu0 0
        %759 = vmatmul.mubr.bf16.gmra.mrb[0].mxu0 %v288
        %v760 = vpop.f32.mrb[0].mxu0
        %v761 = vadd.f32 %v552, %v760
        %v762 = vpop.f32.mrb[0].mxu0
        %v763 = vpop.f32.mrb[0].mxu0
        %v764 = vadd.f32 %v555, %v763
        %v765 = vpop.f32.mrb[0].mxu0
        %766 = vmatprep.mubr.bf16.mxu0 0
        %767 = vmatmul.mubr.bf16.gmra.mrb[0].mxu0 %v289
        %v768 = vpop.f32.mrb[0].mxu0
        %v769 = vadd.f32 %v560, %v768
        %v770 = vpop.f32.mrb[0].mxu0
        %v771 = vpop.f32.mrb[0].mxu0
        %v772 = vadd.f32 %v563, %v771
        %v773 = vpop.f32.mrb[0].mxu0
        %774 = vmatprep.mubr.bf16.mxu0 0
        %775 = vmatmul.mubr.bf16.gmra.mrb[0].mxu0 %v290
        %v776 = vpop.f32.mrb[0].mxu0
        %v777 = vadd.f32 %v568, %v776
        %v778 = vpop.f32.mrb[0].mxu0
        %v779 = vpop.f32.mrb[0].mxu0
        %v780 = vadd.f32 %v571, %v779
        %v781 = vpop.f32.mrb[0].mxu0
        %782 = vmatprep.mubr.bf16.mxu0 0
        %783 = vmatmul.mubr.bf16.gmra.mrb[0].mxu0 %v291
        %v784 = vpop.f32.mrb[0].mxu0
        %v785 = vadd.f32 %v576, %v784
        %v786 = vpop.f32.mrb[0].mxu0
        %v787 = vpop.f32.mrb[0].mxu0
        %v788 = vadd.f32 %v579, %v787
        %v789 = vpop.f32.mrb[0].mxu0
        %790 = vdwg.mxu0
        %v791 = vld [vmem:[%s237 + $0x2] sm:$0xff]
        %v792 = vld [vmem:[%s237 + $0xa] sm:$0xff]
        %v793 = vld [vmem:[%s237 + $0x1a] sm:$0xff]
        %v794 = vld [vmem:[%s237 + $0x22] sm:$0xff]
        %v795 = vld [vmem:[%s237 + $0x32] sm:$0xff]
        %v796 = vld [vmem:[%s237 + $0x3a] sm:$0xff]
        %v797 = vld [vmem:[%s237 + $0x4a] sm:$0xff]
        %v798 = vld [vmem:[%s237 + $0x52] sm:$0xff]
        %v799 = vld [vmem:[%s237 + $0x62] sm:$0xff]
        %v800 = vld [vmem:[%s237 + $0x6a] sm:$0xff]
        %v801 = vld [vmem:[%s237 + $0x7a] sm:$0xff]
        %v802 = vld [vmem:[%s237 + $0x82] sm:$0xff]
        %v803 = vld [vmem:[%s237 + $0x92] sm:$0xff]
        %v804 = vld [vmem:[%s237 + $0x9a] sm:$0xff]
        %v805 = vld [vmem:[%s237 + $0xaa] sm:$0xff]
        %v806 = vld [vmem:[%s237 + $0xb2] sm:$0xff]
        %v807 = vld [vmem:[%s237 + $0xc2] sm:$0xff]
        %v808 = vld [vmem:[%s237 + $0xca] sm:$0xff]
        %v809 = vld [vmem:[%s237 + $0xda] sm:$0xff]
        %v810 = vld [vmem:[%s237 + $0xe2] sm:$0xff]
        %v811 = vld [vmem:[%s237 + $0xf2] sm:$0xff]
        %v812 = vld [vmem:[%s237 + $0xfa] sm:$0xff]
        %v813 = vld [vmem:[%s237 + $0x10a] sm:$0xff]
        %v814 = vld [vmem:[%s237 + $0x112] sm:$0xff]
        %v815 = vld [vmem:[%s237 + $0x122] sm:$0xff]
        %v816 = vld [vmem:[%s237 + $0x12a] sm:$0xff]
        %v817 = vld [vmem:[%s237 + $0x13a] sm:$0xff]
        %v818 = vld [vmem:[%s237 + $0x142] sm:$0xff]
        %v819 = vld [vmem:[%s237 + $0x152] sm:$0xff]
        %v820 = vld [vmem:[%s237 + $0x15a] sm:$0xff]
        %v821 = vld [vmem:[%s237 + $0x16a] sm:$0xff]
        %v822 = vld [vmem:[%s237 + $0x172] sm:$0xff]
        %v823 = vpack.c.bf16 %v792, %v791
        %v824 = vpack.c.bf16 %v794, %v793
        %v825 = vpack.c.bf16 %v796, %v795
        %v826 = vpack.c.bf16 %v798, %v797
        %v827 = vpack.c.bf16 %v800, %v799
        %v828 = vpack.c.bf16 %v802, %v801
        %v829 = vpack.c.bf16 %v804, %v803
        %v830 = vpack.c.bf16 %v806, %v805
        %v831 = vpack.c.bf16 %v808, %v807
        %v832 = vpack.c.bf16 %v810, %v809
        %v833 = vpack.c.bf16 %v812, %v811
        %v834 = vpack.c.bf16 %v814, %v813
        %v835 = vpack.c.bf16 %v816, %v815
        %v836 = vpack.c.bf16 %v818, %v817
        %v837 = vpack.c.bf16 %v820, %v819
        %v838 = vpack.c.bf16 %v822, %v821
        %s839 = scalar_lea.vmem %s1, 128
        %v840 = vld [vmem:[%s839] sm:$0xf]
        %v841 = vld [vmem:[%s839 + $0x4] sm:$0xf]
        %v842 = vld [vmem:[%s839 + $0x8] sm:$0xf]
        %v843 = vld [vmem:[%s839 + $0xc] sm:$0xf]
        %v844 = vld [vmem:[%s839 + $0x10] sm:$0xf]
        %v845 = vld [vmem:[%s839 + $0x14] sm:$0xf]
        %v846 = vld [vmem:[%s839 + $0x18] sm:$0xf]
        %v847 = vld [vmem:[%s839 + $0x1c] sm:$0xf]
        %v848 = vld [vmem:[%s839 + $0x20] sm:$0xf]
        %v849 = vld [vmem:[%s839 + $0x24] sm:$0xf]
        %v850 = vld [vmem:[%s839 + $0x28] sm:$0xf]
        %v851 = vld [vmem:[%s839 + $0x2c] sm:$0xf]
        %v852 = vld [vmem:[%s839 + $0x30] sm:$0xf]
        %v853 = vld [vmem:[%s839 + $0x34] sm:$0xf]
        %v854 = vld [vmem:[%s839 + $0x38] sm:$0xf]
        %v855 = vld [vmem:[%s839 + $0x3c] sm:$0xf]
        %v872 = vunpack.c.l.b16 %v840
        %v873 = vunpack.c.l.b16 %v841
        %v874 = vunpack.c.l.b16 %v842
        %v875 = vunpack.c.l.b16 %v843
        %v876 = vunpack.c.l.b16 %v844
        %v877 = vunpack.c.l.b16 %v845
        %v878 = vunpack.c.l.b16 %v846
        %v879 = vunpack.c.l.b16 %v847
        %v880 = vunpack.c.l.b16 %v848
        %v881 = vunpack.c.l.b16 %v849
        %v882 = vunpack.c.l.b16 %v850
        %v883 = vunpack.c.l.b16 %v851
        %v884 = vunpack.c.l.b16 %v852
        %v885 = vunpack.c.l.b16 %v853
        %v886 = vunpack.c.l.b16 %v854
        %v887 = vunpack.c.l.b16 %v855
        %v888 = vpack.c.b16 %v873, %v872
        %v889 = vpack.c.b16 %v875, %v874
        %v890 = vpack.c.b16 %v877, %v876
        %v891 = vpack.c.b16 %v879, %v878
        %v892 = vpack.c.b16 %v881, %v880
        %v893 = vpack.c.b16 %v883, %v882
        %v894 = vpack.c.b16 %v885, %v884
        %v895 = vpack.c.b16 %v887, %v886
        %904 = vmatprep.subr.bf16.mxu0 0
        %905 = vmatpush1.bf16.msra.mxu0 %v888
        %906 = vmatprep.subr.bf16.mxu0 0
        %907 = vmatpush1.bf16.msra.mxu0 %v889
        %908 = vmatprep.subr.bf16.mxu0 0
        %909 = vmatpush1.bf16.msra.mxu0 %v890
        %910 = vmatprep.subr.bf16.mxu0 0
        %911 = vmatpush1.bf16.msra.mxu0 %v891
        %912 = vmatprep.subr.bf16.mxu0 0
        %913 = vmatpush1.bf16.msra.mxu0 %v892
        %914 = vmatprep.subr.bf16.mxu0 0
        %915 = vmatpush1.bf16.msra.mxu0 %v893
        %916 = vmatprep.subr.bf16.mxu0 0
        %917 = vmatpush1.bf16.msra.mxu0 %v894
        %918 = vmatprep.subr.bf16.mxu0 0
        %919 = vmatpush1.bf16.msra.mxu0 %v895
        %920 = vmatprep.subr.bf16.mxu0 0
        %921 = vmatpush1.bf16.msra.mxu0 0
        %922 = vmatprep.subr.bf16.mxu0 0
        %923 = vmatpush1.bf16.msra.mxu0 0
        %924 = vmatprep.subr.bf16.mxu0 0
        %925 = vmatpush1.bf16.msra.mxu0 0
        %926 = vmatprep.subr.bf16.mxu0 0
        %927 = vmatpush1.bf16.msra.mxu0 0
        %928 = vmatprep.subr.bf16.mxu0 0
        %929 = vmatpush1.bf16.msra.mxu0 0
        %930 = vmatprep.subr.bf16.mxu0 0
        %931 = vmatpush1.bf16.msra.mxu0 0
        %932 = vmatprep.subr.bf16.mxu0 0
        %933 = vmatpush1.bf16.msra.mxu0 0
        %934 = vmatprep.subr.bf16.mxu0 0
        %935 = vmatpush1.bf16.msra.mxu0 0
        %936 = vmatprep.mubr.bf16.mxu0 0
        %937 = vmatmul.mubr.bf16.gmra.mrb[0].mxu0 %v823
        %v938 = vpop.f32.mrb[0].mxu0
        %v939 = vadd.f32 0.0, %v938
        %v940 = vpop.f32.mrb[0].mxu0
        %v941 = vpop.f32.mrb[0].mxu0
        %v942 = vadd.f32 0.0, %v941
        %v943 = vpop.f32.mrb[0].mxu0
        %944 = vmatprep.mubr.bf16.mxu0 0
        %945 = vmatmul.mubr.bf16.gmra.mrb[0].mxu0 %v824
        %v946 = vpop.f32.mrb[0].mxu0
        %v947 = vadd.f32 0.0, %v946
        %v948 = vpop.f32.mrb[0].mxu0
        %v949 = vpop.f32.mrb[0].mxu0
        %v950 = vadd.f32 0.0, %v949
        %v951 = vpop.f32.mrb[0].mxu0
        %952 = vmatprep.mubr.bf16.mxu0 0
        %953 = vmatmul.mubr.bf16.gmra.mrb[0].mxu0 %v825
        %v954 = vpop.f32.mrb[0].mxu0
        %v955 = vadd.f32 0.0, %v954
        %v956 = vpop.f32.mrb[0].mxu0
        %v957 = vpop.f32.mrb[0].mxu0
        %v958 = vadd.f32 0.0, %v957
        %v959 = vpop.f32.mrb[0].mxu0
        %960 = vmatprep.mubr.bf16.mxu0 0
        %961 = vmatmul.mubr.bf16.gmra.mrb[0].mxu0 %v826
        %v962 = vpop.f32.mrb[0].mxu0
        %v963 = vadd.f32 0.0, %v962
        %v964 = vpop.f32.mrb[0].mxu0
        %v965 = vpop.f32.mrb[0].mxu0
        %v966 = vadd.f32 0.0, %v965
        %v967 = vpop.f32.mrb[0].mxu0
        %968 = vmatprep.mubr.bf16.mxu0 0
        %969 = vmatmul.mubr.bf16.gmra.mrb[0].mxu0 %v827
        %v970 = vpop.f32.mrb[0].mxu0
        %v971 = vadd.f32 0.0, %v970
        %v972 = vpop.f32.mrb[0].mxu0
        %v973 = vpop.f32.mrb[0].mxu0
        %v974 = vadd.f32 0.0, %v973
        %v975 = vpop.f32.mrb[0].mxu0
        %976 = vmatprep.mubr.bf16.mxu0 0
        %977 = vmatmul.mubr.bf16.gmra.mrb[0].mxu0 %v828
        %v978 = vpop.f32.mrb[0].mxu0
        %v979 = vadd.f32 0.0, %v978
        %v980 = vpop.f32.mrb[0].mxu0
        %v981 = vpop.f32.mrb[0].mxu0
        %v982 = vadd.f32 0.0, %v981
        %v983 = vpop.f32.mrb[0].mxu0
        %984 = vmatprep.mubr.bf16.mxu0 0
        %985 = vmatmul.mubr.bf16.gmra.mrb[0].mxu0 %v829
        %v986 = vpop.f32.mrb[0].mxu0
        %v987 = vadd.f32 0.0, %v986
        %v988 = vpop.f32.mrb[0].mxu0
        %v989 = vpop.f32.mrb[0].mxu0
        %v990 = vadd.f32 0.0, %v989
        %v991 = vpop.f32.mrb[0].mxu0
        %992 = vmatprep.mubr.bf16.mxu0 0
        %993 = vmatmul.mubr.bf16.gmra.mrb[0].mxu0 %v830
        %v994 = vpop.f32.mrb[0].mxu0
        %v995 = vadd.f32 0.0, %v994
        %v996 = vpop.f32.mrb[0].mxu0
        %v997 = vpop.f32.mrb[0].mxu0
        %v998 = vadd.f32 0.0, %v997
        %v999 = vpop.f32.mrb[0].mxu0
        %1000 = vmatprep.mubr.bf16.mxu0 0
        %1001 = vmatmul.mubr.bf16.gmra.mrb[0].mxu0 %v831
        %v1002 = vpop.f32.mrb[0].mxu0
        %v1003 = vadd.f32 0.0, %v1002
        %v1004 = vpop.f32.mrb[0].mxu0
        %v1005 = vpop.f32.mrb[0].mxu0
        %v1006 = vadd.f32 0.0, %v1005
        %v1007 = vpop.f32.mrb[0].mxu0
        %1008 = vmatprep.mubr.bf16.mxu0 0
        %1009 = vmatmul.mubr.bf16.gmra.mrb[0].mxu0 %v832
        %v1010 = vpop.f32.mrb[0].mxu0
        %v1011 = vadd.f32 0.0, %v1010
        %v1012 = vpop.f32.mrb[0].mxu0
        %v1013 = vpop.f32.mrb[0].mxu0
        %v1014 = vadd.f32 0.0, %v1013
        %v1015 = vpop.f32.mrb[0].mxu0
        %1016 = vmatprep.mubr.bf16.mxu0 0
        %1017 = vmatmul.mubr.bf16.gmra.mrb[0].mxu0 %v833
        %v1018 = vpop.f32.mrb[0].mxu0
        %v1019 = vadd.f32 0.0, %v1018
        %v1020 = vpop.f32.mrb[0].mxu0
        %v1021 = vpop.f32.mrb[0].mxu0
        %v1022 = vadd.f32 0.0, %v1021
        %v1023 = vpop.f32.mrb[0].mxu0
        %1024 = vmatprep.mubr.bf16.mxu0 0
        %1025 = vmatmul.mubr.bf16.gmra.mrb[0].mxu0 %v834
        %v1026 = vpop.f32.mrb[0].mxu0
        %v1027 = vadd.f32 0.0, %v1026
        %v1028 = vpop.f32.mrb[0].mxu0
        %v1029 = vpop.f32.mrb[0].mxu0
        %v1030 = vadd.f32 0.0, %v1029
        %v1031 = vpop.f32.mrb[0].mxu0
        %1032 = vmatprep.mubr.bf16.mxu0 0
        %1033 = vmatmul.mubr.bf16.gmra.mrb[0].mxu0 %v835
        %v1034 = vpop.f32.mrb[0].mxu0
        %v1035 = vadd.f32 0.0, %v1034
        %v1036 = vpop.f32.mrb[0].mxu0
        %v1037 = vpop.f32.mrb[0].mxu0
        %v1038 = vadd.f32 0.0, %v1037
        %v1039 = vpop.f32.mrb[0].mxu0
        %1040 = vmatprep.mubr.bf16.mxu0 0
        %1041 = vmatmul.mubr.bf16.gmra.mrb[0].mxu0 %v836
        %v1042 = vpop.f32.mrb[0].mxu0
        %v1043 = vadd.f32 0.0, %v1042
        %v1044 = vpop.f32.mrb[0].mxu0
        %v1045 = vpop.f32.mrb[0].mxu0
        %v1046 = vadd.f32 0.0, %v1045
        %v1047 = vpop.f32.mrb[0].mxu0
        %1048 = vmatprep.mubr.bf16.mxu0 0
        %1049 = vmatmul.mubr.bf16.gmra.mrb[0].mxu0 %v837
        %v1050 = vpop.f32.mrb[0].mxu0
        %v1051 = vadd.f32 0.0, %v1050
        %v1052 = vpop.f32.mrb[0].mxu0
        %v1053 = vpop.f32.mrb[0].mxu0
        %v1054 = vadd.f32 0.0, %v1053
        %v1055 = vpop.f32.mrb[0].mxu0
        %1056 = vmatprep.mubr.bf16.mxu0 0
        %1057 = vmatmul.mubr.bf16.gmra.mrb[0].mxu0 %v838
        %v1058 = vpop.f32.mrb[0].mxu0
        %v1059 = vadd.f32 0.0, %v1058
        %v1060 = vpop.f32.mrb[0].mxu0
        %v1061 = vpop.f32.mrb[0].mxu0
        %v1062 = vadd.f32 0.0, %v1061
        %v1063 = vpop.f32.mrb[0].mxu0
        %1064 = vdwg.mxu0
        %v1065 = vadd.f32 %v665, %v939
        %v1066 = vadd.f32 %v668, %v942
        %v1067 = vadd.f32 %v673, %v947
        %v1068 = vadd.f32 %v676, %v950
        %v1069 = vadd.f32 %v681, %v955
        %v1070 = vadd.f32 %v684, %v958
        %v1071 = vadd.f32 %v689, %v963
        %v1072 = vadd.f32 %v692, %v966
        %v1073 = vadd.f32 %v697, %v971
        %v1074 = vadd.f32 %v700, %v974
        %v1075 = vadd.f32 %v705, %v979
        %v1076 = vadd.f32 %v708, %v982
        %v1077 = vadd.f32 %v713, %v987
        %v1078 = vadd.f32 %v716, %v990
        %v1079 = vadd.f32 %v721, %v995
        %v1080 = vadd.f32 %v724, %v998
        %v1081 = vadd.f32 %v729, %v1003
        %v1082 = vadd.f32 %v732, %v1006
        %v1083 = vadd.f32 %v737, %v1011
        %v1084 = vadd.f32 %v740, %v1014
        %v1085 = vadd.f32 %v745, %v1019
        %v1086 = vadd.f32 %v748, %v1022
        %v1087 = vadd.f32 %v753, %v1027
        %v1088 = vadd.f32 %v756, %v1030
        %v1089 = vadd.f32 %v761, %v1035
        %v1090 = vadd.f32 %v764, %v1038
        %v1091 = vadd.f32 %v769, %v1043
        %v1092 = vadd.f32 %v772, %v1046
        %v1093 = vadd.f32 %v777, %v1051
        %v1094 = vadd.f32 %v780, %v1054
        %v1095 = vadd.f32 %v785, %v1059
        %v1096 = vadd.f32 %v788, %v1062
        %s1097 = scalar_lea.vmem %s237, 24
        %v1098 = vld [vmem:[%s1097] sm:$0xff]
        %v1099 = vld [vmem:[%s1097 + $0x8] sm:$0xff]
        %v1100 = vld [vmem:[%s1097 + $0x18] sm:$0xff]
        %v1101 = vld [vmem:[%s1097 + $0x20] sm:$0xff]
        %v1102 = vld [vmem:[%s1097 + $0x30] sm:$0xff]
        %v1103 = vld [vmem:[%s1097 + $0x38] sm:$0xff]
        %v1104 = vld [vmem:[%s1097 + $0x48] sm:$0xff]
        %v1105 = vld [vmem:[%s1097 + $0x50] sm:$0xff]
        %v1106 = vld [vmem:[%s1097 + $0x60] sm:$0xff]
        %v1107 = vld [vmem:[%s1097 + $0x68] sm:$0xff]
        %v1108 = vld [vmem:[%s1097 + $0x78] sm:$0xff]
        %v1109 = vld [vmem:[%s1097 + $0x80] sm:$0xff]
        %v1110 = vld [vmem:[%s1097 + $0x90] sm:$0xff]
        %v1111 = vld [vmem:[%s1097 + $0x98] sm:$0xff]
        %v1112 = vld [vmem:[%s1097 + $0xa8] sm:$0xff]
        %v1113 = vld [vmem:[%s1097 + $0xb0] sm:$0xff]
        %v1114 = vld [vmem:[%s1097 + $0xc0] sm:$0xff]
        %v1115 = vld [vmem:[%s1097 + $0xc8] sm:$0xff]
        %v1116 = vld [vmem:[%s1097 + $0xd8] sm:$0xff]
        %v1117 = vld [vmem:[%s1097 + $0xe0] sm:$0xff]
        %v1118 = vld [vmem:[%s1097 + $0xf0] sm:$0xff]
        %v1119 = vld [vmem:[%s1097 + $0xf8] sm:$0xff]
        %v1120 = vld [vmem:[%s1097 + $0x108] sm:$0xff]
        %v1121 = vld [vmem:[%s1097 + $0x110] sm:$0xff]
        %v1122 = vld [vmem:[%s1097 + $0x120] sm:$0xff]
        %v1123 = vld [vmem:[%s1097 + $0x128] sm:$0xff]
        %v1124 = vld [vmem:[%s1097 + $0x138] sm:$0xff]
        %v1125 = vld [vmem:[%s1097 + $0x140] sm:$0xff]
        %v1126 = vld [vmem:[%s1097 + $0x150] sm:$0xff]
        %v1127 = vld [vmem:[%s1097 + $0x158] sm:$0xff]
        %v1128 = vld [vmem:[%s1097 + $0x168] sm:$0xff]
        %v1129 = vld [vmem:[%s1097 + $0x170] sm:$0xff]
        %v1130 = vpack.c.bf16 %v1099, %v1098
        %v1131 = vpack.c.bf16 %v1101, %v1100
        %v1132 = vpack.c.bf16 %v1103, %v1102
        %v1133 = vpack.c.bf16 %v1105, %v1104
        %v1134 = vpack.c.bf16 %v1107, %v1106
        %v1135 = vpack.c.bf16 %v1109, %v1108
        %v1136 = vpack.c.bf16 %v1111, %v1110
        %v1137 = vpack.c.bf16 %v1113, %v1112
        %v1138 = vpack.c.bf16 %v1115, %v1114
        %v1139 = vpack.c.bf16 %v1117, %v1116
        %v1140 = vpack.c.bf16 %v1119, %v1118
        %v1141 = vpack.c.bf16 %v1121, %v1120
        %v1142 = vpack.c.bf16 %v1123, %v1122
        %v1143 = vpack.c.bf16 %v1125, %v1124
        %v1144 = vpack.c.bf16 %v1127, %v1126
        %v1145 = vpack.c.bf16 %v1129, %v1128
        %s1146 = scalar_lea.vmem %s1, 192
        %v1147 = vld [vmem:[%s1146] sm:$0xf]
        %v1148 = vld [vmem:[%s1146 + $0x4] sm:$0xf]
        %v1149 = vld [vmem:[%s1146 + $0x8] sm:$0xf]
        %v1150 = vld [vmem:[%s1146 + $0xc] sm:$0xf]
        %v1151 = vld [vmem:[%s1146 + $0x10] sm:$0xf]
        %v1152 = vld [vmem:[%s1146 + $0x14] sm:$0xf]
        %v1153 = vld [vmem:[%s1146 + $0x18] sm:$0xf]
        %v1154 = vld [vmem:[%s1146 + $0x1c] sm:$0xf]
        %v1155 = vld [vmem:[%s1146 + $0x20] sm:$0xf]
        %v1156 = vld [vmem:[%s1146 + $0x24] sm:$0xf]
        %v1157 = vld [vmem:[%s1146 + $0x28] sm:$0xf]
        %v1158 = vld [vmem:[%s1146 + $0x2c] sm:$0xf]
        %v1159 = vld [vmem:[%s1146 + $0x30] sm:$0xf]
        %v1160 = vld [vmem:[%s1146 + $0x34] sm:$0xf]
        %v1161 = vld [vmem:[%s1146 + $0x38] sm:$0xf]
        %v1162 = vld [vmem:[%s1146 + $0x3c] sm:$0xf]
        %v1179 = vunpack.c.l.b16 %v1147
        %v1180 = vunpack.c.l.b16 %v1148
        %v1181 = vunpack.c.l.b16 %v1149
        %v1182 = vunpack.c.l.b16 %v1150
        %v1183 = vunpack.c.l.b16 %v1151
        %v1184 = vunpack.c.l.b16 %v1152
        %v1185 = vunpack.c.l.b16 %v1153
        %v1186 = vunpack.c.l.b16 %v1154
        %v1187 = vunpack.c.l.b16 %v1155
        %v1188 = vunpack.c.l.b16 %v1156
        %v1189 = vunpack.c.l.b16 %v1157
        %v1190 = vunpack.c.l.b16 %v1158
        %v1191 = vunpack.c.l.b16 %v1159
        %v1192 = vunpack.c.l.b16 %v1160
        %v1193 = vunpack.c.l.b16 %v1161
        %v1194 = vunpack.c.l.b16 %v1162
        %v1195 = vpack.c.b16 %v1180, %v1179
        %v1196 = vpack.c.b16 %v1182, %v1181
        %v1197 = vpack.c.b16 %v1184, %v1183
        %v1198 = vpack.c.b16 %v1186, %v1185
        %v1199 = vpack.c.b16 %v1188, %v1187
        %v1200 = vpack.c.b16 %v1190, %v1189
        %v1201 = vpack.c.b16 %v1192, %v1191
        %v1202 = vpack.c.b16 %v1194, %v1193
        %1211 = vmatprep.subr.bf16.mxu0 0
        %1212 = vmatpush1.bf16.msra.mxu0 %v1195
        %1213 = vmatprep.subr.bf16.mxu0 0
        %1214 = vmatpush1.bf16.msra.mxu0 %v1196
        %1215 = vmatprep.subr.bf16.mxu0 0
        %1216 = vmatpush1.bf16.msra.mxu0 %v1197
        %1217 = vmatprep.subr.bf16.mxu0 0
        %1218 = vmatpush1.bf16.msra.mxu0 %v1198
        %1219 = vmatprep.subr.bf16.mxu0 0
        %1220 = vmatpush1.bf16.msra.mxu0 %v1199
        %1221 = vmatprep.subr.bf16.mxu0 0
        %1222 = vmatpush1.bf16.msra.mxu0 %v1200
        %1223 = vmatprep.subr.bf16.mxu0 0
        %1224 = vmatpush1.bf16.msra.mxu0 %v1201
        %1225 = vmatprep.subr.bf16.mxu0 0
        %1226 = vmatpush1.bf16.msra.mxu0 %v1202
        %1227 = vmatprep.subr.bf16.mxu0 0
        %1228 = vmatpush1.bf16.msra.mxu0 0
        %1229 = vmatprep.subr.bf16.mxu0 0
        %1230 = vmatpush1.bf16.msra.mxu0 0
        %1231 = vmatprep.subr.bf16.mxu0 0
        %1232 = vmatpush1.bf16.msra.mxu0 0
        %1233 = vmatprep.subr.bf16.mxu0 0
        %1234 = vmatpush1.bf16.msra.mxu0 0
        %1235 = vmatprep.subr.bf16.mxu0 0
        %1236 = vmatpush1.bf16.msra.mxu0 0
        %1237 = vmatprep.subr.bf16.mxu0 0
        %1238 = vmatpush1.bf16.msra.mxu0 0
        %1239 = vmatprep.subr.bf16.mxu0 0
        %1240 = vmatpush1.bf16.msra.mxu0 0
        %1241 = vmatprep.subr.bf16.mxu0 0
        %1242 = vmatpush1.bf16.msra.mxu0 0
        %1243 = vmatprep.mubr.bf16.mxu0 0
        %1244 = vmatmul.mubr.bf16.gmra.mrb[0].mxu0 %v1130
        %v1245 = vpop.f32.mrb[0].mxu0
        %v1246 = vadd.f32 0.0, %v1245
        %v1247 = vpop.f32.mrb[0].mxu0
        %v1248 = vpop.f32.mrb[0].mxu0
        %v1249 = vadd.f32 0.0, %v1248
        %v1250 = vpop.f32.mrb[0].mxu0
        %1251 = vmatprep.mubr.bf16.mxu0 0
        %1252 = vmatmul.mubr.bf16.gmra.mrb[0].mxu0 %v1131
        %v1253 = vpop.f32.mrb[0].mxu0
        %v1254 = vadd.f32 0.0, %v1253
        %v1255 = vpop.f32.mrb[0].mxu0
        %v1256 = vpop.f32.mrb[0].mxu0
        %v1257 = vadd.f32 0.0, %v1256
        %v1258 = vpop.f32.mrb[0].mxu0
        %1259 = vmatprep.mubr.bf16.mxu0 0
        %1260 = vmatmul.mubr.bf16.gmra.mrb[0].mxu0 %v1132
        %v1261 = vpop.f32.mrb[0].mxu0
        %v1262 = vadd.f32 0.0, %v1261
        %v1263 = vpop.f32.mrb[0].mxu0
        %v1264 = vpop.f32.mrb[0].mxu0
        %v1265 = vadd.f32 0.0, %v1264
        %v1266 = vpop.f32.mrb[0].mxu0
        %1267 = vmatprep.mubr.bf16.mxu0 0
        %1268 = vmatmul.mubr.bf16.gmra.mrb[0].mxu0 %v1133
        %v1269 = vpop.f32.mrb[0].mxu0
        %v1270 = vadd.f32 0.0, %v1269
        %v1271 = vpop.f32.mrb[0].mxu0
        %v1272 = vpop.f32.mrb[0].mxu0
        %v1273 = vadd.f32 0.0, %v1272
        %v1274 = vpop.f32.mrb[0].mxu0
        %1275 = vmatprep.mubr.bf16.mxu0 0
        %1276 = vmatmul.mubr.bf16.gmra.mrb[0].mxu0 %v1134
        %v1277 = vpop.f32.mrb[0].mxu0
        %v1278 = vadd.f32 0.0, %v1277
        %v1279 = vpop.f32.mrb[0].mxu0
        %v1280 = vpop.f32.mrb[0].mxu0
        %v1281 = vadd.f32 0.0, %v1280
        %v1282 = vpop.f32.mrb[0].mxu0
        %1283 = vmatprep.mubr.bf16.mxu0 0
        %1284 = vmatmul.mubr.bf16.gmra.mrb[0].mxu0 %v1135
        %v1285 = vpop.f32.mrb[0].mxu0
        %v1286 = vadd.f32 0.0, %v1285
        %v1287 = vpop.f32.mrb[0].mxu0
        %v1288 = vpop.f32.mrb[0].mxu0
        %v1289 = vadd.f32 0.0, %v1288
        %v1290 = vpop.f32.mrb[0].mxu0
        %1291 = vmatprep.mubr.bf16.mxu0 0
        %1292 = vmatmul.mubr.bf16.gmra.mrb[0].mxu0 %v1136
        %v1293 = vpop.f32.mrb[0].mxu0
        %v1294 = vadd.f32 0.0, %v1293
        %v1295 = vpop.f32.mrb[0].mxu0
        %v1296 = vpop.f32.mrb[0].mxu0
        %v1297 = vadd.f32 0.0, %v1296
        %v1298 = vpop.f32.mrb[0].mxu0
        %1299 = vmatprep.mubr.bf16.mxu0 0
        %1300 = vmatmul.mubr.bf16.gmra.mrb[0].mxu0 %v1137
        %v1301 = vpop.f32.mrb[0].mxu0
        %v1302 = vadd.f32 0.0, %v1301
        %v1303 = vpop.f32.mrb[0].mxu0
        %v1304 = vpop.f32.mrb[0].mxu0
        %v1305 = vadd.f32 0.0, %v1304
        %v1306 = vpop.f32.mrb[0].mxu0
        %1307 = vmatprep.mubr.bf16.mxu0 0
        %1308 = vmatmul.mubr.bf16.gmra.mrb[0].mxu0 %v1138
        %v1309 = vpop.f32.mrb[0].mxu0
        %v1310 = vadd.f32 0.0, %v1309
        %v1311 = vpop.f32.mrb[0].mxu0
        %v1312 = vpop.f32.mrb[0].mxu0
        %v1313 = vadd.f32 0.0, %v1312
        %v1314 = vpop.f32.mrb[0].mxu0
        %1315 = vmatprep.mubr.bf16.mxu0 0
        %1316 = vmatmul.mubr.bf16.gmra.mrb[0].mxu0 %v1139
        %v1317 = vpop.f32.mrb[0].mxu0
        %v1318 = vadd.f32 0.0, %v1317
        %v1319 = vpop.f32.mrb[0].mxu0
        %v1320 = vpop.f32.mrb[0].mxu0
        %v1321 = vadd.f32 0.0, %v1320
        %v1322 = vpop.f32.mrb[0].mxu0
        %1323 = vmatprep.mubr.bf16.mxu0 0
        %1324 = vmatmul.mubr.bf16.gmra.mrb[0].mxu0 %v1140
        %v1325 = vpop.f32.mrb[0].mxu0
        %v1326 = vadd.f32 0.0, %v1325
        %v1327 = vpop.f32.mrb[0].mxu0
        %v1328 = vpop.f32.mrb[0].mxu0
        %v1329 = vadd.f32 0.0, %v1328
        %v1330 = vpop.f32.mrb[0].mxu0
        %1331 = vmatprep.mubr.bf16.mxu0 0
        %1332 = vmatmul.mubr.bf16.gmra.mrb[0].mxu0 %v1141
        %v1333 = vpop.f32.mrb[0].mxu0
        %v1334 = vadd.f32 0.0, %v1333
        %v1335 = vpop.f32.mrb[0].mxu0
        %v1336 = vpop.f32.mrb[0].mxu0
        %v1337 = vadd.f32 0.0, %v1336
        %v1338 = vpop.f32.mrb[0].mxu0
        %1339 = vmatprep.mubr.bf16.mxu0 0
        %1340 = vmatmul.mubr.bf16.gmra.mrb[0].mxu0 %v1142
        %v1341 = vpop.f32.mrb[0].mxu0
        %v1342 = vadd.f32 0.0, %v1341
        %v1343 = vpop.f32.mrb[0].mxu0
        %v1344 = vpop.f32.mrb[0].mxu0
        %v1345 = vadd.f32 0.0, %v1344
        %v1346 = vpop.f32.mrb[0].mxu0
        %1347 = vmatprep.mubr.bf16.mxu0 0
        %1348 = vmatmul.mubr.bf16.gmra.mrb[0].mxu0 %v1143
        %v1349 = vpop.f32.mrb[0].mxu0
        %v1350 = vadd.f32 0.0, %v1349
        %v1351 = vpop.f32.mrb[0].mxu0
        %v1352 = vpop.f32.mrb[0].mxu0
        %v1353 = vadd.f32 0.0, %v1352
        %v1354 = vpop.f32.mrb[0].mxu0
        %1355 = vmatprep.mubr.bf16.mxu0 0
        %1356 = vmatmul.mubr.bf16.gmra.mrb[0].mxu0 %v1144
        %v1357 = vpop.f32.mrb[0].mxu0
        %v1358 = vadd.f32 0.0, %v1357
        %v1359 = vpop.f32.mrb[0].mxu0
        %v1360 = vpop.f32.mrb[0].mxu0
        %v1361 = vadd.f32 0.0, %v1360
        %v1362 = vpop.f32.mrb[0].mxu0
        %1363 = vmatprep.mubr.bf16.mxu0 0
        %1364 = vmatmul.mubr.bf16.gmra.mrb[0].mxu0 %v1145
        %v1365 = vpop.f32.mrb[0].mxu0
        %v1366 = vadd.f32 0.0, %v1365
        %v1367 = vpop.f32.mrb[0].mxu0
        %v1368 = vpop.f32.mrb[0].mxu0
        %v1369 = vadd.f32 0.0, %v1368
        %v1370 = vpop.f32.mrb[0].mxu0
        %1371 = vdwg.mxu0
        %v1372 = vadd.f32 %v1065, %v1246
        %v1373 = vadd.f32 %v1066, %v1249
        %v1374 = vadd.f32 %v1067, %v1254
        %v1375 = vadd.f32 %v1068, %v1257
        %v1376 = vadd.f32 %v1069, %v1262
        %v1377 = vadd.f32 %v1070, %v1265
        %v1378 = vadd.f32 %v1071, %v1270
        %v1379 = vadd.f32 %v1072, %v1273
        %v1380 = vadd.f32 %v1073, %v1278
        %v1381 = vadd.f32 %v1074, %v1281
        %v1382 = vadd.f32 %v1075, %v1286
        %v1383 = vadd.f32 %v1076, %v1289
        %v1384 = vadd.f32 %v1077, %v1294
        %v1385 = vadd.f32 %v1078, %v1297
        %v1386 = vadd.f32 %v1079, %v1302
        %v1387 = vadd.f32 %v1080, %v1305
        %v1388 = vadd.f32 %v1081, %v1310
        %v1389 = vadd.f32 %v1082, %v1313
        %v1390 = vadd.f32 %v1083, %v1318
        %v1391 = vadd.f32 %v1084, %v1321
        %v1392 = vadd.f32 %v1085, %v1326
        %v1393 = vadd.f32 %v1086, %v1329
        %v1394 = vadd.f32 %v1087, %v1334
        %v1395 = vadd.f32 %v1088, %v1337
        %v1396 = vadd.f32 %v1089, %v1342
        %v1397 = vadd.f32 %v1090, %v1345
        %v1398 = vadd.f32 %v1091, %v1350
        %v1399 = vadd.f32 %v1092, %v1353
        %v1400 = vadd.f32 %v1093, %v1358
        %v1401 = vadd.f32 %v1094, %v1361
        %v1402 = vadd.f32 %v1095, %v1366
        %v1403 = vadd.f32 %v1096, %v1369
        %v1404 = vld [vmem:[%s1097 + $0x1] sm:$0xff]
        %v1405 = vld [vmem:[%s1097 + $0x9] sm:$0xff]
        %v1406 = vld [vmem:[%s1097 + $0x19] sm:$0xff]
        %v1407 = vld [vmem:[%s1097 + $0x21] sm:$0xff]
        %v1408 = vld [vmem:[%s1097 + $0x31] sm:$0xff]
        %v1409 = vld [vmem:[%s1097 + $0x39] sm:$0xff]
        %v1410 = vld [vmem:[%s1097 + $0x49] sm:$0xff]
        %v1411 = vld [vmem:[%s1097 + $0x51] sm:$0xff]
        %v1412 = vld [vmem:[%s1097 + $0x61] sm:$0xff]
        %v1413 = vld [vmem:[%s1097 + $0x69] sm:$0xff]
        %v1414 = vld [vmem:[%s1097 + $0x79] sm:$0xff]
        %v1415 = vld [vmem:[%s1097 + $0x81] sm:$0xff]
        %v1416 = vld [vmem:[%s1097 + $0x91] sm:$0xff]
        %v1417 = vld [vmem:[%s1097 + $0x99] sm:$0xff]
        %v1418 = vld [vmem:[%s1097 + $0xa9] sm:$0xff]
        %v1419 = vld [vmem:[%s1097 + $0xb1] sm:$0xff]
        %v1420 = vld [vmem:[%s1097 + $0xc1] sm:$0xff]
        %v1421 = vld [vmem:[%s1097 + $0xc9] sm:$0xff]
        %v1422 = vld [vmem:[%s1097 + $0xd9] sm:$0xff]
        %v1423 = vld [vmem:[%s1097 + $0xe1] sm:$0xff]
        %v1424 = vld [vmem:[%s1097 + $0xf1] sm:$0xff]
        %v1425 = vld [vmem:[%s1097 + $0xf9] sm:$0xff]
        %v1426 = vld [vmem:[%s1097 + $0x109] sm:$0xff]
        %v1427 = vld [vmem:[%s1097 + $0x111] sm:$0xff]
        %v1428 = vld [vmem:[%s1097 + $0x121] sm:$0xff]
        %v1429 = vld [vmem:[%s1097 + $0x129] sm:$0xff]
        %v1430 = vld [vmem:[%s1097 + $0x139] sm:$0xff]
        %v1431 = vld [vmem:[%s1097 + $0x141] sm:$0xff]
        %v1432 = vld [vmem:[%s1097 + $0x151] sm:$0xff]
        %v1433 = vld [vmem:[%s1097 + $0x159] sm:$0xff]
        %v1434 = vld [vmem:[%s1097 + $0x169] sm:$0xff]
        %v1435 = vld [vmem:[%s1097 + $0x171] sm:$0xff]
        %v1436 = vpack.c.bf16 %v1405, %v1404
        %v1437 = vpack.c.bf16 %v1407, %v1406
        %v1438 = vpack.c.bf16 %v1409, %v1408
        %v1439 = vpack.c.bf16 %v1411, %v1410
        %v1440 = vpack.c.bf16 %v1413, %v1412
        %v1441 = vpack.c.bf16 %v1415, %v1414
        %v1442 = vpack.c.bf16 %v1417, %v1416
        %v1443 = vpack.c.bf16 %v1419, %v1418
        %v1444 = vpack.c.bf16 %v1421, %v1420
        %v1445 = vpack.c.bf16 %v1423, %v1422
        %v1446 = vpack.c.bf16 %v1425, %v1424
        %v1447 = vpack.c.bf16 %v1427, %v1426
        %v1448 = vpack.c.bf16 %v1429, %v1428
        %v1449 = vpack.c.bf16 %v1431, %v1430
        %v1450 = vpack.c.bf16 %v1433, %v1432
        %v1451 = vpack.c.bf16 %v1435, %v1434
        %s1452 = scalar_lea.vmem %s1, 256
        %v1453 = vld [vmem:[%s1452] sm:$0xf]
        %v1454 = vld [vmem:[%s1452 + $0x4] sm:$0xf]
        %v1455 = vld [vmem:[%s1452 + $0x8] sm:$0xf]
        %v1456 = vld [vmem:[%s1452 + $0xc] sm:$0xf]
        %v1457 = vld [vmem:[%s1452 + $0x10] sm:$0xf]
        %v1458 = vld [vmem:[%s1452 + $0x14] sm:$0xf]
        %v1459 = vld [vmem:[%s1452 + $0x18] sm:$0xf]
        %v1460 = vld [vmem:[%s1452 + $0x1c] sm:$0xf]
        %v1461 = vld [vmem:[%s1452 + $0x20] sm:$0xf]
        %v1462 = vld [vmem:[%s1452 + $0x24] sm:$0xf]
        %v1463 = vld [vmem:[%s1452 + $0x28] sm:$0xf]
        %v1464 = vld [vmem:[%s1452 + $0x2c] sm:$0xf]
        %v1465 = vld [vmem:[%s1452 + $0x30] sm:$0xf]
        %v1466 = vld [vmem:[%s1452 + $0x34] sm:$0xf]
        %v1467 = vld [vmem:[%s1452 + $0x38] sm:$0xf]
        %v1468 = vld [vmem:[%s1452 + $0x3c] sm:$0xf]
        %v1485 = vunpack.c.l.b16 %v1453
        %v1486 = vunpack.c.l.b16 %v1454
        %v1487 = vunpack.c.l.b16 %v1455
        %v1488 = vunpack.c.l.b16 %v1456
        %v1489 = vunpack.c.l.b16 %v1457
        %v1490 = vunpack.c.l.b16 %v1458
        %v1491 = vunpack.c.l.b16 %v1459
        %v1492 = vunpack.c.l.b16 %v1460
        %v1493 = vunpack.c.l.b16 %v1461
        %v1494 = vunpack.c.l.b16 %v1462
        %v1495 = vunpack.c.l.b16 %v1463
        %v1496 = vunpack.c.l.b16 %v1464
        %v1497 = vunpack.c.l.b16 %v1465
        %v1498 = vunpack.c.l.b16 %v1466
        %v1499 = vunpack.c.l.b16 %v1467
        %v1500 = vunpack.c.l.b16 %v1468
        %v1501 = vpack.c.b16 %v1486, %v1485
        %v1502 = vpack.c.b16 %v1488, %v1487
        %v1503 = vpack.c.b16 %v1490, %v1489
        %v1504 = vpack.c.b16 %v1492, %v1491
        %v1505 = vpack.c.b16 %v1494, %v1493
        %v1506 = vpack.c.b16 %v1496, %v1495
        %v1507 = vpack.c.b16 %v1498, %v1497
        %v1508 = vpack.c.b16 %v1500, %v1499
        %1517 = vmatprep.subr.bf16.mxu0 0
        %1518 = vmatpush1.bf16.msra.mxu0 %v1501
        %1519 = vmatprep.subr.bf16.mxu0 0
        %1520 = vmatpush1.bf16.msra.mxu0 %v1502
        %1521 = vmatprep.subr.bf16.mxu0 0
        %1522 = vmatpush1.bf16.msra.mxu0 %v1503
        %1523 = vmatprep.subr.bf16.mxu0 0
        %1524 = vmatpush1.bf16.msra.mxu0 %v1504
        %1525 = vmatprep.subr.bf16.mxu0 0
        %1526 = vmatpush1.bf16.msra.mxu0 %v1505
        %1527 = vmatprep.subr.bf16.mxu0 0
        %1528 = vmatpush1.bf16.msra.mxu0 %v1506
        %1529 = vmatprep.subr.bf16.mxu0 0
        %1530 = vmatpush1.bf16.msra.mxu0 %v1507
        %1531 = vmatprep.subr.bf16.mxu0 0
        %1532 = vmatpush1.bf16.msra.mxu0 %v1508
        %1533 = vmatprep.subr.bf16.mxu0 0
        %1534 = vmatpush1.bf16.msra.mxu0 0
        %1535 = vmatprep.subr.bf16.mxu0 0
        %1536 = vmatpush1.bf16.msra.mxu0 0
        %1537 = vmatprep.subr.bf16.mxu0 0
        %1538 = vmatpush1.bf16.msra.mxu0 0
        %1539 = vmatprep.subr.bf16.mxu0 0
        %1540 = vmatpush1.bf16.msra.mxu0 0
        %1541 = vmatprep.subr.bf16.mxu0 0
        %1542 = vmatpush1.bf16.msra.mxu0 0
        %1543 = vmatprep.subr.bf16.mxu0 0
        %1544 = vmatpush1.bf16.msra.mxu0 0
        %1545 = vmatprep.subr.bf16.mxu0 0
        %1546 = vmatpush1.bf16.msra.mxu0 0
        %1547 = vmatprep.subr.bf16.mxu0 0
        %1548 = vmatpush1.bf16.msra.mxu0 0
        %1549 = vmatprep.mubr.bf16.mxu0 0
        %1550 = vmatmul.mubr.bf16.gmra.mrb[0].mxu0 %v1436
        %v1551 = vpop.f32.mrb[0].mxu0
        %v1552 = vadd.f32 0.0, %v1551
        %v1553 = vpop.f32.mrb[0].mxu0
        %v1554 = vpop.f32.mrb[0].mxu0
        %v1555 = vadd.f32 0.0, %v1554
        %v1556 = vpop.f32.mrb[0].mxu0
        %1557 = vmatprep.mubr.bf16.mxu0 0
        %1558 = vmatmul.mubr.bf16.gmra.mrb[0].mxu0 %v1437
        %v1559 = vpop.f32.mrb[0].mxu0
        %v1560 = vadd.f32 0.0, %v1559
        %v1561 = vpop.f32.mrb[0].mxu0
        %v1562 = vpop.f32.mrb[0].mxu0
        %v1563 = vadd.f32 0.0, %v1562
        %v1564 = vpop.f32.mrb[0].mxu0
        %1565 = vmatprep.mubr.bf16.mxu0 0
        %1566 = vmatmul.mubr.bf16.gmra.mrb[0].mxu0 %v1438
        %v1567 = vpop.f32.mrb[0].mxu0
        %v1568 = vadd.f32 0.0, %v1567
        %v1569 = vpop.f32.mrb[0].mxu0
        %v1570 = vpop.f32.mrb[0].mxu0
        %v1571 = vadd.f32 0.0, %v1570
        %v1572 = vpop.f32.mrb[0].mxu0
        %1573 = vmatprep.mubr.bf16.mxu0 0
        %1574 = vmatmul.mubr.bf16.gmra.mrb[0].mxu0 %v1439
        %v1575 = vpop.f32.mrb[0].mxu0
        %v1576 = vadd.f32 0.0, %v1575
        %v1577 = vpop.f32.mrb[0].mxu0
        %v1578 = vpop.f32.mrb[0].mxu0
        %v1579 = vadd.f32 0.0, %v1578
        %v1580 = vpop.f32.mrb[0].mxu0
        %1581 = vmatprep.mubr.bf16.mxu0 0
        %1582 = vmatmul.mubr.bf16.gmra.mrb[0].mxu0 %v1440
        %v1583 = vpop.f32.mrb[0].mxu0
        %v1584 = vadd.f32 0.0, %v1583
        %v1585 = vpop.f32.mrb[0].mxu0
        %v1586 = vpop.f32.mrb[0].mxu0
        %v1587 = vadd.f32 0.0, %v1586
        %v1588 = vpop.f32.mrb[0].mxu0
        %1589 = vmatprep.mubr.bf16.mxu0 0
        %1590 = vmatmul.mubr.bf16.gmra.mrb[0].mxu0 %v1441
        %v1591 = vpop.f32.mrb[0].mxu0
        %v1592 = vadd.f32 0.0, %v1591
        %v1593 = vpop.f32.mrb[0].mxu0
        %v1594 = vpop.f32.mrb[0].mxu0
        %v1595 = vadd.f32 0.0, %v1594
        %v1596 = vpop.f32.mrb[0].mxu0
        %1597 = vmatprep.mubr.bf16.mxu0 0
        %1598 = vmatmul.mubr.bf16.gmra.mrb[0].mxu0 %v1442
        %v1599 = vpop.f32.mrb[0].mxu0
        %v1600 = vadd.f32 0.0, %v1599
        %v1601 = vpop.f32.mrb[0].mxu0
        %v1602 = vpop.f32.mrb[0].mxu0
        %v1603 = vadd.f32 0.0, %v1602
        %v1604 = vpop.f32.mrb[0].mxu0
        %1605 = vmatprep.mubr.bf16.mxu0 0
        %1606 = vmatmul.mubr.bf16.gmra.mrb[0].mxu0 %v1443
        %v1607 = vpop.f32.mrb[0].mxu0
        %v1608 = vadd.f32 0.0, %v1607
        %v1609 = vpop.f32.mrb[0].mxu0
        %v1610 = vpop.f32.mrb[0].mxu0
        %v1611 = vadd.f32 0.0, %v1610
        %v1612 = vpop.f32.mrb[0].mxu0
        %1613 = vmatprep.mubr.bf16.mxu0 0
        %1614 = vmatmul.mubr.bf16.gmra.mrb[0].mxu0 %v1444
        %v1615 = vpop.f32.mrb[0].mxu0
        %v1616 = vadd.f32 0.0, %v1615
        %v1617 = vpop.f32.mrb[0].mxu0
        %v1618 = vpop.f32.mrb[0].mxu0
        %v1619 = vadd.f32 0.0, %v1618
        %v1620 = vpop.f32.mrb[0].mxu0
        %1621 = vmatprep.mubr.bf16.mxu0 0
        %1622 = vmatmul.mubr.bf16.gmra.mrb[0].mxu0 %v1445
        %v1623 = vpop.f32.mrb[0].mxu0
        %v1624 = vadd.f32 0.0, %v1623
        %v1625 = vpop.f32.mrb[0].mxu0
        %v1626 = vpop.f32.mrb[0].mxu0
        %v1627 = vadd.f32 0.0, %v1626
        %v1628 = vpop.f32.mrb[0].mxu0
        %1629 = vmatprep.mubr.bf16.mxu0 0
        %1630 = vmatmul.mubr.bf16.gmra.mrb[0].mxu0 %v1446
        %v1631 = vpop.f32.mrb[0].mxu0
        %v1632 = vadd.f32 0.0, %v1631
        %v1633 = vpop.f32.mrb[0].mxu0
        %v1634 = vpop.f32.mrb[0].mxu0
        %v1635 = vadd.f32 0.0, %v1634
        %v1636 = vpop.f32.mrb[0].mxu0
        %1637 = vmatprep.mubr.bf16.mxu0 0
        %1638 = vmatmul.mubr.bf16.gmra.mrb[0].mxu0 %v1447
        %v1639 = vpop.f32.mrb[0].mxu0
        %v1640 = vadd.f32 0.0, %v1639
        %v1641 = vpop.f32.mrb[0].mxu0
        %v1642 = vpop.f32.mrb[0].mxu0
        %v1643 = vadd.f32 0.0, %v1642
        %v1644 = vpop.f32.mrb[0].mxu0
        %1645 = vmatprep.mubr.bf16.mxu0 0
        %1646 = vmatmul.mubr.bf16.gmra.mrb[0].mxu0 %v1448
        %v1647 = vpop.f32.mrb[0].mxu0
        %v1648 = vadd.f32 0.0, %v1647
        %v1649 = vpop.f32.mrb[0].mxu0
        %v1650 = vpop.f32.mrb[0].mxu0
        %v1651 = vadd.f32 0.0, %v1650
        %v1652 = vpop.f32.mrb[0].mxu0
        %1653 = vmatprep.mubr.bf16.mxu0 0
        %1654 = vmatmul.mubr.bf16.gmra.mrb[0].mxu0 %v1449
        %v1655 = vpop.f32.mrb[0].mxu0
        %v1656 = vadd.f32 0.0, %v1655
        %v1657 = vpop.f32.mrb[0].mxu0
        %v1658 = vpop.f32.mrb[0].mxu0
        %v1659 = vadd.f32 0.0, %v1658
        %v1660 = vpop.f32.mrb[0].mxu0
        %1661 = vmatprep.mubr.bf16.mxu0 0
        %1662 = vmatmul.mubr.bf16.gmra.mrb[0].mxu0 %v1450
        %v1663 = vpop.f32.mrb[0].mxu0
        %v1664 = vadd.f32 0.0, %v1663
        %v1665 = vpop.f32.mrb[0].mxu0
        %v1666 = vpop.f32.mrb[0].mxu0
        %v1667 = vadd.f32 0.0, %v1666
        %v1668 = vpop.f32.mrb[0].mxu0
        %1669 = vmatprep.mubr.bf16.mxu0 0
        %1670 = vmatmul.mubr.bf16.gmra.mrb[0].mxu0 %v1451
        %v1671 = vpop.f32.mrb[0].mxu0
        %v1672 = vadd.f32 0.0, %v1671
        %v1673 = vpop.f32.mrb[0].mxu0
        %v1674 = vpop.f32.mrb[0].mxu0
        %v1675 = vadd.f32 0.0, %v1674
        %v1676 = vpop.f32.mrb[0].mxu0
        %1677 = vdwg.mxu0
        %v1678 = vadd.f32 %v1372, %v1552
        %v1679 = vadd.f32 %v1373, %v1555
        %v1680 = vadd.f32 %v1374, %v1560
        %v1681 = vadd.f32 %v1375, %v1563
        %v1682 = vadd.f32 %v1376, %v1568
        %v1683 = vadd.f32 %v1377, %v1571
        %v1684 = vadd.f32 %v1378, %v1576
        %v1685 = vadd.f32 %v1379, %v1579
        %v1686 = vadd.f32 %v1380, %v1584
        %v1687 = vadd.f32 %v1381, %v1587
        %v1688 = vadd.f32 %v1382, %v1592
        %v1689 = vadd.f32 %v1383, %v1595
        %v1690 = vadd.f32 %v1384, %v1600
        %v1691 = vadd.f32 %v1385, %v1603
        %v1692 = vadd.f32 %v1386, %v1608
        %v1693 = vadd.f32 %v1387, %v1611
        %v1694 = vadd.f32 %v1388, %v1616
        %v1695 = vadd.f32 %v1389, %v1619
        %v1696 = vadd.f32 %v1390, %v1624
        %v1697 = vadd.f32 %v1391, %v1627
        %v1698 = vadd.f32 %v1392, %v1632
        %v1699 = vadd.f32 %v1393, %v1635
        %v1700 = vadd.f32 %v1394, %v1640
        %v1701 = vadd.f32 %v1395, %v1643
        %v1702 = vadd.f32 %v1396, %v1648
        %v1703 = vadd.f32 %v1397, %v1651
        %v1704 = vadd.f32 %v1398, %v1656
        %v1705 = vadd.f32 %v1399, %v1659
        %v1706 = vadd.f32 %v1400, %v1664
        %v1707 = vadd.f32 %v1401, %v1667
        %v1708 = vadd.f32 %v1402, %v1672
        %v1709 = vadd.f32 %v1403, %v1675
        %v1710 = vld [vmem:[%s1097 + $0x2] sm:$0xff]
        %v1711 = vld [vmem:[%s1097 + $0xa] sm:$0xff]
        %v1712 = vld [vmem:[%s1097 + $0x1a] sm:$0xff]
        %v1713 = vld [vmem:[%s1097 + $0x22] sm:$0xff]
        %v1714 = vld [vmem:[%s1097 + $0x32] sm:$0xff]
        %v1715 = vld [vmem:[%s1097 + $0x3a] sm:$0xff]
        %v1716 = vld [vmem:[%s1097 + $0x4a] sm:$0xff]
        %v1717 = vld [vmem:[%s1097 + $0x52] sm:$0xff]
        %v1718 = vld [vmem:[%s1097 + $0x62] sm:$0xff]
        %v1719 = vld [vmem:[%s1097 + $0x6a] sm:$0xff]
        %v1720 = vld [vmem:[%s1097 + $0x7a] sm:$0xff]
        %v1721 = vld [vmem:[%s1097 + $0x82] sm:$0xff]
        %v1722 = vld [vmem:[%s1097 + $0x92] sm:$0xff]
        %v1723 = vld [vmem:[%s1097 + $0x9a] sm:$0xff]
        %v1724 = vld [vmem:[%s1097 + $0xaa] sm:$0xff]
        %v1725 = vld [vmem:[%s1097 + $0xb2] sm:$0xff]
        %v1726 = vld [vmem:[%s1097 + $0xc2] sm:$0xff]
        %v1727 = vld [vmem:[%s1097 + $0xca] sm:$0xff]
        %v1728 = vld [vmem:[%s1097 + $0xda] sm:$0xff]
        %v1729 = vld [vmem:[%s1097 + $0xe2] sm:$0xff]
        %v1730 = vld [vmem:[%s1097 + $0xf2] sm:$0xff]
        %v1731 = vld [vmem:[%s1097 + $0xfa] sm:$0xff]
        %v1732 = vld [vmem:[%s1097 + $0x10a] sm:$0xff]
        %v1733 = vld [vmem:[%s1097 + $0x112] sm:$0xff]
        %v1734 = vld [vmem:[%s1097 + $0x122] sm:$0xff]
        %v1735 = vld [vmem:[%s1097 + $0x12a] sm:$0xff]
        %v1736 = vld [vmem:[%s1097 + $0x13a] sm:$0xff]
        %v1737 = vld [vmem:[%s1097 + $0x142] sm:$0xff]
        %v1738 = vld [vmem:[%s1097 + $0x152] sm:$0xff]
        %v1739 = vld [vmem:[%s1097 + $0x15a] sm:$0xff]
        %v1740 = vld [vmem:[%s1097 + $0x16a] sm:$0xff]
        %v1741 = vld [vmem:[%s1097 + $0x172] sm:$0xff]
        %v1742 = vpack.c.bf16 %v1711, %v1710
        %v1743 = vpack.c.bf16 %v1713, %v1712
        %v1744 = vpack.c.bf16 %v1715, %v1714
        %v1745 = vpack.c.bf16 %v1717, %v1716
        %v1746 = vpack.c.bf16 %v1719, %v1718
        %v1747 = vpack.c.bf16 %v1721, %v1720
        %v1748 = vpack.c.bf16 %v1723, %v1722
        %v1749 = vpack.c.bf16 %v1725, %v1724
        %v1750 = vpack.c.bf16 %v1727, %v1726
        %v1751 = vpack.c.bf16 %v1729, %v1728
        %v1752 = vpack.c.bf16 %v1731, %v1730
        %v1753 = vpack.c.bf16 %v1733, %v1732
        %v1754 = vpack.c.bf16 %v1735, %v1734
        %v1755 = vpack.c.bf16 %v1737, %v1736
        %v1756 = vpack.c.bf16 %v1739, %v1738
        %v1757 = vpack.c.bf16 %v1741, %v1740
        %s1758 = scalar_lea.vmem %s1, 320
        %v1759 = vld [vmem:[%s1758] sm:$0xf]
        %v1760 = vld [vmem:[%s1758 + $0x4] sm:$0xf]
        %v1761 = vld [vmem:[%s1758 + $0x8] sm:$0xf]
        %v1762 = vld [vmem:[%s1758 + $0xc] sm:$0xf]
        %v1763 = vld [vmem:[%s1758 + $0x10] sm:$0xf]
        %v1764 = vld [vmem:[%s1758 + $0x14] sm:$0xf]
        %v1765 = vld [vmem:[%s1758 + $0x18] sm:$0xf]
        %v1766 = vld [vmem:[%s1758 + $0x1c] sm:$0xf]
        %v1767 = vld [vmem:[%s1758 + $0x20] sm:$0xf]
        %v1768 = vld [vmem:[%s1758 + $0x24] sm:$0xf]
        %v1769 = vld [vmem:[%s1758 + $0x28] sm:$0xf]
        %v1770 = vld [vmem:[%s1758 + $0x2c] sm:$0xf]
        %v1771 = vld [vmem:[%s1758 + $0x30] sm:$0xf]
        %v1772 = vld [vmem:[%s1758 + $0x34] sm:$0xf]
        %v1773 = vld [vmem:[%s1758 + $0x38] sm:$0xf]
        %v1774 = vld [vmem:[%s1758 + $0x3c] sm:$0xf]
        %v1791 = vunpack.c.l.b16 %v1759
        %v1792 = vunpack.c.l.b16 %v1760
        %v1793 = vunpack.c.l.b16 %v1761
        %v1794 = vunpack.c.l.b16 %v1762
        %v1795 = vunpack.c.l.b16 %v1763
        %v1796 = vunpack.c.l.b16 %v1764
        %v1797 = vunpack.c.l.b16 %v1765
        %v1798 = vunpack.c.l.b16 %v1766
        %v1799 = vunpack.c.l.b16 %v1767
        %v1800 = vunpack.c.l.b16 %v1768
        %v1801 = vunpack.c.l.b16 %v1769
        %v1802 = vunpack.c.l.b16 %v1770
        %v1803 = vunpack.c.l.b16 %v1771
        %v1804 = vunpack.c.l.b16 %v1772
        %v1805 = vunpack.c.l.b16 %v1773
        %v1806 = vunpack.c.l.b16 %v1774
        %v1807 = vpack.c.b16 %v1792, %v1791
        %v1808 = vpack.c.b16 %v1794, %v1793
        %v1809 = vpack.c.b16 %v1796, %v1795
        %v1810 = vpack.c.b16 %v1798, %v1797
        %v1811 = vpack.c.b16 %v1800, %v1799
        %v1812 = vpack.c.b16 %v1802, %v1801
        %v1813 = vpack.c.b16 %v1804, %v1803
        %v1814 = vpack.c.b16 %v1806, %v1805
        %1823 = vmatprep.subr.bf16.mxu0 0
        %1824 = vmatpush1.bf16.msra.mxu0 %v1807
        %1825 = vmatprep.subr.bf16.mxu0 0
        %1826 = vmatpush1.bf16.msra.mxu0 %v1808
        %1827 = vmatprep.subr.bf16.mxu0 0
        %1828 = vmatpush1.bf16.msra.mxu0 %v1809
        %1829 = vmatprep.subr.bf16.mxu0 0
        %1830 = vmatpush1.bf16.msra.mxu0 %v1810
        %1831 = vmatprep.subr.bf16.mxu0 0
        %1832 = vmatpush1.bf16.msra.mxu0 %v1811
        %1833 = vmatprep.subr.bf16.mxu0 0
        %1834 = vmatpush1.bf16.msra.mxu0 %v1812
        %1835 = vmatprep.subr.bf16.mxu0 0
        %1836 = vmatpush1.bf16.msra.mxu0 %v1813
        %1837 = vmatprep.subr.bf16.mxu0 0
        %1838 = vmatpush1.bf16.msra.mxu0 %v1814
        %1839 = vmatprep.subr.bf16.mxu0 0
        %1840 = vmatpush1.bf16.msra.mxu0 0
        %1841 = vmatprep.subr.bf16.mxu0 0
        %1842 = vmatpush1.bf16.msra.mxu0 0
        %1843 = vmatprep.subr.bf16.mxu0 0
        %1844 = vmatpush1.bf16.msra.mxu0 0
        %1845 = vmatprep.subr.bf16.mxu0 0
        %1846 = vmatpush1.bf16.msra.mxu0 0
        %1847 = vmatprep.subr.bf16.mxu0 0
        %1848 = vmatpush1.bf16.msra.mxu0 0
        %1849 = vmatprep.subr.bf16.mxu0 0
        %1850 = vmatpush1.bf16.msra.mxu0 0
        %1851 = vmatprep.subr.bf16.mxu0 0
        %1852 = vmatpush1.bf16.msra.mxu0 0
        %1853 = vmatprep.subr.bf16.mxu0 0
        %1854 = vmatpush1.bf16.msra.mxu0 0
        %1855 = vmatprep.mubr.bf16.mxu0 0
        %1856 = vmatmul.mubr.bf16.gmra.mrb[0].mxu0 %v1742
        %v1857 = vpop.f32.mrb[0].mxu0
        %v1858 = vadd.f32 0.0, %v1857
        %v1859 = vpop.f32.mrb[0].mxu0
        %v1860 = vpop.f32.mrb[0].mxu0
        %v1861 = vadd.f32 0.0, %v1860
        %v1862 = vpop.f32.mrb[0].mxu0
        %1863 = vmatprep.mubr.bf16.mxu0 0
        %1864 = vmatmul.mubr.bf16.gmra.mrb[0].mxu0 %v1743
        %v1865 = vpop.f32.mrb[0].mxu0
        %v1866 = vadd.f32 0.0, %v1865
        %v1867 = vpop.f32.mrb[0].mxu0
        %v1868 = vpop.f32.mrb[0].mxu0
        %v1869 = vadd.f32 0.0, %v1868
        %v1870 = vpop.f32.mrb[0].mxu0
        %1871 = vmatprep.mubr.bf16.mxu0 0
        %1872 = vmatmul.mubr.bf16.gmra.mrb[0].mxu0 %v1744
        %v1873 = vpop.f32.mrb[0].mxu0
        %v1874 = vadd.f32 0.0, %v1873
        %v1875 = vpop.f32.mrb[0].mxu0
        %v1876 = vpop.f32.mrb[0].mxu0
        %v1877 = vadd.f32 0.0, %v1876
        %v1878 = vpop.f32.mrb[0].mxu0
        %1879 = vmatprep.mubr.bf16.mxu0 0
        %1880 = vmatmul.mubr.bf16.gmra.mrb[0].mxu0 %v1745
        %v1881 = vpop.f32.mrb[0].mxu0
        %v1882 = vadd.f32 0.0, %v1881
        %v1883 = vpop.f32.mrb[0].mxu0
        %v1884 = vpop.f32.mrb[0].mxu0
        %v1885 = vadd.f32 0.0, %v1884
        %v1886 = vpop.f32.mrb[0].mxu0
        %1887 = vmatprep.mubr.bf16.mxu0 0
        %1888 = vmatmul.mubr.bf16.gmra.mrb[0].mxu0 %v1746
        %v1889 = vpop.f32.mrb[0].mxu0
        %v1890 = vadd.f32 0.0, %v1889
        %v1891 = vpop.f32.mrb[0].mxu0
        %v1892 = vpop.f32.mrb[0].mxu0
        %v1893 = vadd.f32 0.0, %v1892
        %v1894 = vpop.f32.mrb[0].mxu0
        %1895 = vmatprep.mubr.bf16.mxu0 0
        %1896 = vmatmul.mubr.bf16.gmra.mrb[0].mxu0 %v1747
        %v1897 = vpop.f32.mrb[0].mxu0
        %v1898 = vadd.f32 0.0, %v1897
        %v1899 = vpop.f32.mrb[0].mxu0
        %v1900 = vpop.f32.mrb[0].mxu0
        %v1901 = vadd.f32 0.0, %v1900
        %v1902 = vpop.f32.mrb[0].mxu0
        %1903 = vmatprep.mubr.bf16.mxu0 0
        %1904 = vmatmul.mubr.bf16.gmra.mrb[0].mxu0 %v1748
        %v1905 = vpop.f32.mrb[0].mxu0
        %v1906 = vadd.f32 0.0, %v1905
        %v1907 = vpop.f32.mrb[0].mxu0
        %v1908 = vpop.f32.mrb[0].mxu0
        %v1909 = vadd.f32 0.0, %v1908
        %v1910 = vpop.f32.mrb[0].mxu0
        %1911 = vmatprep.mubr.bf16.mxu0 0
        %1912 = vmatmul.mubr.bf16.gmra.mrb[0].mxu0 %v1749
        %v1913 = vpop.f32.mrb[0].mxu0
        %v1914 = vadd.f32 0.0, %v1913
        %v1915 = vpop.f32.mrb[0].mxu0
        %v1916 = vpop.f32.mrb[0].mxu0
        %v1917 = vadd.f32 0.0, %v1916
        %v1918 = vpop.f32.mrb[0].mxu0
        %1919 = vmatprep.mubr.bf16.mxu0 0
        %1920 = vmatmul.mubr.bf16.gmra.mrb[0].mxu0 %v1750
        %v1921 = vpop.f32.mrb[0].mxu0
        %v1922 = vadd.f32 0.0, %v1921
        %v1923 = vpop.f32.mrb[0].mxu0
        %v1924 = vpop.f32.mrb[0].mxu0
        %v1925 = vadd.f32 0.0, %v1924
        %v1926 = vpop.f32.mrb[0].mxu0
        %1927 = vmatprep.mubr.bf16.mxu0 0
        %1928 = vmatmul.mubr.bf16.gmra.mrb[0].mxu0 %v1751
        %v1929 = vpop.f32.mrb[0].mxu0
        %v1930 = vadd.f32 0.0, %v1929
        %v1931 = vpop.f32.mrb[0].mxu0
        %v1932 = vpop.f32.mrb[0].mxu0
        %v1933 = vadd.f32 0.0, %v1932
        %v1934 = vpop.f32.mrb[0].mxu0
        %1935 = vmatprep.mubr.bf16.mxu0 0
        %1936 = vmatmul.mubr.bf16.gmra.mrb[0].mxu0 %v1752
        %v1937 = vpop.f32.mrb[0].mxu0
        %v1938 = vadd.f32 0.0, %v1937
        %v1939 = vpop.f32.mrb[0].mxu0
        %v1940 = vpop.f32.mrb[0].mxu0
        %v1941 = vadd.f32 0.0, %v1940
        %v1942 = vpop.f32.mrb[0].mxu0
        %1943 = vmatprep.mubr.bf16.mxu0 0
        %1944 = vmatmul.mubr.bf16.gmra.mrb[0].mxu0 %v1753
        %v1945 = vpop.f32.mrb[0].mxu0
        %v1946 = vadd.f32 0.0, %v1945
        %v1947 = vpop.f32.mrb[0].mxu0
        %v1948 = vpop.f32.mrb[0].mxu0
        %v1949 = vadd.f32 0.0, %v1948
        %v1950 = vpop.f32.mrb[0].mxu0
        %1951 = vmatprep.mubr.bf16.mxu0 0
        %1952 = vmatmul.mubr.bf16.gmra.mrb[0].mxu0 %v1754
        %v1953 = vpop.f32.mrb[0].mxu0
        %v1954 = vadd.f32 0.0, %v1953
        %v1955 = vpop.f32.mrb[0].mxu0
        %v1956 = vpop.f32.mrb[0].mxu0
        %v1957 = vadd.f32 0.0, %v1956
        %v1958 = vpop.f32.mrb[0].mxu0
        %1959 = vmatprep.mubr.bf16.mxu0 0
        %1960 = vmatmul.mubr.bf16.gmra.mrb[0].mxu0 %v1755
        %v1961 = vpop.f32.mrb[0].mxu0
        %v1962 = vadd.f32 0.0, %v1961
        %v1963 = vpop.f32.mrb[0].mxu0
        %v1964 = vpop.f32.mrb[0].mxu0
        %v1965 = vadd.f32 0.0, %v1964
        %v1966 = vpop.f32.mrb[0].mxu0
        %1967 = vmatprep.mubr.bf16.mxu0 0
        %1968 = vmatmul.mubr.bf16.gmra.mrb[0].mxu0 %v1756
        %v1969 = vpop.f32.mrb[0].mxu0
        %v1970 = vadd.f32 0.0, %v1969
        %v1971 = vpop.f32.mrb[0].mxu0
        %v1972 = vpop.f32.mrb[0].mxu0
        %v1973 = vadd.f32 0.0, %v1972
        %v1974 = vpop.f32.mrb[0].mxu0
        %1975 = vmatprep.mubr.bf16.mxu0 0
        %1976 = vmatmul.mubr.bf16.gmra.mrb[0].mxu0 %v1757
        %v1977 = vpop.f32.mrb[0].mxu0
        %v1978 = vadd.f32 0.0, %v1977
        %v1979 = vpop.f32.mrb[0].mxu0
        %v1980 = vpop.f32.mrb[0].mxu0
        %v1981 = vadd.f32 0.0, %v1980
        %v1982 = vpop.f32.mrb[0].mxu0
        %1983 = vdwg.mxu0
        %v1984 = vadd.f32 %v1678, %v1858
        %v1985 = vadd.f32 %v1679, %v1861
        %v1986 = vadd.f32 %v1680, %v1866
        %v1987 = vadd.f32 %v1681, %v1869
        %v1988 = vadd.f32 %v1682, %v1874
        %v1989 = vadd.f32 %v1683, %v1877
        %v1990 = vadd.f32 %v1684, %v1882
        %v1991 = vadd.f32 %v1685, %v1885
        %v1992 = vadd.f32 %v1686, %v1890
        %v1993 = vadd.f32 %v1687, %v1893
        %v1994 = vadd.f32 %v1688, %v1898
        %v1995 = vadd.f32 %v1689, %v1901
        %v1996 = vadd.f32 %v1690, %v1906
        %v1997 = vadd.f32 %v1691, %v1909
        %v1998 = vadd.f32 %v1692, %v1914
        %v1999 = vadd.f32 %v1693, %v1917
        %v2000 = vadd.f32 %v1694, %v1922
        %v2001 = vadd.f32 %v1695, %v1925
        %v2002 = vadd.f32 %v1696, %v1930
        %v2003 = vadd.f32 %v1697, %v1933
        %v2004 = vadd.f32 %v1698, %v1938
        %v2005 = vadd.f32 %v1699, %v1941
        %v2006 = vadd.f32 %v1700, %v1946
        %v2007 = vadd.f32 %v1701, %v1949
        %v2008 = vadd.f32 %v1702, %v1954
        %v2009 = vadd.f32 %v1703, %v1957
        %v2010 = vadd.f32 %v1704, %v1962
        %v2011 = vadd.f32 %v1705, %v1965
        %v2012 = vadd.f32 %v1706, %v1970
        %v2013 = vadd.f32 %v1707, %v1973
        %v2014 = vadd.f32 %v1708, %v1978
        %v2015 = vadd.f32 %v1709, %v1981
        %s2016 = scalar_lea.vmem %s237, 48
        %v2017 = vld [vmem:[%s2016] sm:$0xff]
        %v2018 = vld [vmem:[%s2016 + $0x8] sm:$0xff]
        %v2019 = vld [vmem:[%s2016 + $0x18] sm:$0xff]
        %v2020 = vld [vmem:[%s2016 + $0x20] sm:$0xff]
        %v2021 = vld [vmem:[%s2016 + $0x30] sm:$0xff]
        %v2022 = vld [vmem:[%s2016 + $0x38] sm:$0xff]
        %v2023 = vld [vmem:[%s2016 + $0x48] sm:$0xff]
        %v2024 = vld [vmem:[%s2016 + $0x50] sm:$0xff]
        %v2025 = vld [vmem:[%s2016 + $0x60] sm:$0xff]
        %v2026 = vld [vmem:[%s2016 + $0x68] sm:$0xff]
        %v2027 = vld [vmem:[%s2016 + $0x78] sm:$0xff]
        %v2028 = vld [vmem:[%s2016 + $0x80] sm:$0xff]
        %v2029 = vld [vmem:[%s2016 + $0x90] sm:$0xff]
        %v2030 = vld [vmem:[%s2016 + $0x98] sm:$0xff]
        %v2031 = vld [vmem:[%s2016 + $0xa8] sm:$0xff]
        %v2032 = vld [vmem:[%s2016 + $0xb0] sm:$0xff]
        %v2033 = vld [vmem:[%s2016 + $0xc0] sm:$0xff]
        %v2034 = vld [vmem:[%s2016 + $0xc8] sm:$0xff]
        %v2035 = vld [vmem:[%s2016 + $0xd8] sm:$0xff]
        %v2036 = vld [vmem:[%s2016 + $0xe0] sm:$0xff]
        %v2037 = vld [vmem:[%s2016 + $0xf0] sm:$0xff]
        %v2038 = vld [vmem:[%s2016 + $0xf8] sm:$0xff]
        %v2039 = vld [vmem:[%s2016 + $0x108] sm:$0xff]
        %v2040 = vld [vmem:[%s2016 + $0x110] sm:$0xff]
        %v2041 = vld [vmem:[%s2016 + $0x120] sm:$0xff]
        %v2042 = vld [vmem:[%s2016 + $0x128] sm:$0xff]
        %v2043 = vld [vmem:[%s2016 + $0x138] sm:$0xff]
        %v2044 = vld [vmem:[%s2016 + $0x140] sm:$0xff]
        %v2045 = vld [vmem:[%s2016 + $0x150] sm:$0xff]
        %v2046 = vld [vmem:[%s2016 + $0x158] sm:$0xff]
        %v2047 = vld [vmem:[%s2016 + $0x168] sm:$0xff]
        %v2048 = vld [vmem:[%s2016 + $0x170] sm:$0xff]
        %v2049 = vpack.c.bf16 %v2018, %v2017
        %v2050 = vpack.c.bf16 %v2020, %v2019
        %v2051 = vpack.c.bf16 %v2022, %v2021
        %v2052 = vpack.c.bf16 %v2024, %v2023
        %v2053 = vpack.c.bf16 %v2026, %v2025
        %v2054 = vpack.c.bf16 %v2028, %v2027
        %v2055 = vpack.c.bf16 %v2030, %v2029
        %v2056 = vpack.c.bf16 %v2032, %v2031
        %v2057 = vpack.c.bf16 %v2034, %v2033
        %v2058 = vpack.c.bf16 %v2036, %v2035
        %v2059 = vpack.c.bf16 %v2038, %v2037
        %v2060 = vpack.c.bf16 %v2040, %v2039
        %v2061 = vpack.c.bf16 %v2042, %v2041
        %v2062 = vpack.c.bf16 %v2044, %v2043
        %v2063 = vpack.c.bf16 %v2046, %v2045
        %v2064 = vpack.c.bf16 %v2048, %v2047
        %s2065 = scalar_lea.vmem %s1, 384
        %v2066 = vld [vmem:[%s2065] sm:$0xf]
        %v2067 = vld [vmem:[%s2065 + $0x4] sm:$0xf]
        %v2068 = vld [vmem:[%s2065 + $0x8] sm:$0xf]
        %v2069 = vld [vmem:[%s2065 + $0xc] sm:$0xf]
        %v2070 = vld [vmem:[%s2065 + $0x10] sm:$0xf]
        %v2071 = vld [vmem:[%s2065 + $0x14] sm:$0xf]
        %v2072 = vld [vmem:[%s2065 + $0x18] sm:$0xf]
        %v2073 = vld [vmem:[%s2065 + $0x1c] sm:$0xf]
        %v2074 = vld [vmem:[%s2065 + $0x20] sm:$0xf]
        %v2075 = vld [vmem:[%s2065 + $0x24] sm:$0xf]
        %v2076 = vld [vmem:[%s2065 + $0x28] sm:$0xf]
        %v2077 = vld [vmem:[%s2065 + $0x2c] sm:$0xf]
        %v2078 = vld [vmem:[%s2065 + $0x30] sm:$0xf]
        %v2079 = vld [vmem:[%s2065 + $0x34] sm:$0xf]
        %v2080 = vld [vmem:[%s2065 + $0x38] sm:$0xf]
        %v2081 = vld [vmem:[%s2065 + $0x3c] sm:$0xf]
        %v2098 = vunpack.c.l.b16 %v2066
        %v2099 = vunpack.c.l.b16 %v2067
        %v2100 = vunpack.c.l.b16 %v2068
        %v2101 = vunpack.c.l.b16 %v2069
        %v2102 = vunpack.c.l.b16 %v2070
        %v2103 = vunpack.c.l.b16 %v2071
        %v2104 = vunpack.c.l.b16 %v2072
        %v2105 = vunpack.c.l.b16 %v2073
        %v2106 = vunpack.c.l.b16 %v2074
        %v2107 = vunpack.c.l.b16 %v2075
        %v2108 = vunpack.c.l.b16 %v2076
        %v2109 = vunpack.c.l.b16 %v2077
        %v2110 = vunpack.c.l.b16 %v2078
        %v2111 = vunpack.c.l.b16 %v2079
        %v2112 = vunpack.c.l.b16 %v2080
        %v2113 = vunpack.c.l.b16 %v2081
        %v2114 = vpack.c.b16 %v2099, %v2098
        %v2115 = vpack.c.b16 %v2101, %v2100
        %v2116 = vpack.c.b16 %v2103, %v2102
        %v2117 = vpack.c.b16 %v2105, %v2104
        %v2118 = vpack.c.b16 %v2107, %v2106
        %v2119 = vpack.c.b16 %v2109, %v2108
        %v2120 = vpack.c.b16 %v2111, %v2110
        %v2121 = vpack.c.b16 %v2113, %v2112
        %2130 = vmatprep.subr.bf16.mxu0 0
        %2131 = vmatpush1.bf16.msra.mxu0 %v2114
        %2132 = vmatprep.subr.bf16.mxu0 0
        %2133 = vmatpush1.bf16.msra.mxu0 %v2115
        %2134 = vmatprep.subr.bf16.mxu0 0
        %2135 = vmatpush1.bf16.msra.mxu0 %v2116
        %2136 = vmatprep.subr.bf16.mxu0 0
        %2137 = vmatpush1.bf16.msra.mxu0 %v2117
        %2138 = vmatprep.subr.bf16.mxu0 0
        %2139 = vmatpush1.bf16.msra.mxu0 %v2118
        %2140 = vmatprep.subr.bf16.mxu0 0
        %2141 = vmatpush1.bf16.msra.mxu0 %v2119
        %2142 = vmatprep.subr.bf16.mxu0 0
        %2143 = vmatpush1.bf16.msra.mxu0 %v2120
        %2144 = vmatprep.subr.bf16.mxu0 0
        %2145 = vmatpush1.bf16.msra.mxu0 %v2121
        %2146 = vmatprep.subr.bf16.mxu0 0
        %2147 = vmatpush1.bf16.msra.mxu0 0
        %2148 = vmatprep.subr.bf16.mxu0 0
        %2149 = vmatpush1.bf16.msra.mxu0 0
        %2150 = vmatprep.subr.bf16.mxu0 0
        %2151 = vmatpush1.bf16.msra.mxu0 0
        %2152 = vmatprep.subr.bf16.mxu0 0
        %2153 = vmatpush1.bf16.msra.mxu0 0
        %2154 = vmatprep.subr.bf16.mxu0 0
        %2155 = vmatpush1.bf16.msra.mxu0 0
        %2156 = vmatprep.subr.bf16.mxu0 0
        %2157 = vmatpush1.bf16.msra.mxu0 0
        %2158 = vmatprep.subr.bf16.mxu0 0
        %2159 = vmatpush1.bf16.msra.mxu0 0
        %2160 = vmatprep.subr.bf16.mxu0 0
        %2161 = vmatpush1.bf16.msra.mxu0 0
        %2162 = vmatprep.mubr.bf16.mxu0 0
        %2163 = vmatmul.mubr.bf16.gmra.mrb[0].mxu0 %v2049
        %v2164 = vpop.f32.mrb[0].mxu0
        %v2165 = vadd.f32 0.0, %v2164
        %v2166 = vpop.f32.mrb[0].mxu0
        %v2167 = vpop.f32.mrb[0].mxu0
        %v2168 = vadd.f32 0.0, %v2167
        %v2169 = vpop.f32.mrb[0].mxu0
        %2170 = vmatprep.mubr.bf16.mxu0 0
        %2171 = vmatmul.mubr.bf16.gmra.mrb[0].mxu0 %v2050
        %v2172 = vpop.f32.mrb[0].mxu0
        %v2173 = vadd.f32 0.0, %v2172
        %v2174 = vpop.f32.mrb[0].mxu0
        %v2175 = vpop.f32.mrb[0].mxu0
        %v2176 = vadd.f32 0.0, %v2175
        %v2177 = vpop.f32.mrb[0].mxu0
        %2178 = vmatprep.mubr.bf16.mxu0 0
        %2179 = vmatmul.mubr.bf16.gmra.mrb[0].mxu0 %v2051
        %v2180 = vpop.f32.mrb[0].mxu0
        %v2181 = vadd.f32 0.0, %v2180
        %v2182 = vpop.f32.mrb[0].mxu0
        %v2183 = vpop.f32.mrb[0].mxu0
        %v2184 = vadd.f32 0.0, %v2183
        %v2185 = vpop.f32.mrb[0].mxu0
        %2186 = vmatprep.mubr.bf16.mxu0 0
        %2187 = vmatmul.mubr.bf16.gmra.mrb[0].mxu0 %v2052
        %v2188 = vpop.f32.mrb[0].mxu0
        %v2189 = vadd.f32 0.0, %v2188
        %v2190 = vpop.f32.mrb[0].mxu0
        %v2191 = vpop.f32.mrb[0].mxu0
        %v2192 = vadd.f32 0.0, %v2191
        %v2193 = vpop.f32.mrb[0].mxu0
        %2194 = vmatprep.mubr.bf16.mxu0 0
        %2195 = vmatmul.mubr.bf16.gmra.mrb[0].mxu0 %v2053
        %v2196 = vpop.f32.mrb[0].mxu0
        %v2197 = vadd.f32 0.0, %v2196
        %v2198 = vpop.f32.mrb[0].mxu0
        %v2199 = vpop.f32.mrb[0].mxu0
        %v2200 = vadd.f32 0.0, %v2199
        %v2201 = vpop.f32.mrb[0].mxu0
        %2202 = vmatprep.mubr.bf16.mxu0 0
        %2203 = vmatmul.mubr.bf16.gmra.mrb[0].mxu0 %v2054
        %v2204 = vpop.f32.mrb[0].mxu0
        %v2205 = vadd.f32 0.0, %v2204
        %v2206 = vpop.f32.mrb[0].mxu0
        %v2207 = vpop.f32.mrb[0].mxu0
        %v2208 = vadd.f32 0.0, %v2207
        %v2209 = vpop.f32.mrb[0].mxu0
        %2210 = vmatprep.mubr.bf16.mxu0 0
        %2211 = vmatmul.mubr.bf16.gmra.mrb[0].mxu0 %v2055
        %v2212 = vpop.f32.mrb[0].mxu0
        %v2213 = vadd.f32 0.0, %v2212
        %v2214 = vpop.f32.mrb[0].mxu0
        %v2215 = vpop.f32.mrb[0].mxu0
        %v2216 = vadd.f32 0.0, %v2215
        %v2217 = vpop.f32.mrb[0].mxu0
        %2218 = vmatprep.mubr.bf16.mxu0 0
        %2219 = vmatmul.mubr.bf16.gmra.mrb[0].mxu0 %v2056
        %v2220 = vpop.f32.mrb[0].mxu0
        %v2221 = vadd.f32 0.0, %v2220
        %v2222 = vpop.f32.mrb[0].mxu0
        %v2223 = vpop.f32.mrb[0].mxu0
        %v2224 = vadd.f32 0.0, %v2223
        %v2225 = vpop.f32.mrb[0].mxu0
        %2226 = vmatprep.mubr.bf16.mxu0 0
        %2227 = vmatmul.mubr.bf16.gmra.mrb[0].mxu0 %v2057
        %v2228 = vpop.f32.mrb[0].mxu0
        %v2229 = vadd.f32 0.0, %v2228
        %v2230 = vpop.f32.mrb[0].mxu0
        %v2231 = vpop.f32.mrb[0].mxu0
        %v2232 = vadd.f32 0.0, %v2231
        %v2233 = vpop.f32.mrb[0].mxu0
        %2234 = vmatprep.mubr.bf16.mxu0 0
        %2235 = vmatmul.mubr.bf16.gmra.mrb[0].mxu0 %v2058
        %v2236 = vpop.f32.mrb[0].mxu0
        %v2237 = vadd.f32 0.0, %v2236
        %v2238 = vpop.f32.mrb[0].mxu0
        %v2239 = vpop.f32.mrb[0].mxu0
        %v2240 = vadd.f32 0.0, %v2239
        %v2241 = vpop.f32.mrb[0].mxu0
        %2242 = vmatprep.mubr.bf16.mxu0 0
        %2243 = vmatmul.mubr.bf16.gmra.mrb[0].mxu0 %v2059
        %v2244 = vpop.f32.mrb[0].mxu0
        %v2245 = vadd.f32 0.0, %v2244
        %v2246 = vpop.f32.mrb[0].mxu0
        %v2247 = vpop.f32.mrb[0].mxu0
        %v2248 = vadd.f32 0.0, %v2247
        %v2249 = vpop.f32.mrb[0].mxu0
        %2250 = vmatprep.mubr.bf16.mxu0 0
        %2251 = vmatmul.mubr.bf16.gmra.mrb[0].mxu0 %v2060
        %v2252 = vpop.f32.mrb[0].mxu0
        %v2253 = vadd.f32 0.0, %v2252
        %v2254 = vpop.f32.mrb[0].mxu0
        %v2255 = vpop.f32.mrb[0].mxu0
        %v2256 = vadd.f32 0.0, %v2255
        %v2257 = vpop.f32.mrb[0].mxu0
        %2258 = vmatprep.mubr.bf16.mxu0 0
        %2259 = vmatmul.mubr.bf16.gmra.mrb[0].mxu0 %v2061
        %v2260 = vpop.f32.mrb[0].mxu0
        %v2261 = vadd.f32 0.0, %v2260
        %v2262 = vpop.f32.mrb[0].mxu0
        %v2263 = vpop.f32.mrb[0].mxu0
        %v2264 = vadd.f32 0.0, %v2263
        %v2265 = vpop.f32.mrb[0].mxu0
        %2266 = vmatprep.mubr.bf16.mxu0 0
        %2267 = vmatmul.mubr.bf16.gmra.mrb[0].mxu0 %v2062
        %v2268 = vpop.f32.mrb[0].mxu0
        %v2269 = vadd.f32 0.0, %v2268
        %v2270 = vpop.f32.mrb[0].mxu0
        %v2271 = vpop.f32.mrb[0].mxu0
        %v2272 = vadd.f32 0.0, %v2271
        %v2273 = vpop.f32.mrb[0].mxu0
        %2274 = vmatprep.mubr.bf16.mxu0 0
        %2275 = vmatmul.mubr.bf16.gmra.mrb[0].mxu0 %v2063
        %v2276 = vpop.f32.mrb[0].mxu0
        %v2277 = vadd.f32 0.0, %v2276
        %v2278 = vpop.f32.mrb[0].mxu0
        %v2279 = vpop.f32.mrb[0].mxu0
        %v2280 = vadd.f32 0.0, %v2279
        %v2281 = vpop.f32.mrb[0].mxu0
        %2282 = vmatprep.mubr.bf16.mxu0 0
        %2283 = vmatmul.mubr.bf16.gmra.mrb[0].mxu0 %v2064
        %v2284 = vpop.f32.mrb[0].mxu0
        %v2285 = vadd.f32 0.0, %v2284
        %v2286 = vpop.f32.mrb[0].mxu0
        %v2287 = vpop.f32.mrb[0].mxu0
        %v2288 = vadd.f32 0.0, %v2287
        %v2289 = vpop.f32.mrb[0].mxu0
        %2290 = vdwg.mxu0
        %v2291 = vadd.f32 %v1984, %v2165
        %v2292 = vadd.f32 %v1985, %v2168
        %v2293 = vadd.f32 %v1986, %v2173
        %v2294 = vadd.f32 %v1987, %v2176
        %v2295 = vadd.f32 %v1988, %v2181
        %v2296 = vadd.f32 %v1989, %v2184
        %v2297 = vadd.f32 %v1990, %v2189
        %v2298 = vadd.f32 %v1991, %v2192
        %v2299 = vadd.f32 %v1992, %v2197
        %v2300 = vadd.f32 %v1993, %v2200
        %v2301 = vadd.f32 %v1994, %v2205
        %v2302 = vadd.f32 %v1995, %v2208
        %v2303 = vadd.f32 %v1996, %v2213
        %v2304 = vadd.f32 %v1997, %v2216
        %v2305 = vadd.f32 %v1998, %v2221
        %v2306 = vadd.f32 %v1999, %v2224
        %v2307 = vadd.f32 %v2000, %v2229
        %v2308 = vadd.f32 %v2001, %v2232
        %v2309 = vadd.f32 %v2002, %v2237
        %v2310 = vadd.f32 %v2003, %v2240
        %v2311 = vadd.f32 %v2004, %v2245
        %v2312 = vadd.f32 %v2005, %v2248
        %v2313 = vadd.f32 %v2006, %v2253
        %v2314 = vadd.f32 %v2007, %v2256
        %v2315 = vadd.f32 %v2008, %v2261
        %v2316 = vadd.f32 %v2009, %v2264
        %v2317 = vadd.f32 %v2010, %v2269
        %v2318 = vadd.f32 %v2011, %v2272
        %v2319 = vadd.f32 %v2012, %v2277
        %v2320 = vadd.f32 %v2013, %v2280
        %v2321 = vadd.f32 %v2014, %v2285
        %v2322 = vadd.f32 %v2015, %v2288
        %v2323 = vld [vmem:[%s2016 + $0x1] sm:$0xff]
        %v2324 = vld [vmem:[%s2016 + $0x9] sm:$0xff]
        %v2325 = vld [vmem:[%s2016 + $0x19] sm:$0xff]
        %v2326 = vld [vmem:[%s2016 + $0x21] sm:$0xff]
        %v2327 = vld [vmem:[%s2016 + $0x31] sm:$0xff]
        %v2328 = vld [vmem:[%s2016 + $0x39] sm:$0xff]
        %v2329 = vld [vmem:[%s2016 + $0x49] sm:$0xff]
        %v2330 = vld [vmem:[%s2016 + $0x51] sm:$0xff]
        %v2331 = vld [vmem:[%s2016 + $0x61] sm:$0xff]
        %v2332 = vld [vmem:[%s2016 + $0x69] sm:$0xff]
        %v2333 = vld [vmem:[%s2016 + $0x79] sm:$0xff]
        %v2334 = vld [vmem:[%s2016 + $0x81] sm:$0xff]
        %v2335 = vld [vmem:[%s2016 + $0x91] sm:$0xff]
        %v2336 = vld [vmem:[%s2016 + $0x99] sm:$0xff]
        %v2337 = vld [vmem:[%s2016 + $0xa9] sm:$0xff]
        %v2338 = vld [vmem:[%s2016 + $0xb1] sm:$0xff]
        %v2339 = vld [vmem:[%s2016 + $0xc1] sm:$0xff]
        %v2340 = vld [vmem:[%s2016 + $0xc9] sm:$0xff]
        %v2341 = vld [vmem:[%s2016 + $0xd9] sm:$0xff]
        %v2342 = vld [vmem:[%s2016 + $0xe1] sm:$0xff]
        %v2343 = vld [vmem:[%s2016 + $0xf1] sm:$0xff]
        %v2344 = vld [vmem:[%s2016 + $0xf9] sm:$0xff]
        %v2345 = vld [vmem:[%s2016 + $0x109] sm:$0xff]
        %v2346 = vld [vmem:[%s2016 + $0x111] sm:$0xff]
        %v2347 = vld [vmem:[%s2016 + $0x121] sm:$0xff]
        %v2348 = vld [vmem:[%s2016 + $0x129] sm:$0xff]
        %v2349 = vld [vmem:[%s2016 + $0x139] sm:$0xff]
        %v2350 = vld [vmem:[%s2016 + $0x141] sm:$0xff]
        %v2351 = vld [vmem:[%s2016 + $0x151] sm:$0xff]
        %v2352 = vld [vmem:[%s2016 + $0x159] sm:$0xff]
        %v2353 = vld [vmem:[%s2016 + $0x169] sm:$0xff]
        %v2354 = vld [vmem:[%s2016 + $0x171] sm:$0xff]
        %v2355 = vpack.c.bf16 %v2324, %v2323
        %v2356 = vpack.c.bf16 %v2326, %v2325
        %v2357 = vpack.c.bf16 %v2328, %v2327
        %v2358 = vpack.c.bf16 %v2330, %v2329
        %v2359 = vpack.c.bf16 %v2332, %v2331
        %v2360 = vpack.c.bf16 %v2334, %v2333
        %v2361 = vpack.c.bf16 %v2336, %v2335
        %v2362 = vpack.c.bf16 %v2338, %v2337
        %v2363 = vpack.c.bf16 %v2340, %v2339
        %v2364 = vpack.c.bf16 %v2342, %v2341
        %v2365 = vpack.c.bf16 %v2344, %v2343
        %v2366 = vpack.c.bf16 %v2346, %v2345
        %v2367 = vpack.c.bf16 %v2348, %v2347
        %v2368 = vpack.c.bf16 %v2350, %v2349
        %v2369 = vpack.c.bf16 %v2352, %v2351
        %v2370 = vpack.c.bf16 %v2354, %v2353
        %s2371 = scalar_lea.vmem %s1, 448
        %v2372 = vld [vmem:[%s2371] sm:$0xf]
        %v2373 = vld [vmem:[%s2371 + $0x4] sm:$0xf]
        %v2374 = vld [vmem:[%s2371 + $0x8] sm:$0xf]
        %v2375 = vld [vmem:[%s2371 + $0xc] sm:$0xf]
        %v2376 = vld [vmem:[%s2371 + $0x10] sm:$0xf]
        %v2377 = vld [vmem:[%s2371 + $0x14] sm:$0xf]
        %v2378 = vld [vmem:[%s2371 + $0x18] sm:$0xf]
        %v2379 = vld [vmem:[%s2371 + $0x1c] sm:$0xf]
        %v2380 = vld [vmem:[%s2371 + $0x20] sm:$0xf]
        %v2381 = vld [vmem:[%s2371 + $0x24] sm:$0xf]
        %v2382 = vld [vmem:[%s2371 + $0x28] sm:$0xf]
        %v2383 = vld [vmem:[%s2371 + $0x2c] sm:$0xf]
        %v2384 = vld [vmem:[%s2371 + $0x30] sm:$0xf]
        %v2385 = vld [vmem:[%s2371 + $0x34] sm:$0xf]
        %v2386 = vld [vmem:[%s2371 + $0x38] sm:$0xf]
        %v2387 = vld [vmem:[%s2371 + $0x3c] sm:$0xf]
        %v2404 = vunpack.c.l.b16 %v2372
        %v2405 = vunpack.c.l.b16 %v2373
        %v2406 = vunpack.c.l.b16 %v2374
        %v2407 = vunpack.c.l.b16 %v2375
        %v2408 = vunpack.c.l.b16 %v2376
        %v2409 = vunpack.c.l.b16 %v2377
        %v2410 = vunpack.c.l.b16 %v2378
        %v2411 = vunpack.c.l.b16 %v2379
        %v2412 = vunpack.c.l.b16 %v2380
        %v2413 = vunpack.c.l.b16 %v2381
        %v2414 = vunpack.c.l.b16 %v2382
        %v2415 = vunpack.c.l.b16 %v2383
        %v2416 = vunpack.c.l.b16 %v2384
        %v2417 = vunpack.c.l.b16 %v2385
        %v2418 = vunpack.c.l.b16 %v2386
        %v2419 = vunpack.c.l.b16 %v2387
        %v2420 = vpack.c.b16 %v2405, %v2404
        %v2421 = vpack.c.b16 %v2407, %v2406
        %v2422 = vpack.c.b16 %v2409, %v2408
        %v2423 = vpack.c.b16 %v2411, %v2410
        %v2424 = vpack.c.b16 %v2413, %v2412
        %v2425 = vpack.c.b16 %v2415, %v2414
        %v2426 = vpack.c.b16 %v2417, %v2416
        %v2427 = vpack.c.b16 %v2419, %v2418
        %2436 = vmatprep.subr.bf16.mxu0 0
        %2437 = vmatpush1.bf16.msra.mxu0 %v2420
        %2438 = vmatprep.subr.bf16.mxu0 0
        %2439 = vmatpush1.bf16.msra.mxu0 %v2421
        %2440 = vmatprep.subr.bf16.mxu0 0
        %2441 = vmatpush1.bf16.msra.mxu0 %v2422
        %2442 = vmatprep.subr.bf16.mxu0 0
        %2443 = vmatpush1.bf16.msra.mxu0 %v2423
        %2444 = vmatprep.subr.bf16.mxu0 0
        %2445 = vmatpush1.bf16.msra.mxu0 %v2424
        %2446 = vmatprep.subr.bf16.mxu0 0
        %2447 = vmatpush1.bf16.msra.mxu0 %v2425
        %2448 = vmatprep.subr.bf16.mxu0 0
        %2449 = vmatpush1.bf16.msra.mxu0 %v2426
        %2450 = vmatprep.subr.bf16.mxu0 0
        %2451 = vmatpush1.bf16.msra.mxu0 %v2427
        %2452 = vmatprep.subr.bf16.mxu0 0
        %2453 = vmatpush1.bf16.msra.mxu0 0
        %2454 = vmatprep.subr.bf16.mxu0 0
        %2455 = vmatpush1.bf16.msra.mxu0 0
        %2456 = vmatprep.subr.bf16.mxu0 0
        %2457 = vmatpush1.bf16.msra.mxu0 0
        %2458 = vmatprep.subr.bf16.mxu0 0
        %2459 = vmatpush1.bf16.msra.mxu0 0
        %2460 = vmatprep.subr.bf16.mxu0 0
        %2461 = vmatpush1.bf16.msra.mxu0 0
        %2462 = vmatprep.subr.bf16.mxu0 0
        %2463 = vmatpush1.bf16.msra.mxu0 0
        %2464 = vmatprep.subr.bf16.mxu0 0
        %2465 = vmatpush1.bf16.msra.mxu0 0
        %2466 = vmatprep.subr.bf16.mxu0 0
        %2467 = vmatpush1.bf16.msra.mxu0 0
        %2468 = vmatprep.mubr.bf16.mxu0 0
        %2469 = vmatmul.mubr.bf16.gmra.mrb[0].mxu0 %v2355
        %v2470 = vpop.f32.mrb[0].mxu0
        %v2471 = vadd.f32 0.0, %v2470
        %v2472 = vpop.f32.mrb[0].mxu0
        %v2473 = vpop.f32.mrb[0].mxu0
        %v2474 = vadd.f32 0.0, %v2473
        %v2475 = vpop.f32.mrb[0].mxu0
        %2476 = vmatprep.mubr.bf16.mxu0 0
        %2477 = vmatmul.mubr.bf16.gmra.mrb[0].mxu0 %v2356
        %v2478 = vpop.f32.mrb[0].mxu0
        %v2479 = vadd.f32 0.0, %v2478
        %v2480 = vpop.f32.mrb[0].mxu0
        %v2481 = vpop.f32.mrb[0].mxu0
        %v2482 = vadd.f32 0.0, %v2481
        %v2483 = vpop.f32.mrb[0].mxu0
        %2484 = vmatprep.mubr.bf16.mxu0 0
        %2485 = vmatmul.mubr.bf16.gmra.mrb[0].mxu0 %v2357
        %v2486 = vpop.f32.mrb[0].mxu0
        %v2487 = vadd.f32 0.0, %v2486
        %v2488 = vpop.f32.mrb[0].mxu0
        %v2489 = vpop.f32.mrb[0].mxu0
        %v2490 = vadd.f32 0.0, %v2489
        %v2491 = vpop.f32.mrb[0].mxu0
        %2492 = vmatprep.mubr.bf16.mxu0 0
        %2493 = vmatmul.mubr.bf16.gmra.mrb[0].mxu0 %v2358
        %v2494 = vpop.f32.mrb[0].mxu0
        %v2495 = vadd.f32 0.0, %v2494
        %v2496 = vpop.f32.mrb[0].mxu0
        %v2497 = vpop.f32.mrb[0].mxu0
        %v2498 = vadd.f32 0.0, %v2497
        %v2499 = vpop.f32.mrb[0].mxu0
        %2500 = vmatprep.mubr.bf16.mxu0 0
        %2501 = vmatmul.mubr.bf16.gmra.mrb[0].mxu0 %v2359
        %v2502 = vpop.f32.mrb[0].mxu0
        %v2503 = vadd.f32 0.0, %v2502
        %v2504 = vpop.f32.mrb[0].mxu0
        %v2505 = vpop.f32.mrb[0].mxu0
        %v2506 = vadd.f32 0.0, %v2505
        %v2507 = vpop.f32.mrb[0].mxu0
        %2508 = vmatprep.mubr.bf16.mxu0 0
        %2509 = vmatmul.mubr.bf16.gmra.mrb[0].mxu0 %v2360
        %v2510 = vpop.f32.mrb[0].mxu0
        %v2511 = vadd.f32 0.0, %v2510
        %v2512 = vpop.f32.mrb[0].mxu0
        %v2513 = vpop.f32.mrb[0].mxu0
        %v2514 = vadd.f32 0.0, %v2513
        %v2515 = vpop.f32.mrb[0].mxu0
        %2516 = vmatprep.mubr.bf16.mxu0 0
        %2517 = vmatmul.mubr.bf16.gmra.mrb[0].mxu0 %v2361
        %v2518 = vpop.f32.mrb[0].mxu0
        %v2519 = vadd.f32 0.0, %v2518
        %v2520 = vpop.f32.mrb[0].mxu0
        %v2521 = vpop.f32.mrb[0].mxu0
        %v2522 = vadd.f32 0.0, %v2521
        %v2523 = vpop.f32.mrb[0].mxu0
        %2524 = vmatprep.mubr.bf16.mxu0 0
        %2525 = vmatmul.mubr.bf16.gmra.mrb[0].mxu0 %v2362
        %v2526 = vpop.f32.mrb[0].mxu0
        %v2527 = vadd.f32 0.0, %v2526
        %v2528 = vpop.f32.mrb[0].mxu0
        %v2529 = vpop.f32.mrb[0].mxu0
        %v2530 = vadd.f32 0.0, %v2529
        %v2531 = vpop.f32.mrb[0].mxu0
        %2532 = vmatprep.mubr.bf16.mxu0 0
        %2533 = vmatmul.mubr.bf16.gmra.mrb[0].mxu0 %v2363
        %v2534 = vpop.f32.mrb[0].mxu0
        %v2535 = vadd.f32 0.0, %v2534
        %v2536 = vpop.f32.mrb[0].mxu0
        %v2537 = vpop.f32.mrb[0].mxu0
        %v2538 = vadd.f32 0.0, %v2537
        %v2539 = vpop.f32.mrb[0].mxu0
        %2540 = vmatprep.mubr.bf16.mxu0 0
        %2541 = vmatmul.mubr.bf16.gmra.mrb[0].mxu0 %v2364
        %v2542 = vpop.f32.mrb[0].mxu0
        %v2543 = vadd.f32 0.0, %v2542
        %v2544 = vpop.f32.mrb[0].mxu0
        %v2545 = vpop.f32.mrb[0].mxu0
        %v2546 = vadd.f32 0.0, %v2545
        %v2547 = vpop.f32.mrb[0].mxu0
        %2548 = vmatprep.mubr.bf16.mxu0 0
        %2549 = vmatmul.mubr.bf16.gmra.mrb[0].mxu0 %v2365
        %v2550 = vpop.f32.mrb[0].mxu0
        %v2551 = vadd.f32 0.0, %v2550
        %v2552 = vpop.f32.mrb[0].mxu0
        %v2553 = vpop.f32.mrb[0].mxu0
        %v2554 = vadd.f32 0.0, %v2553
        %v2555 = vpop.f32.mrb[0].mxu0
        %2556 = vmatprep.mubr.bf16.mxu0 0
        %2557 = vmatmul.mubr.bf16.gmra.mrb[0].mxu0 %v2366
        %v2558 = vpop.f32.mrb[0].mxu0
        %v2559 = vadd.f32 0.0, %v2558
        %v2560 = vpop.f32.mrb[0].mxu0
        %v2561 = vpop.f32.mrb[0].mxu0
        %v2562 = vadd.f32 0.0, %v2561
        %v2563 = vpop.f32.mrb[0].mxu0
        %2564 = vmatprep.mubr.bf16.mxu0 0
        %2565 = vmatmul.mubr.bf16.gmra.mrb[0].mxu0 %v2367
        %v2566 = vpop.f32.mrb[0].mxu0
        %v2567 = vadd.f32 0.0, %v2566
        %v2568 = vpop.f32.mrb[0].mxu0
        %v2569 = vpop.f32.mrb[0].mxu0
        %v2570 = vadd.f32 0.0, %v2569
        %v2571 = vpop.f32.mrb[0].mxu0
        %2572 = vmatprep.mubr.bf16.mxu0 0
        %2573 = vmatmul.mubr.bf16.gmra.mrb[0].mxu0 %v2368
        %v2574 = vpop.f32.mrb[0].mxu0
        %v2575 = vadd.f32 0.0, %v2574
        %v2576 = vpop.f32.mrb[0].mxu0
        %v2577 = vpop.f32.mrb[0].mxu0
        %v2578 = vadd.f32 0.0, %v2577
        %v2579 = vpop.f32.mrb[0].mxu0
        %2580 = vmatprep.mubr.bf16.mxu0 0
        %2581 = vmatmul.mubr.bf16.gmra.mrb[0].mxu0 %v2369
        %v2582 = vpop.f32.mrb[0].mxu0
        %v2583 = vadd.f32 0.0, %v2582
        %v2584 = vpop.f32.mrb[0].mxu0
        %v2585 = vpop.f32.mrb[0].mxu0
        %v2586 = vadd.f32 0.0, %v2585
        %v2587 = vpop.f32.mrb[0].mxu0
        %2588 = vmatprep.mubr.bf16.mxu0 0
        %2589 = vmatmul.mubr.bf16.gmra.mrb[0].mxu0 %v2370
        %v2590 = vpop.f32.mrb[0].mxu0
        %v2591 = vadd.f32 0.0, %v2590
        %v2592 = vpop.f32.mrb[0].mxu0
        %v2593 = vpop.f32.mrb[0].mxu0
        %v2594 = vadd.f32 0.0, %v2593
        %v2595 = vpop.f32.mrb[0].mxu0
        %2596 = vdwg.mxu0
        %v2597 = vadd.f32 %v2291, %v2471
        %v2598 = vadd.f32 %v2292, %v2474
        %v2599 = vadd.f32 %v2293, %v2479
        %v2600 = vadd.f32 %v2294, %v2482
        %v2601 = vadd.f32 %v2295, %v2487
        %v2602 = vadd.f32 %v2296, %v2490
        %v2603 = vadd.f32 %v2297, %v2495
        %v2604 = vadd.f32 %v2298, %v2498
        %v2605 = vadd.f32 %v2299, %v2503
        %v2606 = vadd.f32 %v2300, %v2506
        %v2607 = vadd.f32 %v2301, %v2511
        %v2608 = vadd.f32 %v2302, %v2514
        %v2609 = vadd.f32 %v2303, %v2519
        %v2610 = vadd.f32 %v2304, %v2522
        %v2611 = vadd.f32 %v2305, %v2527
        %v2612 = vadd.f32 %v2306, %v2530
        %v2613 = vadd.f32 %v2307, %v2535
        %v2614 = vadd.f32 %v2308, %v2538
        %v2615 = vadd.f32 %v2309, %v2543
        %v2616 = vadd.f32 %v2310, %v2546
        %v2617 = vadd.f32 %v2311, %v2551
        %v2618 = vadd.f32 %v2312, %v2554
        %v2619 = vadd.f32 %v2313, %v2559
        %v2620 = vadd.f32 %v2314, %v2562
        %v2621 = vadd.f32 %v2315, %v2567
        %v2622 = vadd.f32 %v2316, %v2570
        %v2623 = vadd.f32 %v2317, %v2575
        %v2624 = vadd.f32 %v2318, %v2578
        %v2625 = vadd.f32 %v2319, %v2583
        %v2626 = vadd.f32 %v2320, %v2586
        %v2627 = vadd.f32 %v2321, %v2591
        %v2628 = vadd.f32 %v2322, %v2594
        %v2629 = vld [vmem:[%s2016 + $0x2] sm:$0xff]
        %v2630 = vld [vmem:[%s2016 + $0xa] sm:$0xff]
        %v2631 = vld [vmem:[%s2016 + $0x1a] sm:$0xff]
        %v2632 = vld [vmem:[%s2016 + $0x22] sm:$0xff]
        %v2633 = vld [vmem:[%s2016 + $0x32] sm:$0xff]
        %v2634 = vld [vmem:[%s2016 + $0x3a] sm:$0xff]
        %v2635 = vld [vmem:[%s2016 + $0x4a] sm:$0xff]
        %v2636 = vld [vmem:[%s2016 + $0x52] sm:$0xff]
        %v2637 = vld [vmem:[%s2016 + $0x62] sm:$0xff]
        %v2638 = vld [vmem:[%s2016 + $0x6a] sm:$0xff]
        %v2639 = vld [vmem:[%s2016 + $0x7a] sm:$0xff]
        %v2640 = vld [vmem:[%s2016 + $0x82] sm:$0xff]
        %v2641 = vld [vmem:[%s2016 + $0x92] sm:$0xff]
        %v2642 = vld [vmem:[%s2016 + $0x9a] sm:$0xff]
        %v2643 = vld [vmem:[%s2016 + $0xaa] sm:$0xff]
        %v2644 = vld [vmem:[%s2016 + $0xb2] sm:$0xff]
        %v2645 = vld [vmem:[%s2016 + $0xc2] sm:$0xff]
        %v2646 = vld [vmem:[%s2016 + $0xca] sm:$0xff]
        %v2647 = vld [vmem:[%s2016 + $0xda] sm:$0xff]
        %v2648 = vld [vmem:[%s2016 + $0xe2] sm:$0xff]
        %v2649 = vld [vmem:[%s2016 + $0xf2] sm:$0xff]
        %v2650 = vld [vmem:[%s2016 + $0xfa] sm:$0xff]
        %v2651 = vld [vmem:[%s2016 + $0x10a] sm:$0xff]
        %v2652 = vld [vmem:[%s2016 + $0x112] sm:$0xff]
        %v2653 = vld [vmem:[%s2016 + $0x122] sm:$0xff]
        %v2654 = vld [vmem:[%s2016 + $0x12a] sm:$0xff]
        %v2655 = vld [vmem:[%s2016 + $0x13a] sm:$0xff]
        %v2656 = vld [vmem:[%s2016 + $0x142] sm:$0xff]
        %v2657 = vld [vmem:[%s2016 + $0x152] sm:$0xff]
        %v2658 = vld [vmem:[%s2016 + $0x15a] sm:$0xff]
        %v2659 = vld [vmem:[%s2016 + $0x16a] sm:$0xff]
        %v2660 = vld [vmem:[%s2016 + $0x172] sm:$0xff]
        %v2661 = vpack.c.bf16 %v2630, %v2629
        %v2662 = vpack.c.bf16 %v2632, %v2631
        %v2663 = vpack.c.bf16 %v2634, %v2633
        %v2664 = vpack.c.bf16 %v2636, %v2635
        %v2665 = vpack.c.bf16 %v2638, %v2637
        %v2666 = vpack.c.bf16 %v2640, %v2639
        %v2667 = vpack.c.bf16 %v2642, %v2641
        %v2668 = vpack.c.bf16 %v2644, %v2643
        %v2669 = vpack.c.bf16 %v2646, %v2645
        %v2670 = vpack.c.bf16 %v2648, %v2647
        %v2671 = vpack.c.bf16 %v2650, %v2649
        %v2672 = vpack.c.bf16 %v2652, %v2651
        %v2673 = vpack.c.bf16 %v2654, %v2653
        %v2674 = vpack.c.bf16 %v2656, %v2655
        %v2675 = vpack.c.bf16 %v2658, %v2657
        %v2676 = vpack.c.bf16 %v2660, %v2659
        %s2677 = scalar_lea.vmem %s1, 512
        %v2678 = vld [vmem:[%s2677] sm:$0xf]
        %v2679 = vld [vmem:[%s2677 + $0x4] sm:$0xf]
        %v2680 = vld [vmem:[%s2677 + $0x8] sm:$0xf]
        %v2681 = vld [vmem:[%s2677 + $0xc] sm:$0xf]
        %v2682 = vld [vmem:[%s2677 + $0x10] sm:$0xf]
        %v2683 = vld [vmem:[%s2677 + $0x14] sm:$0xf]
        %v2684 = vld [vmem:[%s2677 + $0x18] sm:$0xf]
        %v2685 = vld [vmem:[%s2677 + $0x1c] sm:$0xf]
        %v2686 = vld [vmem:[%s2677 + $0x20] sm:$0xf]
        %v2687 = vld [vmem:[%s2677 + $0x24] sm:$0xf]
        %v2688 = vld [vmem:[%s2677 + $0x28] sm:$0xf]
        %v2689 = vld [vmem:[%s2677 + $0x2c] sm:$0xf]
        %v2690 = vld [vmem:[%s2677 + $0x30] sm:$0xf]
        %v2691 = vld [vmem:[%s2677 + $0x34] sm:$0xf]
        %v2692 = vld [vmem:[%s2677 + $0x38] sm:$0xf]
        %v2693 = vld [vmem:[%s2677 + $0x3c] sm:$0xf]
        %v2710 = vunpack.c.l.b16 %v2678
        %v2711 = vunpack.c.l.b16 %v2679
        %v2712 = vunpack.c.l.b16 %v2680
        %v2713 = vunpack.c.l.b16 %v2681
        %v2714 = vunpack.c.l.b16 %v2682
        %v2715 = vunpack.c.l.b16 %v2683
        %v2716 = vunpack.c.l.b16 %v2684
        %v2717 = vunpack.c.l.b16 %v2685
        %v2718 = vunpack.c.l.b16 %v2686
        %v2719 = vunpack.c.l.b16 %v2687
        %v2720 = vunpack.c.l.b16 %v2688
        %v2721 = vunpack.c.l.b16 %v2689
        %v2722 = vunpack.c.l.b16 %v2690
        %v2723 = vunpack.c.l.b16 %v2691
        %v2724 = vunpack.c.l.b16 %v2692
        %v2725 = vunpack.c.l.b16 %v2693
        %v2726 = vpack.c.b16 %v2711, %v2710
        %v2727 = vpack.c.b16 %v2713, %v2712
        %v2728 = vpack.c.b16 %v2715, %v2714
        %v2729 = vpack.c.b16 %v2717, %v2716
        %v2730 = vpack.c.b16 %v2719, %v2718
        %v2731 = vpack.c.b16 %v2721, %v2720
        %v2732 = vpack.c.b16 %v2723, %v2722
        %v2733 = vpack.c.b16 %v2725, %v2724
        %2742 = vmatprep.subr.bf16.mxu0 0
        %2743 = vmatpush1.bf16.msra.mxu0 %v2726
        %2744 = vmatprep.subr.bf16.mxu0 0
        %2745 = vmatpush1.bf16.msra.mxu0 %v2727
        %2746 = vmatprep.subr.bf16.mxu0 0
        %2747 = vmatpush1.bf16.msra.mxu0 %v2728
        %2748 = vmatprep.subr.bf16.mxu0 0
        %2749 = vmatpush1.bf16.msra.mxu0 %v2729
        %2750 = vmatprep.subr.bf16.mxu0 0
        %2751 = vmatpush1.bf16.msra.mxu0 %v2730
        %2752 = vmatprep.subr.bf16.mxu0 0
        %2753 = vmatpush1.bf16.msra.mxu0 %v2731
        %2754 = vmatprep.subr.bf16.mxu0 0
        %2755 = vmatpush1.bf16.msra.mxu0 %v2732
        %2756 = vmatprep.subr.bf16.mxu0 0
        %2757 = vmatpush1.bf16.msra.mxu0 %v2733
        %2758 = vmatprep.subr.bf16.mxu0 0
        %2759 = vmatpush1.bf16.msra.mxu0 0
        %2760 = vmatprep.subr.bf16.mxu0 0
        %2761 = vmatpush1.bf16.msra.mxu0 0
        %2762 = vmatprep.subr.bf16.mxu0 0
        %2763 = vmatpush1.bf16.msra.mxu0 0
        %2764 = vmatprep.subr.bf16.mxu0 0
        %2765 = vmatpush1.bf16.msra.mxu0 0
        %2766 = vmatprep.subr.bf16.mxu0 0
        %2767 = vmatpush1.bf16.msra.mxu0 0
        %2768 = vmatprep.subr.bf16.mxu0 0
        %2769 = vmatpush1.bf16.msra.mxu0 0
        %2770 = vmatprep.subr.bf16.mxu0 0
        %2771 = vmatpush1.bf16.msra.mxu0 0
        %2772 = vmatprep.subr.bf16.mxu0 0
        %2773 = vmatpush1.bf16.msra.mxu0 0
        %2774 = vmatprep.mubr.bf16.mxu0 0
        %2775 = vmatmul.mubr.bf16.gmra.mrb[0].mxu0 %v2661
        %v2776 = vpop.f32.mrb[0].mxu0
        %v2777 = vadd.f32 0.0, %v2776
        %v2778 = vpop.f32.mrb[0].mxu0
        %v2779 = vpop.f32.mrb[0].mxu0
        %v2780 = vadd.f32 0.0, %v2779
        %v2781 = vpop.f32.mrb[0].mxu0
        %2782 = vmatprep.mubr.bf16.mxu0 0
        %2783 = vmatmul.mubr.bf16.gmra.mrb[0].mxu0 %v2662
        %v2784 = vpop.f32.mrb[0].mxu0
        %v2785 = vadd.f32 0.0, %v2784
        %v2786 = vpop.f32.mrb[0].mxu0
        %v2787 = vpop.f32.mrb[0].mxu0
        %v2788 = vadd.f32 0.0, %v2787
        %v2789 = vpop.f32.mrb[0].mxu0
        %2790 = vmatprep.mubr.bf16.mxu0 0
        %2791 = vmatmul.mubr.bf16.gmra.mrb[0].mxu0 %v2663
        %v2792 = vpop.f32.mrb[0].mxu0
        %v2793 = vadd.f32 0.0, %v2792
        %v2794 = vpop.f32.mrb[0].mxu0
        %v2795 = vpop.f32.mrb[0].mxu0
        %v2796 = vadd.f32 0.0, %v2795
        %v2797 = vpop.f32.mrb[0].mxu0
        %2798 = vmatprep.mubr.bf16.mxu0 0
        %2799 = vmatmul.mubr.bf16.gmra.mrb[0].mxu0 %v2664
        %v2800 = vpop.f32.mrb[0].mxu0
        %v2801 = vadd.f32 0.0, %v2800
        %v2802 = vpop.f32.mrb[0].mxu0
        %v2803 = vpop.f32.mrb[0].mxu0
        %v2804 = vadd.f32 0.0, %v2803
        %v2805 = vpop.f32.mrb[0].mxu0
        %2806 = vmatprep.mubr.bf16.mxu0 0
        %2807 = vmatmul.mubr.bf16.gmra.mrb[0].mxu0 %v2665
        %v2808 = vpop.f32.mrb[0].mxu0
        %v2809 = vadd.f32 0.0, %v2808
        %v2810 = vpop.f32.mrb[0].mxu0
        %v2811 = vpop.f32.mrb[0].mxu0
        %v2812 = vadd.f32 0.0, %v2811
        %v2813 = vpop.f32.mrb[0].mxu0
        %2814 = vmatprep.mubr.bf16.mxu0 0
        %2815 = vmatmul.mubr.bf16.gmra.mrb[0].mxu0 %v2666
        %v2816 = vpop.f32.mrb[0].mxu0
        %v2817 = vadd.f32 0.0, %v2816
        %v2818 = vpop.f32.mrb[0].mxu0
        %v2819 = vpop.f32.mrb[0].mxu0
        %v2820 = vadd.f32 0.0, %v2819
        %v2821 = vpop.f32.mrb[0].mxu0
        %2822 = vmatprep.mubr.bf16.mxu0 0
        %2823 = vmatmul.mubr.bf16.gmra.mrb[0].mxu0 %v2667
        %v2824 = vpop.f32.mrb[0].mxu0
        %v2825 = vadd.f32 0.0, %v2824
        %v2826 = vpop.f32.mrb[0].mxu0
        %v2827 = vpop.f32.mrb[0].mxu0
        %v2828 = vadd.f32 0.0, %v2827
        %v2829 = vpop.f32.mrb[0].mxu0
        %2830 = vmatprep.mubr.bf16.mxu0 0
        %2831 = vmatmul.mubr.bf16.gmra.mrb[0].mxu0 %v2668
        %v2832 = vpop.f32.mrb[0].mxu0
        %v2833 = vadd.f32 0.0, %v2832
        %v2834 = vpop.f32.mrb[0].mxu0
        %v2835 = vpop.f32.mrb[0].mxu0
        %v2836 = vadd.f32 0.0, %v2835
        %v2837 = vpop.f32.mrb[0].mxu0
        %2838 = vmatprep.mubr.bf16.mxu0 0
        %2839 = vmatmul.mubr.bf16.gmra.mrb[0].mxu0 %v2669
        %v2840 = vpop.f32.mrb[0].mxu0
        %v2841 = vadd.f32 0.0, %v2840
        %v2842 = vpop.f32.mrb[0].mxu0
        %v2843 = vpop.f32.mrb[0].mxu0
        %v2844 = vadd.f32 0.0, %v2843
        %v2845 = vpop.f32.mrb[0].mxu0
        %2846 = vmatprep.mubr.bf16.mxu0 0
        %2847 = vmatmul.mubr.bf16.gmra.mrb[0].mxu0 %v2670
        %v2848 = vpop.f32.mrb[0].mxu0
        %v2849 = vadd.f32 0.0, %v2848
        %v2850 = vpop.f32.mrb[0].mxu0
        %v2851 = vpop.f32.mrb[0].mxu0
        %v2852 = vadd.f32 0.0, %v2851
        %v2853 = vpop.f32.mrb[0].mxu0
        %2854 = vmatprep.mubr.bf16.mxu0 0
        %2855 = vmatmul.mubr.bf16.gmra.mrb[0].mxu0 %v2671
        %v2856 = vpop.f32.mrb[0].mxu0
        %v2857 = vadd.f32 0.0, %v2856
        %v2858 = vpop.f32.mrb[0].mxu0
        %v2859 = vpop.f32.mrb[0].mxu0
        %v2860 = vadd.f32 0.0, %v2859
        %v2861 = vpop.f32.mrb[0].mxu0
        %2862 = vmatprep.mubr.bf16.mxu0 0
        %2863 = vmatmul.mubr.bf16.gmra.mrb[0].mxu0 %v2672
        %v2864 = vpop.f32.mrb[0].mxu0
        %v2865 = vadd.f32 0.0, %v2864
        %v2866 = vpop.f32.mrb[0].mxu0
        %v2867 = vpop.f32.mrb[0].mxu0
        %v2868 = vadd.f32 0.0, %v2867
        %v2869 = vpop.f32.mrb[0].mxu0
        %2870 = vmatprep.mubr.bf16.mxu0 0
        %2871 = vmatmul.mubr.bf16.gmra.mrb[0].mxu0 %v2673
        %v2872 = vpop.f32.mrb[0].mxu0
        %v2873 = vadd.f32 0.0, %v2872
        %v2874 = vpop.f32.mrb[0].mxu0
        %v2875 = vpop.f32.mrb[0].mxu0
        %v2876 = vadd.f32 0.0, %v2875
        %v2877 = vpop.f32.mrb[0].mxu0
        %2878 = vmatprep.mubr.bf16.mxu0 0
        %2879 = vmatmul.mubr.bf16.gmra.mrb[0].mxu0 %v2674
        %v2880 = vpop.f32.mrb[0].mxu0
        %v2881 = vadd.f32 0.0, %v2880
        %v2882 = vpop.f32.mrb[0].mxu0
        %v2883 = vpop.f32.mrb[0].mxu0
        %v2884 = vadd.f32 0.0, %v2883
        %v2885 = vpop.f32.mrb[0].mxu0
        %2886 = vmatprep.mubr.bf16.mxu0 0
        %2887 = vmatmul.mubr.bf16.gmra.mrb[0].mxu0 %v2675
        %v2888 = vpop.f32.mrb[0].mxu0
        %v2889 = vadd.f32 0.0, %v2888
        %v2890 = vpop.f32.mrb[0].mxu0
        %v2891 = vpop.f32.mrb[0].mxu0
        %v2892 = vadd.f32 0.0, %v2891
        %v2893 = vpop.f32.mrb[0].mxu0
        %2894 = vmatprep.mubr.bf16.mxu0 0
        %2895 = vmatmul.mubr.bf16.gmra.mrb[0].mxu0 %v2676
        %v2896 = vpop.f32.mrb[0].mxu0
        %v2897 = vadd.f32 0.0, %v2896
        %v2898 = vpop.f32.mrb[0].mxu0
        %v2899 = vpop.f32.mrb[0].mxu0
        %v2900 = vadd.f32 0.0, %v2899
        %v2901 = vpop.f32.mrb[0].mxu0
        %2902 = vdwg.mxu0
        %v2903 = vadd.f32 %v2597, %v2777
        %v2904 = vadd.f32 %v2598, %v2780
        %v2905 = vadd.f32 %v2599, %v2785
        %v2906 = vadd.f32 %v2600, %v2788
        %v2907 = vadd.f32 %v2601, %v2793
        %v2908 = vadd.f32 %v2602, %v2796
        %v2909 = vadd.f32 %v2603, %v2801
        %v2910 = vadd.f32 %v2604, %v2804
        %v2911 = vadd.f32 %v2605, %v2809
        %v2912 = vadd.f32 %v2606, %v2812
        %v2913 = vadd.f32 %v2607, %v2817
        %v2914 = vadd.f32 %v2608, %v2820
        %v2915 = vadd.f32 %v2609, %v2825
        %v2916 = vadd.f32 %v2610, %v2828
        %v2917 = vadd.f32 %v2611, %v2833
        %v2918 = vadd.f32 %v2612, %v2836
        %v2919 = vadd.f32 %v2613, %v2841
        %v2920 = vadd.f32 %v2614, %v2844
        %v2921 = vadd.f32 %v2615, %v2849
        %v2922 = vadd.f32 %v2616, %v2852
        %v2923 = vadd.f32 %v2617, %v2857
        %v2924 = vadd.f32 %v2618, %v2860
        %v2925 = vadd.f32 %v2619, %v2865
        %v2926 = vadd.f32 %v2620, %v2868
        %v2927 = vadd.f32 %v2621, %v2873
        %v2928 = vadd.f32 %v2622, %v2876
        %v2929 = vadd.f32 %v2623, %v2881
        %v2930 = vadd.f32 %v2624, %v2884
        %v2931 = vadd.f32 %v2625, %v2889
        %v2932 = vadd.f32 %v2626, %v2892
        %v2933 = vadd.f32 %v2627, %v2897
        %v2934 = vadd.f32 %v2628, %v2900
        %v2935 = vlaneseq
        %v2936 = vand.u32 %v2935, 127
        %vm2937 = vcmp.ge.s32.totalorder %v2936, 0
        %vm2938 = vcmp.lt.s32.totalorder %v2936, 32
        %vm2939 = vmand %vm2937, %vm2938
        %v2940 = vsel %vm2939, %v2903, 0.0
        %v2941 = vsel %vm2939, %v2904, 0.0
        %v2942 = vsel %vm2939, %v2905, 0.0
        %v2943 = vsel %vm2939, %v2906, 0.0
        %v2944 = vsel %vm2939, %v2907, 0.0
        %v2945 = vsel %vm2939, %v2908, 0.0
        %v2946 = vsel %vm2939, %v2909, 0.0
        %v2947 = vsel %vm2939, %v2910, 0.0
        %v2948 = vsel %vm2939, %v2911, 0.0
        %v2949 = vsel %vm2939, %v2912, 0.0
        %v2950 = vsel %vm2939, %v2913, 0.0
        %v2951 = vsel %vm2939, %v2914, 0.0
        %v2952 = vsel %vm2939, %v2915, 0.0
        %v2953 = vsel %vm2939, %v2916, 0.0
        %v2954 = vsel %vm2939, %v2917, 0.0
        %v2955 = vsel %vm2939, %v2918, 0.0
        %v2956 = vsel %vm2939, %v2919, 0.0
        %v2957 = vsel %vm2939, %v2920, 0.0
        %v2958 = vsel %vm2939, %v2921, 0.0
        %v2959 = vsel %vm2939, %v2922, 0.0
        %v2960 = vsel %vm2939, %v2923, 0.0
        %v2961 = vsel %vm2939, %v2924, 0.0
        %v2962 = vsel %vm2939, %v2925, 0.0
        %v2963 = vsel %vm2939, %v2926, 0.0
        %v2964 = vsel %vm2939, %v2927, 0.0
        %v2965 = vsel %vm2939, %v2928, 0.0
        %v2966 = vsel %vm2939, %v2929, 0.0
        %v2967 = vsel %vm2939, %v2930, 0.0
        %v2968 = vsel %vm2939, %v2931, 0.0
        %v2969 = vsel %vm2939, %v2932, 0.0
        %v2970 = vsel %vm2939, %v2933, 0.0
        %v2971 = vsel %vm2939, %v2934, 0.0
        %v2972 = vadd.f32 %v2940, %v2941
        %v2973 = vadd.f32 %v2972, %v2942
        %v2974 = vadd.f32 %v2973, %v2943
        %v2975 = vadd.f32 %v2974, %v2944
        %v2976 = vadd.f32 %v2975, %v2945
        %v2977 = vadd.f32 %v2976, %v2946
        %v2978 = vadd.f32 %v2977, %v2947
        %v2979 = vadd.f32 %v2978, %v2948
        %v2980 = vadd.f32 %v2979, %v2949
        %v2981 = vadd.f32 %v2980, %v2950
        %v2982 = vadd.f32 %v2981, %v2951
        %v2983 = vadd.f32 %v2982, %v2952
        %v2984 = vadd.f32 %v2983, %v2953
        %v2985 = vadd.f32 %v2984, %v2954
        %v2986 = vadd.f32 %v2985, %v2955
        %v2987 = vadd.f32 %v2986, %v2956
        %v2988 = vadd.f32 %v2987, %v2957
        %v2989 = vadd.f32 %v2988, %v2958
        %v2990 = vadd.f32 %v2989, %v2959
        %v2991 = vadd.f32 %v2990, %v2960
        %v2992 = vadd.f32 %v2991, %v2961
        %v2993 = vadd.f32 %v2992, %v2962
        %v2994 = vadd.f32 %v2993, %v2963
        %v2995 = vadd.f32 %v2994, %v2964
        %v2996 = vadd.f32 %v2995, %v2965
        %v2997 = vadd.f32 %v2996, %v2966
        %v2998 = vadd.f32 %v2997, %v2967
        %v2999 = vadd.f32 %v2998, %v2968
        %v3000 = vadd.f32 %v2999, %v2969
        %v3001 = vadd.f32 %v3000, %v2970
        %v3002 = vadd.f32 %v3001, %v2971
        %3003 = vadd.xlane.f32.xlu0 %v3002
        %v3004 = vpop.xlane.xlu0 %3003
        %v3005 = vrot.slane %v3004, 4
        %v3006 = vadd.f32 %v3004, %v3005
        %v3007 = vrot.slane %v3006, 2
        %v3008 = vadd.f32 %v3006, %v3007
        %v3009 = vrot.slane %v3008, 1
        %v3010 = vadd.f32 %v3008, %v3009
        %s3011 = vtos %v3010
        %v3012 = vrcp.pop 8192.0
        %s3013 = vtos %v3012
        %s3014 = smul.f32 %s3011, %s3013
        %v3015 = vstv %s3014
        %v3016 = vsub.f32 %v2903, %v3015
        %v3017 = vsub.f32 %v2904, %v3015
        %v3018 = vsub.f32 %v2905, %v3015
        %v3019 = vsub.f32 %v2906, %v3015
        %v3020 = vsub.f32 %v2907, %v3015
        %v3021 = vsub.f32 %v2908, %v3015
        %v3022 = vsub.f32 %v2909, %v3015
        %v3023 = vsub.f32 %v2910, %v3015
        %v3024 = vsub.f32 %v2911, %v3015
        %v3025 = vsub.f32 %v2912, %v3015
        %v3026 = vsub.f32 %v2913, %v3015
        %v3027 = vsub.f32 %v2914, %v3015
        %v3028 = vsub.f32 %v2915, %v3015
        %v3029 = vsub.f32 %v2916, %v3015
        %v3030 = vsub.f32 %v2917, %v3015
        %v3031 = vsub.f32 %v2918, %v3015
        %v3032 = vsub.f32 %v2919, %v3015
        %v3033 = vsub.f32 %v2920, %v3015
        %v3034 = vsub.f32 %v2921, %v3015
        %v3035 = vsub.f32 %v2922, %v3015
        %v3036 = vsub.f32 %v2923, %v3015
        %v3037 = vsub.f32 %v2924, %v3015
        %v3038 = vsub.f32 %v2925, %v3015
        %v3039 = vsub.f32 %v2926, %v3015
        %v3040 = vsub.f32 %v2927, %v3015
        %v3041 = vsub.f32 %v2928, %v3015
        %v3042 = vsub.f32 %v2929, %v3015
        %v3043 = vsub.f32 %v2930, %v3015
        %v3044 = vsub.f32 %v2931, %v3015
        %v3045 = vsub.f32 %v2932, %v3015
        %v3046 = vsub.f32 %v2933, %v3015
        %v3047 = vsub.f32 %v2934, %v3015
        %v3048 = vsel %vm2939, %v3016, 0.0
        %v3049 = vsel %vm2939, %v3017, 0.0
        %v3050 = vsel %vm2939, %v3018, 0.0
        %v3051 = vsel %vm2939, %v3019, 0.0
        %v3052 = vsel %vm2939, %v3020, 0.0
        %v3053 = vsel %vm2939, %v3021, 0.0
        %v3054 = vsel %vm2939, %v3022, 0.0
        %v3055 = vsel %vm2939, %v3023, 0.0
        %v3056 = vsel %vm2939, %v3024, 0.0
        %v3057 = vsel %vm2939, %v3025, 0.0
        %v3058 = vsel %vm2939, %v3026, 0.0
        %v3059 = vsel %vm2939, %v3027, 0.0
        %v3060 = vsel %vm2939, %v3028, 0.0
        %v3061 = vsel %vm2939, %v3029, 0.0
        %v3062 = vsel %vm2939, %v3030, 0.0
        %v3063 = vsel %vm2939, %v3031, 0.0
        %v3064 = vsel %vm2939, %v3032, 0.0
        %v3065 = vsel %vm2939, %v3033, 0.0
        %v3066 = vsel %vm2939, %v3034, 0.0
        %v3067 = vsel %vm2939, %v3035, 0.0
        %v3068 = vsel %vm2939, %v3036, 0.0
        %v3069 = vsel %vm2939, %v3037, 0.0
        %v3070 = vsel %vm2939, %v3038, 0.0
        %v3071 = vsel %vm2939, %v3039, 0.0
        %v3072 = vsel %vm2939, %v3040, 0.0
        %v3073 = vsel %vm2939, %v3041, 0.0
        %v3074 = vsel %vm2939, %v3042, 0.0
        %v3075 = vsel %vm2939, %v3043, 0.0
        %v3076 = vsel %vm2939, %v3044, 0.0
        %v3077 = vsel %vm2939, %v3045, 0.0
        %v3078 = vsel %vm2939, %v3046, 0.0
        %v3079 = vsel %vm2939, %v3047, 0.0
        %v3080 = vmul.f32 %v3048, %v3048
        %v3081 = vmul.f32 %v3049, %v3049
        %v3082 = vmul.f32 %v3050, %v3050
        %v3083 = vmul.f32 %v3051, %v3051
        %v3084 = vmul.f32 %v3052, %v3052
        %v3085 = vmul.f32 %v3053, %v3053
        %v3086 = vmul.f32 %v3054, %v3054
        %v3087 = vmul.f32 %v3055, %v3055
        %v3088 = vmul.f32 %v3056, %v3056
        %v3089 = vmul.f32 %v3057, %v3057
        %v3090 = vmul.f32 %v3058, %v3058
        %v3091 = vmul.f32 %v3059, %v3059
        %v3092 = vmul.f32 %v3060, %v3060
        %v3093 = vmul.f32 %v3061, %v3061
        %v3094 = vmul.f32 %v3062, %v3062
        %v3095 = vmul.f32 %v3063, %v3063
        %v3096 = vmul.f32 %v3064, %v3064
        %v3097 = vmul.f32 %v3065, %v3065
        %v3098 = vmul.f32 %v3066, %v3066
        %v3099 = vmul.f32 %v3067, %v3067
        %v3100 = vmul.f32 %v3068, %v3068
        %v3101 = vmul.f32 %v3069, %v3069
        %v3102 = vmul.f32 %v3070, %v3070
        %v3103 = vmul.f32 %v3071, %v3071
        %v3104 = vmul.f32 %v3072, %v3072
        %v3105 = vmul.f32 %v3073, %v3073
        %v3106 = vmul.f32 %v3074, %v3074
        %v3107 = vmul.f32 %v3075, %v3075
        %v3108 = vmul.f32 %v3076, %v3076
        %v3109 = vmul.f32 %v3077, %v3077
        %v3110 = vmul.f32 %v3078, %v3078
        %v3111 = vmul.f32 %v3079, %v3079
        %v3112 = vadd.f32 %v3080, %v3081
        %v3113 = vadd.f32 %v3112, %v3082
        %v3114 = vadd.f32 %v3113, %v3083
        %v3115 = vadd.f32 %v3114, %v3084
        %v3116 = vadd.f32 %v3115, %v3085
        %v3117 = vadd.f32 %v3116, %v3086
        %v3118 = vadd.f32 %v3117, %v3087
        %v3119 = vadd.f32 %v3118, %v3088
        %v3120 = vadd.f32 %v3119, %v3089
        %v3121 = vadd.f32 %v3120, %v3090
        %v3122 = vadd.f32 %v3121, %v3091
        %v3123 = vadd.f32 %v3122, %v3092
        %v3124 = vadd.f32 %v3123, %v3093
        %v3125 = vadd.f32 %v3124, %v3094
        %v3126 = vadd.f32 %v3125, %v3095
        %v3127 = vadd.f32 %v3126, %v3096
        %v3128 = vadd.f32 %v3127, %v3097
        %v3129 = vadd.f32 %v3128, %v3098
        %v3130 = vadd.f32 %v3129, %v3099
        %v3131 = vadd.f32 %v3130, %v3100
        %v3132 = vadd.f32 %v3131, %v3101
        %v3133 = vadd.f32 %v3132, %v3102
        %v3134 = vadd.f32 %v3133, %v3103
        %v3135 = vadd.f32 %v3134, %v3104
        %v3136 = vadd.f32 %v3135, %v3105
        %v3137 = vadd.f32 %v3136, %v3106
        %v3138 = vadd.f32 %v3137, %v3107
        %v3139 = vadd.f32 %v3138, %v3108
        %v3140 = vadd.f32 %v3139, %v3109
        %v3141 = vadd.f32 %v3140, %v3110
        %v3142 = vadd.f32 %v3141, %v3111
        %3143 = vadd.xlane.f32.xlu0 %v3142
        %v3144 = vpop.xlane.xlu0 %3143
        %v3145 = vrot.slane %v3144, 4
        %v3146 = vadd.f32 %v3144, %v3145
        %v3147 = vrot.slane %v3146, 2
        %v3148 = vadd.f32 %v3146, %v3147
        %v3149 = vrot.slane %v3148, 1
        %v3150 = vadd.f32 %v3148, %v3149
        %s3151 = vtos %v3150
        %v3152 = vrcp.pop 8192.0
        %s3153 = vtos %v3152
        %s3154 = smul.f32 %s3151, %s3153
        %s3155 = sadd.f32 %s3154, 1e-05
        %v3156 = vstv %s3155
        %v3157 = vrsqrt.pop %v3156
        %s3158 = vtos %v3157
        %v3159 = vstv %s3158
        %v3160 = vmul.f32 %v3016, %v3159
        %v3161 = vmul.f32 %v3017, %v3159
        %v3162 = vmul.f32 %v3018, %v3159
        %v3163 = vmul.f32 %v3019, %v3159
        %v3164 = vmul.f32 %v3020, %v3159
        %v3165 = vmul.f32 %v3021, %v3159
        %v3166 = vmul.f32 %v3022, %v3159
        %v3167 = vmul.f32 %v3023, %v3159
        %v3168 = vmul.f32 %v3024, %v3159
        %v3169 = vmul.f32 %v3025, %v3159
        %v3170 = vmul.f32 %v3026, %v3159
        %v3171 = vmul.f32 %v3027, %v3159
        %v3172 = vmul.f32 %v3028, %v3159
        %v3173 = vmul.f32 %v3029, %v3159
        %v3174 = vmul.f32 %v3030, %v3159
        %v3175 = vmul.f32 %v3031, %v3159
        %v3176 = vmul.f32 %v3032, %v3159
        %v3177 = vmul.f32 %v3033, %v3159
        %v3178 = vmul.f32 %v3034, %v3159
        %v3179 = vmul.f32 %v3035, %v3159
        %v3180 = vmul.f32 %v3036, %v3159
        %v3181 = vmul.f32 %v3037, %v3159
        %v3182 = vmul.f32 %v3038, %v3159
        %v3183 = vmul.f32 %v3039, %v3159
        %v3184 = vmul.f32 %v3040, %v3159
        %v3185 = vmul.f32 %v3041, %v3159
        %v3186 = vmul.f32 %v3042, %v3159
        %v3187 = vmul.f32 %v3043, %v3159
        %v3188 = vmul.f32 %v3044, %v3159
        %v3189 = vmul.f32 %v3045, %v3159
        %v3190 = vmul.f32 %v3046, %v3159
        %v3191 = vmul.f32 %v3047, %v3159
        %v3192 = vsel %vm2939, %v3160, 0.0
        %v3193 = vsel %vm2939, %v3161, 0.0
        %v3194 = vsel %vm2939, %v3162, 0.0
        %v3195 = vsel %vm2939, %v3163, 0.0
        %v3196 = vsel %vm2939, %v3164, 0.0
        %v3197 = vsel %vm2939, %v3165, 0.0
        %v3198 = vsel %vm2939, %v3166, 0.0
        %v3199 = vsel %vm2939, %v3167, 0.0
        %v3200 = vsel %vm2939, %v3168, 0.0
        %v3201 = vsel %vm2939, %v3169, 0.0
        %v3202 = vsel %vm2939, %v3170, 0.0
        %v3203 = vsel %vm2939, %v3171, 0.0
        %v3204 = vsel %vm2939, %v3172, 0.0
        %v3205 = vsel %vm2939, %v3173, 0.0
        %v3206 = vsel %vm2939, %v3174, 0.0
        %v3207 = vsel %vm2939, %v3175, 0.0
        %v3208 = vsel %vm2939, %v3176, 0.0
        %v3209 = vsel %vm2939, %v3177, 0.0
        %v3210 = vsel %vm2939, %v3178, 0.0
        %v3211 = vsel %vm2939, %v3179, 0.0
        %v3212 = vsel %vm2939, %v3180, 0.0
        %v3213 = vsel %vm2939, %v3181, 0.0
        %v3214 = vsel %vm2939, %v3182, 0.0
        %v3215 = vsel %vm2939, %v3183, 0.0
        %v3216 = vsel %vm2939, %v3184, 0.0
        %v3217 = vsel %vm2939, %v3185, 0.0
        %v3218 = vsel %vm2939, %v3186, 0.0
        %v3219 = vsel %vm2939, %v3187, 0.0
        %v3220 = vsel %vm2939, %v3188, 0.0
        %v3221 = vsel %vm2939, %v3189, 0.0
        %v3222 = vsel %vm2939, %v3190, 0.0
        %v3223 = vsel %vm2939, %v3191, 0.0
        %vm3224 = vcmp.ge.s32.totalorder %v2936, 32
        %vm3225 = vcmp.lt.s32.totalorder %v2936, 64
        %vm3226 = vmand %vm3224, %vm3225
        %v3227 = vsel %vm3226, %v2903, 0.0
        %v3228 = vsel %vm3226, %v2904, 0.0
        %v3229 = vsel %vm3226, %v2905, 0.0
        %v3230 = vsel %vm3226, %v2906, 0.0
        %v3231 = vsel %vm3226, %v2907, 0.0
        %v3232 = vsel %vm3226, %v2908, 0.0
        %v3233 = vsel %vm3226, %v2909, 0.0
        %v3234 = vsel %vm3226, %v2910, 0.0
        %v3235 = vsel %vm3226, %v2911, 0.0
        %v3236 = vsel %vm3226, %v2912, 0.0
        %v3237 = vsel %vm3226, %v2913, 0.0
        %v3238 = vsel %vm3226, %v2914, 0.0
        %v3239 = vsel %vm3226, %v2915, 0.0
        %v3240 = vsel %vm3226, %v2916, 0.0
        %v3241 = vsel %vm3226, %v2917, 0.0
        %v3242 = vsel %vm3226, %v2918, 0.0
        %v3243 = vsel %vm3226, %v2919, 0.0
        %v3244 = vsel %vm3226, %v2920, 0.0
        %v3245 = vsel %vm3226, %v2921, 0.0
        %v3246 = vsel %vm3226, %v2922, 0.0
        %v3247 = vsel %vm3226, %v2923, 0.0
        %v3248 = vsel %vm3226, %v2924, 0.0
        %v3249 = vsel %vm3226, %v2925, 0.0
        %v3250 = vsel %vm3226, %v2926, 0.0
        %v3251 = vsel %vm3226, %v2927, 0.0
        %v3252 = vsel %vm3226, %v2928, 0.0
        %v3253 = vsel %vm3226, %v2929, 0.0
        %v3254 = vsel %vm3226, %v2930, 0.0
        %v3255 = vsel %vm3226, %v2931, 0.0
        %v3256 = vsel %vm3226, %v2932, 0.0
        %v3257 = vsel %vm3226, %v2933, 0.0
        %v3258 = vsel %vm3226, %v2934, 0.0
        %v3259 = vadd.f32 %v3227, %v3228
        %v3260 = vadd.f32 %v3259, %v3229
        %v3261 = vadd.f32 %v3260, %v3230
        %v3262 = vadd.f32 %v3261, %v3231
        %v3263 = vadd.f32 %v3262, %v3232
        %v3264 = vadd.f32 %v3263, %v3233
        %v3265 = vadd.f32 %v3264, %v3234
        %v3266 = vadd.f32 %v3265, %v3235
        %v3267 = vadd.f32 %v3266, %v3236
        %v3268 = vadd.f32 %v3267, %v3237
        %v3269 = vadd.f32 %v3268, %v3238
        %v3270 = vadd.f32 %v3269, %v3239
        %v3271 = vadd.f32 %v3270, %v3240
        %v3272 = vadd.f32 %v3271, %v3241
        %v3273 = vadd.f32 %v3272, %v3242
        %v3274 = vadd.f32 %v3273, %v3243
        %v3275 = vadd.f32 %v3274, %v3244
        %v3276 = vadd.f32 %v3275, %v3245
        %v3277 = vadd.f32 %v3276, %v3246
        %v3278 = vadd.f32 %v3277, %v3247
        %v3279 = vadd.f32 %v3278, %v3248
        %v3280 = vadd.f32 %v3279, %v3249
        %v3281 = vadd.f32 %v3280, %v3250
        %v3282 = vadd.f32 %v3281, %v3251
        %v3283 = vadd.f32 %v3282, %v3252
        %v3284 = vadd.f32 %v3283, %v3253
        %v3285 = vadd.f32 %v3284, %v3254
        %v3286 = vadd.f32 %v3285, %v3255
        %v3287 = vadd.f32 %v3286, %v3256
        %v3288 = vadd.f32 %v3287, %v3257
        %v3289 = vadd.f32 %v3288, %v3258
        %3290 = vadd.xlane.f32.xlu0 %v3289
        %v3291 = vpop.xlane.xlu0 %3290
        %v3292 = vrot.slane %v3291, 4
        %v3293 = vadd.f32 %v3291, %v3292
        %v3294 = vrot.slane %v3293, 2
        %v3295 = vadd.f32 %v3293, %v3294
        %v3296 = vrot.slane %v3295, 1
        %v3297 = vadd.f32 %v3295, %v3296
        %s3298 = vtos %v3297
        %v3299 = vrcp.pop 8192.0
        %s3300 = vtos %v3299
        %s3301 = smul.f32 %s3298, %s3300
        %v3302 = vstv %s3301
        %v3303 = vsub.f32 %v2903, %v3302
        %v3304 = vsub.f32 %v2904, %v3302
        %v3305 = vsub.f32 %v2905, %v3302
        %v3306 = vsub.f32 %v2906, %v3302
        %v3307 = vsub.f32 %v2907, %v3302
        %v3308 = vsub.f32 %v2908, %v3302
        %v3309 = vsub.f32 %v2909, %v3302
        %v3310 = vsub.f32 %v2910, %v3302
        %v3311 = vsub.f32 %v2911, %v3302
        %v3312 = vsub.f32 %v2912, %v3302
        %v3313 = vsub.f32 %v2913, %v3302
        %v3314 = vsub.f32 %v2914, %v3302
        %v3315 = vsub.f32 %v2915, %v3302
        %v3316 = vsub.f32 %v2916, %v3302
        %v3317 = vsub.f32 %v2917, %v3302
        %v3318 = vsub.f32 %v2918, %v3302
        %v3319 = vsub.f32 %v2919, %v3302
        %v3320 = vsub.f32 %v2920, %v3302
        %v3321 = vsub.f32 %v2921, %v3302
        %v3322 = vsub.f32 %v2922, %v3302
        %v3323 = vsub.f32 %v2923, %v3302
        %v3324 = vsub.f32 %v2924, %v3302
        %v3325 = vsub.f32 %v2925, %v3302
        %v3326 = vsub.f32 %v2926, %v3302
        %v3327 = vsub.f32 %v2927, %v3302
        %v3328 = vsub.f32 %v2928, %v3302
        %v3329 = vsub.f32 %v2929, %v3302
        %v3330 = vsub.f32 %v2930, %v3302
        %v3331 = vsub.f32 %v2931, %v3302
        %v3332 = vsub.f32 %v2932, %v3302
        %v3333 = vsub.f32 %v2933, %v3302
        %v3334 = vsub.f32 %v2934, %v3302
        %v3335 = vsel %vm3226, %v3303, 0.0
        %v3336 = vsel %vm3226, %v3304, 0.0
        %v3337 = vsel %vm3226, %v3305, 0.0
        %v3338 = vsel %vm3226, %v3306, 0.0
        %v3339 = vsel %vm3226, %v3307, 0.0
        %v3340 = vsel %vm3226, %v3308, 0.0
        %v3341 = vsel %vm3226, %v3309, 0.0
        %v3342 = vsel %vm3226, %v3310, 0.0
        %v3343 = vsel %vm3226, %v3311, 0.0
        %v3344 = vsel %vm3226, %v3312, 0.0
        %v3345 = vsel %vm3226, %v3313, 0.0
        %v3346 = vsel %vm3226, %v3314, 0.0
        %v3347 = vsel %vm3226, %v3315, 0.0
        %v3348 = vsel %vm3226, %v3316, 0.0
        %v3349 = vsel %vm3226, %v3317, 0.0
        %v3350 = vsel %vm3226, %v3318, 0.0
        %v3351 = vsel %vm3226, %v3319, 0.0
        %v3352 = vsel %vm3226, %v3320, 0.0
        %v3353 = vsel %vm3226, %v3321, 0.0
        %v3354 = vsel %vm3226, %v3322, 0.0
        %v3355 = vsel %vm3226, %v3323, 0.0
        %v3356 = vsel %vm3226, %v3324, 0.0
        %v3357 = vsel %vm3226, %v3325, 0.0
        %v3358 = vsel %vm3226, %v3326, 0.0
        %v3359 = vsel %vm3226, %v3327, 0.0
        %v3360 = vsel %vm3226, %v3328, 0.0
        %v3361 = vsel %vm3226, %v3329, 0.0
        %v3362 = vsel %vm3226, %v3330, 0.0
        %v3363 = vsel %vm3226, %v3331, 0.0
        %v3364 = vsel %vm3226, %v3332, 0.0
        %v3365 = vsel %vm3226, %v3333, 0.0
        %v3366 = vsel %vm3226, %v3334, 0.0
        %v3367 = vmul.f32 %v3335, %v3335
        %v3368 = vmul.f32 %v3336, %v3336
        %v3369 = vmul.f32 %v3337, %v3337
        %v3370 = vmul.f32 %v3338, %v3338
        %v3371 = vmul.f32 %v3339, %v3339
        %v3372 = vmul.f32 %v3340, %v3340
        %v3373 = vmul.f32 %v3341, %v3341
        %v3374 = vmul.f32 %v3342, %v3342
        %v3375 = vmul.f32 %v3343, %v3343
        %v3376 = vmul.f32 %v3344, %v3344
        %v3377 = vmul.f32 %v3345, %v3345
        %v3378 = vmul.f32 %v3346, %v3346
        %v3379 = vmul.f32 %v3347, %v3347
        %v3380 = vmul.f32 %v3348, %v3348
        %v3381 = vmul.f32 %v3349, %v3349
        %v3382 = vmul.f32 %v3350, %v3350
        %v3383 = vmul.f32 %v3351, %v3351
        %v3384 = vmul.f32 %v3352, %v3352
        %v3385 = vmul.f32 %v3353, %v3353
        %v3386 = vmul.f32 %v3354, %v3354
        %v3387 = vmul.f32 %v3355, %v3355
        %v3388 = vmul.f32 %v3356, %v3356
        %v3389 = vmul.f32 %v3357, %v3357
        %v3390 = vmul.f32 %v3358, %v3358
        %v3391 = vmul.f32 %v3359, %v3359
        %v3392 = vmul.f32 %v3360, %v3360
        %v3393 = vmul.f32 %v3361, %v3361
        %v3394 = vmul.f32 %v3362, %v3362
        %v3395 = vmul.f32 %v3363, %v3363
        %v3396 = vmul.f32 %v3364, %v3364
        %v3397 = vmul.f32 %v3365, %v3365
        %v3398 = vmul.f32 %v3366, %v3366
        %v3399 = vadd.f32 %v3367, %v3368
        %v3400 = vadd.f32 %v3399, %v3369
        %v3401 = vadd.f32 %v3400, %v3370
        %v3402 = vadd.f32 %v3401, %v3371
        %v3403 = vadd.f32 %v3402, %v3372
        %v3404 = vadd.f32 %v3403, %v3373
        %v3405 = vadd.f32 %v3404, %v3374
        %v3406 = vadd.f32 %v3405, %v3375
        %v3407 = vadd.f32 %v3406, %v3376
        %v3408 = vadd.f32 %v3407, %v3377
        %v3409 = vadd.f32 %v3408, %v3378
        %v3410 = vadd.f32 %v3409, %v3379
        %v3411 = vadd.f32 %v3410, %v3380
        %v3412 = vadd.f32 %v3411, %v3381
        %v3413 = vadd.f32 %v3412, %v3382
        %v3414 = vadd.f32 %v3413, %v3383
        %v3415 = vadd.f32 %v3414, %v3384
        %v3416 = vadd.f32 %v3415, %v3385
        %v3417 = vadd.f32 %v3416, %v3386
        %v3418 = vadd.f32 %v3417, %v3387
        %v3419 = vadd.f32 %v3418, %v3388
        %v3420 = vadd.f32 %v3419, %v3389
        %v3421 = vadd.f32 %v3420, %v3390
        %v3422 = vadd.f32 %v3421, %v3391
        %v3423 = vadd.f32 %v3422, %v3392
        %v3424 = vadd.f32 %v3423, %v3393
        %v3425 = vadd.f32 %v3424, %v3394
        %v3426 = vadd.f32 %v3425, %v3395
        %v3427 = vadd.f32 %v3426, %v3396
        %v3428 = vadd.f32 %v3427, %v3397
        %v3429 = vadd.f32 %v3428, %v3398
        %3430 = vadd.xlane.f32.xlu0 %v3429
        %v3431 = vpop.xlane.xlu0 %3430
        %v3432 = vrot.slane %v3431, 4
        %v3433 = vadd.f32 %v3431, %v3432
        %v3434 = vrot.slane %v3433, 2
        %v3435 = vadd.f32 %v3433, %v3434
        %v3436 = vrot.slane %v3435, 1
        %v3437 = vadd.f32 %v3435, %v3436
        %s3438 = vtos %v3437
        %v3439 = vrcp.pop 8192.0
        %s3440 = vtos %v3439
        %s3441 = smul.f32 %s3438, %s3440
        %s3442 = sadd.f32 %s3441, 1e-05
        %v3443 = vstv %s3442
        %v3444 = vrsqrt.pop %v3443
        %s3445 = vtos %v3444
        %v3446 = vstv %s3445
        %v3447 = vmul.f32 %v3303, %v3446
        %v3448 = vmul.f32 %v3304, %v3446
        %v3449 = vmul.f32 %v3305, %v3446
        %v3450 = vmul.f32 %v3306, %v3446
        %v3451 = vmul.f32 %v3307, %v3446
        %v3452 = vmul.f32 %v3308, %v3446
        %v3453 = vmul.f32 %v3309, %v3446
        %v3454 = vmul.f32 %v3310, %v3446
        %v3455 = vmul.f32 %v3311, %v3446
        %v3456 = vmul.f32 %v3312, %v3446
        %v3457 = vmul.f32 %v3313, %v3446
        %v3458 = vmul.f32 %v3314, %v3446
        %v3459 = vmul.f32 %v3315, %v3446
        %v3460 = vmul.f32 %v3316, %v3446
        %v3461 = vmul.f32 %v3317, %v3446
        %v3462 = vmul.f32 %v3318, %v3446
        %v3463 = vmul.f32 %v3319, %v3446
        %v3464 = vmul.f32 %v3320, %v3446
        %v3465 = vmul.f32 %v3321, %v3446
        %v3466 = vmul.f32 %v3322, %v3446
        %v3467 = vmul.f32 %v3323, %v3446
        %v3468 = vmul.f32 %v3324, %v3446
        %v3469 = vmul.f32 %v3325, %v3446
        %v3470 = vmul.f32 %v3326, %v3446
        %v3471 = vmul.f32 %v3327, %v3446
        %v3472 = vmul.f32 %v3328, %v3446
        %v3473 = vmul.f32 %v3329, %v3446
        %v3474 = vmul.f32 %v3330, %v3446
        %v3475 = vmul.f32 %v3331, %v3446
        %v3476 = vmul.f32 %v3332, %v3446
        %v3477 = vmul.f32 %v3333, %v3446
        %v3478 = vmul.f32 %v3334, %v3446
        %v3479 = vsel %vm3226, %v3447, %v3192
        %v3480 = vsel %vm3226, %v3448, %v3193
        %v3481 = vsel %vm3226, %v3449, %v3194
        %v3482 = vsel %vm3226, %v3450, %v3195
        %v3483 = vsel %vm3226, %v3451, %v3196
        %v3484 = vsel %vm3226, %v3452, %v3197
        %v3485 = vsel %vm3226, %v3453, %v3198
        %v3486 = vsel %vm3226, %v3454, %v3199
        %v3487 = vsel %vm3226, %v3455, %v3200
        %v3488 = vsel %vm3226, %v3456, %v3201
        %v3489 = vsel %vm3226, %v3457, %v3202
        %v3490 = vsel %vm3226, %v3458, %v3203
        %v3491 = vsel %vm3226, %v3459, %v3204
        %v3492 = vsel %vm3226, %v3460, %v3205
        %v3493 = vsel %vm3226, %v3461, %v3206
        %v3494 = vsel %vm3226, %v3462, %v3207
        %v3495 = vsel %vm3226, %v3463, %v3208
        %v3496 = vsel %vm3226, %v3464, %v3209
        %v3497 = vsel %vm3226, %v3465, %v3210
        %v3498 = vsel %vm3226, %v3466, %v3211
        %v3499 = vsel %vm3226, %v3467, %v3212
        %v3500 = vsel %vm3226, %v3468, %v3213
        %v3501 = vsel %vm3226, %v3469, %v3214
        %v3502 = vsel %vm3226, %v3470, %v3215
        %v3503 = vsel %vm3226, %v3471, %v3216
        %v3504 = vsel %vm3226, %v3472, %v3217
        %v3505 = vsel %vm3226, %v3473, %v3218
        %v3506 = vsel %vm3226, %v3474, %v3219
        %v3507 = vsel %vm3226, %v3475, %v3220
        %v3508 = vsel %vm3226, %v3476, %v3221
        %v3509 = vsel %vm3226, %v3477, %v3222
        %v3510 = vsel %vm3226, %v3478, %v3223
        %vm3511 = vcmp.ge.s32.totalorder %v2936, 64
        %vm3512 = vcmp.lt.s32.totalorder %v2936, 96
        %vm3513 = vmand %vm3511, %vm3512
        %v3514 = vsel %vm3513, %v2903, 0.0
        %v3515 = vsel %vm3513, %v2904, 0.0
        %v3516 = vsel %vm3513, %v2905, 0.0
        %v3517 = vsel %vm3513, %v2906, 0.0
        %v3518 = vsel %vm3513, %v2907, 0.0
        %v3519 = vsel %vm3513, %v2908, 0.0
        %v3520 = vsel %vm3513, %v2909, 0.0
        %v3521 = vsel %vm3513, %v2910, 0.0
        %v3522 = vsel %vm3513, %v2911, 0.0
        %v3523 = vsel %vm3513, %v2912, 0.0
        %v3524 = vsel %vm3513, %v2913, 0.0
        %v3525 = vsel %vm3513, %v2914, 0.0
        %v3526 = vsel %vm3513, %v2915, 0.0
        %v3527 = vsel %vm3513, %v2916, 0.0
        %v3528 = vsel %vm3513, %v2917, 0.0
        %v3529 = vsel %vm3513, %v2918, 0.0
        %v3530 = vsel %vm3513, %v2919, 0.0
        %v3531 = vsel %vm3513, %v2920, 0.0
        %v3532 = vsel %vm3513, %v2921, 0.0
        %v3533 = vsel %vm3513, %v2922, 0.0
        %v3534 = vsel %vm3513, %v2923, 0.0
        %v3535 = vsel %vm3513, %v2924, 0.0
        %v3536 = vsel %vm3513, %v2925, 0.0
        %v3537 = vsel %vm3513, %v2926, 0.0
        %v3538 = vsel %vm3513, %v2927, 0.0
        %v3539 = vsel %vm3513, %v2928, 0.0
        %v3540 = vsel %vm3513, %v2929, 0.0
        %v3541 = vsel %vm3513, %v2930, 0.0
        %v3542 = vsel %vm3513, %v2931, 0.0
        %v3543 = vsel %vm3513, %v2932, 0.0
        %v3544 = vsel %vm3513, %v2933, 0.0
        %v3545 = vsel %vm3513, %v2934, 0.0
        %v3546 = vadd.f32 %v3514, %v3515
        %v3547 = vadd.f32 %v3546, %v3516
        %v3548 = vadd.f32 %v3547, %v3517
        %v3549 = vadd.f32 %v3548, %v3518
        %v3550 = vadd.f32 %v3549, %v3519
        %v3551 = vadd.f32 %v3550, %v3520
        %v3552 = vadd.f32 %v3551, %v3521
        %v3553 = vadd.f32 %v3552, %v3522
        %v3554 = vadd.f32 %v3553, %v3523
        %v3555 = vadd.f32 %v3554, %v3524
        %v3556 = vadd.f32 %v3555, %v3525
        %v3557 = vadd.f32 %v3556, %v3526
        %v3558 = vadd.f32 %v3557, %v3527
        %v3559 = vadd.f32 %v3558, %v3528
        %v3560 = vadd.f32 %v3559, %v3529
        %v3561 = vadd.f32 %v3560, %v3530
        %v3562 = vadd.f32 %v3561, %v3531
        %v3563 = vadd.f32 %v3562, %v3532
        %v3564 = vadd.f32 %v3563, %v3533
        %v3565 = vadd.f32 %v3564, %v3534
        %v3566 = vadd.f32 %v3565, %v3535
        %v3567 = vadd.f32 %v3566, %v3536
        %v3568 = vadd.f32 %v3567, %v3537
        %v3569 = vadd.f32 %v3568, %v3538
        %v3570 = vadd.f32 %v3569, %v3539
        %v3571 = vadd.f32 %v3570, %v3540
        %v3572 = vadd.f32 %v3571, %v3541
        %v3573 = vadd.f32 %v3572, %v3542
        %v3574 = vadd.f32 %v3573, %v3543
        %v3575 = vadd.f32 %v3574, %v3544
        %v3576 = vadd.f32 %v3575, %v3545
        %3577 = vadd.xlane.f32.xlu0 %v3576
        %v3578 = vpop.xlane.xlu0 %3577
        %v3579 = vrot.slane %v3578, 4
        %v3580 = vadd.f32 %v3578, %v3579
        %v3581 = vrot.slane %v3580, 2
        %v3582 = vadd.f32 %v3580, %v3581
        %v3583 = vrot.slane %v3582, 1
        %v3584 = vadd.f32 %v3582, %v3583
        %s3585 = vtos %v3584
        %v3586 = vrcp.pop 8192.0
        %s3587 = vtos %v3586
        %s3588 = smul.f32 %s3585, %s3587
        %v3589 = vstv %s3588
        %v3590 = vsub.f32 %v2903, %v3589
        %v3591 = vsub.f32 %v2904, %v3589
        %v3592 = vsub.f32 %v2905, %v3589
        %v3593 = vsub.f32 %v2906, %v3589
        %v3594 = vsub.f32 %v2907, %v3589
        %v3595 = vsub.f32 %v2908, %v3589
        %v3596 = vsub.f32 %v2909, %v3589
        %v3597 = vsub.f32 %v2910, %v3589
        %v3598 = vsub.f32 %v2911, %v3589
        %v3599 = vsub.f32 %v2912, %v3589
        %v3600 = vsub.f32 %v2913, %v3589
        %v3601 = vsub.f32 %v2914, %v3589
        %v3602 = vsub.f32 %v2915, %v3589
        %v3603 = vsub.f32 %v2916, %v3589
        %v3604 = vsub.f32 %v2917, %v3589
        %v3605 = vsub.f32 %v2918, %v3589
        %v3606 = vsub.f32 %v2919, %v3589
        %v3607 = vsub.f32 %v2920, %v3589
        %v3608 = vsub.f32 %v2921, %v3589
        %v3609 = vsub.f32 %v2922, %v3589
        %v3610 = vsub.f32 %v2923, %v3589
        %v3611 = vsub.f32 %v2924, %v3589
        %v3612 = vsub.f32 %v2925, %v3589
        %v3613 = vsub.f32 %v2926, %v3589
        %v3614 = vsub.f32 %v2927, %v3589
        %v3615 = vsub.f32 %v2928, %v3589
        %v3616 = vsub.f32 %v2929, %v3589
        %v3617 = vsub.f32 %v2930, %v3589
        %v3618 = vsub.f32 %v2931, %v3589
        %v3619 = vsub.f32 %v2932, %v3589
        %v3620 = vsub.f32 %v2933, %v3589
        %v3621 = vsub.f32 %v2934, %v3589
        %v3622 = vsel %vm3513, %v3590, 0.0
        %v3623 = vsel %vm3513, %v3591, 0.0
        %v3624 = vsel %vm3513, %v3592, 0.0
        %v3625 = vsel %vm3513, %v3593, 0.0
        %v3626 = vsel %vm3513, %v3594, 0.0
        %v3627 = vsel %vm3513, %v3595, 0.0
        %v3628 = vsel %vm3513, %v3596, 0.0
        %v3629 = vsel %vm3513, %v3597, 0.0
        %v3630 = vsel %vm3513, %v3598, 0.0
        %v3631 = vsel %vm3513, %v3599, 0.0
        %v3632 = vsel %vm3513, %v3600, 0.0
        %v3633 = vsel %vm3513, %v3601, 0.0
        %v3634 = vsel %vm3513, %v3602, 0.0
        %v3635 = vsel %vm3513, %v3603, 0.0
        %v3636 = vsel %vm3513, %v3604, 0.0
        %v3637 = vsel %vm3513, %v3605, 0.0
        %v3638 = vsel %vm3513, %v3606, 0.0
        %v3639 = vsel %vm3513, %v3607, 0.0
        %v3640 = vsel %vm3513, %v3608, 0.0
        %v3641 = vsel %vm3513, %v3609, 0.0
        %v3642 = vsel %vm3513, %v3610, 0.0
        %v3643 = vsel %vm3513, %v3611, 0.0
        %v3644 = vsel %vm3513, %v3612, 0.0
        %v3645 = vsel %vm3513, %v3613, 0.0
        %v3646 = vsel %vm3513, %v3614, 0.0
        %v3647 = vsel %vm3513, %v3615, 0.0
        %v3648 = vsel %vm3513, %v3616, 0.0
        %v3649 = vsel %vm3513, %v3617, 0.0
        %v3650 = vsel %vm3513, %v3618, 0.0
        %v3651 = vsel %vm3513, %v3619, 0.0
        %v3652 = vsel %vm3513, %v3620, 0.0
        %v3653 = vsel %vm3513, %v3621, 0.0
        %v3654 = vmul.f32 %v3622, %v3622
        %v3655 = vmul.f32 %v3623, %v3623
        %v3656 = vmul.f32 %v3624, %v3624
        %v3657 = vmul.f32 %v3625, %v3625
        %v3658 = vmul.f32 %v3626, %v3626
        %v3659 = vmul.f32 %v3627, %v3627
        %v3660 = vmul.f32 %v3628, %v3628
        %v3661 = vmul.f32 %v3629, %v3629
        %v3662 = vmul.f32 %v3630, %v3630
        %v3663 = vmul.f32 %v3631, %v3631
        %v3664 = vmul.f32 %v3632, %v3632
        %v3665 = vmul.f32 %v3633, %v3633
        %v3666 = vmul.f32 %v3634, %v3634
        %v3667 = vmul.f32 %v3635, %v3635
        %v3668 = vmul.f32 %v3636, %v3636
        %v3669 = vmul.f32 %v3637, %v3637
        %v3670 = vmul.f32 %v3638, %v3638
        %v3671 = vmul.f32 %v3639, %v3639
        %v3672 = vmul.f32 %v3640, %v3640
        %v3673 = vmul.f32 %v3641, %v3641
        %v3674 = vmul.f32 %v3642, %v3642
        %v3675 = vmul.f32 %v3643, %v3643
        %v3676 = vmul.f32 %v3644, %v3644
        %v3677 = vmul.f32 %v3645, %v3645
        %v3678 = vmul.f32 %v3646, %v3646
        %v3679 = vmul.f32 %v3647, %v3647
        %v3680 = vmul.f32 %v3648, %v3648
        %v3681 = vmul.f32 %v3649, %v3649
        %v3682 = vmul.f32 %v3650, %v3650
        %v3683 = vmul.f32 %v3651, %v3651
        %v3684 = vmul.f32 %v3652, %v3652
        %v3685 = vmul.f32 %v3653, %v3653
        %v3686 = vadd.f32 %v3654, %v3655
        %v3687 = vadd.f32 %v3686, %v3656
        %v3688 = vadd.f32 %v3687, %v3657
        %v3689 = vadd.f32 %v3688, %v3658
        %v3690 = vadd.f32 %v3689, %v3659
        %v3691 = vadd.f32 %v3690, %v3660
        %v3692 = vadd.f32 %v3691, %v3661
        %v3693 = vadd.f32 %v3692, %v3662
        %v3694 = vadd.f32 %v3693, %v3663
        %v3695 = vadd.f32 %v3694, %v3664
        %v3696 = vadd.f32 %v3695, %v3665
        %v3697 = vadd.f32 %v3696, %v3666
        %v3698 = vadd.f32 %v3697, %v3667
        %v3699 = vadd.f32 %v3698, %v3668
        %v3700 = vadd.f32 %v3699, %v3669
        %v3701 = vadd.f32 %v3700, %v3670
        %v3702 = vadd.f32 %v3701, %v3671
        %v3703 = vadd.f32 %v3702, %v3672
        %v3704 = vadd.f32 %v3703, %v3673
        %v3705 = vadd.f32 %v3704, %v3674
        %v3706 = vadd.f32 %v3705, %v3675
        %v3707 = vadd.f32 %v3706, %v3676
        %v3708 = vadd.f32 %v3707, %v3677
        %v3709 = vadd.f32 %v3708, %v3678
        %v3710 = vadd.f32 %v3709, %v3679
        %v3711 = vadd.f32 %v3710, %v3680
        %v3712 = vadd.f32 %v3711, %v3681
        %v3713 = vadd.f32 %v3712, %v3682
        %v3714 = vadd.f32 %v3713, %v3683
        %v3715 = vadd.f32 %v3714, %v3684
        %v3716 = vadd.f32 %v3715, %v3685
        %3717 = vadd.xlane.f32.xlu0 %v3716
        %v3718 = vpop.xlane.xlu0 %3717
        %v3719 = vrot.slane %v3718, 4
        %v3720 = vadd.f32 %v3718, %v3719
        %v3721 = vrot.slane %v3720, 2
        %v3722 = vadd.f32 %v3720, %v3721
        %v3723 = vrot.slane %v3722, 1
        %v3724 = vadd.f32 %v3722, %v3723
        %s3725 = vtos %v3724
        %v3726 = vrcp.pop 8192.0
        %s3727 = vtos %v3726
        %s3728 = smul.f32 %s3725, %s3727
        %s3729 = sadd.f32 %s3728, 1e-05
        %v3730 = vstv %s3729
        %v3731 = vrsqrt.pop %v3730
        %s3732 = vtos %v3731
        %v3733 = vstv %s3732
        %v3734 = vmul.f32 %v3590, %v3733
        %v3735 = vmul.f32 %v3591, %v3733
        %v3736 = vmul.f32 %v3592, %v3733
        %v3737 = vmul.f32 %v3593, %v3733
        %v3738 = vmul.f32 %v3594, %v3733
        %v3739 = vmul.f32 %v3595, %v3733
        %v3740 = vmul.f32 %v3596, %v3733
        %v3741 = vmul.f32 %v3597, %v3733
        %v3742 = vmul.f32 %v3598, %v3733
        %v3743 = vmul.f32 %v3599, %v3733
        %v3744 = vmul.f32 %v3600, %v3733
        %v3745 = vmul.f32 %v3601, %v3733
        %v3746 = vmul.f32 %v3602, %v3733
        %v3747 = vmul.f32 %v3603, %v3733
        %v3748 = vmul.f32 %v3604, %v3733
        %v3749 = vmul.f32 %v3605, %v3733
        %v3750 = vmul.f32 %v3606, %v3733
        %v3751 = vmul.f32 %v3607, %v3733
        %v3752 = vmul.f32 %v3608, %v3733
        %v3753 = vmul.f32 %v3609, %v3733
        %v3754 = vmul.f32 %v3610, %v3733
        %v3755 = vmul.f32 %v3611, %v3733
        %v3756 = vmul.f32 %v3612, %v3733
        %v3757 = vmul.f32 %v3613, %v3733
        %v3758 = vmul.f32 %v3614, %v3733
        %v3759 = vmul.f32 %v3615, %v3733
        %v3760 = vmul.f32 %v3616, %v3733
        %v3761 = vmul.f32 %v3617, %v3733
        %v3762 = vmul.f32 %v3618, %v3733
        %v3763 = vmul.f32 %v3619, %v3733
        %v3764 = vmul.f32 %v3620, %v3733
        %v3765 = vmul.f32 %v3621, %v3733
        %v3766 = vsel %vm3513, %v3734, %v3479
        %v3767 = vsel %vm3513, %v3735, %v3480
        %v3768 = vsel %vm3513, %v3736, %v3481
        %v3769 = vsel %vm3513, %v3737, %v3482
        %v3770 = vsel %vm3513, %v3738, %v3483
        %v3771 = vsel %vm3513, %v3739, %v3484
        %v3772 = vsel %vm3513, %v3740, %v3485
        %v3773 = vsel %vm3513, %v3741, %v3486
        %v3774 = vsel %vm3513, %v3742, %v3487
        %v3775 = vsel %vm3513, %v3743, %v3488
        %v3776 = vsel %vm3513, %v3744, %v3489
        %v3777 = vsel %vm3513, %v3745, %v3490
        %v3778 = vsel %vm3513, %v3746, %v3491
        %v3779 = vsel %vm3513, %v3747, %v3492
        %v3780 = vsel %vm3513, %v3748, %v3493
        %v3781 = vsel %vm3513, %v3749, %v3494
        %v3782 = vsel %vm3513, %v3750, %v3495
        %v3783 = vsel %vm3513, %v3751, %v3496
        %v3784 = vsel %vm3513, %v3752, %v3497
        %v3785 = vsel %vm3513, %v3753, %v3498
        %v3786 = vsel %vm3513, %v3754, %v3499
        %v3787 = vsel %vm3513, %v3755, %v3500
        %v3788 = vsel %vm3513, %v3756, %v3501
        %v3789 = vsel %vm3513, %v3757, %v3502
        %v3790 = vsel %vm3513, %v3758, %v3503
        %v3791 = vsel %vm3513, %v3759, %v3504
        %v3792 = vsel %vm3513, %v3760, %v3505
        %v3793 = vsel %vm3513, %v3761, %v3506
        %v3794 = vsel %vm3513, %v3762, %v3507
        %v3795 = vsel %vm3513, %v3763, %v3508
        %v3796 = vsel %vm3513, %v3764, %v3509
        %v3797 = vsel %vm3513, %v3765, %v3510
        %vm3798 = vcmp.ge.s32.totalorder %v2936, 96
        %vm3799 = vcmp.lt.s32.totalorder %v2936, 128
        %vm3800 = vmand %vm3798, %vm3799
        %v3801 = vsel %vm3800, %v2903, 0.0
        %v3802 = vsel %vm3800, %v2904, 0.0
        %v3803 = vsel %vm3800, %v2905, 0.0
        %v3804 = vsel %vm3800, %v2906, 0.0
        %v3805 = vsel %vm3800, %v2907, 0.0
        %v3806 = vsel %vm3800, %v2908, 0.0
        %v3807 = vsel %vm3800, %v2909, 0.0
        %v3808 = vsel %vm3800, %v2910, 0.0
        %v3809 = vsel %vm3800, %v2911, 0.0
        %v3810 = vsel %vm3800, %v2912, 0.0
        %v3811 = vsel %vm3800, %v2913, 0.0
        %v3812 = vsel %vm3800, %v2914, 0.0
        %v3813 = vsel %vm3800, %v2915, 0.0
        %v3814 = vsel %vm3800, %v2916, 0.0
        %v3815 = vsel %vm3800, %v2917, 0.0
        %v3816 = vsel %vm3800, %v2918, 0.0
        %v3817 = vsel %vm3800, %v2919, 0.0
        %v3818 = vsel %vm3800, %v2920, 0.0
        %v3819 = vsel %vm3800, %v2921, 0.0
        %v3820 = vsel %vm3800, %v2922, 0.0
        %v3821 = vsel %vm3800, %v2923, 0.0
        %v3822 = vsel %vm3800, %v2924, 0.0
        %v3823 = vsel %vm3800, %v2925, 0.0
        %v3824 = vsel %vm3800, %v2926, 0.0
        %v3825 = vsel %vm3800, %v2927, 0.0
        %v3826 = vsel %vm3800, %v2928, 0.0
        %v3827 = vsel %vm3800, %v2929, 0.0
        %v3828 = vsel %vm3800, %v2930, 0.0
        %v3829 = vsel %vm3800, %v2931, 0.0
        %v3830 = vsel %vm3800, %v2932, 0.0
        %v3831 = vsel %vm3800, %v2933, 0.0
        %v3832 = vsel %vm3800, %v2934, 0.0
        %v3833 = vadd.f32 %v3801, %v3802
        %v3834 = vadd.f32 %v3833, %v3803
        %v3835 = vadd.f32 %v3834, %v3804
        %v3836 = vadd.f32 %v3835, %v3805
        %v3837 = vadd.f32 %v3836, %v3806
        %v3838 = vadd.f32 %v3837, %v3807
        %v3839 = vadd.f32 %v3838, %v3808
        %v3840 = vadd.f32 %v3839, %v3809
        %v3841 = vadd.f32 %v3840, %v3810
        %v3842 = vadd.f32 %v3841, %v3811
        %v3843 = vadd.f32 %v3842, %v3812
        %v3844 = vadd.f32 %v3843, %v3813
        %v3845 = vadd.f32 %v3844, %v3814
        %v3846 = vadd.f32 %v3845, %v3815
        %v3847 = vadd.f32 %v3846, %v3816
        %v3848 = vadd.f32 %v3847, %v3817
        %v3849 = vadd.f32 %v3848, %v3818
        %v3850 = vadd.f32 %v3849, %v3819
        %v3851 = vadd.f32 %v3850, %v3820
        %v3852 = vadd.f32 %v3851, %v3821
        %v3853 = vadd.f32 %v3852, %v3822
        %v3854 = vadd.f32 %v3853, %v3823
        %v3855 = vadd.f32 %v3854, %v3824
        %v3856 = vadd.f32 %v3855, %v3825
        %v3857 = vadd.f32 %v3856, %v3826
        %v3858 = vadd.f32 %v3857, %v3827
        %v3859 = vadd.f32 %v3858, %v3828
        %v3860 = vadd.f32 %v3859, %v3829
        %v3861 = vadd.f32 %v3860, %v3830
        %v3862 = vadd.f32 %v3861, %v3831
        %v3863 = vadd.f32 %v3862, %v3832
        %3864 = vadd.xlane.f32.xlu0 %v3863
        %v3865 = vpop.xlane.xlu0 %3864
        %v3866 = vrot.slane %v3865, 4
        %v3867 = vadd.f32 %v3865, %v3866
        %v3868 = vrot.slane %v3867, 2
        %v3869 = vadd.f32 %v3867, %v3868
        %v3870 = vrot.slane %v3869, 1
        %v3871 = vadd.f32 %v3869, %v3870
        %s3872 = vtos %v3871
        %v3873 = vrcp.pop 8192.0
        %s3874 = vtos %v3873
        %s3875 = smul.f32 %s3872, %s3874
        %v3876 = vstv %s3875
        %v3877 = vsub.f32 %v2903, %v3876
        %v3878 = vsub.f32 %v2904, %v3876
        %v3879 = vsub.f32 %v2905, %v3876
        %v3880 = vsub.f32 %v2906, %v3876
        %v3881 = vsub.f32 %v2907, %v3876
        %v3882 = vsub.f32 %v2908, %v3876
        %v3883 = vsub.f32 %v2909, %v3876
        %v3884 = vsub.f32 %v2910, %v3876
        %v3885 = vsub.f32 %v2911, %v3876
        %v3886 = vsub.f32 %v2912, %v3876
        %v3887 = vsub.f32 %v2913, %v3876
        %v3888 = vsub.f32 %v2914, %v3876
        %v3889 = vsub.f32 %v2915, %v3876
        %v3890 = vsub.f32 %v2916, %v3876
        %v3891 = vsub.f32 %v2917, %v3876
        %v3892 = vsub.f32 %v2918, %v3876
        %v3893 = vsub.f32 %v2919, %v3876
        %v3894 = vsub.f32 %v2920, %v3876
        %v3895 = vsub.f32 %v2921, %v3876
        %v3896 = vsub.f32 %v2922, %v3876
        %v3897 = vsub.f32 %v2923, %v3876
        %v3898 = vsub.f32 %v2924, %v3876
        %v3899 = vsub.f32 %v2925, %v3876
        %v3900 = vsub.f32 %v2926, %v3876
        %v3901 = vsub.f32 %v2927, %v3876
        %v3902 = vsub.f32 %v2928, %v3876
        %v3903 = vsub.f32 %v2929, %v3876
        %v3904 = vsub.f32 %v2930, %v3876
        %v3905 = vsub.f32 %v2931, %v3876
        %v3906 = vsub.f32 %v2932, %v3876
        %v3907 = vsub.f32 %v2933, %v3876
        %v3908 = vsub.f32 %v2934, %v3876
        %v3909 = vsel %vm3800, %v3877, 0.0
        %v3910 = vsel %vm3800, %v3878, 0.0
        %v3911 = vsel %vm3800, %v3879, 0.0
        %v3912 = vsel %vm3800, %v3880, 0.0
        %v3913 = vsel %vm3800, %v3881, 0.0
        %v3914 = vsel %vm3800, %v3882, 0.0
        %v3915 = vsel %vm3800, %v3883, 0.0
        %v3916 = vsel %vm3800, %v3884, 0.0
        %v3917 = vsel %vm3800, %v3885, 0.0
        %v3918 = vsel %vm3800, %v3886, 0.0
        %v3919 = vsel %vm3800, %v3887, 0.0
        %v3920 = vsel %vm3800, %v3888, 0.0
        %v3921 = vsel %vm3800, %v3889, 0.0
        %v3922 = vsel %vm3800, %v3890, 0.0
        %v3923 = vsel %vm3800, %v3891, 0.0
        %v3924 = vsel %vm3800, %v3892, 0.0
        %v3925 = vsel %vm3800, %v3893, 0.0
        %v3926 = vsel %vm3800, %v3894, 0.0
        %v3927 = vsel %vm3800, %v3895, 0.0
        %v3928 = vsel %vm3800, %v3896, 0.0
        %v3929 = vsel %vm3800, %v3897, 0.0
        %v3930 = vsel %vm3800, %v3898, 0.0
        %v3931 = vsel %vm3800, %v3899, 0.0
        %v3932 = vsel %vm3800, %v3900, 0.0
        %v3933 = vsel %vm3800, %v3901, 0.0
        %v3934 = vsel %vm3800, %v3902, 0.0
        %v3935 = vsel %vm3800, %v3903, 0.0
        %v3936 = vsel %vm3800, %v3904, 0.0
        %v3937 = vsel %vm3800, %v3905, 0.0
        %v3938 = vsel %vm3800, %v3906, 0.0
        %v3939 = vsel %vm3800, %v3907, 0.0
        %v3940 = vsel %vm3800, %v3908, 0.0
        %v3941 = vmul.f32 %v3909, %v3909
        %v3942 = vmul.f32 %v3910, %v3910
        %v3943 = vmul.f32 %v3911, %v3911
        %v3944 = vmul.f32 %v3912, %v3912
        %v3945 = vmul.f32 %v3913, %v3913
        %v3946 = vmul.f32 %v3914, %v3914
        %v3947 = vmul.f32 %v3915, %v3915
        %v3948 = vmul.f32 %v3916, %v3916
        %v3949 = vmul.f32 %v3917, %v3917
        %v3950 = vmul.f32 %v3918, %v3918
        %v3951 = vmul.f32 %v3919, %v3919
        %v3952 = vmul.f32 %v3920, %v3920
        %v3953 = vmul.f32 %v3921, %v3921
        %v3954 = vmul.f32 %v3922, %v3922
        %v3955 = vmul.f32 %v3923, %v3923
        %v3956 = vmul.f32 %v3924, %v3924
        %v3957 = vmul.f32 %v3925, %v3925
        %v3958 = vmul.f32 %v3926, %v3926
        %v3959 = vmul.f32 %v3927, %v3927
        %v3960 = vmul.f32 %v3928, %v3928
        %v3961 = vmul.f32 %v3929, %v3929
        %v3962 = vmul.f32 %v3930, %v3930
        %v3963 = vmul.f32 %v3931, %v3931
        %v3964 = vmul.f32 %v3932, %v3932
        %v3965 = vmul.f32 %v3933, %v3933
        %v3966 = vmul.f32 %v3934, %v3934
        %v3967 = vmul.f32 %v3935, %v3935
        %v3968 = vmul.f32 %v3936, %v3936
        %v3969 = vmul.f32 %v3937, %v3937
        %v3970 = vmul.f32 %v3938, %v3938
        %v3971 = vmul.f32 %v3939, %v3939
        %v3972 = vmul.f32 %v3940, %v3940
        %v3973 = vadd.f32 %v3941, %v3942
        %v3974 = vadd.f32 %v3973, %v3943
        %v3975 = vadd.f32 %v3974, %v3944
        %v3976 = vadd.f32 %v3975, %v3945
        %v3977 = vadd.f32 %v3976, %v3946
        %v3978 = vadd.f32 %v3977, %v3947
        %v3979 = vadd.f32 %v3978, %v3948
        %v3980 = vadd.f32 %v3979, %v3949
        %v3981 = vadd.f32 %v3980, %v3950
        %v3982 = vadd.f32 %v3981, %v3951
        %v3983 = vadd.f32 %v3982, %v3952
        %v3984 = vadd.f32 %v3983, %v3953
        %v3985 = vadd.f32 %v3984, %v3954
        %v3986 = vadd.f32 %v3985, %v3955
        %v3987 = vadd.f32 %v3986, %v3956
        %v3988 = vadd.f32 %v3987, %v3957
        %v3989 = vadd.f32 %v3988, %v3958
        %v3990 = vadd.f32 %v3989, %v3959
        %v3991 = vadd.f32 %v3990, %v3960
        %v3992 = vadd.f32 %v3991, %v3961
        %v3993 = vadd.f32 %v3992, %v3962
        %v3994 = vadd.f32 %v3993, %v3963
        %v3995 = vadd.f32 %v3994, %v3964
        %v3996 = vadd.f32 %v3995, %v3965
        %v3997 = vadd.f32 %v3996, %v3966
        %v3998 = vadd.f32 %v3997, %v3967
        %v3999 = vadd.f32 %v3998, %v3968
        %v4000 = vadd.f32 %v3999, %v3969
        %v4001 = vadd.f32 %v4000, %v3970
        %v4002 = vadd.f32 %v4001, %v3971
        %v4003 = vadd.f32 %v4002, %v3972
        %4004 = vadd.xlane.f32.xlu0 %v4003
        %v4005 = vpop.xlane.xlu0 %4004
        %v4006 = vrot.slane %v4005, 4
        %v4007 = vadd.f32 %v4005, %v4006
        %v4008 = vrot.slane %v4007, 2
        %v4009 = vadd.f32 %v4007, %v4008
        %v4010 = vrot.slane %v4009, 1
        %v4011 = vadd.f32 %v4009, %v4010
        %s4012 = vtos %v4011
        %v4013 = vrcp.pop 8192.0
        %s4014 = vtos %v4013
        %s4015 = smul.f32 %s4012, %s4014
        %s4016 = sadd.f32 %s4015, 1e-05
        %v4017 = vstv %s4016
        %v4018 = vrsqrt.pop %v4017
        %s4019 = vtos %v4018
        %v4020 = vstv %s4019
        %v4021 = vmul.f32 %v3877, %v4020
        %v4022 = vmul.f32 %v3878, %v4020
        %v4023 = vmul.f32 %v3879, %v4020
        %v4024 = vmul.f32 %v3880, %v4020
        %v4025 = vmul.f32 %v3881, %v4020
        %v4026 = vmul.f32 %v3882, %v4020
        %v4027 = vmul.f32 %v3883, %v4020
        %v4028 = vmul.f32 %v3884, %v4020
        %v4029 = vmul.f32 %v3885, %v4020
        %v4030 = vmul.f32 %v3886, %v4020
        %v4031 = vmul.f32 %v3887, %v4020
        %v4032 = vmul.f32 %v3888, %v4020
        %v4033 = vmul.f32 %v3889, %v4020
        %v4034 = vmul.f32 %v3890, %v4020
        %v4035 = vmul.f32 %v3891, %v4020
        %v4036 = vmul.f32 %v3892, %v4020
        %v4037 = vmul.f32 %v3893, %v4020
        %v4038 = vmul.f32 %v3894, %v4020
        %v4039 = vmul.f32 %v3895, %v4020
        %v4040 = vmul.f32 %v3896, %v4020
        %v4041 = vmul.f32 %v3897, %v4020
        %v4042 = vmul.f32 %v3898, %v4020
        %v4043 = vmul.f32 %v3899, %v4020
        %v4044 = vmul.f32 %v3900, %v4020
        %v4045 = vmul.f32 %v3901, %v4020
        %v4046 = vmul.f32 %v3902, %v4020
        %v4047 = vmul.f32 %v3903, %v4020
        %v4048 = vmul.f32 %v3904, %v4020
        %v4049 = vmul.f32 %v3905, %v4020
        %v4050 = vmul.f32 %v3906, %v4020
        %v4051 = vmul.f32 %v3907, %v4020
        %v4052 = vmul.f32 %v3908, %v4020
        %v4053 = vsel %vm3800, %v4021, %v3766
        %v4054 = vsel %vm3800, %v4022, %v3767
        %v4055 = vsel %vm3800, %v4023, %v3768
        %v4056 = vsel %vm3800, %v4024, %v3769
        %v4057 = vsel %vm3800, %v4025, %v3770
        %v4058 = vsel %vm3800, %v4026, %v3771
        %v4059 = vsel %vm3800, %v4027, %v3772
        %v4060 = vsel %vm3800, %v4028, %v3773
        %v4061 = vsel %vm3800, %v4029, %v3774
        %v4062 = vsel %vm3800, %v4030, %v3775
        %v4063 = vsel %vm3800, %v4031, %v3776
        %v4064 = vsel %vm3800, %v4032, %v3777
        %v4065 = vsel %vm3800, %v4033, %v3778
        %v4066 = vsel %vm3800, %v4034, %v3779
        %v4067 = vsel %vm3800, %v4035, %v3780
        %v4068 = vsel %vm3800, %v4036, %v3781
        %v4069 = vsel %vm3800, %v4037, %v3782
        %v4070 = vsel %vm3800, %v4038, %v3783
        %v4071 = vsel %vm3800, %v4039, %v3784
        %v4072 = vsel %vm3800, %v4040, %v3785
        %v4073 = vsel %vm3800, %v4041, %v3786
        %v4074 = vsel %vm3800, %v4042, %v3787
        %v4075 = vsel %vm3800, %v4043, %v3788
        %v4076 = vsel %vm3800, %v4044, %v3789
        %v4077 = vsel %vm3800, %v4045, %v3790
        %v4078 = vsel %vm3800, %v4046, %v3791
        %v4079 = vsel %vm3800, %v4047, %v3792
        %v4080 = vsel %vm3800, %v4048, %v3793
        %v4081 = vsel %vm3800, %v4049, %v3794
        %v4082 = vsel %vm3800, %v4050, %v3795
        %v4083 = vsel %vm3800, %v4051, %v3796
        %v4084 = vsel %vm3800, %v4052, %v3797
        %v4085 = vld [vmem:[%s2] sm:$0x1]
        %v4087 = vlaneseq
        %v4088 = vshrl.u32 %v4087, 7
        %v4089 = vsub.s32 0, %v4088
        %v4090 = vrot.slane %v4085, %v4089
        %v4092 = vmul.f32 %v4053, %v4090
        %v4093 = vmul.f32 %v4054, %v4090
        %v4094 = vmul.f32 %v4055, %v4090
        %v4095 = vmul.f32 %v4056, %v4090
        %v4096 = vmul.f32 %v4057, %v4090
        %v4097 = vmul.f32 %v4058, %v4090
        %v4098 = vmul.f32 %v4059, %v4090
        %v4099 = vmul.f32 %v4060, %v4090
        %v4100 = vmul.f32 %v4061, %v4090
        %v4101 = vmul.f32 %v4062, %v4090
        %v4102 = vmul.f32 %v4063, %v4090
        %v4103 = vmul.f32 %v4064, %v4090
        %v4104 = vmul.f32 %v4065, %v4090
        %v4105 = vmul.f32 %v4066, %v4090
        %v4106 = vmul.f32 %v4067, %v4090
        %v4107 = vmul.f32 %v4068, %v4090
        %v4108 = vmul.f32 %v4069, %v4090
        %v4109 = vmul.f32 %v4070, %v4090
        %v4110 = vmul.f32 %v4071, %v4090
        %v4111 = vmul.f32 %v4072, %v4090
        %v4112 = vmul.f32 %v4073, %v4090
        %v4113 = vmul.f32 %v4074, %v4090
        %v4114 = vmul.f32 %v4075, %v4090
        %v4115 = vmul.f32 %v4076, %v4090
        %v4116 = vmul.f32 %v4077, %v4090
        %v4117 = vmul.f32 %v4078, %v4090
        %v4118 = vmul.f32 %v4079, %v4090
        %v4119 = vmul.f32 %v4080, %v4090
        %v4120 = vmul.f32 %v4081, %v4090
        %v4121 = vmul.f32 %v4082, %v4090
        %v4122 = vmul.f32 %v4083, %v4090
        %v4123 = vmul.f32 %v4084, %v4090
        %v4124 = vld [vmem:[%s3] sm:$0x1]
        %v4126 = vlaneseq
        %v4127 = vshrl.u32 %v4126, 7
        %v4128 = vsub.s32 0, %v4127
        %v4129 = vrot.slane %v4124, %v4128
        %v4131 = vadd.f32 %v4092, %v4129
        %v4132 = vadd.f32 %v4093, %v4129
        %v4133 = vadd.f32 %v4094, %v4129
        %v4134 = vadd.f32 %v4095, %v4129
        %v4135 = vadd.f32 %v4096, %v4129
        %v4136 = vadd.f32 %v4097, %v4129
        %v4137 = vadd.f32 %v4098, %v4129
        %v4138 = vadd.f32 %v4099, %v4129
        %v4139 = vadd.f32 %v4100, %v4129
        %v4140 = vadd.f32 %v4101, %v4129
        %v4141 = vadd.f32 %v4102, %v4129
        %v4142 = vadd.f32 %v4103, %v4129
        %v4143 = vadd.f32 %v4104, %v4129
        %v4144 = vadd.f32 %v4105, %v4129
        %v4145 = vadd.f32 %v4106, %v4129
        %v4146 = vadd.f32 %v4107, %v4129
        %v4147 = vadd.f32 %v4108, %v4129
        %v4148 = vadd.f32 %v4109, %v4129
        %v4149 = vadd.f32 %v4110, %v4129
        %v4150 = vadd.f32 %v4111, %v4129
        %v4151 = vadd.f32 %v4112, %v4129
        %v4152 = vadd.f32 %v4113, %v4129
        %v4153 = vadd.f32 %v4114, %v4129
        %v4154 = vadd.f32 %v4115, %v4129
        %v4155 = vadd.f32 %v4116, %v4129
        %v4156 = vadd.f32 %v4117, %v4129
        %v4157 = vadd.f32 %v4118, %v4129
        %v4158 = vadd.f32 %v4119, %v4129
        %v4159 = vadd.f32 %v4120, %v4129
        %v4160 = vadd.f32 %v4121, %v4129
        %v4161 = vadd.f32 %v4122, %v4129
        %v4162 = vadd.f32 %v4123, %v4129
        %v4163 = vld [vmem:[%s242] sm:$0xff]
        %v4164 = vld [vmem:[%s242 + $0x8] sm:$0xff]
        %v4165 = vld [vmem:[%s242 + $0x10] sm:$0xff]
        %v4166 = vld [vmem:[%s242 + $0x18] sm:$0xff]
        %v4167 = vld [vmem:[%s242 + $0x20] sm:$0xff]
        %v4168 = vld [vmem:[%s242 + $0x28] sm:$0xff]
        %v4169 = vld [vmem:[%s242 + $0x30] sm:$0xff]
        %v4170 = vld [vmem:[%s242 + $0x38] sm:$0xff]
        %v4171 = vld [vmem:[%s242 + $0x40] sm:$0xff]
        %v4172 = vld [vmem:[%s242 + $0x48] sm:$0xff]
        %v4173 = vld [vmem:[%s242 + $0x50] sm:$0xff]
        %v4174 = vld [vmem:[%s242 + $0x58] sm:$0xff]
        %v4175 = vld [vmem:[%s242 + $0x60] sm:$0xff]
        %v4176 = vld [vmem:[%s242 + $0x68] sm:$0xff]
        %v4177 = vld [vmem:[%s242 + $0x70] sm:$0xff]
        %v4178 = vld [vmem:[%s242 + $0x78] sm:$0xff]
        %v4179 = vld [vmem:[%s242 + $0x80] sm:$0xff]
        %v4180 = vld [vmem:[%s242 + $0x88] sm:$0xff]
        %v4181 = vld [vmem:[%s242 + $0x90] sm:$0xff]
        %v4182 = vld [vmem:[%s242 + $0x98] sm:$0xff]
        %v4183 = vld [vmem:[%s242 + $0xa0] sm:$0xff]
        %v4184 = vld [vmem:[%s242 + $0xa8] sm:$0xff]
        %v4185 = vld [vmem:[%s242 + $0xb0] sm:$0xff]
        %v4186 = vld [vmem:[%s242 + $0xb8] sm:$0xff]
        %v4187 = vld [vmem:[%s242 + $0xc0] sm:$0xff]
        %v4188 = vld [vmem:[%s242 + $0xc8] sm:$0xff]
        %v4189 = vld [vmem:[%s242 + $0xd0] sm:$0xff]
        %v4190 = vld [vmem:[%s242 + $0xd8] sm:$0xff]
        %v4191 = vld [vmem:[%s242 + $0xe0] sm:$0xff]
        %v4192 = vld [vmem:[%s242 + $0xe8] sm:$0xff]
        %v4193 = vld [vmem:[%s242 + $0xf0] sm:$0xff]
        %v4194 = vld [vmem:[%s242 + $0xf8] sm:$0xff]
        %v4195 = vadd.f32 %v4131, %v4163
        %v4196 = vadd.f32 %v4132, %v4164
        %v4197 = vadd.f32 %v4133, %v4165
        %v4198 = vadd.f32 %v4134, %v4166
        %v4199 = vadd.f32 %v4135, %v4167
        %v4200 = vadd.f32 %v4136, %v4168
        %v4201 = vadd.f32 %v4137, %v4169
        %v4202 = vadd.f32 %v4138, %v4170
        %v4203 = vadd.f32 %v4139, %v4171
        %v4204 = vadd.f32 %v4140, %v4172
        %v4205 = vadd.f32 %v4141, %v4173
        %v4206 = vadd.f32 %v4142, %v4174
        %v4207 = vadd.f32 %v4143, %v4175
        %v4208 = vadd.f32 %v4144, %v4176
        %v4209 = vadd.f32 %v4145, %v4177
        %v4210 = vadd.f32 %v4146, %v4178
        %v4211 = vadd.f32 %v4147, %v4179
        %v4212 = vadd.f32 %v4148, %v4180
        %v4213 = vadd.f32 %v4149, %v4181
        %v4214 = vadd.f32 %v4150, %v4182
        %v4215 = vadd.f32 %v4151, %v4183
        %v4216 = vadd.f32 %v4152, %v4184
        %v4217 = vadd.f32 %v4153, %v4185
        %v4218 = vadd.f32 %v4154, %v4186
        %v4219 = vadd.f32 %v4155, %v4187
        %v4220 = vadd.f32 %v4156, %v4188
        %v4221 = vadd.f32 %v4157, %v4189
        %v4222 = vadd.f32 %v4158, %v4190
        %v4223 = vadd.f32 %v4159, %v4191
        %v4224 = vadd.f32 %v4160, %v4192
        %v4225 = vadd.f32 %v4161, %v4193
        %v4226 = vadd.f32 %v4162, %v4194
        %v4227 = vmul.f32 %v4195, 0.5
        %v4228 = vmul.f32 %v4196, 0.5
        %v4229 = vmul.f32 %v4197, 0.5
        %v4230 = vmul.f32 %v4198, 0.5
        %v4231 = vmul.f32 %v4199, 0.5
        %v4232 = vmul.f32 %v4200, 0.5
        %v4233 = vmul.f32 %v4201, 0.5
        %v4234 = vmul.f32 %v4202, 0.5
        %v4235 = vmul.f32 %v4203, 0.5
        %v4236 = vmul.f32 %v4204, 0.5
        %v4237 = vmul.f32 %v4205, 0.5
        %v4238 = vmul.f32 %v4206, 0.5
        %v4239 = vmul.f32 %v4207, 0.5
        %v4240 = vmul.f32 %v4208, 0.5
        %v4241 = vmul.f32 %v4209, 0.5
        %v4242 = vmul.f32 %v4210, 0.5
        %v4243 = vmul.f32 %v4211, 0.5
        %v4244 = vmul.f32 %v4212, 0.5
        %v4245 = vmul.f32 %v4213, 0.5
        %v4246 = vmul.f32 %v4214, 0.5
        %v4247 = vmul.f32 %v4215, 0.5
        %v4248 = vmul.f32 %v4216, 0.5
        %v4249 = vmul.f32 %v4217, 0.5
        %v4250 = vmul.f32 %v4218, 0.5
        %v4251 = vmul.f32 %v4219, 0.5
        %v4252 = vmul.f32 %v4220, 0.5
        %v4253 = vmul.f32 %v4221, 0.5
        %v4254 = vmul.f32 %v4222, 0.5
        %v4255 = vmul.f32 %v4223, 0.5
        %v4256 = vmul.f32 %v4224, 0.5
        %v4257 = vmul.f32 %v4225, 0.5
        %v4258 = vmul.f32 %v4226, 0.5
        %v4259 = vmul.f32 %v4195, 0.70710677
        %v4260 = vmul.f32 %v4196, 0.70710677
        %v4261 = vmul.f32 %v4197, 0.70710677
        %v4262 = vmul.f32 %v4198, 0.70710677
        %v4263 = vmul.f32 %v4199, 0.70710677
        %v4264 = vmul.f32 %v4200, 0.70710677
        %v4265 = vmul.f32 %v4201, 0.70710677
        %v4266 = vmul.f32 %v4202, 0.70710677
        %v4267 = vmul.f32 %v4203, 0.70710677
        %v4268 = vmul.f32 %v4204, 0.70710677
        %v4269 = vmul.f32 %v4205, 0.70710677
        %v4270 = vmul.f32 %v4206, 0.70710677
        %v4271 = vmul.f32 %v4207, 0.70710677
        %v4272 = vmul.f32 %v4208, 0.70710677
        %v4273 = vmul.f32 %v4209, 0.70710677
        %v4274 = vmul.f32 %v4210, 0.70710677
        %v4275 = vmul.f32 %v4211, 0.70710677
        %v4276 = vmul.f32 %v4212, 0.70710677
        %v4277 = vmul.f32 %v4213, 0.70710677
        %v4278 = vmul.f32 %v4214, 0.70710677
        %v4279 = vmul.f32 %v4215, 0.70710677
        %v4280 = vmul.f32 %v4216, 0.70710677
        %v4281 = vmul.f32 %v4217, 0.70710677
        %v4282 = vmul.f32 %v4218, 0.70710677
        %v4283 = vmul.f32 %v4219, 0.70710677
        %v4284 = vmul.f32 %v4220, 0.70710677
        %v4285 = vmul.f32 %v4221, 0.70710677
        %v4286 = vmul.f32 %v4222, 0.70710677
        %v4287 = vmul.f32 %v4223, 0.70710677
        %v4288 = vmul.f32 %v4224, 0.70710677
        %v4289 = vmul.f32 %v4225, 0.70710677
        %v4290 = vmul.f32 %v4226, 0.70710677
        %v4291 = vand.u32 2147483647, %v4259
        %v4292 = vand.u32 2147483647, %v4260
        %v4293 = vand.u32 2147483647, %v4261
        %v4294 = vand.u32 2147483647, %v4262
        %v4295 = vand.u32 2147483647, %v4263
        %v4296 = vand.u32 2147483647, %v4264
        %v4297 = vand.u32 2147483647, %v4265
        %v4298 = vand.u32 2147483647, %v4266
        %v4299 = vand.u32 2147483647, %v4267
        %v4300 = vand.u32 2147483647, %v4268
        %v4301 = vand.u32 2147483647, %v4269
        %v4302 = vand.u32 2147483647, %v4270
        %v4303 = vand.u32 2147483647, %v4271
        %v4304 = vand.u32 2147483647, %v4272
        %v4305 = vand.u32 2147483647, %v4273
        %v4306 = vand.u32 2147483647, %v4274
        %v4307 = vand.u32 2147483647, %v4275
        %v4308 = vand.u32 2147483647, %v4276
        %v4309 = vand.u32 2147483647, %v4277
        %v4310 = vand.u32 2147483647, %v4278
        %v4311 = vand.u32 2147483647, %v4279
        %v4312 = vand.u32 2147483647, %v4280
        %v4313 = vand.u32 2147483647, %v4281
        %v4314 = vand.u32 2147483647, %v4282
        %v4315 = vand.u32 2147483647, %v4283
        %v4316 = vand.u32 2147483647, %v4284
        %v4317 = vand.u32 2147483647, %v4285
        %v4318 = vand.u32 2147483647, %v4286
        %v4319 = vand.u32 2147483647, %v4287
        %v4320 = vand.u32 2147483647, %v4288
        %v4321 = vand.u32 2147483647, %v4289
        %v4322 = vand.u32 2147483647, %v4290
        %v4323 = vmul.f32 %v4291, 0.3275911
        %v4324 = vmul.f32 %v4292, 0.3275911
        %v4325 = vmul.f32 %v4293, 0.3275911
        %v4326 = vmul.f32 %v4294, 0.3275911
        %v4327 = vmul.f32 %v4295, 0.3275911
        %v4328 = vmul.f32 %v4296, 0.3275911
        %v4329 = vmul.f32 %v4297, 0.3275911
        %v4330 = vmul.f32 %v4298, 0.3275911
        %v4331 = vmul.f32 %v4299, 0.3275911
        %v4332 = vmul.f32 %v4300, 0.3275911
        %v4333 = vmul.f32 %v4301, 0.3275911
        %v4334 = vmul.f32 %v4302, 0.3275911
        %v4335 = vmul.f32 %v4303, 0.3275911
        %v4336 = vmul.f32 %v4304, 0.3275911
        %v4337 = vmul.f32 %v4305, 0.3275911
        %v4338 = vmul.f32 %v4306, 0.3275911
        %v4339 = vmul.f32 %v4307, 0.3275911
        %v4340 = vmul.f32 %v4308, 0.3275911
        %v4341 = vmul.f32 %v4309, 0.3275911
        %v4342 = vmul.f32 %v4310, 0.3275911
        %v4343 = vmul.f32 %v4311, 0.3275911
        %v4344 = vmul.f32 %v4312, 0.3275911
        %v4345 = vmul.f32 %v4313, 0.3275911
        %v4346 = vmul.f32 %v4314, 0.3275911
        %v4347 = vmul.f32 %v4315, 0.3275911
        %v4348 = vmul.f32 %v4316, 0.3275911
        %v4349 = vmul.f32 %v4317, 0.3275911
        %v4350 = vmul.f32 %v4318, 0.3275911
        %v4351 = vmul.f32 %v4319, 0.3275911
        %v4352 = vmul.f32 %v4320, 0.3275911
        %v4353 = vmul.f32 %v4321, 0.3275911
        %v4354 = vmul.f32 %v4322, 0.3275911
        %v4355 = vadd.f32 %v4323, 1.0
        %v4356 = vadd.f32 %v4324, 1.0
        %v4357 = vadd.f32 %v4325, 1.0
        %v4358 = vadd.f32 %v4326, 1.0
        %v4359 = vadd.f32 %v4327, 1.0
        %v4360 = vadd.f32 %v4328, 1.0
        %v4361 = vadd.f32 %v4329, 1.0
        %v4362 = vadd.f32 %v4330, 1.0
        %v4363 = vadd.f32 %v4331, 1.0
        %v4364 = vadd.f32 %v4332, 1.0
        %v4365 = vadd.f32 %v4333, 1.0
        %v4366 = vadd.f32 %v4334, 1.0
        %v4367 = vadd.f32 %v4335, 1.0
        %v4368 = vadd.f32 %v4336, 1.0
        %v4369 = vadd.f32 %v4337, 1.0
        %v4370 = vadd.f32 %v4338, 1.0
        %v4371 = vadd.f32 %v4339, 1.0
        %v4372 = vadd.f32 %v4340, 1.0
        %v4373 = vadd.f32 %v4341, 1.0
        %v4374 = vadd.f32 %v4342, 1.0
        %v4375 = vadd.f32 %v4343, 1.0
        %v4376 = vadd.f32 %v4344, 1.0
        %v4377 = vadd.f32 %v4345, 1.0
        %v4378 = vadd.f32 %v4346, 1.0
        %v4379 = vadd.f32 %v4347, 1.0
        %v4380 = vadd.f32 %v4348, 1.0
        %v4381 = vadd.f32 %v4349, 1.0
        %v4382 = vadd.f32 %v4350, 1.0
        %v4383 = vadd.f32 %v4351, 1.0
        %v4384 = vadd.f32 %v4352, 1.0
        %v4385 = vadd.f32 %v4353, 1.0
        %v4386 = vadd.f32 %v4354, 1.0
        %v4387 = vrcp.pop %v4355
        %v4388 = vmul.f32 1.0, %v4387
        %v4389 = vrcp.pop %v4356
        %v4390 = vmul.f32 1.0, %v4389
        %v4391 = vrcp.pop %v4357
        %v4392 = vmul.f32 1.0, %v4391
        %v4393 = vrcp.pop %v4358
        %v4394 = vmul.f32 1.0, %v4393
        %v4395 = vrcp.pop %v4359
        %v4396 = vmul.f32 1.0, %v4395
        %v4397 = vrcp.pop %v4360
        %v4398 = vmul.f32 1.0, %v4397
        %v4399 = vrcp.pop %v4361
        %v4400 = vmul.f32 1.0, %v4399
        %v4401 = vrcp.pop %v4362
        %v4402 = vmul.f32 1.0, %v4401
        %v4403 = vrcp.pop %v4363
        %v4404 = vmul.f32 1.0, %v4403
        %v4405 = vrcp.pop %v4364
        %v4406 = vmul.f32 1.0, %v4405
        %v4407 = vrcp.pop %v4365
        %v4408 = vmul.f32 1.0, %v4407
        %v4409 = vrcp.pop %v4366
        %v4410 = vmul.f32 1.0, %v4409
        %v4411 = vrcp.pop %v4367
        %v4412 = vmul.f32 1.0, %v4411
        %v4413 = vrcp.pop %v4368
        %v4414 = vmul.f32 1.0, %v4413
        %v4415 = vrcp.pop %v4369
        %v4416 = vmul.f32 1.0, %v4415
        %v4417 = vrcp.pop %v4370
        %v4418 = vmul.f32 1.0, %v4417
        %v4419 = vrcp.pop %v4371
        %v4420 = vmul.f32 1.0, %v4419
        %v4421 = vrcp.pop %v4372
        %v4422 = vmul.f32 1.0, %v4421
        %v4423 = vrcp.pop %v4373
        %v4424 = vmul.f32 1.0, %v4423
        %v4425 = vrcp.pop %v4374
        %v4426 = vmul.f32 1.0, %v4425
        %v4427 = vrcp.pop %v4375
        %v4428 = vmul.f32 1.0, %v4427
        %v4429 = vrcp.pop %v4376
        %v4430 = vmul.f32 1.0, %v4429
        %v4431 = vrcp.pop %v4377
        %v4432 = vmul.f32 1.0, %v4431
        %v4433 = vrcp.pop %v4378
        %v4434 = vmul.f32 1.0, %v4433
        %v4435 = vrcp.pop %v4379
        %v4436 = vmul.f32 1.0, %v4435
        %v4437 = vrcp.pop %v4380
        %v4438 = vmul.f32 1.0, %v4437
        %v4439 = vrcp.pop %v4381
        %v4440 = vmul.f32 1.0, %v4439
        %v4441 = vrcp.pop %v4382
        %v4442 = vmul.f32 1.0, %v4441
        %v4443 = vrcp.pop %v4383
        %v4444 = vmul.f32 1.0, %v4443
        %v4445 = vrcp.pop %v4384
        %v4446 = vmul.f32 1.0, %v4445
        %v4447 = vrcp.pop %v4385
        %v4448 = vmul.f32 1.0, %v4447
        %v4449 = vrcp.pop %v4386
        %v4450 = vmul.f32 1.0, %v4449
        %v4451 = vmul.f32 %v4388, 1.0614054
        %v4452 = vmul.f32 %v4390, 1.0614054
        %v4453 = vmul.f32 %v4392, 1.0614054
        %v4454 = vmul.f32 %v4394, 1.0614054
        %v4455 = vmul.f32 %v4396, 1.0614054
        %v4456 = vmul.f32 %v4398, 1.0614054
        %v4457 = vmul.f32 %v4400, 1.0614054
        %v4458 = vmul.f32 %v4402, 1.0614054
        %v4459 = vmul.f32 %v4404, 1.0614054
        %v4460 = vmul.f32 %v4406, 1.0614054
        %v4461 = vmul.f32 %v4408, 1.0614054
        %v4462 = vmul.f32 %v4410, 1.0614054
        %v4463 = vmul.f32 %v4412, 1.0614054
        %v4464 = vmul.f32 %v4414, 1.0614054
        %v4465 = vmul.f32 %v4416, 1.0614054
        %v4466 = vmul.f32 %v4418, 1.0614054
        %v4467 = vmul.f32 %v4420, 1.0614054
        %v4468 = vmul.f32 %v4422, 1.0614054
        %v4469 = vmul.f32 %v4424, 1.0614054
        %v4470 = vmul.f32 %v4426, 1.0614054
        %v4471 = vmul.f32 %v4428, 1.0614054
        %v4472 = vmul.f32 %v4430, 1.0614054
        %v4473 = vmul.f32 %v4432, 1.0614054
        %v4474 = vmul.f32 %v4434, 1.0614054
        %v4475 = vmul.f32 %v4436, 1.0614054
        %v4476 = vmul.f32 %v4438, 1.0614054
        %v4477 = vmul.f32 %v4440, 1.0614054
        %v4478 = vmul.f32 %v4442, 1.0614054
        %v4479 = vmul.f32 %v4444, 1.0614054
        %v4480 = vmul.f32 %v4446, 1.0614054
        %v4481 = vmul.f32 %v4448, 1.0614054
        %v4482 = vmul.f32 %v4450, 1.0614054
        %v4483 = vadd.f32 %v4451, -1.4531521
        %v4484 = vadd.f32 %v4452, -1.4531521
        %v4485 = vadd.f32 %v4453, -1.4531521
        %v4486 = vadd.f32 %v4454, -1.4531521
        %v4487 = vadd.f32 %v4455, -1.4531521
        %v4488 = vadd.f32 %v4456, -1.4531521
        %v4489 = vadd.f32 %v4457, -1.4531521
        %v4490 = vadd.f32 %v4458, -1.4531521
        %v4491 = vadd.f32 %v4459, -1.4531521
        %v4492 = vadd.f32 %v4460, -1.4531521
        %v4493 = vadd.f32 %v4461, -1.4531521
        %v4494 = vadd.f32 %v4462, -1.4531521
        %v4495 = vadd.f32 %v4463, -1.4531521
        %v4496 = vadd.f32 %v4464, -1.4531521
        %v4497 = vadd.f32 %v4465, -1.4531521
        %v4498 = vadd.f32 %v4466, -1.4531521
        %v4499 = vadd.f32 %v4467, -1.4531521
        %v4500 = vadd.f32 %v4468, -1.4531521
        %v4501 = vadd.f32 %v4469, -1.4531521
        %v4502 = vadd.f32 %v4470, -1.4531521
        %v4503 = vadd.f32 %v4471, -1.4531521
        %v4504 = vadd.f32 %v4472, -1.4531521
        %v4505 = vadd.f32 %v4473, -1.4531521
        %v4506 = vadd.f32 %v4474, -1.4531521
        %v4507 = vadd.f32 %v4475, -1.4531521
        %v4508 = vadd.f32 %v4476, -1.4531521
        %v4509 = vadd.f32 %v4477, -1.4531521
        %v4510 = vadd.f32 %v4478, -1.4531521
        %v4511 = vadd.f32 %v4479, -1.4531521
        %v4512 = vadd.f32 %v4480, -1.4531521
        %v4513 = vadd.f32 %v4481, -1.4531521
        %v4514 = vadd.f32 %v4482, -1.4531521
        %v4515 = vmul.f32 %v4483, %v4388
        %v4516 = vmul.f32 %v4484, %v4390
        %v4517 = vmul.f32 %v4485, %v4392
        %v4518 = vmul.f32 %v4486, %v4394
        %v4519 = vmul.f32 %v4487, %v4396
        %v4520 = vmul.f32 %v4488, %v4398
        %v4521 = vmul.f32 %v4489, %v4400
        %v4522 = vmul.f32 %v4490, %v4402
        %v4523 = vmul.f32 %v4491, %v4404
        %v4524 = vmul.f32 %v4492, %v4406
        %v4525 = vmul.f32 %v4493, %v4408
        %v4526 = vmul.f32 %v4494, %v4410
        %v4527 = vmul.f32 %v4495, %v4412
        %v4528 = vmul.f32 %v4496, %v4414
        %v4529 = vmul.f32 %v4497, %v4416
        %v4530 = vmul.f32 %v4498, %v4418
        %v4531 = vmul.f32 %v4499, %v4420
        %v4532 = vmul.f32 %v4500, %v4422
        %v4533 = vmul.f32 %v4501, %v4424
        %v4534 = vmul.f32 %v4502, %v4426
        %v4535 = vmul.f32 %v4503, %v4428
        %v4536 = vmul.f32 %v4504, %v4430
        %v4537 = vmul.f32 %v4505, %v4432
        %v4538 = vmul.f32 %v4506, %v4434
        %v4539 = vmul.f32 %v4507, %v4436
        %v4540 = vmul.f32 %v4508, %v4438
        %v4541 = vmul.f32 %v4509, %v4440
        %v4542 = vmul.f32 %v4510, %v4442
        %v4543 = vmul.f32 %v4511, %v4444
        %v4544 = vmul.f32 %v4512, %v4446
        %v4545 = vmul.f32 %v4513, %v4448
        %v4546 = vmul.f32 %v4514, %v4450
        %v4547 = vadd.f32 %v4515, 1.4214138
        %v4548 = vadd.f32 %v4516, 1.4214138
        %v4549 = vadd.f32 %v4517, 1.4214138
        %v4550 = vadd.f32 %v4518, 1.4214138
        %v4551 = vadd.f32 %v4519, 1.4214138
        %v4552 = vadd.f32 %v4520, 1.4214138
        %v4553 = vadd.f32 %v4521, 1.4214138
        %v4554 = vadd.f32 %v4522, 1.4214138
        %v4555 = vadd.f32 %v4523, 1.4214138
        %v4556 = vadd.f32 %v4524, 1.4214138
        %v4557 = vadd.f32 %v4525, 1.4214138
        %v4558 = vadd.f32 %v4526, 1.4214138
        %v4559 = vadd.f32 %v4527, 1.4214138
        %v4560 = vadd.f32 %v4528, 1.4214138
        %v4561 = vadd.f32 %v4529, 1.4214138
        %v4562 = vadd.f32 %v4530, 1.4214138
        %v4563 = vadd.f32 %v4531, 1.4214138
        %v4564 = vadd.f32 %v4532, 1.4214138
        %v4565 = vadd.f32 %v4533, 1.4214138
        %v4566 = vadd.f32 %v4534, 1.4214138
        %v4567 = vadd.f32 %v4535, 1.4214138
        %v4568 = vadd.f32 %v4536, 1.4214138
        %v4569 = vadd.f32 %v4537, 1.4214138
        %v4570 = vadd.f32 %v4538, 1.4214138
        %v4571 = vadd.f32 %v4539, 1.4214138
        %v4572 = vadd.f32 %v4540, 1.4214138
        %v4573 = vadd.f32 %v4541, 1.4214138
        %v4574 = vadd.f32 %v4542, 1.4214138
        %v4575 = vadd.f32 %v4543, 1.4214138
        %v4576 = vadd.f32 %v4544, 1.4214138
        %v4577 = vadd.f32 %v4545, 1.4214138
        %v4578 = vadd.f32 %v4546, 1.4214138
        %v4579 = vmul.f32 %v4547, %v4388
        %v4580 = vmul.f32 %v4548, %v4390
        %v4581 = vmul.f32 %v4549, %v4392
        %v4582 = vmul.f32 %v4550, %v4394
        %v4583 = vmul.f32 %v4551, %v4396
        %v4584 = vmul.f32 %v4552, %v4398
        %v4585 = vmul.f32 %v4553, %v4400
        %v4586 = vmul.f32 %v4554, %v4402
        %v4587 = vmul.f32 %v4555, %v4404
        %v4588 = vmul.f32 %v4556, %v4406
        %v4589 = vmul.f32 %v4557, %v4408
        %v4590 = vmul.f32 %v4558, %v4410
        %v4591 = vmul.f32 %v4559, %v4412
        %v4592 = vmul.f32 %v4560, %v4414
        %v4593 = vmul.f32 %v4561, %v4416
        %v4594 = vmul.f32 %v4562, %v4418
        %v4595 = vmul.f32 %v4563, %v4420
        %v4596 = vmul.f32 %v4564, %v4422
        %v4597 = vmul.f32 %v4565, %v4424
        %v4598 = vmul.f32 %v4566, %v4426
        %v4599 = vmul.f32 %v4567, %v4428
        %v4600 = vmul.f32 %v4568, %v4430
        %v4601 = vmul.f32 %v4569, %v4432
        %v4602 = vmul.f32 %v4570, %v4434
        %v4603 = vmul.f32 %v4571, %v4436
        %v4604 = vmul.f32 %v4572, %v4438
        %v4605 = vmul.f32 %v4573, %v4440
        %v4606 = vmul.f32 %v4574, %v4442
        %v4607 = vmul.f32 %v4575, %v4444
        %v4608 = vmul.f32 %v4576, %v4446
        %v4609 = vmul.f32 %v4577, %v4448
        %v4610 = vmul.f32 %v4578, %v4450
        %v4611 = vadd.f32 %v4579, -0.28449672
        %v4612 = vadd.f32 %v4580, -0.28449672
        %v4613 = vadd.f32 %v4581, -0.28449672
        %v4614 = vadd.f32 %v4582, -0.28449672
        %v4615 = vadd.f32 %v4583, -0.28449672
        %v4616 = vadd.f32 %v4584, -0.28449672
        %v4617 = vadd.f32 %v4585, -0.28449672
        %v4618 = vadd.f32 %v4586, -0.28449672
        %v4619 = vadd.f32 %v4587, -0.28449672
        %v4620 = vadd.f32 %v4588, -0.28449672
        %v4621 = vadd.f32 %v4589, -0.28449672
        %v4622 = vadd.f32 %v4590, -0.28449672
        %v4623 = vadd.f32 %v4591, -0.28449672
        %v4624 = vadd.f32 %v4592, -0.28449672
        %v4625 = vadd.f32 %v4593, -0.28449672
        %v4626 = vadd.f32 %v4594, -0.28449672
        %v4627 = vadd.f32 %v4595, -0.28449672
        %v4628 = vadd.f32 %v4596, -0.28449672
        %v4629 = vadd.f32 %v4597, -0.28449672
        %v4630 = vadd.f32 %v4598, -0.28449672
        %v4631 = vadd.f32 %v4599, -0.28449672
        %v4632 = vadd.f32 %v4600, -0.28449672
        %v4633 = vadd.f32 %v4601, -0.28449672
        %v4634 = vadd.f32 %v4602, -0.28449672
        %v4635 = vadd.f32 %v4603, -0.28449672
        %v4636 = vadd.f32 %v4604, -0.28449672
        %v4637 = vadd.f32 %v4605, -0.28449672
        %v4638 = vadd.f32 %v4606, -0.28449672
        %v4639 = vadd.f32 %v4607, -0.28449672
        %v4640 = vadd.f32 %v4608, -0.28449672
        %v4641 = vadd.f32 %v4609, -0.28449672
        %v4642 = vadd.f32 %v4610, -0.28449672
        %v4643 = vmul.f32 %v4611, %v4388
        %v4644 = vmul.f32 %v4612, %v4390
        %v4645 = vmul.f32 %v4613, %v4392
        %v4646 = vmul.f32 %v4614, %v4394
        %v4647 = vmul.f32 %v4615, %v4396
        %v4648 = vmul.f32 %v4616, %v4398
        %v4649 = vmul.f32 %v4617, %v4400
        %v4650 = vmul.f32 %v4618, %v4402
        %v4651 = vmul.f32 %v4619, %v4404
        %v4652 = vmul.f32 %v4620, %v4406
        %v4653 = vmul.f32 %v4621, %v4408
        %v4654 = vmul.f32 %v4622, %v4410
        %v4655 = vmul.f32 %v4623, %v4412
        %v4656 = vmul.f32 %v4624, %v4414
        %v4657 = vmul.f32 %v4625, %v4416
        %v4658 = vmul.f32 %v4626, %v4418
        %v4659 = vmul.f32 %v4627, %v4420
        %v4660 = vmul.f32 %v4628, %v4422
        %v4661 = vmul.f32 %v4629, %v4424
        %v4662 = vmul.f32 %v4630, %v4426
        %v4663 = vmul.f32 %v4631, %v4428
        %v4664 = vmul.f32 %v4632, %v4430
        %v4665 = vmul.f32 %v4633, %v4432
        %v4666 = vmul.f32 %v4634, %v4434
        %v4667 = vmul.f32 %v4635, %v4436
        %v4668 = vmul.f32 %v4636, %v4438
        %v4669 = vmul.f32 %v4637, %v4440
        %v4670 = vmul.f32 %v4638, %v4442
        %v4671 = vmul.f32 %v4639, %v4444
        %v4672 = vmul.f32 %v4640, %v4446
        %v4673 = vmul.f32 %v4641, %v4448
        %v4674 = vmul.f32 %v4642, %v4450
        %v4675 = vadd.f32 %v4643, 0.2548296
        %v4676 = vadd.f32 %v4644, 0.2548296
        %v4677 = vadd.f32 %v4645, 0.2548296
        %v4678 = vadd.f32 %v4646, 0.2548296
        %v4679 = vadd.f32 %v4647, 0.2548296
        %v4680 = vadd.f32 %v4648, 0.2548296
        %v4681 = vadd.f32 %v4649, 0.2548296
        %v4682 = vadd.f32 %v4650, 0.2548296
        %v4683 = vadd.f32 %v4651, 0.2548296
        %v4684 = vadd.f32 %v4652, 0.2548296
        %v4685 = vadd.f32 %v4653, 0.2548296
        %v4686 = vadd.f32 %v4654, 0.2548296
        %v4687 = vadd.f32 %v4655, 0.2548296
        %v4688 = vadd.f32 %v4656, 0.2548296
        %v4689 = vadd.f32 %v4657, 0.2548296
        %v4690 = vadd.f32 %v4658, 0.2548296
        %v4691 = vadd.f32 %v4659, 0.2548296
        %v4692 = vadd.f32 %v4660, 0.2548296
        %v4693 = vadd.f32 %v4661, 0.2548296
        %v4694 = vadd.f32 %v4662, 0.2548296
        %v4695 = vadd.f32 %v4663, 0.2548296
        %v4696 = vadd.f32 %v4664, 0.2548296
        %v4697 = vadd.f32 %v4665, 0.2548296
        %v4698 = vadd.f32 %v4666, 0.2548296
        %v4699 = vadd.f32 %v4667, 0.2548296
        %v4700 = vadd.f32 %v4668, 0.2548296
        %v4701 = vadd.f32 %v4669, 0.2548296
        %v4702 = vadd.f32 %v4670, 0.2548296
        %v4703 = vadd.f32 %v4671, 0.2548296
        %v4704 = vadd.f32 %v4672, 0.2548296
        %v4705 = vadd.f32 %v4673, 0.2548296
        %v4706 = vadd.f32 %v4674, 0.2548296
        %v4707 = vmul.f32 %v4675, %v4388
        %v4708 = vmul.f32 %v4676, %v4390
        %v4709 = vmul.f32 %v4677, %v4392
        %v4710 = vmul.f32 %v4678, %v4394
        %v4711 = vmul.f32 %v4679, %v4396
        %v4712 = vmul.f32 %v4680, %v4398
        %v4713 = vmul.f32 %v4681, %v4400
        %v4714 = vmul.f32 %v4682, %v4402
        %v4715 = vmul.f32 %v4683, %v4404
        %v4716 = vmul.f32 %v4684, %v4406
        %v4717 = vmul.f32 %v4685, %v4408
        %v4718 = vmul.f32 %v4686, %v4410
        %v4719 = vmul.f32 %v4687, %v4412
        %v4720 = vmul.f32 %v4688, %v4414
        %v4721 = vmul.f32 %v4689, %v4416
        %v4722 = vmul.f32 %v4690, %v4418
        %v4723 = vmul.f32 %v4691, %v4420
        %v4724 = vmul.f32 %v4692, %v4422
        %v4725 = vmul.f32 %v4693, %v4424
        %v4726 = vmul.f32 %v4694, %v4426
        %v4727 = vmul.f32 %v4695, %v4428
        %v4728 = vmul.f32 %v4696, %v4430
        %v4729 = vmul.f32 %v4697, %v4432
        %v4730 = vmul.f32 %v4698, %v4434
        %v4731 = vmul.f32 %v4699, %v4436
        %v4732 = vmul.f32 %v4700, %v4438
        %v4733 = vmul.f32 %v4701, %v4440
        %v4734 = vmul.f32 %v4702, %v4442
        %v4735 = vmul.f32 %v4703, %v4444
        %v4736 = vmul.f32 %v4704, %v4446
        %v4737 = vmul.f32 %v4705, %v4448
        %v4738 = vmul.f32 %v4706, %v4450
        %v4739 = vsub.f32 0.0, %v4291
        %v4740 = vsub.f32 0.0, %v4292
        %v4741 = vsub.f32 0.0, %v4293
        %v4742 = vsub.f32 0.0, %v4294
        %v4743 = vsub.f32 0.0, %v4295
        %v4744 = vsub.f32 0.0, %v4296
        %v4745 = vsub.f32 0.0, %v4297
        %v4746 = vsub.f32 0.0, %v4298
        %v4747 = vsub.f32 0.0, %v4299
        %v4748 = vsub.f32 0.0, %v4300
        %v4749 = vsub.f32 0.0, %v4301
        %v4750 = vsub.f32 0.0, %v4302
        %v4751 = vsub.f32 0.0, %v4303
        %v4752 = vsub.f32 0.0, %v4304
        %v4753 = vsub.f32 0.0, %v4305
        %v4754 = vsub.f32 0.0, %v4306
        %v4755 = vsub.f32 0.0, %v4307
        %v4756 = vsub.f32 0.0, %v4308
        %v4757 = vsub.f32 0.0, %v4309
        %v4758 = vsub.f32 0.0, %v4310
        %v4759 = vsub.f32 0.0, %v4311
        %v4760 = vsub.f32 0.0, %v4312
        %v4761 = vsub.f32 0.0, %v4313
        %v4762 = vsub.f32 0.0, %v4314
        %v4763 = vsub.f32 0.0, %v4315
        %v4764 = vsub.f32 0.0, %v4316
        %v4765 = vsub.f32 0.0, %v4317
        %v4766 = vsub.f32 0.0, %v4318
        %v4767 = vsub.f32 0.0, %v4319
        %v4768 = vsub.f32 0.0, %v4320
        %v4769 = vsub.f32 0.0, %v4321
        %v4770 = vsub.f32 0.0, %v4322
        %v4771 = vmul.f32 %v4739, %v4291
        %v4772 = vmul.f32 %v4740, %v4292
        %v4773 = vmul.f32 %v4741, %v4293
        %v4774 = vmul.f32 %v4742, %v4294
        %v4775 = vmul.f32 %v4743, %v4295
        %v4776 = vmul.f32 %v4744, %v4296
        %v4777 = vmul.f32 %v4745, %v4297
        %v4778 = vmul.f32 %v4746, %v4298
        %v4779 = vmul.f32 %v4747, %v4299
        %v4780 = vmul.f32 %v4748, %v4300
        %v4781 = vmul.f32 %v4749, %v4301
        %v4782 = vmul.f32 %v4750, %v4302
        %v4783 = vmul.f32 %v4751, %v4303
        %v4784 = vmul.f32 %v4752, %v4304
        %v4785 = vmul.f32 %v4753, %v4305
        %v4786 = vmul.f32 %v4754, %v4306
        %v4787 = vmul.f32 %v4755, %v4307
        %v4788 = vmul.f32 %v4756, %v4308
        %v4789 = vmul.f32 %v4757, %v4309
        %v4790 = vmul.f32 %v4758, %v4310
        %v4791 = vmul.f32 %v4759, %v4311
        %v4792 = vmul.f32 %v4760, %v4312
        %v4793 = vmul.f32 %v4761, %v4313
        %v4794 = vmul.f32 %v4762, %v4314
        %v4795 = vmul.f32 %v4763, %v4315
        %v4796 = vmul.f32 %v4764, %v4316
        %v4797 = vmul.f32 %v4765, %v4317
        %v4798 = vmul.f32 %v4766, %v4318
        %v4799 = vmul.f32 %v4767, %v4319
        %v4800 = vmul.f32 %v4768, %v4320
        %v4801 = vmul.f32 %v4769, %v4321
        %v4802 = vmul.f32 %v4770, %v4322
        %v4803 = vmul.f32 %v4771, 1.442695
        %v4804 = vpow.pop %v4803
        %v4805 = vmul.f32 %v4772, 1.442695
        %v4806 = vpow.pop %v4805
        %v4807 = vmul.f32 %v4773, 1.442695
        %v4808 = vpow.pop %v4807
        %v4809 = vmul.f32 %v4774, 1.442695
        %v4810 = vpow.pop %v4809
        %v4811 = vmul.f32 %v4775, 1.442695
        %v4812 = vpow.pop %v4811
        %v4813 = vmul.f32 %v4776, 1.442695
        %v4814 = vpow.pop %v4813
        %v4815 = vmul.f32 %v4777, 1.442695
        %v4816 = vpow.pop %v4815
        %v4817 = vmul.f32 %v4778, 1.442695
        %v4818 = vpow.pop %v4817
        %v4819 = vmul.f32 %v4779, 1.442695
        %v4820 = vpow.pop %v4819
        %v4821 = vmul.f32 %v4780, 1.442695
        %v4822 = vpow.pop %v4821
        %v4823 = vmul.f32 %v4781, 1.442695
        %v4824 = vpow.pop %v4823
        %v4825 = vmul.f32 %v4782, 1.442695
        %v4826 = vpow.pop %v4825
        %v4827 = vmul.f32 %v4783, 1.442695
        %v4828 = vpow.pop %v4827
        %v4829 = vmul.f32 %v4784, 1.442695
        %v4830 = vpow.pop %v4829
        %v4831 = vmul.f32 %v4785, 1.442695
        %v4832 = vpow.pop %v4831
        %v4833 = vmul.f32 %v4786, 1.442695
        %v4834 = vpow.pop %v4833
        %v4835 = vmul.f32 %v4787, 1.442695
        %v4836 = vpow.pop %v4835
        %v4837 = vmul.f32 %v4788, 1.442695
        %v4838 = vpow.pop %v4837
        %v4839 = vmul.f32 %v4789, 1.442695
        %v4840 = vpow.pop %v4839
        %v4841 = vmul.f32 %v4790, 1.442695
        %v4842 = vpow.pop %v4841
        %v4843 = vmul.f32 %v4791, 1.442695
        %v4844 = vpow.pop %v4843
        %v4845 = vmul.f32 %v4792, 1.442695
        %v4846 = vpow.pop %v4845
        %v4847 = vmul.f32 %v4793, 1.442695
        %v4848 = vpow.pop %v4847
        %v4849 = vmul.f32 %v4794, 1.442695
        %v4850 = vpow.pop %v4849
        %v4851 = vmul.f32 %v4795, 1.442695
        %v4852 = vpow.pop %v4851
        %v4853 = vmul.f32 %v4796, 1.442695
        %v4854 = vpow.pop %v4853
        %v4855 = vmul.f32 %v4797, 1.442695
        %v4856 = vpow.pop %v4855
        %v4857 = vmul.f32 %v4798, 1.442695
        %v4858 = vpow.pop %v4857
        %v4859 = vmul.f32 %v4799, 1.442695
        %v4860 = vpow.pop %v4859
        %v4861 = vmul.f32 %v4800, 1.442695
        %v4862 = vpow.pop %v4861
        %v4863 = vmul.f32 %v4801, 1.442695
        %v4864 = vpow.pop %v4863
        %v4865 = vmul.f32 %v4802, 1.442695
        %v4866 = vpow.pop %v4865
        %v4867 = vmul.f32 %v4707, %v4804
        %v4868 = vmul.f32 %v4708, %v4806
        %v4869 = vmul.f32 %v4709, %v4808
        %v4870 = vmul.f32 %v4710, %v4810
        %v4871 = vmul.f32 %v4711, %v4812
        %v4872 = vmul.f32 %v4712, %v4814
        %v4873 = vmul.f32 %v4713, %v4816
        %v4874 = vmul.f32 %v4714, %v4818
        %v4875 = vmul.f32 %v4715, %v4820
        %v4876 = vmul.f32 %v4716, %v4822
        %v4877 = vmul.f32 %v4717, %v4824
        %v4878 = vmul.f32 %v4718, %v4826
        %v4879 = vmul.f32 %v4719, %v4828
        %v4880 = vmul.f32 %v4720, %v4830
        %v4881 = vmul.f32 %v4721, %v4832
        %v4882 = vmul.f32 %v4722, %v4834
        %v4883 = vmul.f32 %v4723, %v4836
        %v4884 = vmul.f32 %v4724, %v4838
        %v4885 = vmul.f32 %v4725, %v4840
        %v4886 = vmul.f32 %v4726, %v4842
        %v4887 = vmul.f32 %v4727, %v4844
        %v4888 = vmul.f32 %v4728, %v4846
        %v4889 = vmul.f32 %v4729, %v4848
        %v4890 = vmul.f32 %v4730, %v4850
        %v4891 = vmul.f32 %v4731, %v4852
        %v4892 = vmul.f32 %v4732, %v4854
        %v4893 = vmul.f32 %v4733, %v4856
        %v4894 = vmul.f32 %v4734, %v4858
        %v4895 = vmul.f32 %v4735, %v4860
        %v4896 = vmul.f32 %v4736, %v4862
        %v4897 = vmul.f32 %v4737, %v4864
        %v4898 = vmul.f32 %v4738, %v4866
        %v4899 = vsub.f32 1.0, %v4867
        %v4900 = vsub.f32 1.0, %v4868
        %v4901 = vsub.f32 1.0, %v4869
        %v4902 = vsub.f32 1.0, %v4870
        %v4903 = vsub.f32 1.0, %v4871
        %v4904 = vsub.f32 1.0, %v4872
        %v4905 = vsub.f32 1.0, %v4873
        %v4906 = vsub.f32 1.0, %v4874
        %v4907 = vsub.f32 1.0, %v4875
        %v4908 = vsub.f32 1.0, %v4876
        %v4909 = vsub.f32 1.0, %v4877
        %v4910 = vsub.f32 1.0, %v4878
        %v4911 = vsub.f32 1.0, %v4879
        %v4912 = vsub.f32 1.0, %v4880
        %v4913 = vsub.f32 1.0, %v4881
        %v4914 = vsub.f32 1.0, %v4882
        %v4915 = vsub.f32 1.0, %v4883
        %v4916 = vsub.f32 1.0, %v4884
        %v4917 = vsub.f32 1.0, %v4885
        %v4918 = vsub.f32 1.0, %v4886
        %v4919 = vsub.f32 1.0, %v4887
        %v4920 = vsub.f32 1.0, %v4888
        %v4921 = vsub.f32 1.0, %v4889
        %v4922 = vsub.f32 1.0, %v4890
        %v4923 = vsub.f32 1.0, %v4891
        %v4924 = vsub.f32 1.0, %v4892
        %v4925 = vsub.f32 1.0, %v4893
        %v4926 = vsub.f32 1.0, %v4894
        %v4927 = vsub.f32 1.0, %v4895
        %v4928 = vsub.f32 1.0, %v4896
        %v4929 = vsub.f32 1.0, %v4897
        %v4930 = vsub.f32 1.0, %v4898
        %vm4931 = vcmp.ge.f32.partialorder %v4259, 0.0
        %vm4932 = vcmp.ge.f32.partialorder %v4260, 0.0
        %vm4933 = vcmp.ge.f32.partialorder %v4261, 0.0
        %vm4934 = vcmp.ge.f32.partialorder %v4262, 0.0
        %vm4935 = vcmp.ge.f32.partialorder %v4263, 0.0
        %vm4936 = vcmp.ge.f32.partialorder %v4264, 0.0
        %vm4937 = vcmp.ge.f32.partialorder %v4265, 0.0
        %vm4938 = vcmp.ge.f32.partialorder %v4266, 0.0
        %vm4939 = vcmp.ge.f32.partialorder %v4267, 0.0
        %vm4940 = vcmp.ge.f32.partialorder %v4268, 0.0
        %vm4941 = vcmp.ge.f32.partialorder %v4269, 0.0
        %vm4942 = vcmp.ge.f32.partialorder %v4270, 0.0
        %vm4943 = vcmp.ge.f32.partialorder %v4271, 0.0
        %vm4944 = vcmp.ge.f32.partialorder %v4272, 0.0
        %vm4945 = vcmp.ge.f32.partialorder %v4273, 0.0
        %vm4946 = vcmp.ge.f32.partialorder %v4274, 0.0
        %vm4947 = vcmp.ge.f32.partialorder %v4275, 0.0
        %vm4948 = vcmp.ge.f32.partialorder %v4276, 0.0
        %vm4949 = vcmp.ge.f32.partialorder %v4277, 0.0
        %vm4950 = vcmp.ge.f32.partialorder %v4278, 0.0
        %vm4951 = vcmp.ge.f32.partialorder %v4279, 0.0
        %vm4952 = vcmp.ge.f32.partialorder %v4280, 0.0
        %vm4953 = vcmp.ge.f32.partialorder %v4281, 0.0
        %vm4954 = vcmp.ge.f32.partialorder %v4282, 0.0
        %vm4955 = vcmp.ge.f32.partialorder %v4283, 0.0
        %vm4956 = vcmp.ge.f32.partialorder %v4284, 0.0
        %vm4957 = vcmp.ge.f32.partialorder %v4285, 0.0
        %vm4958 = vcmp.ge.f32.partialorder %v4286, 0.0
        %vm4959 = vcmp.ge.f32.partialorder %v4287, 0.0
        %vm4960 = vcmp.ge.f32.partialorder %v4288, 0.0
        %vm4961 = vcmp.ge.f32.partialorder %v4289, 0.0
        %vm4962 = vcmp.ge.f32.partialorder %v4290, 0.0
        %v4963 = vsub.f32 0.0, %v4899
        %v4964 = vsub.f32 0.0, %v4900
        %v4965 = vsub.f32 0.0, %v4901
        %v4966 = vsub.f32 0.0, %v4902
        %v4967 = vsub.f32 0.0, %v4903
        %v4968 = vsub.f32 0.0, %v4904
        %v4969 = vsub.f32 0.0, %v4905
        %v4970 = vsub.f32 0.0, %v4906
        %v4971 = vsub.f32 0.0, %v4907
        %v4972 = vsub.f32 0.0, %v4908
        %v4973 = vsub.f32 0.0, %v4909
        %v4974 = vsub.f32 0.0, %v4910
        %v4975 = vsub.f32 0.0, %v4911
        %v4976 = vsub.f32 0.0, %v4912
        %v4977 = vsub.f32 0.0, %v4913
        %v4978 = vsub.f32 0.0, %v4914
        %v4979 = vsub.f32 0.0, %v4915
        %v4980 = vsub.f32 0.0, %v4916
        %v4981 = vsub.f32 0.0, %v4917
        %v4982 = vsub.f32 0.0, %v4918
        %v4983 = vsub.f32 0.0, %v4919
        %v4984 = vsub.f32 0.0, %v4920
        %v4985 = vsub.f32 0.0, %v4921
        %v4986 = vsub.f32 0.0, %v4922
        %v4987 = vsub.f32 0.0, %v4923
        %v4988 = vsub.f32 0.0, %v4924
        %v4989 = vsub.f32 0.0, %v4925
        %v4990 = vsub.f32 0.0, %v4926
        %v4991 = vsub.f32 0.0, %v4927
        %v4992 = vsub.f32 0.0, %v4928
        %v4993 = vsub.f32 0.0, %v4929
        %v4994 = vsub.f32 0.0, %v4930
        %v4995 = vsel %vm4931, %v4899, %v4963
        %v4996 = vsel %vm4932, %v4900, %v4964
        %v4997 = vsel %vm4933, %v4901, %v4965
        %v4998 = vsel %vm4934, %v4902, %v4966
        %v4999 = vsel %vm4935, %v4903, %v4967
        %v5000 = vsel %vm4936, %v4904, %v4968
        %v5001 = vsel %vm4937, %v4905, %v4969
        %v5002 = vsel %vm4938, %v4906, %v4970
        %v5003 = vsel %vm4939, %v4907, %v4971
        %v5004 = vsel %vm4940, %v4908, %v4972
        %v5005 = vsel %vm4941, %v4909, %v4973
        %v5006 = vsel %vm4942, %v4910, %v4974
        %v5007 = vsel %vm4943, %v4911, %v4975
        %v5008 = vsel %vm4944, %v4912, %v4976
        %v5009 = vsel %vm4945, %v4913, %v4977
        %v5010 = vsel %vm4946, %v4914, %v4978
        %v5011 = vsel %vm4947, %v4915, %v4979
        %v5012 = vsel %vm4948, %v4916, %v4980
        %v5013 = vsel %vm4949, %v4917, %v4981
        %v5014 = vsel %vm4950, %v4918, %v4982
        %v5015 = vsel %vm4951, %v4919, %v4983
        %v5016 = vsel %vm4952, %v4920, %v4984
        %v5017 = vsel %vm4953, %v4921, %v4985
        %v5018 = vsel %vm4954, %v4922, %v4986
        %v5019 = vsel %vm4955, %v4923, %v4987
        %v5020 = vsel %vm4956, %v4924, %v4988
        %v5021 = vsel %vm4957, %v4925, %v4989
        %v5022 = vsel %vm4958, %v4926, %v4990
        %v5023 = vsel %vm4959, %v4927, %v4991
        %v5024 = vsel %vm4960, %v4928, %v4992
        %v5025 = vsel %vm4961, %v4929, %v4993
        %v5026 = vsel %vm4962, %v4930, %v4994
        %v5027 = vadd.f32 %v4995, 1.0
        %v5028 = vadd.f32 %v4996, 1.0
        %v5029 = vadd.f32 %v4997, 1.0
        %v5030 = vadd.f32 %v4998, 1.0
        %v5031 = vadd.f32 %v4999, 1.0
        %v5032 = vadd.f32 %v5000, 1.0
        %v5033 = vadd.f32 %v5001, 1.0
        %v5034 = vadd.f32 %v5002, 1.0
        %v5035 = vadd.f32 %v5003, 1.0
        %v5036 = vadd.f32 %v5004, 1.0
        %v5037 = vadd.f32 %v5005, 1.0
        %v5038 = vadd.f32 %v5006, 1.0
        %v5039 = vadd.f32 %v5007, 1.0
        %v5040 = vadd.f32 %v5008, 1.0
        %v5041 = vadd.f32 %v5009, 1.0
        %v5042 = vadd.f32 %v5010, 1.0
        %v5043 = vadd.f32 %v5011, 1.0
        %v5044 = vadd.f32 %v5012, 1.0
        %v5045 = vadd.f32 %v5013, 1.0
        %v5046 = vadd.f32 %v5014, 1.0
        %v5047 = vadd.f32 %v5015, 1.0
        %v5048 = vadd.f32 %v5016, 1.0
        %v5049 = vadd.f32 %v5017, 1.0
        %v5050 = vadd.f32 %v5018, 1.0
        %v5051 = vadd.f32 %v5019, 1.0
        %v5052 = vadd.f32 %v5020, 1.0
        %v5053 = vadd.f32 %v5021, 1.0
        %v5054 = vadd.f32 %v5022, 1.0
        %v5055 = vadd.f32 %v5023, 1.0
        %v5056 = vadd.f32 %v5024, 1.0
        %v5057 = vadd.f32 %v5025, 1.0
        %v5058 = vadd.f32 %v5026, 1.0
        %v5059 = vmul.f32 %v4227, %v5027
        %v5060 = vmul.f32 %v4228, %v5028
        %v5061 = vmul.f32 %v4229, %v5029
        %v5062 = vmul.f32 %v4230, %v5030
        %v5063 = vmul.f32 %v4231, %v5031
        %v5064 = vmul.f32 %v4232, %v5032
        %v5065 = vmul.f32 %v4233, %v5033
        %v5066 = vmul.f32 %v4234, %v5034
        %v5067 = vmul.f32 %v4235, %v5035
        %v5068 = vmul.f32 %v4236, %v5036
        %v5069 = vmul.f32 %v4237, %v5037
        %v5070 = vmul.f32 %v4238, %v5038
        %v5071 = vmul.f32 %v4239, %v5039
        %v5072 = vmul.f32 %v4240, %v5040
        %v5073 = vmul.f32 %v4241, %v5041
        %v5074 = vmul.f32 %v4242, %v5042
        %v5075 = vmul.f32 %v4243, %v5043
        %v5076 = vmul.f32 %v4244, %v5044
        %v5077 = vmul.f32 %v4245, %v5045
        %v5078 = vmul.f32 %v4246, %v5046
        %v5079 = vmul.f32 %v4247, %v5047
        %v5080 = vmul.f32 %v4248, %v5048
        %v5081 = vmul.f32 %v4249, %v5049
        %v5082 = vmul.f32 %v4250, %v5050
        %v5083 = vmul.f32 %v4251, %v5051
        %v5084 = vmul.f32 %v4252, %v5052
        %v5085 = vmul.f32 %v4253, %v5053
        %v5086 = vmul.f32 %v4254, %v5054
        %v5087 = vmul.f32 %v4255, %v5055
        %v5088 = vmul.f32 %v4256, %v5056
        %v5089 = vmul.f32 %v4257, %v5057
        %v5090 = vmul.f32 %v4258, %v5058
        %5091 = vst [vmem:[%s232] sm:$0xff] %v5059
        %5092 = vst [vmem:[%s232 + $0x8] sm:$0xff] %v5060
        %5093 = vst [vmem:[%s232 + $0x10] sm:$0xff] %v5061
        %5094 = vst [vmem:[%s232 + $0x18] sm:$0xff] %v5062
        %5095 = vst [vmem:[%s232 + $0x20] sm:$0xff] %v5063
        %5096 = vst [vmem:[%s232 + $0x28] sm:$0xff] %v5064
        %5097 = vst [vmem:[%s232 + $0x30] sm:$0xff] %v5065
        %5098 = vst [vmem:[%s232 + $0x38] sm:$0xff] %v5066
        %5099 = vst [vmem:[%s232 + $0x40] sm:$0xff] %v5067
        %5100 = vst [vmem:[%s232 + $0x48] sm:$0xff] %v5068
        %5101 = vst [vmem:[%s232 + $0x50] sm:$0xff] %v5069
        %5102 = vst [vmem:[%s232 + $0x58] sm:$0xff] %v5070
        %5103 = vst [vmem:[%s232 + $0x60] sm:$0xff] %v5071
        %5104 = vst [vmem:[%s232 + $0x68] sm:$0xff] %v5072
        %5105 = vst [vmem:[%s232 + $0x70] sm:$0xff] %v5073
        %5106 = vst [vmem:[%s232 + $0x78] sm:$0xff] %v5074
        %5107 = vst [vmem:[%s232 + $0x80] sm:$0xff] %v5075
        %5108 = vst [vmem:[%s232 + $0x88] sm:$0xff] %v5076
        %5109 = vst [vmem:[%s232 + $0x90] sm:$0xff] %v5077
        %5110 = vst [vmem:[%s232 + $0x98] sm:$0xff] %v5078
        %5111 = vst [vmem:[%s232 + $0xa0] sm:$0xff] %v5079
        %5112 = vst [vmem:[%s232 + $0xa8] sm:$0xff] %v5080
        %5113 = vst [vmem:[%s232 + $0xb0] sm:$0xff] %v5081
        %5114 = vst [vmem:[%s232 + $0xb8] sm:$0xff] %v5082
        %5115 = vst [vmem:[%s232 + $0xc0] sm:$0xff] %v5083
        %5116 = vst [vmem:[%s232 + $0xc8] sm:$0xff] %v5084
        %5117 = vst [vmem:[%s232 + $0xd0] sm:$0xff] %v5085
        %5118 = vst [vmem:[%s232 + $0xd8] sm:$0xff] %v5086
        %5119 = vst [vmem:[%s232 + $0xe0] sm:$0xff] %v5087
        %5120 = vst [vmem:[%s232 + $0xe8] sm:$0xff] %v5088
        %5121 = vst [vmem:[%s232 + $0xf0] sm:$0xff] %v5089
        %5122 = vst [vmem:[%s232 + $0xf8] sm:$0xff] %v5090
        %s5123 = sand.u32 %s142, 1
        %s5124 = scalar_lea.sflag [#allocation3], %s5123
        %s5125 = sand.u32 %s142, 1
        %s5126 = smul.addr %s5125, 256
        %s5127 = scalar_lea.vmem [#allocation2], %s5126
        // Predicated region
        $region41: #{residual_block.3} parent=39 // pred_check
          %p5128 = pneg %p152
        $region42: #{residual_block.3} parent=39 // pred_check_branch
          %5130 = sbr.rel (%p5128) target = $region44
        $region43: #{residual_block.3} parent=39 // pred_region
          %s5132 = ssub.s32 4096, 4096
          %5133 = vsyncadd %s5124, %s5132
          %s5134 = smul.addr %s19, 32
          %s5135 = smul.addr %s5134, 128
          %s5136 = scalar_lea.hbm %s5, %s5135
          %s5137 = sshll.u32 %s5127, 4
          %s5138 = int_to_ptr.vmem [resolvable:$true] %s5137
          %5143 = dma.vmem_to_hbm [thread:$0]  %s5138, 4096, %s5136, %s5124, 128, 128, 8
        $region44: #{residual_block.3} parent=39 // pred_fallthru
          _
      $region40: #{residual_block.3} parent=5 // pred_fallthru
        _
      %p5144 = scmp.le.s32.totalorder 2, %s14
      // Predicated region
      $region45: #{residual_block.3} parent=5 // pred_check
        %p5145 = pneg %p5144
      $region46: #{residual_block.3} parent=5 // pred_check_branch
        %5147 = sbr.rel (%p5145) target = $region48
      $region47: #{residual_block.3} parent=5 // pred_region
        %s5148 = ssub.s32 %s14, 2
        // Predicated region
        $region49: #{residual_block.3} parent=47 // pred_check
          %p5149 = pneg %p158
        $region50: #{residual_block.3} parent=47 // pred_check_branch
          %5151 = sbr.rel (%p5149) target = $region52
        $region51: #{residual_block.3} parent=47 // pred_region
          %s5152 = sand.u32 %s143, 1
          %s5153 = scalar_lea.sflag [#allocation3], %s5152
          %s5154 = sand.u32 %s143, 1
          %s5155 = smul.addr %s5154, 256
          %s5156 = scalar_lea.vmem [#allocation2], %s5155
          %5157 = dma.done %s5153, 4096
        $region52: #{residual_block.3} parent=47 // pred_fallthru
          _
      $region48: #{residual_block.3} parent=5 // pred_fallthru
        _
    $region6: #{residual_block.3} parent=1 // loop_footer
      %s18 = sadd.s32 1, %s14
    $region7: #{residual_block.3} parent=1 // loop_footer_branch
      %13 = sbr.rel target = $region3
    $region8: #{residual_block.3} parent=1 // loop_exit
      _
    %5158 = vsyncpa [#allocation3], 1
    %s5159 = scalar_lea.sflag [#allocation3], 1
    %5160 = vsyncpa %s5159, 1

</llo_original>
